<compile_context>
chip_gen: v7x
topology: tpu7x:2x2x1
jax: 0.10.0
libtpu: 0.0.40
codegen_flags: <defaults>
</compile_context>

<pallas_src>
import jax
import jax.numpy as jnp
from jax.experimental import pallas as pl
from jax.experimental.pallas import tpu as pltpu

_CIN_RAW = 35   # 3 (geometry) + 32 (embedding) input channels
_CIN_PAD = 64   # pad input channels so the first matmul K-dim is aligned


def _posenetfeat_kernel(
    xin_ref,                    # (1, 64, tn)  bf16   [x ; emb ; zero-pad]
    wf1_ref, bf1_ref,           # (128, 64)  bf16, (128, 1) f32   conv1+e_conv1
    wf2_ref, bf2_ref,           # (256, 128) bf16, (256, 1) f32   conv2+e_conv2
    w5_ref, b5_ref,             # (256, 256) bf16, (256, 1) f32   conv5
    wa1_ref, ba1_ref,           # (320, 640) bf16, (320, 1) f32   all_conv1
    wa2_ref, ba2_ref,           # (160, 320) bf16, (160, 1) f32   all_conv2
    out_ref,                    # (1, 160, tn) f32
):
    relu = lambda v: jnp.maximum(v, 0.0)
    leaky = lambda v: jnp.where(v > 0, v, 0.01 * v)
    dot = lambda w, a: jnp.dot(w, a, preferred_element_type=jnp.float32)
    bf16 = lambda v: v.astype(jnp.bfloat16)

    xin = xin_ref[0]                                       # (64, tn) bf16

    # fused conv1 / e_conv1  ->  pointfeat_1 = [x1 ; e1]
    pf1 = relu(dot(wf1_ref[...], xin) + bf1_ref[...])      # (128, tn) f32
    pf1_b = bf16(pf1)

    # fused conv2 / e_conv2  ->  pointfeat_2 = [x2 ; e2]
    pf2 = relu(dot(wf2_ref[...], pf1_b) + bf2_ref[...])    # (256, tn) f32
    pf2_b = bf16(pf2)

    # conv5
    x5 = relu(dot(w5_ref[...], pf2_b) + b5_ref[...])       # (256, tn) f32
    x5_b = bf16(x5)

    # all_conv1 over cat([pf1, pf2, x5]) without materializing the 640-wide
    # concat: accumulate three lane-aligned matmuls (static ref slices).
    acc = dot(wa1_ref[:, 0:128], pf1_b)
    acc = acc + dot(wa1_ref[:, 128:384], pf2_b)
    acc = acc + dot(wa1_ref[:, 384:640], x5_b)
    a1 = leaky(acc + ba1_ref[...])                         # (320, tn) f32

    # all_conv2 (no activation)
    out = dot(wa2_ref[...], bf16(a1)) + ba2_ref[...]       # (160, tn) f32
    out_ref[0] = out.astype(out_ref.dtype)


def posenetfeat_forward(x, emb, params, *, tile_n=512, vmem_limit_bytes=None):
    """x: (B, 3, N), emb: (B, 32, N) in torch NCW layout.  Returns (B, 160, N)."""
    assert tile_n % 128 == 0
    B, cx, N = x.shape
    _, ce, _ = emb.shape
    assert cx == 3 and ce == 32

    f32, bf16 = jnp.float32, jnp.bfloat16

    # ---- fuse / pack weights (done in the wrapper; constant under jit) ----
    wf1 = jnp.zeros((128, _CIN_PAD), f32)
    wf1 = wf1.at[0:64, 0:3].set(params["conv1_w"])
    wf1 = wf1.at[64:128, 3:35].set(params["e_conv1_w"])
    bf1 = jnp.concatenate([params["conv1_b"], params["e_conv1_b"]])[:, None]

    wf2 = jnp.zeros((256, 128), f32)
    wf2 = wf2.at[0:128, 0:64].set(params["conv2_w"])
    wf2 = wf2.at[128:256, 64:128].set(params["e_conv2_w"])
    bf2 = jnp.concatenate([params["conv2_b"], params["e_conv2_b"]])[:, None]

    w5, b5 = params["conv5_w"], params["conv5_b"][:, None]
    wa1, ba1 = params["all_conv1_w"], params["all_conv1_b"][:, None]
    wa2, ba2 = params["all_conv2_w"], params["all_conv2_b"][:, None]

    wf1, wf2, w5, wa1, wa2 = (w.astype(bf16) for w in (wf1, wf2, w5, wa1, wa2))
    bf1, bf2, b5, ba1, ba2 = (b.astype(f32) for b in (bf1, bf2, b5, ba1, ba2))

    # ---- pack inputs: [x ; emb] on the channel axis, pad C->64 and N->tile ----
    n_pad = ((N + tile_n - 1) // tile_n) * tile_n
    xin = jnp.concatenate([x, emb], axis=1)                       # (B, 35, N)
    xin = jnp.pad(xin, ((0, 0), (0, _CIN_PAD - _CIN_RAW), (0, n_pad - N)))
    xin = xin.astype(bf16)                                        # (B, 64, n_pad)

    grid = (B, n_pad // tile_n)

    def const_spec(arr):
        return pl.BlockSpec(arr.shape, lambda b, i: (0, 0))

    in_specs = [
        pl.BlockSpec((1, _CIN_PAD, tile_n), lambda b, i: (b, 0, i)),
        const_spec(wf1), const_spec(bf1),
        const_spec(wf2), const_spec(bf2),
        const_spec(w5), const_spec(b5),
        const_spec(wa1), const_spec(ba1),
        const_spec(wa2), const_spec(ba2),
    ]

    if vmem_limit_bytes is None and tile_n > 512:
        # bigger tiles (v5e/v6e: 1024-2048, v7x: cap ~1024) need more than the
        # default scoped-VMEM budget.
        vmem_limit_bytes = 64 * 1024 * 1024

    out = pl.pallas_call(
        _posenetfeat_kernel,
        out_shape=jax.ShapeDtypeStruct((B, 160, n_pad), f32),
        grid_spec=pltpu.PrefetchScalarGridSpec(
            num_scalar_prefetch=0,
            grid=grid,
            in_specs=in_specs,
            out_specs=pl.BlockSpec((1, 160, tile_n), lambda b, i: (b, 0, i)),
        ),
        compiler_params=pltpu.CompilerParams(
            dimension_semantics=("parallel", "parallel"),
            vmem_limit_bytes=vmem_limit_bytes,
        ),
    )(xin, wf1, bf1, wf2, bf2, w5, b5, wa1, ba1, wa2, ba2)

    return out[:, :, :N]


def init_params(key):
    """Deterministic synthetic parameters in torch Conv1d layout:
    weight (C_out, C_in), bias (C_out,)."""
    layers = [
        ("conv1", 3, 64), ("e_conv1", 32, 64),
        ("conv2", 64, 128), ("e_conv2", 64, 128),
        ("conv5", 256, 256),
        ("all_conv1", 640, 320), ("all_conv2", 320, 160),
    ]
    keys = jax.random.split(key, 2 * len(layers))
    params = {}
    for i, (name, cin, cout) in enumerate(layers):
        scale = float(cin) ** -0.5
        params[name + "_w"] = jax.random.uniform(
            keys[2 * i], (cout, cin), jnp.float32, -scale, scale)
        params[name + "_b"] = jax.random.uniform(
            keys[2 * i + 1], (cout,), jnp.float32, -scale, scale)
    return params


def reference_forward(x, emb, params):
    """Pure-JAX f32 reference mirroring the torch module."""
    def conv(name, v):
        w, b = params[name + "_w"], params[name + "_b"]
        return jnp.einsum("oc,bcn->bon", w, v) + b[None, :, None]

    relu = jax.nn.relu
    x1 = relu(conv("conv1", x))
    e1 = relu(conv("e_conv1", emb))
    pf1 = jnp.concatenate([x1, e1], axis=1)
    x2 = relu(conv("conv2", x1))
    e2 = relu(conv("e_conv2", e1))
    pf2 = jnp.concatenate([x2, e2], axis=1)
    x5 = relu(conv("conv5", pf2))
    full = jnp.concatenate([pf1, pf2, x5], axis=1)
    a1 = jax.nn.leaky_relu(conv("all_conv1", full), negative_slope=0.01)
    return conv("all_conv2", a1)


if __name__ == "__main__":
    key = jax.random.PRNGKey(0)
    k_x, k_e, k_p = jax.random.split(key, 3)

    B, N = 2, 500   # typical 6-PACK num_points; exercises the N-padding path
    x = jax.random.normal(k_x, (B, 3, N), jnp.float32)     # torch: (B, 3, N)
    emb = jax.random.normal(k_e, (B, 32, N), jnp.float32)  # torch: (B, 32, N)
    params = init_params(k_p)

    fwd = jax.jit(lambda xx, ee: posenetfeat_forward(xx, ee, params, tile_n=512))
    out = jax.block_until_ready(fwd(x, emb))

    ref = reference_forward(x, emb, params)
    assert out.shape == (B, 160, N)
    # bf16 MXU matmuls with f32 accumulation -> loosened tolerance vs f32 ref.
    assert jnp.allclose(out, ref, atol=3e-2, rtol=3e-2), \
        float(jnp.max(jnp.abs(out - ref)))

    print("KERNEL_OK")
</pallas_src>

<mosaic_0001>
module attributes {stable_mosaic.version = 11 : i64} {
  func.func @_posenetfeat_kernel(%arg0: i32, %arg1: i32, %arg2: memref<1x64x512xbf16, #tpu.memory_space<vmem>>, %arg3: memref<128x64xbf16, #tpu.memory_space<vmem>>, %arg4: memref<128x1xf32, #tpu.memory_space<vmem>>, %arg5: memref<256x128xbf16, #tpu.memory_space<vmem>>, %arg6: memref<256x1xf32, #tpu.memory_space<vmem>>, %arg7: memref<256x256xbf16, #tpu.memory_space<vmem>>, %arg8: memref<256x1xf32, #tpu.memory_space<vmem>>, %arg9: memref<320x640xbf16, #tpu.memory_space<vmem>>, %arg10: memref<320x1xf32, #tpu.memory_space<vmem>>, %arg11: memref<160x320xbf16, #tpu.memory_space<vmem>>, %arg12: memref<160x1xf32, #tpu.memory_space<vmem>>, %arg13: memref<1x160x512xf32, #tpu.memory_space<vmem>>) attributes {dimension_semantics = [#tpu.dimension_semantics<parallel>, #tpu.dimension_semantics<parallel>], iteration_bounds = array<i64: 2, 1>, scalar_prefetch = 0 : i64, scratch_operands = 0 : i64, tpu.core_type = #tpu.core_type<tc>, window_params = [{transform_indices = @transform_0, window_bounds = array<i64: 1, 64, 512>}, {pipeline_mode = #tpu.pipeline_mode<synchronous>, transform_indices = @transform_1, window_bounds = array<i64: 128, 64>}, {pipeline_mode = #tpu.pipeline_mode<synchronous>, transform_indices = @transform_2, window_bounds = array<i64: 128, 1>}, {pipeline_mode = #tpu.pipeline_mode<synchronous>, transform_indices = @transform_3, window_bounds = array<i64: 256, 128>}, {pipeline_mode = #tpu.pipeline_mode<synchronous>, transform_indices = @transform_4, window_bounds = array<i64: 256, 1>}, {pipeline_mode = #tpu.pipeline_mode<synchronous>, transform_indices = @transform_5, window_bounds = array<i64: 256, 256>}, {pipeline_mode = #tpu.pipeline_mode<synchronous>, transform_indices = @transform_6, window_bounds = array<i64: 256, 1>}, {pipeline_mode = #tpu.pipeline_mode<synchronous>, transform_indices = @transform_7, window_bounds = array<i64: 320, 640>}, {pipeline_mode = #tpu.pipeline_mode<synchronous>, transform_indices = @transform_8, window_bounds = array<i64: 320, 1>}, {pipeline_mode = #tpu.pipeline_mode<synchronous>, transform_indices = @transform_9, window_bounds = array<i64: 160, 320>}, {pipeline_mode = #tpu.pipeline_mode<synchronous>, transform_indices = @transform_10, window_bounds = array<i64: 160, 1>}, {transform_indices = @transform_11, window_bounds = array<i64: 1, 160, 512>}]} {
    %c0 = arith.constant 0 : index
    %c0_0 = arith.constant 0 : index
    %c0_1 = arith.constant 0 : index
    %0 = vector.load %arg2[%c0, %c0_0, %c0_1] : memref<1x64x512xbf16, #tpu.memory_space<vmem>>, vector<1x64x512xbf16>
    %1 = vector.shape_cast %0 : vector<1x64x512xbf16> to vector<64x512xbf16>
    %c0_2 = arith.constant 0 : index
    %c0_3 = arith.constant 0 : index
    %2 = vector.load %arg3[%c0_2, %c0_3] : memref<128x64xbf16, #tpu.memory_space<vmem>>, vector<128x64xbf16>
    %cst = arith.constant dense<0.000000e+00> : vector<128x512xf32>
    %3 = tpu.matmul %2, %1, %cst {dimension_numbers = #tpu.dot_dimension_numbers<[1], [0], [0], [1], [0, 0, 1, 1], [], []>} : vector<128x64xbf16>, vector<64x512xbf16>, vector<128x512xf32> -> vector<128x512xf32>
    %c0_4 = arith.constant 0 : index
    %c0_5 = arith.constant 0 : index
    %4 = vector.load %arg4[%c0_4, %c0_5] : memref<128x1xf32, #tpu.memory_space<vmem>>, vector<128x1xf32>
    %5 = vector.broadcast %4 : vector<128x1xf32> to vector<128x512xf32>
    %6 = arith.addf %3, %5 : vector<128x512xf32>
    %cst_6 = arith.constant 0.000000e+00 : f32
    %7 = vector.broadcast %cst_6 : f32 to vector<128x512xf32>
    %8 = arith.maximumf %6, %7 : vector<128x512xf32>
    %9 = arith.truncf %8 : vector<128x512xf32> to vector<128x512xbf16>
    %c0_7 = arith.constant 0 : index
    %c0_8 = arith.constant 0 : index
    %10 = vector.load %arg5[%c0_7, %c0_8] : memref<256x128xbf16, #tpu.memory_space<vmem>>, vector<256x128xbf16>
    %cst_9 = arith.constant dense<0.000000e+00> : vector<256x512xf32>
    %11 = tpu.matmul %10, %9, %cst_9 {dimension_numbers = #tpu.dot_dimension_numbers<[1], [0], [0], [1], [0, 0, 1, 1], [], []>} : vector<256x128xbf16>, vector<128x512xbf16>, vector<256x512xf32> -> vector<256x512xf32>
    %c0_10 = arith.constant 0 : index
    %c0_11 = arith.constant 0 : index
    %12 = vector.load %arg6[%c0_10, %c0_11] : memref<256x1xf32, #tpu.memory_space<vmem>>, vector<256x1xf32>
    %13 = vector.broadcast %12 : vector<256x1xf32> to vector<256x512xf32>
    %14 = arith.addf %11, %13 : vector<256x512xf32>
    %cst_12 = arith.constant 0.000000e+00 : f32
    %15 = vector.broadcast %cst_12 : f32 to vector<256x512xf32>
    %16 = arith.maximumf %14, %15 : vector<256x512xf32>
    %17 = arith.truncf %16 : vector<256x512xf32> to vector<256x512xbf16>
    %c0_13 = arith.constant 0 : index
    %c0_14 = arith.constant 0 : index
    %18 = vector.load %arg7[%c0_13, %c0_14] : memref<256x256xbf16, #tpu.memory_space<vmem>>, vector<256x256xbf16>
    %cst_15 = arith.constant dense<0.000000e+00> : vector<256x512xf32>
    %19 = tpu.matmul %18, %17, %cst_15 {dimension_numbers = #tpu.dot_dimension_numbers<[1], [0], [0], [1], [0, 0, 1, 1], [], []>} : vector<256x256xbf16>, vector<256x512xbf16>, vector<256x512xf32> -> vector<256x512xf32>
    %c0_16 = arith.constant 0 : index
    %c0_17 = arith.constant 0 : index
    %20 = vector.load %arg8[%c0_16, %c0_17] : memref<256x1xf32, #tpu.memory_space<vmem>>, vector<256x1xf32>
    %21 = vector.broadcast %20 : vector<256x1xf32> to vector<256x512xf32>
    %22 = arith.addf %19, %21 : vector<256x512xf32>
    %cst_18 = arith.constant 0.000000e+00 : f32
    %23 = vector.broadcast %cst_18 : f32 to vector<256x512xf32>
    %24 = arith.maximumf %22, %23 : vector<256x512xf32>
    %25 = arith.truncf %24 : vector<256x512xf32> to vector<256x512xbf16>
    %c0_19 = arith.constant 0 : index
    %c0_20 = arith.constant 0 : index
    %26 = vector.load %arg9[%c0_19, %c0_20] : memref<320x640xbf16, #tpu.memory_space<vmem>>, vector<320x128xbf16>
    %cst_21 = arith.constant dense<0.000000e+00> : vector<320x512xf32>
    %27 = tpu.matmul %26, %9, %cst_21 {dimension_numbers = #tpu.dot_dimension_numbers<[1], [0], [0], [1], [0, 0, 1, 1], [], []>} : vector<320x128xbf16>, vector<128x512xbf16>, vector<320x512xf32> -> vector<320x512xf32>
    %c0_22 = arith.constant 0 : index
    %c128 = arith.constant 128 : index
    %28 = vector.load %arg9[%c0_22, %c128] : memref<320x640xbf16, #tpu.memory_space<vmem>>, vector<320x256xbf16>
    %cst_23 = arith.constant dense<0.000000e+00> : vector<320x512xf32>
    %29 = tpu.matmul %28, %17, %cst_23 {dimension_numbers = #tpu.dot_dimension_numbers<[1], [0], [0], [1], [0, 0, 1, 1], [], []>} : vector<320x256xbf16>, vector<256x512xbf16>, vector<320x512xf32> -> vector<320x512xf32>
    %30 = arith.addf %27, %29 : vector<320x512xf32>
    %c0_24 = arith.constant 0 : index
    %c384 = arith.constant 384 : index
    %31 = vector.load %arg9[%c0_24, %c384] : memref<320x640xbf16, #tpu.memory_space<vmem>>, vector<320x256xbf16>
    %cst_25 = arith.constant dense<0.000000e+00> : vector<320x512xf32>
    %32 = tpu.matmul %31, %25, %cst_25 {dimension_numbers = #tpu.dot_dimension_numbers<[1], [0], [0], [1], [0, 0, 1, 1], [], []>} : vector<320x256xbf16>, vector<256x512xbf16>, vector<320x512xf32> -> vector<320x512xf32>
    %33 = arith.addf %30, %32 : vector<320x512xf32>
    %c0_26 = arith.constant 0 : index
    %c0_27 = arith.constant 0 : index
    %34 = vector.load %arg10[%c0_26, %c0_27] : memref<320x1xf32, #tpu.memory_space<vmem>>, vector<320x1xf32>
    %35 = vector.broadcast %34 : vector<320x1xf32> to vector<320x512xf32>
    %36 = arith.addf %33, %35 : vector<320x512xf32>
    %cst_28 = arith.constant 0.000000e+00 : f32
    %37 = vector.broadcast %cst_28 : f32 to vector<320x512xf32>
    %38 = arith.cmpf ogt, %36, %37 : vector<320x512xf32>
    %cst_29 = arith.constant 0.00999999977 : f32
    %39 = vector.broadcast %cst_29 : f32 to vector<320x512xf32>
    %40 = arith.mulf %39, %36 : vector<320x512xf32>
    %41 = arith.select %38, %36, %40 : vector<320x512xi1>, vector<320x512xf32>
    %c0_30 = arith.constant 0 : index
    %c0_31 = arith.constant 0 : index
    %42 = vector.load %arg11[%c0_30, %c0_31] : memref<160x320xbf16, #tpu.memory_space<vmem>>, vector<160x320xbf16>
    %43 = arith.truncf %41 : vector<320x512xf32> to vector<320x512xbf16>
    %cst_32 = arith.constant dense<0.000000e+00> : vector<160x512xf32>
    %44 = tpu.matmul %42, %43, %cst_32 {dimension_numbers = #tpu.dot_dimension_numbers<[1], [0], [0], [1], [0, 0, 1, 1], [], []>} : vector<160x320xbf16>, vector<320x512xbf16>, vector<160x512xf32> -> vector<160x512xf32>
    %c0_33 = arith.constant 0 : index
    %c0_34 = arith.constant 0 : index
    %45 = vector.load %arg12[%c0_33, %c0_34] : memref<160x1xf32, #tpu.memory_space<vmem>>, vector<160x1xf32>
    %46 = vector.broadcast %45 : vector<160x1xf32> to vector<160x512xf32>
    %47 = arith.addf %44, %46 : vector<160x512xf32>
    %c0_35 = arith.constant 0 : index
    %c0_36 = arith.constant 0 : index
    %c0_37 = arith.constant 0 : index
    %48 = vector.load %arg13[%c0_35, %c0_36, %c0_37] : memref<1x160x512xf32, #tpu.memory_space<vmem>>, vector<1x160x512xf32>
    %49 = vector.shape_cast %48 : vector<1x160x512xf32> to vector<160x512xf32>
    %50 = vector.shape_cast %47 : vector<160x512xf32> to vector<1x160x512xf32>
    tpu.vector_store %arg13[%c0_35, %c0_36, %c0_37], %50 {strides = array<i32>} : memref<1x160x512xf32, #tpu.memory_space<vmem>>, vector<1x160x512xf32>,
    return
  }
  func.func @transform_0(%arg0: i32, %arg1: i32) -> (i32, i32, i32) {
    %c0_i32 = arith.constant 0 : i32
    %c0_i32_0 = arith.constant 0 : i32
    return %arg0, %c0_i32, %arg1 : i32, i32, i32
  }
  func.func @transform_1(%arg0: i32, %arg1: i32) -> (i32, i32) {
    %c0_i32 = arith.constant 0 : i32
    %c0_i32_0 = arith.constant 0 : i32
    %c0_i32_1 = arith.constant 0 : i32
    return %c0_i32, %c0_i32_0 : i32, i32
  }
  func.func @transform_2(%arg0: i32, %arg1: i32) -> (i32, i32) {
    %c0_i32 = arith.constant 0 : i32
    %c0_i32_0 = arith.constant 0 : i32
    %c0_i32_1 = arith.constant 0 : i32
    return %c0_i32, %c0_i32_0 : i32, i32
  }
  func.func @transform_3(%arg0: i32, %arg1: i32) -> (i32, i32) {
    %c0_i32 = arith.constant 0 : i32
    %c0_i32_0 = arith.constant 0 : i32
    %c0_i32_1 = arith.constant 0 : i32
    return %c0_i32, %c0_i32_0 : i32, i32
  }
  func.func @transform_4(%arg0: i32, %arg1: i32) -> (i32, i32) {
    %c0_i32 = arith.constant 0 : i32
    %c0_i32_0 = arith.constant 0 : i32
    %c0_i32_1 = arith.constant 0 : i32
    return %c0_i32, %c0_i32_0 : i32, i32
  }
  func.func @transform_5(%arg0: i32, %arg1: i32) -> (i32, i32) {
    %c0_i32 = arith.constant 0 : i32
    %c0_i32_0 = arith.constant 0 : i32
    %c0_i32_1 = arith.constant 0 : i32
    return %c0_i32, %c0_i32_0 : i32, i32
  }
  func.func @transform_6(%arg0: i32, %arg1: i32) -> (i32, i32) {
    %c0_i32 = arith.constant 0 : i32
    %c0_i32_0 = arith.constant 0 : i32
    %c0_i32_1 = arith.constant 0 : i32
    return %c0_i32, %c0_i32_0 : i32, i32
  }
  func.func @transform_7(%arg0: i32, %arg1: i32) -> (i32, i32) {
    %c0_i32 = arith.constant 0 : i32
    %c0_i32_0 = arith.constant 0 : i32
    %c0_i32_1 = arith.constant 0 : i32
    return %c0_i32, %c0_i32_0 : i32, i32
  }
  func.func @transform_8(%arg0: i32, %arg1: i32) -> (i32, i32) {
    %c0_i32 = arith.constant 0 : i32
    %c0_i32_0 = arith.constant 0 : i32
    %c0_i32_1 = arith.constant 0 : i32
    return %c0_i32, %c0_i32_0 : i32, i32
  }
  func.func @transform_9(%arg0: i32, %arg1: i32) -> (i32, i32) {
    %c0_i32 = arith.constant 0 : i32
    %c0_i32_0 = arith.constant 0 : i32
    %c0_i32_1 = arith.constant 0 : i32
    return %c0_i32, %c0_i32_0 : i32, i32
  }
  func.func @transform_10(%arg0: i32, %arg1: i32) -> (i32, i32) {
    %c0_i32 = arith.constant 0 : i32
    %c0_i32_0 = arith.constant 0 : i32
    %c0_i32_1 = arith.constant 0 : i32
    return %c0_i32, %c0_i32_0 : i32, i32
  }
  func.func @transform_11(%arg0: i32, %arg1: i32) -> (i32, i32, i32) {
    %c0_i32 = arith.constant 0 : i32
    %c0_i32_0 = arith.constant 0 : i32
    return %arg0, %c0_i32, %arg1 : i32, i32, i32
  }
}

</mosaic_0001>

<llo_original>
// kernel: _lambda_.1
$region0: #{_lambda_.1}
  #allocation0 [shape = 'u32[]', space=smem, size = 0x4, offset = 0x4, fixed_abs, tag = 'smem constant byte address 0x4 - core index']
  #allocation1 [shape = 'u32[144,128]{1,0:T(1,128)}', space=vmem, size = 0x12000, scoped, tag = 'internal scratch']
  %s0 = inlined_call_operand.vmem [shape: bf16[2,64,512], index: 0, kind: input, shape index: {}]
  %s1 = inlined_call_operand.vmem [shape: bf16[128,64], index: 1, kind: input, shape index: {}]
  %s2 = inlined_call_operand.vmem [shape: f32[128,1], index: 2, kind: input, shape index: {}]
  %s3 = inlined_call_operand.vmem [shape: bf16[256,128], index: 3, kind: input, shape index: {}]
  %s4 = inlined_call_operand.vmem [shape: f32[256,1], index: 4, kind: input, shape index: {}]
  %s5 = inlined_call_operand.vmem [shape: bf16[256,256], index: 5, kind: input, shape index: {}]
  %s6 = inlined_call_operand.vmem [shape: f32[256,1], index: 6, kind: input, shape index: {}]
  %s7 = inlined_call_operand.vmem [shape: bf16[320,640], index: 7, kind: input, shape index: {}]
  %s8 = inlined_call_operand.vmem [shape: f32[320,1], index: 8, kind: input, shape index: {}]
  %s9 = inlined_call_operand.vmem [shape: bf16[160,320], index: 9, kind: input, shape index: {}]
  %s10 = inlined_call_operand.vmem [shape: f32[160,1], index: 10, kind: input, shape index: {}]
  %s11 = inlined_call_operand.hbm [shape: f32[2,160,512], index: 11, kind: output, shape index: {}]
  %s12 = sld [smem:[#allocation0]]
  $region77: #{_lambda_.1} parent=0
    _
  %s14 = ssub.s32 1, %s12
  %s15 = scalar_select 0, %s14, %s12
  $region1: #{_lambda_.1} parent=0
    #allocation2 [shape = 'u8[655360]{0}', space=vmem, size = 0xa0000, scoped, tag = 'output window, operand 0']
    #allocation3 [shape = 's32[2]{0}', space=sflag, size = 0x8, scoped, tag = 'scoped memory for _lambda_.1']
    %16 = vsyncpa [#allocation3], 0
    %s17 = scalar_lea.sflag [#allocation3], 1
    %18 = vsyncpa %s17, 0
    loop: start=0, step=1, limit=4
    $region2: #{_lambda_.1} parent=1 // loop_pre_header
      _
    $region3: #{_lambda_.1} parent=1 // loop_header
      %s20 = sphi 0, %s24
      %p21 = scmp.ge.s32.totalorder %s20, 4
      %s27 = sphi 0, %s39
      %s28 = sphi 0, %s35
      %s29 = sphi 0, %s27
      %s30 = sphi 0, %s28
      %s31 = sphi 0, %s29
      %s32 = sphi 0, %s30
      %s44 = sphi 0, %s46
      %s47 = sphi 0, %s44
      %s48 = sphi 0, %s47
      %s64 = sphi 0, %s48
      %s68 = sphi 0, %s68
      %s70 = sphi 0, %s68
      %s71 = sphi 0, %s70
      %s85 = sphi 0, %s71
      %s89 = sphi 0, %s89
      %s91 = sphi 0, %s89
      %s92 = sphi 0, %s91
      %s106 = sphi 0, %s92
      %s110 = sphi 0, %s110
      %s112 = sphi 0, %s110
      %s113 = sphi 0, %s112
      %s127 = sphi 0, %s113
      %s131 = sphi 0, %s131
      %s133 = sphi 0, %s131
      %s134 = sphi 0, %s133
      %s148 = sphi 0, %s134
      %s152 = sphi 0, %s152
      %s154 = sphi 0, %s152
      %s155 = sphi 0, %s154
      %s169 = sphi 0, %s155
      %s173 = sphi 0, %s173
      %s175 = sphi 0, %s173
      %s176 = sphi 0, %s175
      %s190 = sphi 0, %s176
      %s194 = sphi 0, %s194
      %s196 = sphi 0, %s194
      %s197 = sphi 0, %s196
      %s211 = sphi 0, %s197
      %s215 = sphi 0, %s215
      %s217 = sphi 0, %s215
      %s218 = sphi 0, %s217
      %s232 = sphi 0, %s218
      %s236 = sphi 0, %s236
      %s238 = sphi 0, %s236
      %s239 = sphi 0, %s238
      %s253 = sphi 0, %s239
      %s257 = sphi 0, %s257
      %s259 = sphi 0, %s257
      %s260 = sphi 0, %s259
      %s274 = sphi 0, %s260
      %s282 = sphi 0, %s284
      %s285 = sphi 0, %s282
      %s286 = sphi 0, %s285
      %s302 = sphi 0, %s286
    $region4: #{_lambda_.1} parent=1 // loop_header_branch
      %23 = sbr.rel (%p21) target = $region8
    $region5: #{_lambda_.1} parent=1 // loop_body
      %s25 = ssub.s32 %s20, 1
      %s26 = ssub.s32 %s20, 2
      %s33 = sadd.s32 1, %s28
      %p34 = scmp.ge.s32.totalorder %s33, 1
      %s35 = scalar_select %p34, 0, %s33
      %s36 = sadd.s32 1, %s27
      %s37 = scalar_select %p34, %s36, %s27
      %p38 = scmp.ge.s32.totalorder %s37, 2
      %s39 = scalar_select %p38, 0, %s37
      %s40 = ssub.s32 %s27, %s39
      %s41 = ssub.s32 %s28, %s35
      %s42 = sor.u32 %s40, %s41
      %p43 = scmp.eq.s32.totalorder %s42, 0
      %s45 = sadd.s32 %s44, 1
      %s46 = scalar_select %p43, %s44, %s45
      %p49 = pneg %p43
      %p50 = scmp.eq.s32.totalorder %s20, 1
      %p51 = por %p49, %p50
      %p52 = scmp.ne.s32.totalorder %s44, %s47
      %p53 = scmp.eq.s32.totalorder %s20, 0
      %p54 = por %p52, %p53
      %p55 = scmp.ne.s32.totalorder %s44, %s47
      %p56 = scmp.eq.s32.totalorder %s25, 1
      %p57 = por %p55, %p56
      %p58 = scmp.ne.s32.totalorder %s47, %s48
      %p59 = scmp.eq.s32.totalorder %s25, 0
      %p60 = por %p58, %p59
      %p61 = scmp.ne.s32.totalorder %s47, %s48
      %p62 = scmp.eq.s32.totalorder %s26, 1
      %p63 = por %p61, %p62
      %p65 = scmp.ne.s32.totalorder %s48, %s64
      %p66 = scmp.eq.s32.totalorder %s26, 0
      %p67 = por %p65, %p66
      %s69 = sadd.s32 %s68, 1
      %p72 = scmp.eq.s32.totalorder %s20, 1
      %p73 = scmp.ne.s32.totalorder %s68, %s70
      %p74 = scmp.eq.s32.totalorder %s20, 0
      %p75 = por %p73, %p74
      %p76 = scmp.ne.s32.totalorder %s68, %s70
      %p77 = scmp.eq.s32.totalorder %s25, 1
      %p78 = por %p76, %p77
      %p79 = scmp.ne.s32.totalorder %s70, %s71
      %p80 = scmp.eq.s32.totalorder %s25, 0
      %p81 = por %p79, %p80
      %p82 = scmp.ne.s32.totalorder %s70, %s71
      %p83 = scmp.eq.s32.totalorder %s26, 1
      %p84 = por %p82, %p83
      %p86 = scmp.ne.s32.totalorder %s71, %s85
      %p87 = scmp.eq.s32.totalorder %s26, 0
      %p88 = por %p86, %p87
      %s90 = sadd.s32 %s89, 1
      %p93 = scmp.eq.s32.totalorder %s20, 1
      %p94 = scmp.ne.s32.totalorder %s89, %s91
      %p95 = scmp.eq.s32.totalorder %s20, 0
      %p96 = por %p94, %p95
      %p97 = scmp.ne.s32.totalorder %s89, %s91
      %p98 = scmp.eq.s32.totalorder %s25, 1
      %p99 = por %p97, %p98
      %p100 = scmp.ne.s32.totalorder %s91, %s92
      %p101 = scmp.eq.s32.totalorder %s25, 0
      %p102 = por %p100, %p101
      %p103 = scmp.ne.s32.totalorder %s91, %s92
      %p104 = scmp.eq.s32.totalorder %s26, 1
      %p105 = por %p103, %p104
      %p107 = scmp.ne.s32.totalorder %s92, %s106
      %p108 = scmp.eq.s32.totalorder %s26, 0
      %p109 = por %p107, %p108
      %s111 = sadd.s32 %s110, 1
      %p114 = scmp.eq.s32.totalorder %s20, 1
      %p115 = scmp.ne.s32.totalorder %s110, %s112
      %p116 = scmp.eq.s32.totalorder %s20, 0
      %p117 = por %p115, %p116
      %p118 = scmp.ne.s32.totalorder %s110, %s112
      %p119 = scmp.eq.s32.totalorder %s25, 1
      %p120 = por %p118, %p119
      %p121 = scmp.ne.s32.totalorder %s112, %s113
      %p122 = scmp.eq.s32.totalorder %s25, 0
      %p123 = por %p121, %p122
      %p124 = scmp.ne.s32.totalorder %s112, %s113
      %p125 = scmp.eq.s32.totalorder %s26, 1
      %p126 = por %p124, %p125
      %p128 = scmp.ne.s32.totalorder %s113, %s127
      %p129 = scmp.eq.s32.totalorder %s26, 0
      %p130 = por %p128, %p129
      %s132 = sadd.s32 %s131, 1
      %p135 = scmp.eq.s32.totalorder %s20, 1
      %p136 = scmp.ne.s32.totalorder %s131, %s133
      %p137 = scmp.eq.s32.totalorder %s20, 0
      %p138 = por %p136, %p137
      %p139 = scmp.ne.s32.totalorder %s131, %s133
      %p140 = scmp.eq.s32.totalorder %s25, 1
      %p141 = por %p139, %p140
      %p142 = scmp.ne.s32.totalorder %s133, %s134
      %p143 = scmp.eq.s32.totalorder %s25, 0
      %p144 = por %p142, %p143
      %p145 = scmp.ne.s32.totalorder %s133, %s134
      %p146 = scmp.eq.s32.totalorder %s26, 1
      %p147 = por %p145, %p146
      %p149 = scmp.ne.s32.totalorder %s134, %s148
      %p150 = scmp.eq.s32.totalorder %s26, 0
      %p151 = por %p149, %p150
      %s153 = sadd.s32 %s152, 1
      %p156 = scmp.eq.s32.totalorder %s20, 1
      %p157 = scmp.ne.s32.totalorder %s152, %s154
      %p158 = scmp.eq.s32.totalorder %s20, 0
      %p159 = por %p157, %p158
      %p160 = scmp.ne.s32.totalorder %s152, %s154
      %p161 = scmp.eq.s32.totalorder %s25, 1
      %p162 = por %p160, %p161
      %p163 = scmp.ne.s32.totalorder %s154, %s155
      %p164 = scmp.eq.s32.totalorder %s25, 0
      %p165 = por %p163, %p164
      %p166 = scmp.ne.s32.totalorder %s154, %s155
      %p167 = scmp.eq.s32.totalorder %s26, 1
      %p168 = por %p166, %p167
      %p170 = scmp.ne.s32.totalorder %s155, %s169
      %p171 = scmp.eq.s32.totalorder %s26, 0
      %p172 = por %p170, %p171
      %s174 = sadd.s32 %s173, 1
      %p177 = scmp.eq.s32.totalorder %s20, 1
      %p178 = scmp.ne.s32.totalorder %s173, %s175
      %p179 = scmp.eq.s32.totalorder %s20, 0
      %p180 = por %p178, %p179
      %p181 = scmp.ne.s32.totalorder %s173, %s175
      %p182 = scmp.eq.s32.totalorder %s25, 1
      %p183 = por %p181, %p182
      %p184 = scmp.ne.s32.totalorder %s175, %s176
      %p185 = scmp.eq.s32.totalorder %s25, 0
      %p186 = por %p184, %p185
      %p187 = scmp.ne.s32.totalorder %s175, %s176
      %p188 = scmp.eq.s32.totalorder %s26, 1
      %p189 = por %p187, %p188
      %p191 = scmp.ne.s32.totalorder %s176, %s190
      %p192 = scmp.eq.s32.totalorder %s26, 0
      %p193 = por %p191, %p192
      %s195 = sadd.s32 %s194, 1
      %p198 = scmp.eq.s32.totalorder %s20, 1
      %p199 = scmp.ne.s32.totalorder %s194, %s196
      %p200 = scmp.eq.s32.totalorder %s20, 0
      %p201 = por %p199, %p200
      %p202 = scmp.ne.s32.totalorder %s194, %s196
      %p203 = scmp.eq.s32.totalorder %s25, 1
      %p204 = por %p202, %p203
      %p205 = scmp.ne.s32.totalorder %s196, %s197
      %p206 = scmp.eq.s32.totalorder %s25, 0
      %p207 = por %p205, %p206
      %p208 = scmp.ne.s32.totalorder %s196, %s197
      %p209 = scmp.eq.s32.totalorder %s26, 1
      %p210 = por %p208, %p209
      %p212 = scmp.ne.s32.totalorder %s197, %s211
      %p213 = scmp.eq.s32.totalorder %s26, 0
      %p214 = por %p212, %p213
      %s216 = sadd.s32 %s215, 1
      %p219 = scmp.eq.s32.totalorder %s20, 1
      %p220 = scmp.ne.s32.totalorder %s215, %s217
      %p221 = scmp.eq.s32.totalorder %s20, 0
      %p222 = por %p220, %p221
      %p223 = scmp.ne.s32.totalorder %s215, %s217
      %p224 = scmp.eq.s32.totalorder %s25, 1
      %p225 = por %p223, %p224
      %p226 = scmp.ne.s32.totalorder %s217, %s218
      %p227 = scmp.eq.s32.totalorder %s25, 0
      %p228 = por %p226, %p227
      %p229 = scmp.ne.s32.totalorder %s217, %s218
      %p230 = scmp.eq.s32.totalorder %s26, 1
      %p231 = por %p229, %p230
      %p233 = scmp.ne.s32.totalorder %s218, %s232
      %p234 = scmp.eq.s32.totalorder %s26, 0
      %p235 = por %p233, %p234
      %s237 = sadd.s32 %s236, 1
      %p240 = scmp.eq.s32.totalorder %s20, 1
      %p241 = scmp.ne.s32.totalorder %s236, %s238
      %p242 = scmp.eq.s32.totalorder %s20, 0
      %p243 = por %p241, %p242
      %p244 = scmp.ne.s32.totalorder %s236, %s238
      %p245 = scmp.eq.s32.totalorder %s25, 1
      %p246 = por %p244, %p245
      %p247 = scmp.ne.s32.totalorder %s238, %s239
      %p248 = scmp.eq.s32.totalorder %s25, 0
      %p249 = por %p247, %p248
      %p250 = scmp.ne.s32.totalorder %s238, %s239
      %p251 = scmp.eq.s32.totalorder %s26, 1
      %p252 = por %p250, %p251
      %p254 = scmp.ne.s32.totalorder %s239, %s253
      %p255 = scmp.eq.s32.totalorder %s26, 0
      %p256 = por %p254, %p255
      %s258 = sadd.s32 %s257, 1
      %p261 = scmp.eq.s32.totalorder %s20, 1
      %p262 = scmp.ne.s32.totalorder %s257, %s259
      %p263 = scmp.eq.s32.totalorder %s20, 0
      %p264 = por %p262, %p263
      %p265 = scmp.ne.s32.totalorder %s257, %s259
      %p266 = scmp.eq.s32.totalorder %s25, 1
      %p267 = por %p265, %p266
      %p268 = scmp.ne.s32.totalorder %s259, %s260
      %p269 = scmp.eq.s32.totalorder %s25, 0
      %p270 = por %p268, %p269
      %p271 = scmp.ne.s32.totalorder %s259, %s260
      %p272 = scmp.eq.s32.totalorder %s26, 1
      %p273 = por %p271, %p272
      %p275 = scmp.ne.s32.totalorder %s260, %s274
      %p276 = scmp.eq.s32.totalorder %s26, 0
      %p277 = por %p275, %p276
      %s278 = ssub.s32 %s27, %s39
      %s279 = ssub.s32 %s28, %s35
      %s280 = sor.u32 %s278, %s279
      %p281 = scmp.eq.s32.totalorder %s280, 0
      %s283 = sadd.s32 %s282, 1
      %s284 = scalar_select %p281, %s282, %s283
      %p287 = pneg %p281
      %p288 = scmp.eq.s32.totalorder %s20, 1
      %p289 = por %p287, %p288
      %p290 = scmp.ne.s32.totalorder %s282, %s285
      %p291 = scmp.eq.s32.totalorder %s20, 0
      %p292 = por %p290, %p291
      %p293 = scmp.ne.s32.totalorder %s282, %s285
      %p294 = scmp.eq.s32.totalorder %s25, 1
      %p295 = por %p293, %p294
      %p296 = scmp.ne.s32.totalorder %s285, %s286
      %p297 = scmp.eq.s32.totalorder %s25, 0
      %p298 = por %p296, %p297
      %p299 = scmp.ne.s32.totalorder %s285, %s286
      %p300 = scmp.eq.s32.totalorder %s26, 1
      %p301 = por %p299, %p300
      %p303 = scmp.ne.s32.totalorder %s286, %s302
      %p304 = scmp.eq.s32.totalorder %s26, 0
      %p305 = por %p303, %p304
      %p306 = scmp.le.s32.totalorder 1, %s20
      %p307 = scmp.lt.s32.totalorder %s20, 3
      %p308 = pnand %p306, %p307
      %p309 = pneg %p308
      // Predicated region
      $region9: #{_lambda_.1} parent=5 // pred_check
        _
      $region10: #{_lambda_.1} parent=5 // pred_check_branch
        %311 = sbr.rel (%p308) target = $region12
      $region11: #{_lambda_.1} parent=5 // pred_region
        %s312 = ssub.s32 %s20, 1
        // Predicated region
        $region13: #{_lambda_.1} parent=11 // pred_check
          %p313 = pneg %p81
        $region14: #{_lambda_.1} parent=11 // pred_check_branch
          %315 = sbr.rel (%p313) target = $region16
        $region15: #{_lambda_.1} parent=11 // pred_region
          _
        $region16: #{_lambda_.1} parent=11 // pred_fallthru
          _
        // Predicated region
        $region17: #{_lambda_.1} parent=11 // pred_check
          %p316 = pneg %p102
        $region18: #{_lambda_.1} parent=11 // pred_check_branch
          %318 = sbr.rel (%p316) target = $region20
        $region19: #{_lambda_.1} parent=11 // pred_region
          _
        $region20: #{_lambda_.1} parent=11 // pred_fallthru
          _
        // Predicated region
        $region21: #{_lambda_.1} parent=11 // pred_check
          %p319 = pneg %p123
        $region22: #{_lambda_.1} parent=11 // pred_check_branch
          %321 = sbr.rel (%p319) target = $region24
        $region23: #{_lambda_.1} parent=11 // pred_region
          _
        $region24: #{_lambda_.1} parent=11 // pred_fallthru
          _
        // Predicated region
        $region25: #{_lambda_.1} parent=11 // pred_check
          %p322 = pneg %p144
        $region26: #{_lambda_.1} parent=11 // pred_check_branch
          %324 = sbr.rel (%p322) target = $region28
        $region27: #{_lambda_.1} parent=11 // pred_region
          _
        $region28: #{_lambda_.1} parent=11 // pred_fallthru
          _
        // Predicated region
        $region29: #{_lambda_.1} parent=11 // pred_check
          %p325 = pneg %p165
        $region30: #{_lambda_.1} parent=11 // pred_check_branch
          %327 = sbr.rel (%p325) target = $region32
        $region31: #{_lambda_.1} parent=11 // pred_region
          _
        $region32: #{_lambda_.1} parent=11 // pred_fallthru
          _
        // Predicated region
        $region33: #{_lambda_.1} parent=11 // pred_check
          %p328 = pneg %p186
        $region34: #{_lambda_.1} parent=11 // pred_check_branch
          %330 = sbr.rel (%p328) target = $region36
        $region35: #{_lambda_.1} parent=11 // pred_region
          _
        $region36: #{_lambda_.1} parent=11 // pred_fallthru
          _
        // Predicated region
        $region37: #{_lambda_.1} parent=11 // pred_check
          %p331 = pneg %p207
        $region38: #{_lambda_.1} parent=11 // pred_check_branch
          %333 = sbr.rel (%p331) target = $region40
        $region39: #{_lambda_.1} parent=11 // pred_region
          _
        $region40: #{_lambda_.1} parent=11 // pred_fallthru
          _
        // Predicated region
        $region41: #{_lambda_.1} parent=11 // pred_check
          %p334 = pneg %p228
        $region42: #{_lambda_.1} parent=11 // pred_check_branch
          %336 = sbr.rel (%p334) target = $region44
        $region43: #{_lambda_.1} parent=11 // pred_region
          _
        $region44: #{_lambda_.1} parent=11 // pred_fallthru
          _
        // Predicated region
        $region45: #{_lambda_.1} parent=11 // pred_check
          %p337 = pneg %p249
        $region46: #{_lambda_.1} parent=11 // pred_check_branch
          %339 = sbr.rel (%p337) target = $region48
        $region47: #{_lambda_.1} parent=11 // pred_region
          _
        $region48: #{_lambda_.1} parent=11 // pred_fallthru
          _
        // Predicated region
        $region49: #{_lambda_.1} parent=11 // pred_check
          %p340 = pneg %p270
        $region50: #{_lambda_.1} parent=11 // pred_check_branch
          %342 = sbr.rel (%p340) target = $region52
        $region51: #{_lambda_.1} parent=11 // pred_region
          _
        $region52: #{_lambda_.1} parent=11 // pred_fallthru
          _
      $region12: #{_lambda_.1} parent=5 // pred_fallthru
        _
      %p343 = scmp.lt.s32.totalorder %s20, 2
      // Predicated region
      $region53: #{_lambda_.1} parent=5 // pred_check
        %p344 = pneg %p343
      $region54: #{_lambda_.1} parent=5 // pred_check_branch
        %346 = sbr.rel (%p344) target = $region56
      $region55: #{_lambda_.1} parent=5 // pred_region
        // Predicated region
        $region57: #{_lambda_.1} parent=55 // pred_check
          %p347 = pneg %p54
        $region58: #{_lambda_.1} parent=55 // pred_check_branch
          %349 = sbr.rel (%p347) target = $region60
        $region59: #{_lambda_.1} parent=55 // pred_region
          %s350 = smul.u32 4, %s28
          %p351 = scmp.lt.s32.totalorder %s27, 1
          %s352 = scalar_select %p351, %s27, 1
          %p353 = scmp.lt.s32.totalorder %s350, 3
          %s354 = scalar_select %p353, %s350, 3
          %s355 = smul.addr %s352, 32
          %s356 = sadd.s32 %s354, %s355
          %s357 = smul.addr %s356, 4
          %s358 = scalar_lea.vmem %s0, %s357
          %s359 = smul.u32 4, %s28
        $region60: #{_lambda_.1} parent=55 // pred_fallthru
          _
      $region56: #{_lambda_.1} parent=5 // pred_fallthru
        _
      %p360 = scmp.le.s32.totalorder 1, %s20
      %p361 = scmp.lt.s32.totalorder %s20, 3
      %p362 = pnand %p360, %p361
      %p363 = pneg %p362
      // Predicated region
      $region61: #{_lambda_.1} parent=5 // pred_check
        _
      $region62: #{_lambda_.1} parent=5 // pred_check_branch
        %365 = sbr.rel (%p362) target = $region64
      $region63: #{_lambda_.1} parent=5 // pred_region
        %s366 = ssub.s32 %s20, 1
        %s367 = smul.u32 4, %s30
        %p368 = scmp.lt.s32.totalorder %s29, 1
        %s369 = scalar_select %p368, %s29, 1
        %p370 = scmp.lt.s32.totalorder %s367, 3
        %s371 = scalar_select %p370, %s367, 3
        %s372 = smul.addr %s369, 32
        %s373 = sadd.s32 %s371, %s372
        %s374 = smul.addr %s373, 4
        %s375 = scalar_lea.vmem %s0, %s374
        %p376 = pneg %p60
        %p377 = pneg %p57
        %p378 = pneg %p81
        %p379 = pneg %p78
        %p380 = pneg %p102
        %p381 = pneg %p99
        %p382 = pneg %p123
        %p383 = pneg %p120
        %p384 = pneg %p144
        %p385 = pneg %p141
        %p386 = pneg %p165
        %p387 = pneg %p162
        %p388 = pneg %p186
        %p389 = pneg %p183
        %p390 = pneg %p207
        %p391 = pneg %p204
        %p392 = pneg %p228
        %p393 = pneg %p225
        %p394 = pneg %p249
        %p395 = pneg %p246
        %p396 = pneg %p270
        %p397 = pneg %p267
        %p398 = pneg %p298
        %p399 = pneg %p295
        %s400 = sand.u32 %s285, 1
        %s401 = scalar_lea.sflag [#allocation3], %s400
        %s402 = sand.u32 %s285, 1
        %s403 = smul.addr %s402, 640
        %s404 = scalar_lea.vmem [#allocation2], %s403
        %s405 = smul.u32 4, %s30
        %p406 = scmp.lt.s32.totalorder %s29, 1
        %s407 = scalar_select %p406, %s29, 1
        %p408 = scmp.lt.s32.totalorder %s405, 3
        %s409 = scalar_select %p408, %s405, 3
        %s410 = smul.addr %s407, 32
        %s411 = sadd.s32 %s409, %s410
        %s412 = smul.addr %s411, 4
        %s413 = scalar_lea.vmem %s0, %s412
        %s414 = smul.u32 4, %s30
        %s415 = smul.u32 4, %s30
        %v417 = vld [vmem:[%s413] sm:$0xff]
        %v418 = vld [vmem:[%s413 + $0x8] sm:$0xff]
        %v419 = vld [vmem:[%s413 + $0x10] sm:$0xff]
        %v420 = vld [vmem:[%s413 + $0x18] sm:$0xff]
        %v421 = vld [vmem:[%s413 + $0x20] sm:$0xff]
        %v422 = vld [vmem:[%s413 + $0x28] sm:$0xff]
        %v423 = vld [vmem:[%s413 + $0x30] sm:$0xff]
        %v424 = vld [vmem:[%s413 + $0x38] sm:$0xff]
        %v425 = vld [vmem:[%s413 + $0x40] sm:$0xff]
        %v426 = vld [vmem:[%s413 + $0x48] sm:$0xff]
        %v427 = vld [vmem:[%s413 + $0x50] sm:$0xff]
        %v428 = vld [vmem:[%s413 + $0x58] sm:$0xff]
        %v429 = vld [vmem:[%s413 + $0x60] sm:$0xff]
        %v430 = vld [vmem:[%s413 + $0x68] sm:$0xff]
        %v431 = vld [vmem:[%s413 + $0x70] sm:$0xff]
        %v432 = vld [vmem:[%s413 + $0x78] sm:$0xff]
        %v433 = vld [vmem:[%s1] sm:$0xf]
        %v434 = vld [vmem:[%s1 + $0x4] sm:$0xf]
        %v435 = vld [vmem:[%s1 + $0x8] sm:$0xf]
        %v436 = vld [vmem:[%s1 + $0xc] sm:$0xf]
        %v437 = vld [vmem:[%s1 + $0x10] sm:$0xf]
        %v438 = vld [vmem:[%s1 + $0x14] sm:$0xf]
        %v439 = vld [vmem:[%s1 + $0x18] sm:$0xf]
        %v440 = vld [vmem:[%s1 + $0x1c] sm:$0xf]
        %v441 = vld [vmem:[%s1 + $0x20] sm:$0xf]
        %v442 = vld [vmem:[%s1 + $0x24] sm:$0xf]
        %v443 = vld [vmem:[%s1 + $0x28] sm:$0xf]
        %v444 = vld [vmem:[%s1 + $0x2c] sm:$0xf]
        %v445 = vld [vmem:[%s1 + $0x30] sm:$0xf]
        %v446 = vld [vmem:[%s1 + $0x34] sm:$0xf]
        %v447 = vld [vmem:[%s1 + $0x38] sm:$0xf]
        %v448 = vld [vmem:[%s1 + $0x3c] sm:$0xf]
        %v449 = vld [vmem:[%s2] sm:$0xff]
        %v450 = vld [vmem:[%s2 + $0x8] sm:$0xff]
        %v451 = vld [vmem:[%s2 + $0x10] sm:$0xff]
        %v452 = vld [vmem:[%s2 + $0x18] sm:$0xff]
        %v453 = vld [vmem:[%s2 + $0x20] sm:$0xff]
        %v454 = vld [vmem:[%s2 + $0x28] sm:$0xff]
        %v455 = vld [vmem:[%s2 + $0x30] sm:$0xff]
        %v456 = vld [vmem:[%s2 + $0x38] sm:$0xff]
        %v457 = vld [vmem:[%s2 + $0x40] sm:$0xff]
        %v458 = vld [vmem:[%s2 + $0x48] sm:$0xff]
        %v459 = vld [vmem:[%s2 + $0x50] sm:$0xff]
        %v460 = vld [vmem:[%s2 + $0x58] sm:$0xff]
        %v461 = vld [vmem:[%s2 + $0x60] sm:$0xff]
        %v462 = vld [vmem:[%s2 + $0x68] sm:$0xff]
        %v463 = vld [vmem:[%s2 + $0x70] sm:$0xff]
        %v464 = vld [vmem:[%s2 + $0x78] sm:$0xff]
        %466 = vset.pattern.permute.xlu0 0
        %467 = vperm.xlu0 %466, %v449
        %v468 = vpop.permute.xlu0 %467
        %471 = vset.pattern.permute.xlu0 0
        %472 = vperm.xlu0 %471, %v450
        %v473 = vpop.permute.xlu0 %472
        %476 = vset.pattern.permute.xlu0 0
        %477 = vperm.xlu0 %476, %v451
        %v478 = vpop.permute.xlu0 %477
        %481 = vset.pattern.permute.xlu0 0
        %482 = vperm.xlu0 %481, %v452
        %v483 = vpop.permute.xlu0 %482
        %486 = vset.pattern.permute.xlu0 0
        %487 = vperm.xlu0 %486, %v453
        %v488 = vpop.permute.xlu0 %487
        %491 = vset.pattern.permute.xlu0 0
        %492 = vperm.xlu0 %491, %v454
        %v493 = vpop.permute.xlu0 %492
        %496 = vset.pattern.permute.xlu0 0
        %497 = vperm.xlu0 %496, %v455
        %v498 = vpop.permute.xlu0 %497
        %501 = vset.pattern.permute.xlu0 0
        %502 = vperm.xlu0 %501, %v456
        %v503 = vpop.permute.xlu0 %502
        %506 = vset.pattern.permute.xlu0 0
        %507 = vperm.xlu0 %506, %v457
        %v508 = vpop.permute.xlu0 %507
        %511 = vset.pattern.permute.xlu0 0
        %512 = vperm.xlu0 %511, %v458
        %v513 = vpop.permute.xlu0 %512
        %516 = vset.pattern.permute.xlu0 0
        %517 = vperm.xlu0 %516, %v459
        %v518 = vpop.permute.xlu0 %517
        %521 = vset.pattern.permute.xlu0 0
        %522 = vperm.xlu0 %521, %v460
        %v523 = vpop.permute.xlu0 %522
        %526 = vset.pattern.permute.xlu0 0
        %527 = vperm.xlu0 %526, %v461
        %v528 = vpop.permute.xlu0 %527
        %531 = vset.pattern.permute.xlu0 0
        %532 = vperm.xlu0 %531, %v462
        %v533 = vpop.permute.xlu0 %532
        %536 = vset.pattern.permute.xlu0 0
        %537 = vperm.xlu0 %536, %v463
        %v538 = vpop.permute.xlu0 %537
        %541 = vset.pattern.permute.xlu0 0
        %542 = vperm.xlu0 %541, %v464
        %v543 = vpop.permute.xlu0 %542
        %v561 = vunpack.c.l.b16 %v433
        %v562 = vunpack.c.l.b16 %v434
        %v563 = vunpack.c.l.b16 %v435
        %v564 = vunpack.c.l.b16 %v436
        %v565 = vunpack.c.l.b16 %v437
        %v566 = vunpack.c.l.b16 %v438
        %v567 = vunpack.c.l.b16 %v439
        %v568 = vunpack.c.l.b16 %v440
        %v569 = vunpack.c.l.b16 %v441
        %v570 = vunpack.c.l.b16 %v442
        %v571 = vunpack.c.l.b16 %v443
        %v572 = vunpack.c.l.b16 %v444
        %v573 = vunpack.c.l.b16 %v445
        %v574 = vunpack.c.l.b16 %v446
        %v575 = vunpack.c.l.b16 %v447
        %v576 = vunpack.c.l.b16 %v448
        %v577 = vpack.c.b16 %v562, %v561
        %v578 = vpack.c.b16 %v564, %v563
        %v579 = vpack.c.b16 %v566, %v565
        %v580 = vpack.c.b16 %v568, %v567
        %v581 = vpack.c.b16 %v570, %v569
        %v582 = vpack.c.b16 %v572, %v571
        %v583 = vpack.c.b16 %v574, %v573
        %v584 = vpack.c.b16 %v576, %v575
        %v601 = vunpack.c.l.b16 %v417
        %v602 = vunpack.c.h.b16 %v417
        %v603 = vunpack.c.l.b16 %v418
        %v604 = vunpack.c.h.b16 %v418
        %v605 = vunpack.c.l.b16 %v419
        %v606 = vunpack.c.h.b16 %v419
        %v607 = vunpack.c.l.b16 %v420
        %v608 = vunpack.c.h.b16 %v420
        %v609 = vunpack.c.l.b16 %v421
        %v610 = vunpack.c.h.b16 %v421
        %v611 = vunpack.c.l.b16 %v422
        %v612 = vunpack.c.h.b16 %v422
        %v613 = vunpack.c.l.b16 %v423
        %v614 = vunpack.c.h.b16 %v423
        %v615 = vunpack.c.l.b16 %v424
        %v616 = vunpack.c.h.b16 %v424
        %v617 = vunpack.c.l.b16 %v425
        %v618 = vunpack.c.h.b16 %v425
        %v619 = vunpack.c.l.b16 %v426
        %v620 = vunpack.c.h.b16 %v426
        %v621 = vunpack.c.l.b16 %v427
        %v622 = vunpack.c.h.b16 %v427
        %v623 = vunpack.c.l.b16 %v428
        %v624 = vunpack.c.h.b16 %v428
        %v625 = vunpack.c.l.b16 %v429
        %v626 = vunpack.c.h.b16 %v429
        %v627 = vunpack.c.l.b16 %v430
        %v628 = vunpack.c.h.b16 %v430
        %v629 = vunpack.c.l.b16 %v431
        %v630 = vunpack.c.h.b16 %v431
        %v631 = vunpack.c.l.b16 %v432
        %v632 = vunpack.c.h.b16 %v432
        %v633 = vpack.c.b16 %v605, %v601
        %v634 = vpack.c.b16 %v606, %v602
        %v635 = vpack.c.b16 %v607, %v603
        %v636 = vpack.c.b16 %v608, %v604
        %v637 = vpack.c.b16 %v613, %v609
        %v638 = vpack.c.b16 %v614, %v610
        %v639 = vpack.c.b16 %v615, %v611
        %v640 = vpack.c.b16 %v616, %v612
        %v641 = vpack.c.b16 %v621, %v617
        %v642 = vpack.c.b16 %v622, %v618
        %v643 = vpack.c.b16 %v623, %v619
        %v644 = vpack.c.b16 %v624, %v620
        %v645 = vpack.c.b16 %v629, %v625
        %v646 = vpack.c.b16 %v630, %v626
        %v647 = vpack.c.b16 %v631, %v627
        %v648 = vpack.c.b16 %v632, %v628
        %vm665 = vcmask 523264
        %v667 = vsel %vm665, %v577, 0
        %v670 = vsel %vm665, %v578, 0
        %v673 = vsel %vm665, %v579, 0
        %v676 = vsel %vm665, %v580, 0
        %v679 = vsel %vm665, %v581, 0
        %v682 = vsel %vm665, %v582, 0
        %v685 = vsel %vm665, %v583, 0
        %v688 = vsel %vm665, %v584, 0
        %690 = vmatprep.subr.bf16.mxu0 %v634
        %691 = vmatpush1.bf16.msra.mxu0 %v633
        %692 = vmatprep.subr.bf16.mxu0 %v638
        %693 = vmatpush1.bf16.msra.mxu0 %v637
        %694 = vmatprep.subr.bf16.mxu0 %v642
        %695 = vmatpush1.bf16.msra.mxu0 %v641
        %696 = vmatprep.subr.bf16.mxu0 %v646
        %697 = vmatpush1.bf16.msra.mxu0 %v645
        %698 = vmatprep.subr.bf16.mxu0 0
        %699 = vmatpush1.bf16.msra.mxu0 0
        %700 = vmatprep.subr.bf16.mxu0 0
        %701 = vmatpush1.bf16.msra.mxu0 0
        %702 = vmatprep.subr.bf16.mxu0 0
        %703 = vmatpush1.bf16.msra.mxu0 0
        %704 = vmatprep.subr.bf16.mxu0 0
        %705 = vmatpush1.bf16.msra.mxu0 0
        %706 = vmatprep.subr.bf16.mxu0 0
        %707 = vmatpush1.bf16.msra.mxu0 0
        %708 = vmatprep.subr.bf16.mxu0 0
        %709 = vmatpush1.bf16.msra.mxu0 0
        %710 = vmatprep.subr.bf16.mxu0 0
        %711 = vmatpush1.bf16.msra.mxu0 0
        %712 = vmatprep.subr.bf16.mxu0 0
        %713 = vmatpush1.bf16.msra.mxu0 0
        %714 = vmatprep.subr.bf16.mxu0 0
        %715 = vmatpush1.bf16.msra.mxu0 0
        %716 = vmatprep.subr.bf16.mxu0 0
        %717 = vmatpush1.bf16.msra.mxu0 0
        %718 = vmatprep.subr.bf16.mxu0 0
        %719 = vmatpush1.bf16.msra.mxu0 0
        %720 = vmatprep.subr.bf16.mxu0 0
        %721 = vmatpush1.bf16.msra.mxu0 0
        %722 = vmatprep.mubr.bf16.mxu0 0
        %723 = vmatmul.mubr.bf16.gmra.mrb[0].mxu0 %v667
        %v724 = vpop.f32.mrb[0].mxu0
        %v725 = vadd.f32 %v468, %v724
        %v726 = vpop.f32.mrb[0].mxu0
        %v727 = vadd.f32 %v468, %v726
        %v728 = vpop.f32.mrb[0].mxu0
        %v729 = vadd.f32 %v473, %v728
        %v730 = vpop.f32.mrb[0].mxu0
        %v731 = vadd.f32 %v473, %v730
        %732 = vmatprep.mubr.bf16.mxu0 0
        %733 = vmatmul.mubr.bf16.gmra.mrb[0].mxu0 %v670
        %v734 = vpop.f32.mrb[0].mxu0
        %v735 = vadd.f32 %v478, %v734
        %v736 = vpop.f32.mrb[0].mxu0
        %v737 = vadd.f32 %v478, %v736
        %v738 = vpop.f32.mrb[0].mxu0
        %v739 = vadd.f32 %v483, %v738
        %v740 = vpop.f32.mrb[0].mxu0
        %v741 = vadd.f32 %v483, %v740
        %742 = vmatprep.mubr.bf16.mxu0 0
        %743 = vmatmul.mubr.bf16.gmra.mrb[0].mxu0 %v673
        %v744 = vpop.f32.mrb[0].mxu0
        %v745 = vadd.f32 %v488, %v744
        %v746 = vpop.f32.mrb[0].mxu0
        %v747 = vadd.f32 %v488, %v746
        %v748 = vpop.f32.mrb[0].mxu0
        %v749 = vadd.f32 %v493, %v748
        %v750 = vpop.f32.mrb[0].mxu0
        %v751 = vadd.f32 %v493, %v750
        %752 = vmatprep.mubr.bf16.mxu0 0
        %753 = vmatmul.mubr.bf16.gmra.mrb[0].mxu0 %v676
        %v754 = vpop.f32.mrb[0].mxu0
        %v755 = vadd.f32 %v498, %v754
        %v756 = vpop.f32.mrb[0].mxu0
        %v757 = vadd.f32 %v498, %v756
        %v758 = vpop.f32.mrb[0].mxu0
        %v759 = vadd.f32 %v503, %v758
        %v760 = vpop.f32.mrb[0].mxu0
        %v761 = vadd.f32 %v503, %v760
        %762 = vmatprep.mubr.bf16.mxu0 0
        %763 = vmatmul.mubr.bf16.gmra.mrb[0].mxu0 %v679
        %v764 = vpop.f32.mrb[0].mxu0
        %v765 = vadd.f32 %v508, %v764
        %v766 = vpop.f32.mrb[0].mxu0
        %v767 = vadd.f32 %v508, %v766
        %v768 = vpop.f32.mrb[0].mxu0
        %v769 = vadd.f32 %v513, %v768
        %v770 = vpop.f32.mrb[0].mxu0
        %v771 = vadd.f32 %v513, %v770
        %772 = vmatprep.mubr.bf16.mxu0 0
        %773 = vmatmul.mubr.bf16.gmra.mrb[0].mxu0 %v682
        %v774 = vpop.f32.mrb[0].mxu0
        %v775 = vadd.f32 %v518, %v774
        %v776 = vpop.f32.mrb[0].mxu0
        %v777 = vadd.f32 %v518, %v776
        %v778 = vpop.f32.mrb[0].mxu0
        %v779 = vadd.f32 %v523, %v778
        %v780 = vpop.f32.mrb[0].mxu0
        %v781 = vadd.f32 %v523, %v780
        %782 = vmatprep.mubr.bf16.mxu0 0
        %783 = vmatmul.mubr.bf16.gmra.mrb[0].mxu0 %v685
        %v784 = vpop.f32.mrb[0].mxu0
        %v785 = vadd.f32 %v528, %v784
        %v786 = vpop.f32.mrb[0].mxu0
        %v787 = vadd.f32 %v528, %v786
        %v788 = vpop.f32.mrb[0].mxu0
        %v789 = vadd.f32 %v533, %v788
        %v790 = vpop.f32.mrb[0].mxu0
        %v791 = vadd.f32 %v533, %v790
        %792 = vmatprep.mubr.bf16.mxu0 0
        %793 = vmatmul.mubr.bf16.gmra.mrb[0].mxu0 %v688
        %v794 = vpop.f32.mrb[0].mxu0
        %v795 = vadd.f32 %v538, %v794
        %v796 = vpop.f32.mrb[0].mxu0
        %v797 = vadd.f32 %v538, %v796
        %v798 = vpop.f32.mrb[0].mxu0
        %v799 = vadd.f32 %v543, %v798
        %v800 = vpop.f32.mrb[0].mxu0
        %v801 = vadd.f32 %v543, %v800
        %802 = vdwg.mxu0
        %803 = vmatprep.subr.bf16.mxu0 %v636
        %804 = vmatpush1.bf16.msra.mxu0 %v635
        %805 = vmatprep.subr.bf16.mxu0 %v640
        %806 = vmatpush1.bf16.msra.mxu0 %v639
        %807 = vmatprep.subr.bf16.mxu0 %v644
        %808 = vmatpush1.bf16.msra.mxu0 %v643
        %809 = vmatprep.subr.bf16.mxu0 %v648
        %810 = vmatpush1.bf16.msra.mxu0 %v647
        %811 = vmatprep.subr.bf16.mxu0 0
        %812 = vmatpush1.bf16.msra.mxu0 0
        %813 = vmatprep.subr.bf16.mxu0 0
        %814 = vmatpush1.bf16.msra.mxu0 0
        %815 = vmatprep.subr.bf16.mxu0 0
        %816 = vmatpush1.bf16.msra.mxu0 0
        %817 = vmatprep.subr.bf16.mxu0 0
        %818 = vmatpush1.bf16.msra.mxu0 0
        %819 = vmatprep.subr.bf16.mxu0 0
        %820 = vmatpush1.bf16.msra.mxu0 0
        %821 = vmatprep.subr.bf16.mxu0 0
        %822 = vmatpush1.bf16.msra.mxu0 0
        %823 = vmatprep.subr.bf16.mxu0 0
        %824 = vmatpush1.bf16.msra.mxu0 0
        %825 = vmatprep.subr.bf16.mxu0 0
        %826 = vmatpush1.bf16.msra.mxu0 0
        %827 = vmatprep.subr.bf16.mxu0 0
        %828 = vmatpush1.bf16.msra.mxu0 0
        %829 = vmatprep.subr.bf16.mxu0 0
        %830 = vmatpush1.bf16.msra.mxu0 0
        %831 = vmatprep.subr.bf16.mxu0 0
        %832 = vmatpush1.bf16.msra.mxu0 0
        %833 = vmatprep.subr.bf16.mxu0 0
        %834 = vmatpush1.bf16.msra.mxu0 0
        %835 = vmatprep.mubr.bf16.mxu0 0
        %836 = vmatmul.mubr.bf16.gmra.mrb[0].mxu0 %v667
        %v837 = vpop.f32.mrb[0].mxu0
        %v838 = vadd.f32 %v468, %v837
        %v839 = vpop.f32.mrb[0].mxu0
        %v840 = vadd.f32 %v468, %v839
        %v841 = vpop.f32.mrb[0].mxu0
        %v842 = vadd.f32 %v473, %v841
        %v843 = vpop.f32.mrb[0].mxu0
        %v844 = vadd.f32 %v473, %v843
        %845 = vmatprep.mubr.bf16.mxu0 0
        %846 = vmatmul.mubr.bf16.gmra.mrb[0].mxu0 %v670
        %v847 = vpop.f32.mrb[0].mxu0
        %v848 = vadd.f32 %v478, %v847
        %v849 = vpop.f32.mrb[0].mxu0
        %v850 = vadd.f32 %v478, %v849
        %v851 = vpop.f32.mrb[0].mxu0
        %v852 = vadd.f32 %v483, %v851
        %v853 = vpop.f32.mrb[0].mxu0
        %v854 = vadd.f32 %v483, %v853
        %855 = vmatprep.mubr.bf16.mxu0 0
        %856 = vmatmul.mubr.bf16.gmra.mrb[0].mxu0 %v673
        %v857 = vpop.f32.mrb[0].mxu0
        %v858 = vadd.f32 %v488, %v857
        %v859 = vpop.f32.mrb[0].mxu0
        %v860 = vadd.f32 %v488, %v859
        %v861 = vpop.f32.mrb[0].mxu0
        %v862 = vadd.f32 %v493, %v861
        %v863 = vpop.f32.mrb[0].mxu0
        %v864 = vadd.f32 %v493, %v863
        %865 = vmatprep.mubr.bf16.mxu0 0
        %866 = vmatmul.mubr.bf16.gmra.mrb[0].mxu0 %v676
        %v867 = vpop.f32.mrb[0].mxu0
        %v868 = vadd.f32 %v498, %v867
        %v869 = vpop.f32.mrb[0].mxu0
        %v870 = vadd.f32 %v498, %v869
        %v871 = vpop.f32.mrb[0].mxu0
        %v872 = vadd.f32 %v503, %v871
        %v873 = vpop.f32.mrb[0].mxu0
        %v874 = vadd.f32 %v503, %v873
        %875 = vmatprep.mubr.bf16.mxu0 0
        %876 = vmatmul.mubr.bf16.gmra.mrb[0].mxu0 %v679
        %v877 = vpop.f32.mrb[0].mxu0
        %v878 = vadd.f32 %v508, %v877
        %v879 = vpop.f32.mrb[0].mxu0
        %v880 = vadd.f32 %v508, %v879
        %v881 = vpop.f32.mrb[0].mxu0
        %v882 = vadd.f32 %v513, %v881
        %v883 = vpop.f32.mrb[0].mxu0
        %v884 = vadd.f32 %v513, %v883
        %885 = vmatprep.mubr.bf16.mxu0 0
        %886 = vmatmul.mubr.bf16.gmra.mrb[0].mxu0 %v682
        %v887 = vpop.f32.mrb[0].mxu0
        %v888 = vadd.f32 %v518, %v887
        %v889 = vpop.f32.mrb[0].mxu0
        %v890 = vadd.f32 %v518, %v889
        %v891 = vpop.f32.mrb[0].mxu0
        %v892 = vadd.f32 %v523, %v891
        %v893 = vpop.f32.mrb[0].mxu0
        %v894 = vadd.f32 %v523, %v893
        %895 = vmatprep.mubr.bf16.mxu0 0
        %896 = vmatmul.mubr.bf16.gmra.mrb[0].mxu0 %v685
        %v897 = vpop.f32.mrb[0].mxu0
        %v898 = vadd.f32 %v528, %v897
        %v899 = vpop.f32.mrb[0].mxu0
        %v900 = vadd.f32 %v528, %v899
        %v901 = vpop.f32.mrb[0].mxu0
        %v902 = vadd.f32 %v533, %v901
        %v903 = vpop.f32.mrb[0].mxu0
        %v904 = vadd.f32 %v533, %v903
        %905 = vmatprep.mubr.bf16.mxu0 0
        %906 = vmatmul.mubr.bf16.gmra.mrb[0].mxu0 %v688
        %v907 = vpop.f32.mrb[0].mxu0
        %v908 = vadd.f32 %v538, %v907
        %v909 = vpop.f32.mrb[0].mxu0
        %v910 = vadd.f32 %v538, %v909
        %v911 = vpop.f32.mrb[0].mxu0
        %v912 = vadd.f32 %v543, %v911
        %v913 = vpop.f32.mrb[0].mxu0
        %v914 = vadd.f32 %v543, %v913
        %915 = vdwg.mxu0
        %v916 = vmax.f32 %v725, 0.0
        %v917 = vmax.f32 %v727, 0.0
        %v918 = vmax.f32 %v838, 0.0
        %v919 = vmax.f32 %v840, 0.0
        %v920 = vmax.f32 %v729, 0.0
        %v921 = vmax.f32 %v731, 0.0
        %v922 = vmax.f32 %v842, 0.0
        %v923 = vmax.f32 %v844, 0.0
        %v924 = vmax.f32 %v735, 0.0
        %v925 = vmax.f32 %v737, 0.0
        %v926 = vmax.f32 %v848, 0.0
        %v927 = vmax.f32 %v850, 0.0
        %v928 = vmax.f32 %v739, 0.0
        %v929 = vmax.f32 %v741, 0.0
        %v930 = vmax.f32 %v852, 0.0
        %v931 = vmax.f32 %v854, 0.0
        %v932 = vmax.f32 %v745, 0.0
        %v933 = vmax.f32 %v747, 0.0
        %v934 = vmax.f32 %v858, 0.0
        %v935 = vmax.f32 %v860, 0.0
        %v936 = vmax.f32 %v749, 0.0
        %v937 = vmax.f32 %v751, 0.0
        %v938 = vmax.f32 %v862, 0.0
        %v939 = vmax.f32 %v864, 0.0
        %v940 = vmax.f32 %v755, 0.0
        %v941 = vmax.f32 %v757, 0.0
        %v942 = vmax.f32 %v868, 0.0
        %v943 = vmax.f32 %v870, 0.0
        %v944 = vmax.f32 %v759, 0.0
        %v945 = vmax.f32 %v761, 0.0
        %v946 = vmax.f32 %v872, 0.0
        %v947 = vmax.f32 %v874, 0.0
        %v948 = vmax.f32 %v765, 0.0
        %v949 = vmax.f32 %v767, 0.0
        %v950 = vmax.f32 %v878, 0.0
        %v951 = vmax.f32 %v880, 0.0
        %v952 = vmax.f32 %v769, 0.0
        %v953 = vmax.f32 %v771, 0.0
        %v954 = vmax.f32 %v882, 0.0
        %v955 = vmax.f32 %v884, 0.0
        %v956 = vmax.f32 %v775, 0.0
        %v957 = vmax.f32 %v777, 0.0
        %v958 = vmax.f32 %v888, 0.0
        %v959 = vmax.f32 %v890, 0.0
        %v960 = vmax.f32 %v779, 0.0
        %v961 = vmax.f32 %v781, 0.0
        %v962 = vmax.f32 %v892, 0.0
        %v963 = vmax.f32 %v894, 0.0
        %v964 = vmax.f32 %v785, 0.0
        %v965 = vmax.f32 %v787, 0.0
        %v966 = vmax.f32 %v898, 0.0
        %v967 = vmax.f32 %v900, 0.0
        %v968 = vmax.f32 %v789, 0.0
        %v969 = vmax.f32 %v791, 0.0
        %v970 = vmax.f32 %v902, 0.0
        %v971 = vmax.f32 %v904, 0.0
        %v972 = vmax.f32 %v795, 0.0
        %v973 = vmax.f32 %v797, 0.0
        %v974 = vmax.f32 %v908, 0.0
        %v975 = vmax.f32 %v910, 0.0
        %v976 = vmax.f32 %v799, 0.0
        %v977 = vmax.f32 %v801, 0.0
        %v978 = vmax.f32 %v912, 0.0
        %v979 = vmax.f32 %v914, 0.0
        %v980 = vpack.c.bf16 %v920, %v916
        %v981 = vpack.c.bf16 %v921, %v917
        %v982 = vpack.c.bf16 %v922, %v918
        %v983 = vpack.c.bf16 %v923, %v919
        %v984 = vpack.c.bf16 %v928, %v924
        %v985 = vpack.c.bf16 %v929, %v925
        %v986 = vpack.c.bf16 %v930, %v926
        %v987 = vpack.c.bf16 %v931, %v927
        %v988 = vpack.c.bf16 %v936, %v932
        %v989 = vpack.c.bf16 %v937, %v933
        %v990 = vpack.c.bf16 %v938, %v934
        %v991 = vpack.c.bf16 %v939, %v935
        %v992 = vpack.c.bf16 %v944, %v940
        %v993 = vpack.c.bf16 %v945, %v941
        %v994 = vpack.c.bf16 %v946, %v942
        %v995 = vpack.c.bf16 %v947, %v943
        %v996 = vpack.c.bf16 %v952, %v948
        %v997 = vpack.c.bf16 %v953, %v949
        %v998 = vpack.c.bf16 %v954, %v950
        %v999 = vpack.c.bf16 %v955, %v951
        %v1000 = vpack.c.bf16 %v960, %v956
        %v1001 = vpack.c.bf16 %v961, %v957
        %v1002 = vpack.c.bf16 %v962, %v958
        %v1003 = vpack.c.bf16 %v963, %v959
        %v1004 = vpack.c.bf16 %v968, %v964
        %v1005 = vpack.c.bf16 %v969, %v965
        %v1006 = vpack.c.bf16 %v970, %v966
        %v1007 = vpack.c.bf16 %v971, %v967
        %v1008 = vpack.c.bf16 %v976, %v972
        %v1009 = vpack.c.bf16 %v977, %v973
        %v1010 = vpack.c.bf16 %v978, %v974
        %v1011 = vpack.c.bf16 %v979, %v975
        %v1012 = vld [vmem:[%s3] sm:$0xf]
        %v1013 = vld [vmem:[%s3 + $0x4] sm:$0xf]
        %v1014 = vld [vmem:[%s3 + $0x8] sm:$0xf]
        %v1015 = vld [vmem:[%s3 + $0xc] sm:$0xf]
        %v1016 = vld [vmem:[%s3 + $0x10] sm:$0xf]
        %v1017 = vld [vmem:[%s3 + $0x14] sm:$0xf]
        %v1018 = vld [vmem:[%s3 + $0x18] sm:$0xf]
        %v1019 = vld [vmem:[%s3 + $0x1c] sm:$0xf]
        %v1020 = vld [vmem:[%s3 + $0x20] sm:$0xf]
        %v1021 = vld [vmem:[%s3 + $0x24] sm:$0xf]
        %v1022 = vld [vmem:[%s3 + $0x28] sm:$0xf]
        %v1023 = vld [vmem:[%s3 + $0x2c] sm:$0xf]
        %v1024 = vld [vmem:[%s3 + $0x30] sm:$0xf]
        %v1025 = vld [vmem:[%s3 + $0x34] sm:$0xf]
        %v1026 = vld [vmem:[%s3 + $0x38] sm:$0xf]
        %v1027 = vld [vmem:[%s3 + $0x3c] sm:$0xf]
        %v1028 = vld [vmem:[%s3 + $0x40] sm:$0xf]
        %v1029 = vld [vmem:[%s3 + $0x44] sm:$0xf]
        %v1030 = vld [vmem:[%s3 + $0x48] sm:$0xf]
        %v1031 = vld [vmem:[%s3 + $0x4c] sm:$0xf]
        %v1032 = vld [vmem:[%s3 + $0x50] sm:$0xf]
        %v1033 = vld [vmem:[%s3 + $0x54] sm:$0xf]
        %v1034 = vld [vmem:[%s3 + $0x58] sm:$0xf]
        %v1035 = vld [vmem:[%s3 + $0x5c] sm:$0xf]
        %v1036 = vld [vmem:[%s3 + $0x60] sm:$0xf]
        %v1037 = vld [vmem:[%s3 + $0x64] sm:$0xf]
        %v1038 = vld [vmem:[%s3 + $0x68] sm:$0xf]
        %v1039 = vld [vmem:[%s3 + $0x6c] sm:$0xf]
        %v1040 = vld [vmem:[%s3 + $0x70] sm:$0xf]
        %v1041 = vld [vmem:[%s3 + $0x74] sm:$0xf]
        %v1042 = vld [vmem:[%s3 + $0x78] sm:$0xf]
        %v1043 = vld [vmem:[%s3 + $0x7c] sm:$0xf]
        %v1044 = vld [vmem:[%s4] sm:$0xff]
        %v1045 = vld [vmem:[%s4 + $0x8] sm:$0xff]
        %v1046 = vld [vmem:[%s4 + $0x10] sm:$0xff]
        %v1047 = vld [vmem:[%s4 + $0x18] sm:$0xff]
        %v1048 = vld [vmem:[%s4 + $0x20] sm:$0xff]
        %v1049 = vld [vmem:[%s4 + $0x28] sm:$0xff]
        %v1050 = vld [vmem:[%s4 + $0x30] sm:$0xff]
        %v1051 = vld [vmem:[%s4 + $0x38] sm:$0xff]
        %v1052 = vld [vmem:[%s4 + $0x40] sm:$0xff]
        %v1053 = vld [vmem:[%s4 + $0x48] sm:$0xff]
        %v1054 = vld [vmem:[%s4 + $0x50] sm:$0xff]
        %v1055 = vld [vmem:[%s4 + $0x58] sm:$0xff]
        %v1056 = vld [vmem:[%s4 + $0x60] sm:$0xff]
        %v1057 = vld [vmem:[%s4 + $0x68] sm:$0xff]
        %v1058 = vld [vmem:[%s4 + $0x70] sm:$0xff]
        %v1059 = vld [vmem:[%s4 + $0x78] sm:$0xff]
        %v1060 = vld [vmem:[%s4 + $0x80] sm:$0xff]
        %v1061 = vld [vmem:[%s4 + $0x88] sm:$0xff]
        %v1062 = vld [vmem:[%s4 + $0x90] sm:$0xff]
        %v1063 = vld [vmem:[%s4 + $0x98] sm:$0xff]
        %v1064 = vld [vmem:[%s4 + $0xa0] sm:$0xff]
        %v1065 = vld [vmem:[%s4 + $0xa8] sm:$0xff]
        %v1066 = vld [vmem:[%s4 + $0xb0] sm:$0xff]
        %v1067 = vld [vmem:[%s4 + $0xb8] sm:$0xff]
        %v1068 = vld [vmem:[%s4 + $0xc0] sm:$0xff]
        %v1069 = vld [vmem:[%s4 + $0xc8] sm:$0xff]
        %v1070 = vld [vmem:[%s4 + $0xd0] sm:$0xff]
        %v1071 = vld [vmem:[%s4 + $0xd8] sm:$0xff]
        %v1072 = vld [vmem:[%s4 + $0xe0] sm:$0xff]
        %v1073 = vld [vmem:[%s4 + $0xe8] sm:$0xff]
        %v1074 = vld [vmem:[%s4 + $0xf0] sm:$0xff]
        %v1075 = vld [vmem:[%s4 + $0xf8] sm:$0xff]
        %1077 = vset.pattern.permute.xlu0 0
        %1078 = vperm.xlu0 %1077, %v1044
        %v1079 = vpop.permute.xlu0 %1078
        %1082 = vset.pattern.permute.xlu0 0
        %1083 = vperm.xlu0 %1082, %v1045
        %v1084 = vpop.permute.xlu0 %1083
        %1087 = vset.pattern.permute.xlu0 0
        %1088 = vperm.xlu0 %1087, %v1046
        %v1089 = vpop.permute.xlu0 %1088
        %1092 = vset.pattern.permute.xlu0 0
        %1093 = vperm.xlu0 %1092, %v1047
        %v1094 = vpop.permute.xlu0 %1093
        %1097 = vset.pattern.permute.xlu0 0
        %1098 = vperm.xlu0 %1097, %v1048
        %v1099 = vpop.permute.xlu0 %1098
        %1102 = vset.pattern.permute.xlu0 0
        %1103 = vperm.xlu0 %1102, %v1049
        %v1104 = vpop.permute.xlu0 %1103
        %1107 = vset.pattern.permute.xlu0 0
        %1108 = vperm.xlu0 %1107, %v1050
        %v1109 = vpop.permute.xlu0 %1108
        %1112 = vset.pattern.permute.xlu0 0
        %1113 = vperm.xlu0 %1112, %v1051
        %v1114 = vpop.permute.xlu0 %1113
        %1117 = vset.pattern.permute.xlu0 0
        %1118 = vperm.xlu0 %1117, %v1052
        %v1119 = vpop.permute.xlu0 %1118
        %1122 = vset.pattern.permute.xlu0 0
        %1123 = vperm.xlu0 %1122, %v1053
        %v1124 = vpop.permute.xlu0 %1123
        %1127 = vset.pattern.permute.xlu0 0
        %1128 = vperm.xlu0 %1127, %v1054
        %v1129 = vpop.permute.xlu0 %1128
        %1132 = vset.pattern.permute.xlu0 0
        %1133 = vperm.xlu0 %1132, %v1055
        %v1134 = vpop.permute.xlu0 %1133
        %1137 = vset.pattern.permute.xlu0 0
        %1138 = vperm.xlu0 %1137, %v1056
        %v1139 = vpop.permute.xlu0 %1138
        %1142 = vset.pattern.permute.xlu0 0
        %1143 = vperm.xlu0 %1142, %v1057
        %v1144 = vpop.permute.xlu0 %1143
        %1147 = vset.pattern.permute.xlu0 0
        %1148 = vperm.xlu0 %1147, %v1058
        %v1149 = vpop.permute.xlu0 %1148
        %1152 = vset.pattern.permute.xlu0 0
        %1153 = vperm.xlu0 %1152, %v1059
        %v1154 = vpop.permute.xlu0 %1153
        %1157 = vset.pattern.permute.xlu0 0
        %1158 = vperm.xlu0 %1157, %v1060
        %v1159 = vpop.permute.xlu0 %1158
        %1162 = vset.pattern.permute.xlu0 0
        %1163 = vperm.xlu0 %1162, %v1061
        %v1164 = vpop.permute.xlu0 %1163
        %1167 = vset.pattern.permute.xlu0 0
        %1168 = vperm.xlu0 %1167, %v1062
        %v1169 = vpop.permute.xlu0 %1168
        %1172 = vset.pattern.permute.xlu0 0
        %1173 = vperm.xlu0 %1172, %v1063
        %v1174 = vpop.permute.xlu0 %1173
        %1177 = vset.pattern.permute.xlu0 0
        %1178 = vperm.xlu0 %1177, %v1064
        %v1179 = vpop.permute.xlu0 %1178
        %1182 = vset.pattern.permute.xlu0 0
        %1183 = vperm.xlu0 %1182, %v1065
        %v1184 = vpop.permute.xlu0 %1183
        %1187 = vset.pattern.permute.xlu0 0
        %1188 = vperm.xlu0 %1187, %v1066
        %v1189 = vpop.permute.xlu0 %1188
        %1192 = vset.pattern.permute.xlu0 0
        %1193 = vperm.xlu0 %1192, %v1067
        %v1194 = vpop.permute.xlu0 %1193
        %1197 = vset.pattern.permute.xlu0 0
        %1198 = vperm.xlu0 %1197, %v1068
        %v1199 = vpop.permute.xlu0 %1198
        %1202 = vset.pattern.permute.xlu0 0
        %1203 = vperm.xlu0 %1202, %v1069
        %v1204 = vpop.permute.xlu0 %1203
        %1207 = vset.pattern.permute.xlu0 0
        %1208 = vperm.xlu0 %1207, %v1070
        %v1209 = vpop.permute.xlu0 %1208
        %1212 = vset.pattern.permute.xlu0 0
        %1213 = vperm.xlu0 %1212, %v1071
        %v1214 = vpop.permute.xlu0 %1213
        %1217 = vset.pattern.permute.xlu0 0
        %1218 = vperm.xlu0 %1217, %v1072
        %v1219 = vpop.permute.xlu0 %1218
        %1222 = vset.pattern.permute.xlu0 0
        %1223 = vperm.xlu0 %1222, %v1073
        %v1224 = vpop.permute.xlu0 %1223
        %1227 = vset.pattern.permute.xlu0 0
        %1228 = vperm.xlu0 %1227, %v1074
        %v1229 = vpop.permute.xlu0 %1228
        %1232 = vset.pattern.permute.xlu0 0
        %1233 = vperm.xlu0 %1232, %v1075
        %v1234 = vpop.permute.xlu0 %1233
        %v1268 = vunpack.c.l.b16 %v1012
        %v1269 = vunpack.c.l.b16 %v1013
        %v1270 = vunpack.c.l.b16 %v1014
        %v1271 = vunpack.c.l.b16 %v1015
        %v1272 = vunpack.c.l.b16 %v1016
        %v1273 = vunpack.c.l.b16 %v1017
        %v1274 = vunpack.c.l.b16 %v1018
        %v1275 = vunpack.c.l.b16 %v1019
        %v1276 = vunpack.c.l.b16 %v1020
        %v1277 = vunpack.c.l.b16 %v1021
        %v1278 = vunpack.c.l.b16 %v1022
        %v1279 = vunpack.c.l.b16 %v1023
        %v1280 = vunpack.c.l.b16 %v1024
        %v1281 = vunpack.c.l.b16 %v1025
        %v1282 = vunpack.c.l.b16 %v1026
        %v1283 = vunpack.c.l.b16 %v1027
        %v1284 = vunpack.c.l.b16 %v1028
        %v1285 = vunpack.c.l.b16 %v1029
        %v1286 = vunpack.c.l.b16 %v1030
        %v1287 = vunpack.c.l.b16 %v1031
        %v1288 = vunpack.c.l.b16 %v1032
        %v1289 = vunpack.c.l.b16 %v1033
        %v1290 = vunpack.c.l.b16 %v1034
        %v1291 = vunpack.c.l.b16 %v1035
        %v1292 = vunpack.c.l.b16 %v1036
        %v1293 = vunpack.c.l.b16 %v1037
        %v1294 = vunpack.c.l.b16 %v1038
        %v1295 = vunpack.c.l.b16 %v1039
        %v1296 = vunpack.c.l.b16 %v1040
        %v1297 = vunpack.c.l.b16 %v1041
        %v1298 = vunpack.c.l.b16 %v1042
        %v1299 = vunpack.c.l.b16 %v1043
        %v1300 = vpack.c.b16 %v1269, %v1268
        %v1301 = vpack.c.b16 %v1271, %v1270
        %v1302 = vpack.c.b16 %v1273, %v1272
        %v1303 = vpack.c.b16 %v1275, %v1274
        %v1304 = vpack.c.b16 %v1277, %v1276
        %v1305 = vpack.c.b16 %v1279, %v1278
        %v1306 = vpack.c.b16 %v1281, %v1280
        %v1307 = vpack.c.b16 %v1283, %v1282
        %v1308 = vpack.c.b16 %v1285, %v1284
        %v1309 = vpack.c.b16 %v1287, %v1286
        %v1310 = vpack.c.b16 %v1289, %v1288
        %v1311 = vpack.c.b16 %v1291, %v1290
        %v1312 = vpack.c.b16 %v1293, %v1292
        %v1313 = vpack.c.b16 %v1295, %v1294
        %v1314 = vpack.c.b16 %v1297, %v1296
        %v1315 = vpack.c.b16 %v1299, %v1298
        %1332 = vmatprep.subr.bf16.mxu0 %v981
        %1333 = vmatpush1.bf16.msra.mxu0 %v980
        %1334 = vmatprep.subr.bf16.mxu0 %v985
        %1335 = vmatpush1.bf16.msra.mxu0 %v984
        %1336 = vmatprep.subr.bf16.mxu0 %v989
        %1337 = vmatpush1.bf16.msra.mxu0 %v988
        %1338 = vmatprep.subr.bf16.mxu0 %v993
        %1339 = vmatpush1.bf16.msra.mxu0 %v992
        %1340 = vmatprep.subr.bf16.mxu0 %v997
        %1341 = vmatpush1.bf16.msra.mxu0 %v996
        %1342 = vmatprep.subr.bf16.mxu0 %v1001
        %1343 = vmatpush1.bf16.msra.mxu0 %v1000
        %1344 = vmatprep.subr.bf16.mxu0 %v1005
        %1345 = vmatpush1.bf16.msra.mxu0 %v1004
        %1346 = vmatprep.subr.bf16.mxu0 %v1009
        %1347 = vmatpush1.bf16.msra.mxu0 %v1008
        %1348 = vmatprep.subr.bf16.mxu0 0
        %1349 = vmatpush1.bf16.msra.mxu0 0
        %1350 = vmatprep.subr.bf16.mxu0 0
        %1351 = vmatpush1.bf16.msra.mxu0 0
        %1352 = vmatprep.subr.bf16.mxu0 0
        %1353 = vmatpush1.bf16.msra.mxu0 0
        %1354 = vmatprep.subr.bf16.mxu0 0
        %1355 = vmatpush1.bf16.msra.mxu0 0
        %1356 = vmatprep.subr.bf16.mxu0 0
        %1357 = vmatpush1.bf16.msra.mxu0 0
        %1358 = vmatprep.subr.bf16.mxu0 0
        %1359 = vmatpush1.bf16.msra.mxu0 0
        %1360 = vmatprep.subr.bf16.mxu0 0
        %1361 = vmatpush1.bf16.msra.mxu0 0
        %1362 = vmatprep.subr.bf16.mxu0 0
        %1363 = vmatpush1.bf16.msra.mxu0 0
        %1364 = vmatprep.mubr.bf16.mxu0 0
        %1365 = vmatmul.mubr.bf16.gmra.mrb[0].mxu0 %v1300
        %v1366 = vpop.f32.mrb[0].mxu0
        %v1367 = vadd.f32 %v1079, %v1366
        %v1368 = vpop.f32.mrb[0].mxu0
        %v1369 = vadd.f32 %v1079, %v1368
        %v1370 = vpop.f32.mrb[0].mxu0
        %v1371 = vadd.f32 %v1084, %v1370
        %v1372 = vpop.f32.mrb[0].mxu0
        %v1373 = vadd.f32 %v1084, %v1372
        %1374 = vmatprep.mubr.bf16.mxu0 0
        %1375 = vmatmul.mubr.bf16.gmra.mrb[0].mxu0 %v1301
        %v1376 = vpop.f32.mrb[0].mxu0
        %v1377 = vadd.f32 %v1089, %v1376
        %v1378 = vpop.f32.mrb[0].mxu0
        %v1379 = vadd.f32 %v1089, %v1378
        %v1380 = vpop.f32.mrb[0].mxu0
        %v1381 = vadd.f32 %v1094, %v1380
        %v1382 = vpop.f32.mrb[0].mxu0
        %v1383 = vadd.f32 %v1094, %v1382
        %1384 = vmatprep.mubr.bf16.mxu0 0
        %1385 = vmatmul.mubr.bf16.gmra.mrb[0].mxu0 %v1302
        %v1386 = vpop.f32.mrb[0].mxu0
        %v1387 = vadd.f32 %v1099, %v1386
        %v1388 = vpop.f32.mrb[0].mxu0
        %v1389 = vadd.f32 %v1099, %v1388
        %v1390 = vpop.f32.mrb[0].mxu0
        %v1391 = vadd.f32 %v1104, %v1390
        %v1392 = vpop.f32.mrb[0].mxu0
        %v1393 = vadd.f32 %v1104, %v1392
        %1394 = vmatprep.mubr.bf16.mxu0 0
        %1395 = vmatmul.mubr.bf16.gmra.mrb[0].mxu0 %v1303
        %v1396 = vpop.f32.mrb[0].mxu0
        %v1397 = vadd.f32 %v1109, %v1396
        %v1398 = vpop.f32.mrb[0].mxu0
        %v1399 = vadd.f32 %v1109, %v1398
        %v1400 = vpop.f32.mrb[0].mxu0
        %v1401 = vadd.f32 %v1114, %v1400
        %v1402 = vpop.f32.mrb[0].mxu0
        %v1403 = vadd.f32 %v1114, %v1402
        %1404 = vmatprep.mubr.bf16.mxu0 0
        %1405 = vmatmul.mubr.bf16.gmra.mrb[0].mxu0 %v1304
        %v1406 = vpop.f32.mrb[0].mxu0
        %v1407 = vadd.f32 %v1119, %v1406
        %v1408 = vpop.f32.mrb[0].mxu0
        %v1409 = vadd.f32 %v1119, %v1408
        %v1410 = vpop.f32.mrb[0].mxu0
        %v1411 = vadd.f32 %v1124, %v1410
        %v1412 = vpop.f32.mrb[0].mxu0
        %v1413 = vadd.f32 %v1124, %v1412
        %1414 = vmatprep.mubr.bf16.mxu0 0
        %1415 = vmatmul.mubr.bf16.gmra.mrb[0].mxu0 %v1305
        %v1416 = vpop.f32.mrb[0].mxu0
        %v1417 = vadd.f32 %v1129, %v1416
        %v1418 = vpop.f32.mrb[0].mxu0
        %v1419 = vadd.f32 %v1129, %v1418
        %v1420 = vpop.f32.mrb[0].mxu0
        %v1421 = vadd.f32 %v1134, %v1420
        %v1422 = vpop.f32.mrb[0].mxu0
        %v1423 = vadd.f32 %v1134, %v1422
        %1424 = vmatprep.mubr.bf16.mxu0 0
        %1425 = vmatmul.mubr.bf16.gmra.mrb[0].mxu0 %v1306
        %v1426 = vpop.f32.mrb[0].mxu0
        %v1427 = vadd.f32 %v1139, %v1426
        %v1428 = vpop.f32.mrb[0].mxu0
        %v1429 = vadd.f32 %v1139, %v1428
        %v1430 = vpop.f32.mrb[0].mxu0
        %v1431 = vadd.f32 %v1144, %v1430
        %v1432 = vpop.f32.mrb[0].mxu0
        %v1433 = vadd.f32 %v1144, %v1432
        %1434 = vmatprep.mubr.bf16.mxu0 0
        %1435 = vmatmul.mubr.bf16.gmra.mrb[0].mxu0 %v1307
        %v1436 = vpop.f32.mrb[0].mxu0
        %v1437 = vadd.f32 %v1149, %v1436
        %v1438 = vpop.f32.mrb[0].mxu0
        %v1439 = vadd.f32 %v1149, %v1438
        %v1440 = vpop.f32.mrb[0].mxu0
        %v1441 = vadd.f32 %v1154, %v1440
        %v1442 = vpop.f32.mrb[0].mxu0
        %v1443 = vadd.f32 %v1154, %v1442
        %1444 = vmatprep.mubr.bf16.mxu0 0
        %1445 = vmatmul.mubr.bf16.gmra.mrb[0].mxu0 %v1308
        %v1446 = vpop.f32.mrb[0].mxu0
        %v1447 = vadd.f32 %v1159, %v1446
        %v1448 = vpop.f32.mrb[0].mxu0
        %v1449 = vadd.f32 %v1159, %v1448
        %v1450 = vpop.f32.mrb[0].mxu0
        %v1451 = vadd.f32 %v1164, %v1450
        %v1452 = vpop.f32.mrb[0].mxu0
        %v1453 = vadd.f32 %v1164, %v1452
        %1454 = vmatprep.mubr.bf16.mxu0 0
        %1455 = vmatmul.mubr.bf16.gmra.mrb[0].mxu0 %v1309
        %v1456 = vpop.f32.mrb[0].mxu0
        %v1457 = vadd.f32 %v1169, %v1456
        %v1458 = vpop.f32.mrb[0].mxu0
        %v1459 = vadd.f32 %v1169, %v1458
        %v1460 = vpop.f32.mrb[0].mxu0
        %v1461 = vadd.f32 %v1174, %v1460
        %v1462 = vpop.f32.mrb[0].mxu0
        %v1463 = vadd.f32 %v1174, %v1462
        %1464 = vmatprep.mubr.bf16.mxu0 0
        %1465 = vmatmul.mubr.bf16.gmra.mrb[0].mxu0 %v1310
        %v1466 = vpop.f32.mrb[0].mxu0
        %v1467 = vadd.f32 %v1179, %v1466
        %v1468 = vpop.f32.mrb[0].mxu0
        %v1469 = vadd.f32 %v1179, %v1468
        %v1470 = vpop.f32.mrb[0].mxu0
        %v1471 = vadd.f32 %v1184, %v1470
        %v1472 = vpop.f32.mrb[0].mxu0
        %v1473 = vadd.f32 %v1184, %v1472
        %1474 = vmatprep.mubr.bf16.mxu0 0
        %1475 = vmatmul.mubr.bf16.gmra.mrb[0].mxu0 %v1311
        %v1476 = vpop.f32.mrb[0].mxu0
        %v1477 = vadd.f32 %v1189, %v1476
        %v1478 = vpop.f32.mrb[0].mxu0
        %v1479 = vadd.f32 %v1189, %v1478
        %v1480 = vpop.f32.mrb[0].mxu0
        %v1481 = vadd.f32 %v1194, %v1480
        %v1482 = vpop.f32.mrb[0].mxu0
        %v1483 = vadd.f32 %v1194, %v1482
        %1484 = vmatprep.mubr.bf16.mxu0 0
        %1485 = vmatmul.mubr.bf16.gmra.mrb[0].mxu0 %v1312
        %v1486 = vpop.f32.mrb[0].mxu0
        %v1487 = vadd.f32 %v1199, %v1486
        %v1488 = vpop.f32.mrb[0].mxu0
        %v1489 = vadd.f32 %v1199, %v1488
        %v1490 = vpop.f32.mrb[0].mxu0
        %v1491 = vadd.f32 %v1204, %v1490
        %v1492 = vpop.f32.mrb[0].mxu0
        %v1493 = vadd.f32 %v1204, %v1492
        %1494 = vmatprep.mubr.bf16.mxu0 0
        %1495 = vmatmul.mubr.bf16.gmra.mrb[0].mxu0 %v1313
        %v1496 = vpop.f32.mrb[0].mxu0
        %v1497 = vadd.f32 %v1209, %v1496
        %v1498 = vpop.f32.mrb[0].mxu0
        %v1499 = vadd.f32 %v1209, %v1498
        %v1500 = vpop.f32.mrb[0].mxu0
        %v1501 = vadd.f32 %v1214, %v1500
        %v1502 = vpop.f32.mrb[0].mxu0
        %v1503 = vadd.f32 %v1214, %v1502
        %1504 = vmatprep.mubr.bf16.mxu0 0
        %1505 = vmatmul.mubr.bf16.gmra.mrb[0].mxu0 %v1314
        %v1506 = vpop.f32.mrb[0].mxu0
        %v1507 = vadd.f32 %v1219, %v1506
        %v1508 = vpop.f32.mrb[0].mxu0
        %v1509 = vadd.f32 %v1219, %v1508
        %v1510 = vpop.f32.mrb[0].mxu0
        %v1511 = vadd.f32 %v1224, %v1510
        %v1512 = vpop.f32.mrb[0].mxu0
        %v1513 = vadd.f32 %v1224, %v1512
        %1514 = vmatprep.mubr.bf16.mxu0 0
        %1515 = vmatmul.mubr.bf16.gmra.mrb[0].mxu0 %v1315
        %v1516 = vpop.f32.mrb[0].mxu0
        %v1517 = vadd.f32 %v1229, %v1516
        %v1518 = vpop.f32.mrb[0].mxu0
        %v1519 = vadd.f32 %v1229, %v1518
        %v1520 = vpop.f32.mrb[0].mxu0
        %v1521 = vadd.f32 %v1234, %v1520
        %v1522 = vpop.f32.mrb[0].mxu0
        %v1523 = vadd.f32 %v1234, %v1522
        %1524 = vdwg.mxu0
        %1525 = vmatprep.subr.bf16.mxu0 %v983
        %1526 = vmatpush1.bf16.msra.mxu0 %v982
        %1527 = vmatprep.subr.bf16.mxu0 %v987
        %1528 = vmatpush1.bf16.msra.mxu0 %v986
        %1529 = vmatprep.subr.bf16.mxu0 %v991
        %1530 = vmatpush1.bf16.msra.mxu0 %v990
        %1531 = vmatprep.subr.bf16.mxu0 %v995
        %1532 = vmatpush1.bf16.msra.mxu0 %v994
        %1533 = vmatprep.subr.bf16.mxu0 %v999
        %1534 = vmatpush1.bf16.msra.mxu0 %v998
        %1535 = vmatprep.subr.bf16.mxu0 %v1003
        %1536 = vmatpush1.bf16.msra.mxu0 %v1002
        %1537 = vmatprep.subr.bf16.mxu0 %v1007
        %1538 = vmatpush1.bf16.msra.mxu0 %v1006
        %1539 = vmatprep.subr.bf16.mxu0 %v1011
        %1540 = vmatpush1.bf16.msra.mxu0 %v1010
        %1541 = vmatprep.subr.bf16.mxu0 0
        %1542 = vmatpush1.bf16.msra.mxu0 0
        %1543 = vmatprep.subr.bf16.mxu0 0
        %1544 = vmatpush1.bf16.msra.mxu0 0
        %1545 = vmatprep.subr.bf16.mxu0 0
        %1546 = vmatpush1.bf16.msra.mxu0 0
        %1547 = vmatprep.subr.bf16.mxu0 0
        %1548 = vmatpush1.bf16.msra.mxu0 0
        %1549 = vmatprep.subr.bf16.mxu0 0
        %1550 = vmatpush1.bf16.msra.mxu0 0
        %1551 = vmatprep.subr.bf16.mxu0 0
        %1552 = vmatpush1.bf16.msra.mxu0 0
        %1553 = vmatprep.subr.bf16.mxu0 0
        %1554 = vmatpush1.bf16.msra.mxu0 0
        %1555 = vmatprep.subr.bf16.mxu0 0
        %1556 = vmatpush1.bf16.msra.mxu0 0
        %1557 = vmatprep.mubr.bf16.mxu0 0
        %1558 = vmatmul.mubr.bf16.gmra.mrb[0].mxu0 %v1300
        %v1559 = vpop.f32.mrb[0].mxu0
        %v1560 = vadd.f32 %v1079, %v1559
        %v1561 = vpop.f32.mrb[0].mxu0
        %v1562 = vadd.f32 %v1079, %v1561
        %v1563 = vpop.f32.mrb[0].mxu0
        %v1564 = vadd.f32 %v1084, %v1563
        %v1565 = vpop.f32.mrb[0].mxu0
        %v1566 = vadd.f32 %v1084, %v1565
        %1567 = vmatprep.mubr.bf16.mxu0 0
        %1568 = vmatmul.mubr.bf16.gmra.mrb[0].mxu0 %v1301
        %v1569 = vpop.f32.mrb[0].mxu0
        %v1570 = vadd.f32 %v1089, %v1569
        %v1571 = vpop.f32.mrb[0].mxu0
        %v1572 = vadd.f32 %v1089, %v1571
        %v1573 = vpop.f32.mrb[0].mxu0
        %v1574 = vadd.f32 %v1094, %v1573
        %v1575 = vpop.f32.mrb[0].mxu0
        %v1576 = vadd.f32 %v1094, %v1575
        %1577 = vmatprep.mubr.bf16.mxu0 0
        %1578 = vmatmul.mubr.bf16.gmra.mrb[0].mxu0 %v1302
        %v1579 = vpop.f32.mrb[0].mxu0
        %v1580 = vadd.f32 %v1099, %v1579
        %v1581 = vpop.f32.mrb[0].mxu0
        %v1582 = vadd.f32 %v1099, %v1581
        %v1583 = vpop.f32.mrb[0].mxu0
        %v1584 = vadd.f32 %v1104, %v1583
        %v1585 = vpop.f32.mrb[0].mxu0
        %v1586 = vadd.f32 %v1104, %v1585
        %1587 = vmatprep.mubr.bf16.mxu0 0
        %1588 = vmatmul.mubr.bf16.gmra.mrb[0].mxu0 %v1303
        %v1589 = vpop.f32.mrb[0].mxu0
        %v1590 = vadd.f32 %v1109, %v1589
        %v1591 = vpop.f32.mrb[0].mxu0
        %v1592 = vadd.f32 %v1109, %v1591
        %v1593 = vpop.f32.mrb[0].mxu0
        %v1594 = vadd.f32 %v1114, %v1593
        %v1595 = vpop.f32.mrb[0].mxu0
        %v1596 = vadd.f32 %v1114, %v1595
        %1597 = vmatprep.mubr.bf16.mxu0 0
        %1598 = vmatmul.mubr.bf16.gmra.mrb[0].mxu0 %v1304
        %v1599 = vpop.f32.mrb[0].mxu0
        %v1600 = vadd.f32 %v1119, %v1599
        %v1601 = vpop.f32.mrb[0].mxu0
        %v1602 = vadd.f32 %v1119, %v1601
        %v1603 = vpop.f32.mrb[0].mxu0
        %v1604 = vadd.f32 %v1124, %v1603
        %v1605 = vpop.f32.mrb[0].mxu0
        %v1606 = vadd.f32 %v1124, %v1605
        %1607 = vmatprep.mubr.bf16.mxu0 0
        %1608 = vmatmul.mubr.bf16.gmra.mrb[0].mxu0 %v1305
        %v1609 = vpop.f32.mrb[0].mxu0
        %v1610 = vadd.f32 %v1129, %v1609
        %v1611 = vpop.f32.mrb[0].mxu0
        %v1612 = vadd.f32 %v1129, %v1611
        %v1613 = vpop.f32.mrb[0].mxu0
        %v1614 = vadd.f32 %v1134, %v1613
        %v1615 = vpop.f32.mrb[0].mxu0
        %v1616 = vadd.f32 %v1134, %v1615
        %1617 = vmatprep.mubr.bf16.mxu0 0
        %1618 = vmatmul.mubr.bf16.gmra.mrb[0].mxu0 %v1306
        %v1619 = vpop.f32.mrb[0].mxu0
        %v1620 = vadd.f32 %v1139, %v1619
        %v1621 = vpop.f32.mrb[0].mxu0
        %v1622 = vadd.f32 %v1139, %v1621
        %v1623 = vpop.f32.mrb[0].mxu0
        %v1624 = vadd.f32 %v1144, %v1623
        %v1625 = vpop.f32.mrb[0].mxu0
        %v1626 = vadd.f32 %v1144, %v1625
        %1627 = vmatprep.mubr.bf16.mxu0 0
        %1628 = vmatmul.mubr.bf16.gmra.mrb[0].mxu0 %v1307
        %v1629 = vpop.f32.mrb[0].mxu0
        %v1630 = vadd.f32 %v1149, %v1629
        %v1631 = vpop.f32.mrb[0].mxu0
        %v1632 = vadd.f32 %v1149, %v1631
        %v1633 = vpop.f32.mrb[0].mxu0
        %v1634 = vadd.f32 %v1154, %v1633
        %v1635 = vpop.f32.mrb[0].mxu0
        %v1636 = vadd.f32 %v1154, %v1635
        %1637 = vmatprep.mubr.bf16.mxu0 0
        %1638 = vmatmul.mubr.bf16.gmra.mrb[0].mxu0 %v1308
        %v1639 = vpop.f32.mrb[0].mxu0
        %v1640 = vadd.f32 %v1159, %v1639
        %v1641 = vpop.f32.mrb[0].mxu0
        %v1642 = vadd.f32 %v1159, %v1641
        %v1643 = vpop.f32.mrb[0].mxu0
        %v1644 = vadd.f32 %v1164, %v1643
        %v1645 = vpop.f32.mrb[0].mxu0
        %v1646 = vadd.f32 %v1164, %v1645
        %1647 = vmatprep.mubr.bf16.mxu0 0
        %1648 = vmatmul.mubr.bf16.gmra.mrb[0].mxu0 %v1309
        %v1649 = vpop.f32.mrb[0].mxu0
        %v1650 = vadd.f32 %v1169, %v1649
        %v1651 = vpop.f32.mrb[0].mxu0
        %v1652 = vadd.f32 %v1169, %v1651
        %v1653 = vpop.f32.mrb[0].mxu0
        %v1654 = vadd.f32 %v1174, %v1653
        %v1655 = vpop.f32.mrb[0].mxu0
        %v1656 = vadd.f32 %v1174, %v1655
        %1657 = vmatprep.mubr.bf16.mxu0 0
        %1658 = vmatmul.mubr.bf16.gmra.mrb[0].mxu0 %v1310
        %v1659 = vpop.f32.mrb[0].mxu0
        %v1660 = vadd.f32 %v1179, %v1659
        %v1661 = vpop.f32.mrb[0].mxu0
        %v1662 = vadd.f32 %v1179, %v1661
        %v1663 = vpop.f32.mrb[0].mxu0
        %v1664 = vadd.f32 %v1184, %v1663
        %v1665 = vpop.f32.mrb[0].mxu0
        %v1666 = vadd.f32 %v1184, %v1665
        %1667 = vmatprep.mubr.bf16.mxu0 0
        %1668 = vmatmul.mubr.bf16.gmra.mrb[0].mxu0 %v1311
        %v1669 = vpop.f32.mrb[0].mxu0
        %v1670 = vadd.f32 %v1189, %v1669
        %v1671 = vpop.f32.mrb[0].mxu0
        %v1672 = vadd.f32 %v1189, %v1671
        %v1673 = vpop.f32.mrb[0].mxu0
        %v1674 = vadd.f32 %v1194, %v1673
        %v1675 = vpop.f32.mrb[0].mxu0
        %v1676 = vadd.f32 %v1194, %v1675
        %1677 = vmatprep.mubr.bf16.mxu0 0
        %1678 = vmatmul.mubr.bf16.gmra.mrb[0].mxu0 %v1312
        %v1679 = vpop.f32.mrb[0].mxu0
        %v1680 = vadd.f32 %v1199, %v1679
        %v1681 = vpop.f32.mrb[0].mxu0
        %v1682 = vadd.f32 %v1199, %v1681
        %v1683 = vpop.f32.mrb[0].mxu0
        %v1684 = vadd.f32 %v1204, %v1683
        %v1685 = vpop.f32.mrb[0].mxu0
        %v1686 = vadd.f32 %v1204, %v1685
        %1687 = vmatprep.mubr.bf16.mxu0 0
        %1688 = vmatmul.mubr.bf16.gmra.mrb[0].mxu0 %v1313
        %v1689 = vpop.f32.mrb[0].mxu0
        %v1690 = vadd.f32 %v1209, %v1689
        %v1691 = vpop.f32.mrb[0].mxu0
        %v1692 = vadd.f32 %v1209, %v1691
        %v1693 = vpop.f32.mrb[0].mxu0
        %v1694 = vadd.f32 %v1214, %v1693
        %v1695 = vpop.f32.mrb[0].mxu0
        %v1696 = vadd.f32 %v1214, %v1695
        %1697 = vmatprep.mubr.bf16.mxu0 0
        %1698 = vmatmul.mubr.bf16.gmra.mrb[0].mxu0 %v1314
        %v1699 = vpop.f32.mrb[0].mxu0
        %v1700 = vadd.f32 %v1219, %v1699
        %v1701 = vpop.f32.mrb[0].mxu0
        %v1702 = vadd.f32 %v1219, %v1701
        %v1703 = vpop.f32.mrb[0].mxu0
        %v1704 = vadd.f32 %v1224, %v1703
        %v1705 = vpop.f32.mrb[0].mxu0
        %v1706 = vadd.f32 %v1224, %v1705
        %1707 = vmatprep.mubr.bf16.mxu0 0
        %1708 = vmatmul.mubr.bf16.gmra.mrb[0].mxu0 %v1315
        %v1709 = vpop.f32.mrb[0].mxu0
        %v1710 = vadd.f32 %v1229, %v1709
        %v1711 = vpop.f32.mrb[0].mxu0
        %v1712 = vadd.f32 %v1229, %v1711
        %v1713 = vpop.f32.mrb[0].mxu0
        %v1714 = vadd.f32 %v1234, %v1713
        %v1715 = vpop.f32.mrb[0].mxu0
        %v1716 = vadd.f32 %v1234, %v1715
        %1717 = vdwg.mxu0
        %v1718 = vmax.f32 %v1367, 0.0
        %v1719 = vmax.f32 %v1369, 0.0
        %v1720 = vmax.f32 %v1560, 0.0
        %v1721 = vmax.f32 %v1562, 0.0
        %v1722 = vmax.f32 %v1371, 0.0
        %v1723 = vmax.f32 %v1373, 0.0
        %v1724 = vmax.f32 %v1564, 0.0
        %v1725 = vmax.f32 %v1566, 0.0
        %v1726 = vmax.f32 %v1377, 0.0
        %v1727 = vmax.f32 %v1379, 0.0
        %v1728 = vmax.f32 %v1570, 0.0
        %v1729 = vmax.f32 %v1572, 0.0
        %v1730 = vmax.f32 %v1381, 0.0
        %v1731 = vmax.f32 %v1383, 0.0
        %v1732 = vmax.f32 %v1574, 0.0
        %v1733 = vmax.f32 %v1576, 0.0
        %v1734 = vmax.f32 %v1387, 0.0
        %v1735 = vmax.f32 %v1389, 0.0
        %v1736 = vmax.f32 %v1580, 0.0
        %v1737 = vmax.f32 %v1582, 0.0
        %v1738 = vmax.f32 %v1391, 0.0
        %v1739 = vmax.f32 %v1393, 0.0
        %v1740 = vmax.f32 %v1584, 0.0
        %v1741 = vmax.f32 %v1586, 0.0
        %v1742 = vmax.f32 %v1397, 0.0
        %v1743 = vmax.f32 %v1399, 0.0
        %v1744 = vmax.f32 %v1590, 0.0
        %v1745 = vmax.f32 %v1592, 0.0
        %v1746 = vmax.f32 %v1401, 0.0
        %v1747 = vmax.f32 %v1403, 0.0
        %v1748 = vmax.f32 %v1594, 0.0
        %v1749 = vmax.f32 %v1596, 0.0
        %v1750 = vmax.f32 %v1407, 0.0
        %v1751 = vmax.f32 %v1409, 0.0
        %v1752 = vmax.f32 %v1600, 0.0
        %v1753 = vmax.f32 %v1602, 0.0
        %v1754 = vmax.f32 %v1411, 0.0
        %v1755 = vmax.f32 %v1413, 0.0
        %v1756 = vmax.f32 %v1604, 0.0
        %v1757 = vmax.f32 %v1606, 0.0
        %v1758 = vmax.f32 %v1417, 0.0
        %v1759 = vmax.f32 %v1419, 0.0
        %v1760 = vmax.f32 %v1610, 0.0
        %v1761 = vmax.f32 %v1612, 0.0
        %v1762 = vmax.f32 %v1421, 0.0
        %v1763 = vmax.f32 %v1423, 0.0
        %v1764 = vmax.f32 %v1614, 0.0
        %v1765 = vmax.f32 %v1616, 0.0
        %v1766 = vmax.f32 %v1427, 0.0
        %v1767 = vmax.f32 %v1429, 0.0
        %v1768 = vmax.f32 %v1620, 0.0
        %v1769 = vmax.f32 %v1622, 0.0
        %v1770 = vmax.f32 %v1431, 0.0
        %v1771 = vmax.f32 %v1433, 0.0
        %v1772 = vmax.f32 %v1624, 0.0
        %v1773 = vmax.f32 %v1626, 0.0
        %v1774 = vmax.f32 %v1437, 0.0
        %v1775 = vmax.f32 %v1439, 0.0
        %v1776 = vmax.f32 %v1630, 0.0
        %v1777 = vmax.f32 %v1632, 0.0
        %v1778 = vmax.f32 %v1441, 0.0
        %v1779 = vmax.f32 %v1443, 0.0
        %v1780 = vmax.f32 %v1634, 0.0
        %v1781 = vmax.f32 %v1636, 0.0
        %v1782 = vmax.f32 %v1447, 0.0
        %v1783 = vmax.f32 %v1449, 0.0
        %v1784 = vmax.f32 %v1640, 0.0
        %v1785 = vmax.f32 %v1642, 0.0
        %v1786 = vmax.f32 %v1451, 0.0
        %v1787 = vmax.f32 %v1453, 0.0
        %v1788 = vmax.f32 %v1644, 0.0
        %v1789 = vmax.f32 %v1646, 0.0
        %v1790 = vmax.f32 %v1457, 0.0
        %v1791 = vmax.f32 %v1459, 0.0
        %v1792 = vmax.f32 %v1650, 0.0
        %v1793 = vmax.f32 %v1652, 0.0
        %v1794 = vmax.f32 %v1461, 0.0
        %v1795 = vmax.f32 %v1463, 0.0
        %v1796 = vmax.f32 %v1654, 0.0
        %v1797 = vmax.f32 %v1656, 0.0
        %v1798 = vmax.f32 %v1467, 0.0
        %v1799 = vmax.f32 %v1469, 0.0
        %v1800 = vmax.f32 %v1660, 0.0
        %v1801 = vmax.f32 %v1662, 0.0
        %v1802 = vmax.f32 %v1471, 0.0
        %v1803 = vmax.f32 %v1473, 0.0
        %v1804 = vmax.f32 %v1664, 0.0
        %v1805 = vmax.f32 %v1666, 0.0
        %v1806 = vmax.f32 %v1477, 0.0
        %v1807 = vmax.f32 %v1479, 0.0
        %v1808 = vmax.f32 %v1670, 0.0
        %v1809 = vmax.f32 %v1672, 0.0
        %v1810 = vmax.f32 %v1481, 0.0
        %v1811 = vmax.f32 %v1483, 0.0
        %v1812 = vmax.f32 %v1674, 0.0
        %v1813 = vmax.f32 %v1676, 0.0
        %v1814 = vmax.f32 %v1487, 0.0
        %v1815 = vmax.f32 %v1489, 0.0
        %v1816 = vmax.f32 %v1680, 0.0
        %v1817 = vmax.f32 %v1682, 0.0
        %v1818 = vmax.f32 %v1491, 0.0
        %v1819 = vmax.f32 %v1493, 0.0
        %v1820 = vmax.f32 %v1684, 0.0
        %v1821 = vmax.f32 %v1686, 0.0
        %v1822 = vmax.f32 %v1497, 0.0
        %v1823 = vmax.f32 %v1499, 0.0
        %v1824 = vmax.f32 %v1690, 0.0
        %v1825 = vmax.f32 %v1692, 0.0
        %v1826 = vmax.f32 %v1501, 0.0
        %v1827 = vmax.f32 %v1503, 0.0
        %v1828 = vmax.f32 %v1694, 0.0
        %v1829 = vmax.f32 %v1696, 0.0
        %v1830 = vmax.f32 %v1507, 0.0
        %v1831 = vmax.f32 %v1509, 0.0
        %v1832 = vmax.f32 %v1700, 0.0
        %v1833 = vmax.f32 %v1702, 0.0
        %v1834 = vmax.f32 %v1511, 0.0
        %v1835 = vmax.f32 %v1513, 0.0
        %v1836 = vmax.f32 %v1704, 0.0
        %v1837 = vmax.f32 %v1706, 0.0
        %v1838 = vmax.f32 %v1517, 0.0
        %v1839 = vmax.f32 %v1519, 0.0
        %v1840 = vmax.f32 %v1710, 0.0
        %v1841 = vmax.f32 %v1712, 0.0
        %v1842 = vmax.f32 %v1521, 0.0
        %v1843 = vmax.f32 %v1523, 0.0
        %v1844 = vmax.f32 %v1714, 0.0
        %v1845 = vmax.f32 %v1716, 0.0
        %v1846 = vpack.c.bf16 %v1722, %v1718
        %v1847 = vpack.c.bf16 %v1723, %v1719
        %v1848 = vpack.c.bf16 %v1724, %v1720
        %v1849 = vpack.c.bf16 %v1725, %v1721
        %v1850 = vpack.c.bf16 %v1730, %v1726
        %v1851 = vpack.c.bf16 %v1731, %v1727
        %v1852 = vpack.c.bf16 %v1732, %v1728
        %v1853 = vpack.c.bf16 %v1733, %v1729
        %v1854 = vpack.c.bf16 %v1738, %v1734
        %v1855 = vpack.c.bf16 %v1739, %v1735
        %v1856 = vpack.c.bf16 %v1740, %v1736
        %v1857 = vpack.c.bf16 %v1741, %v1737
        %v1858 = vpack.c.bf16 %v1746, %v1742
        %v1859 = vpack.c.bf16 %v1747, %v1743
        %v1860 = vpack.c.bf16 %v1748, %v1744
        %v1861 = vpack.c.bf16 %v1749, %v1745
        %v1862 = vpack.c.bf16 %v1754, %v1750
        %v1863 = vpack.c.bf16 %v1755, %v1751
        %v1864 = vpack.c.bf16 %v1756, %v1752
        %v1865 = vpack.c.bf16 %v1757, %v1753
        %v1866 = vpack.c.bf16 %v1762, %v1758
        %v1867 = vpack.c.bf16 %v1763, %v1759
        %v1868 = vpack.c.bf16 %v1764, %v1760
        %v1869 = vpack.c.bf16 %v1765, %v1761
        %v1870 = vpack.c.bf16 %v1770, %v1766
        %v1871 = vpack.c.bf16 %v1771, %v1767
        %v1872 = vpack.c.bf16 %v1772, %v1768
        %v1873 = vpack.c.bf16 %v1773, %v1769
        %v1874 = vpack.c.bf16 %v1778, %v1774
        %v1875 = vpack.c.bf16 %v1779, %v1775
        %v1876 = vpack.c.bf16 %v1780, %v1776
        %v1877 = vpack.c.bf16 %v1781, %v1777
        %v1878 = vpack.c.bf16 %v1786, %v1782
        %v1879 = vpack.c.bf16 %v1787, %v1783
        %v1880 = vpack.c.bf16 %v1788, %v1784
        %v1881 = vpack.c.bf16 %v1789, %v1785
        %v1882 = vpack.c.bf16 %v1794, %v1790
        %v1883 = vpack.c.bf16 %v1795, %v1791
        %v1884 = vpack.c.bf16 %v1796, %v1792
        %v1885 = vpack.c.bf16 %v1797, %v1793
        %v1886 = vpack.c.bf16 %v1802, %v1798
        %v1887 = vpack.c.bf16 %v1803, %v1799
        %v1888 = vpack.c.bf16 %v1804, %v1800
        %v1889 = vpack.c.bf16 %v1805, %v1801
        %v1890 = vpack.c.bf16 %v1810, %v1806
        %v1891 = vpack.c.bf16 %v1811, %v1807
        %v1892 = vpack.c.bf16 %v1812, %v1808
        %v1893 = vpack.c.bf16 %v1813, %v1809
        %v1894 = vpack.c.bf16 %v1818, %v1814
        %v1895 = vpack.c.bf16 %v1819, %v1815
        %v1896 = vpack.c.bf16 %v1820, %v1816
        %v1897 = vpack.c.bf16 %v1821, %v1817
        %v1898 = vpack.c.bf16 %v1826, %v1822
        %v1899 = vpack.c.bf16 %v1827, %v1823
        %v1900 = vpack.c.bf16 %v1828, %v1824
        %v1901 = vpack.c.bf16 %v1829, %v1825
        %v1902 = vpack.c.bf16 %v1834, %v1830
        %v1903 = vpack.c.bf16 %v1835, %v1831
        %v1904 = vpack.c.bf16 %v1836, %v1832
        %v1905 = vpack.c.bf16 %v1837, %v1833
        %v1906 = vpack.c.bf16 %v1842, %v1838
        %v1907 = vpack.c.bf16 %v1843, %v1839
        %v1908 = vpack.c.bf16 %v1844, %v1840
        %v1909 = vpack.c.bf16 %v1845, %v1841
        %v1910 = vld [vmem:[%s5] sm:$0xff]
        %v1911 = vld [vmem:[%s5 + $0x8] sm:$0xff]
        %v1912 = vld [vmem:[%s5 + $0x10] sm:$0xff]
        %v1913 = vld [vmem:[%s5 + $0x18] sm:$0xff]
        %v1914 = vld [vmem:[%s5 + $0x20] sm:$0xff]
        %v1915 = vld [vmem:[%s5 + $0x28] sm:$0xff]
        %v1916 = vld [vmem:[%s5 + $0x30] sm:$0xff]
        %v1917 = vld [vmem:[%s5 + $0x38] sm:$0xff]
        %v1918 = vld [vmem:[%s5 + $0x40] sm:$0xff]
        %v1919 = vld [vmem:[%s5 + $0x48] sm:$0xff]
        %v1920 = vld [vmem:[%s5 + $0x50] sm:$0xff]
        %v1921 = vld [vmem:[%s5 + $0x58] sm:$0xff]
        %v1922 = vld [vmem:[%s5 + $0x60] sm:$0xff]
        %v1923 = vld [vmem:[%s5 + $0x68] sm:$0xff]
        %v1924 = vld [vmem:[%s5 + $0x70] sm:$0xff]
        %v1925 = vld [vmem:[%s5 + $0x78] sm:$0xff]
        %v1926 = vld [vmem:[%s5 + $0x80] sm:$0xff]
        %v1927 = vld [vmem:[%s5 + $0x88] sm:$0xff]
        %v1928 = vld [vmem:[%s5 + $0x90] sm:$0xff]
        %v1929 = vld [vmem:[%s5 + $0x98] sm:$0xff]
        %v1930 = vld [vmem:[%s5 + $0xa0] sm:$0xff]
        %v1931 = vld [vmem:[%s5 + $0xa8] sm:$0xff]
        %v1932 = vld [vmem:[%s5 + $0xb0] sm:$0xff]
        %v1933 = vld [vmem:[%s5 + $0xb8] sm:$0xff]
        %v1934 = vld [vmem:[%s5 + $0xc0] sm:$0xff]
        %v1935 = vld [vmem:[%s5 + $0xc8] sm:$0xff]
        %v1936 = vld [vmem:[%s5 + $0xd0] sm:$0xff]
        %v1937 = vld [vmem:[%s5 + $0xd8] sm:$0xff]
        %v1938 = vld [vmem:[%s5 + $0xe0] sm:$0xff]
        %v1939 = vld [vmem:[%s5 + $0xe8] sm:$0xff]
        %v1940 = vld [vmem:[%s5 + $0xf0] sm:$0xff]
        %v1941 = vld [vmem:[%s5 + $0xf8] sm:$0xff]
        %v1942 = vld [vmem:[%s6] sm:$0xff]
        %v1943 = vld [vmem:[%s6 + $0x8] sm:$0xff]
        %v1944 = vld [vmem:[%s6 + $0x10] sm:$0xff]
        %v1945 = vld [vmem:[%s6 + $0x18] sm:$0xff]
        %v1946 = vld [vmem:[%s6 + $0x20] sm:$0xff]
        %v1947 = vld [vmem:[%s6 + $0x28] sm:$0xff]
        %v1948 = vld [vmem:[%s6 + $0x30] sm:$0xff]
        %v1949 = vld [vmem:[%s6 + $0x38] sm:$0xff]
        %v1950 = vld [vmem:[%s6 + $0x40] sm:$0xff]
        %v1951 = vld [vmem:[%s6 + $0x48] sm:$0xff]
        %v1952 = vld [vmem:[%s6 + $0x50] sm:$0xff]
        %v1953 = vld [vmem:[%s6 + $0x58] sm:$0xff]
        %v1954 = vld [vmem:[%s6 + $0x60] sm:$0xff]
        %v1955 = vld [vmem:[%s6 + $0x68] sm:$0xff]
        %v1956 = vld [vmem:[%s6 + $0x70] sm:$0xff]
        %v1957 = vld [vmem:[%s6 + $0x78] sm:$0xff]
        %v1958 = vld [vmem:[%s6 + $0x80] sm:$0xff]
        %v1959 = vld [vmem:[%s6 + $0x88] sm:$0xff]
        %v1960 = vld [vmem:[%s6 + $0x90] sm:$0xff]
        %v1961 = vld [vmem:[%s6 + $0x98] sm:$0xff]
        %v1962 = vld [vmem:[%s6 + $0xa0] sm:$0xff]
        %v1963 = vld [vmem:[%s6 + $0xa8] sm:$0xff]
        %v1964 = vld [vmem:[%s6 + $0xb0] sm:$0xff]
        %v1965 = vld [vmem:[%s6 + $0xb8] sm:$0xff]
        %v1966 = vld [vmem:[%s6 + $0xc0] sm:$0xff]
        %v1967 = vld [vmem:[%s6 + $0xc8] sm:$0xff]
        %v1968 = vld [vmem:[%s6 + $0xd0] sm:$0xff]
        %v1969 = vld [vmem:[%s6 + $0xd8] sm:$0xff]
        %v1970 = vld [vmem:[%s6 + $0xe0] sm:$0xff]
        %v1971 = vld [vmem:[%s6 + $0xe8] sm:$0xff]
        %v1972 = vld [vmem:[%s6 + $0xf0] sm:$0xff]
        %v1973 = vld [vmem:[%s6 + $0xf8] sm:$0xff]
        %1975 = vset.pattern.permute.xlu0 0
        %1976 = vperm.xlu0 %1975, %v1942
        %v1977 = vpop.permute.xlu0 %1976
        %1980 = vset.pattern.permute.xlu0 0
        %1981 = vperm.xlu0 %1980, %v1943
        %v1982 = vpop.permute.xlu0 %1981
        %1985 = vset.pattern.permute.xlu0 0
        %1986 = vperm.xlu0 %1985, %v1944
        %v1987 = vpop.permute.xlu0 %1986
        %1990 = vset.pattern.permute.xlu0 0
        %1991 = vperm.xlu0 %1990, %v1945
        %v1992 = vpop.permute.xlu0 %1991
        %1995 = vset.pattern.permute.xlu0 0
        %1996 = vperm.xlu0 %1995, %v1946
        %v1997 = vpop.permute.xlu0 %1996
        %2000 = vset.pattern.permute.xlu0 0
        %2001 = vperm.xlu0 %2000, %v1947
        %v2002 = vpop.permute.xlu0 %2001
        %2005 = vset.pattern.permute.xlu0 0
        %2006 = vperm.xlu0 %2005, %v1948
        %v2007 = vpop.permute.xlu0 %2006
        %2010 = vset.pattern.permute.xlu0 0
        %2011 = vperm.xlu0 %2010, %v1949
        %v2012 = vpop.permute.xlu0 %2011
        %2015 = vset.pattern.permute.xlu0 0
        %2016 = vperm.xlu0 %2015, %v1950
        %v2017 = vpop.permute.xlu0 %2016
        %2020 = vset.pattern.permute.xlu0 0
        %2021 = vperm.xlu0 %2020, %v1951
        %v2022 = vpop.permute.xlu0 %2021
        %2025 = vset.pattern.permute.xlu0 0
        %2026 = vperm.xlu0 %2025, %v1952
        %v2027 = vpop.permute.xlu0 %2026
        %2030 = vset.pattern.permute.xlu0 0
        %2031 = vperm.xlu0 %2030, %v1953
        %v2032 = vpop.permute.xlu0 %2031
        %2035 = vset.pattern.permute.xlu0 0
        %2036 = vperm.xlu0 %2035, %v1954
        %v2037 = vpop.permute.xlu0 %2036
        %2040 = vset.pattern.permute.xlu0 0
        %2041 = vperm.xlu0 %2040, %v1955
        %v2042 = vpop.permute.xlu0 %2041
        %2045 = vset.pattern.permute.xlu0 0
        %2046 = vperm.xlu0 %2045, %v1956
        %v2047 = vpop.permute.xlu0 %2046
        %2050 = vset.pattern.permute.xlu0 0
        %2051 = vperm.xlu0 %2050, %v1957
        %v2052 = vpop.permute.xlu0 %2051
        %2055 = vset.pattern.permute.xlu0 0
        %2056 = vperm.xlu0 %2055, %v1958
        %v2057 = vpop.permute.xlu0 %2056
        %2060 = vset.pattern.permute.xlu0 0
        %2061 = vperm.xlu0 %2060, %v1959
        %v2062 = vpop.permute.xlu0 %2061
        %2065 = vset.pattern.permute.xlu0 0
        %2066 = vperm.xlu0 %2065, %v1960
        %v2067 = vpop.permute.xlu0 %2066
        %2070 = vset.pattern.permute.xlu0 0
        %2071 = vperm.xlu0 %2070, %v1961
        %v2072 = vpop.permute.xlu0 %2071
        %2075 = vset.pattern.permute.xlu0 0
        %2076 = vperm.xlu0 %2075, %v1962
        %v2077 = vpop.permute.xlu0 %2076
        %2080 = vset.pattern.permute.xlu0 0
        %2081 = vperm.xlu0 %2080, %v1963
        %v2082 = vpop.permute.xlu0 %2081
        %2085 = vset.pattern.permute.xlu0 0
        %2086 = vperm.xlu0 %2085, %v1964
        %v2087 = vpop.permute.xlu0 %2086
        %2090 = vset.pattern.permute.xlu0 0
        %2091 = vperm.xlu0 %2090, %v1965
        %v2092 = vpop.permute.xlu0 %2091
        %2095 = vset.pattern.permute.xlu0 0
        %2096 = vperm.xlu0 %2095, %v1966
        %v2097 = vpop.permute.xlu0 %2096
        %2100 = vset.pattern.permute.xlu0 0
        %2101 = vperm.xlu0 %2100, %v1967
        %v2102 = vpop.permute.xlu0 %2101
        %2105 = vset.pattern.permute.xlu0 0
        %2106 = vperm.xlu0 %2105, %v1968
        %v2107 = vpop.permute.xlu0 %2106
        %2110 = vset.pattern.permute.xlu0 0
        %2111 = vperm.xlu0 %2110, %v1969
        %v2112 = vpop.permute.xlu0 %2111
        %2115 = vset.pattern.permute.xlu0 0
        %2116 = vperm.xlu0 %2115, %v1970
        %v2117 = vpop.permute.xlu0 %2116
        %2120 = vset.pattern.permute.xlu0 0
        %2121 = vperm.xlu0 %2120, %v1971
        %v2122 = vpop.permute.xlu0 %2121
        %2125 = vset.pattern.permute.xlu0 0
        %2126 = vperm.xlu0 %2125, %v1972
        %v2127 = vpop.permute.xlu0 %2126
        %2130 = vset.pattern.permute.xlu0 0
        %2131 = vperm.xlu0 %2130, %v1973
        %v2132 = vpop.permute.xlu0 %2131
        %v2166 = vunpack.c.l.b16 %v1910
        %v2167 = vunpack.c.h.b16 %v1910
        %v2168 = vunpack.c.l.b16 %v1911
        %v2169 = vunpack.c.h.b16 %v1911
        %v2170 = vunpack.c.l.b16 %v1912
        %v2171 = vunpack.c.h.b16 %v1912
        %v2172 = vunpack.c.l.b16 %v1913
        %v2173 = vunpack.c.h.b16 %v1913
        %v2174 = vunpack.c.l.b16 %v1914
        %v2175 = vunpack.c.h.b16 %v1914
        %v2176 = vunpack.c.l.b16 %v1915
        %v2177 = vunpack.c.h.b16 %v1915
        %v2178 = vunpack.c.l.b16 %v1916
        %v2179 = vunpack.c.h.b16 %v1916
        %v2180 = vunpack.c.l.b16 %v1917
        %v2181 = vunpack.c.h.b16 %v1917
        %v2182 = vunpack.c.l.b16 %v1918
        %v2183 = vunpack.c.h.b16 %v1918
        %v2184 = vunpack.c.l.b16 %v1919
        %v2185 = vunpack.c.h.b16 %v1919
        %v2186 = vunpack.c.l.b16 %v1920
        %v2187 = vunpack.c.h.b16 %v1920
        %v2188 = vunpack.c.l.b16 %v1921
        %v2189 = vunpack.c.h.b16 %v1921
        %v2190 = vunpack.c.l.b16 %v1922
        %v2191 = vunpack.c.h.b16 %v1922
        %v2192 = vunpack.c.l.b16 %v1923
        %v2193 = vunpack.c.h.b16 %v1923
        %v2194 = vunpack.c.l.b16 %v1924
        %v2195 = vunpack.c.h.b16 %v1924
        %v2196 = vunpack.c.l.b16 %v1925
        %v2197 = vunpack.c.h.b16 %v1925
        %v2198 = vunpack.c.l.b16 %v1926
        %v2199 = vunpack.c.h.b16 %v1926
        %v2200 = vunpack.c.l.b16 %v1927
        %v2201 = vunpack.c.h.b16 %v1927
        %v2202 = vunpack.c.l.b16 %v1928
        %v2203 = vunpack.c.h.b16 %v1928
        %v2204 = vunpack.c.l.b16 %v1929
        %v2205 = vunpack.c.h.b16 %v1929
        %v2206 = vunpack.c.l.b16 %v1930
        %v2207 = vunpack.c.h.b16 %v1930
        %v2208 = vunpack.c.l.b16 %v1931
        %v2209 = vunpack.c.h.b16 %v1931
        %v2210 = vunpack.c.l.b16 %v1932
        %v2211 = vunpack.c.h.b16 %v1932
        %v2212 = vunpack.c.l.b16 %v1933
        %v2213 = vunpack.c.h.b16 %v1933
        %v2214 = vunpack.c.l.b16 %v1934
        %v2215 = vunpack.c.h.b16 %v1934
        %v2216 = vunpack.c.l.b16 %v1935
        %v2217 = vunpack.c.h.b16 %v1935
        %v2218 = vunpack.c.l.b16 %v1936
        %v2219 = vunpack.c.h.b16 %v1936
        %v2220 = vunpack.c.l.b16 %v1937
        %v2221 = vunpack.c.h.b16 %v1937
        %v2222 = vunpack.c.l.b16 %v1938
        %v2223 = vunpack.c.h.b16 %v1938
        %v2224 = vunpack.c.l.b16 %v1939
        %v2225 = vunpack.c.h.b16 %v1939
        %v2226 = vunpack.c.l.b16 %v1940
        %v2227 = vunpack.c.h.b16 %v1940
        %v2228 = vunpack.c.l.b16 %v1941
        %v2229 = vunpack.c.h.b16 %v1941
        %v2230 = vpack.c.b16 %v2168, %v2166
        %v2231 = vpack.c.b16 %v2169, %v2167
        %v2232 = vpack.c.b16 %v2172, %v2170
        %v2233 = vpack.c.b16 %v2173, %v2171
        %v2234 = vpack.c.b16 %v2176, %v2174
        %v2235 = vpack.c.b16 %v2177, %v2175
        %v2236 = vpack.c.b16 %v2180, %v2178
        %v2237 = vpack.c.b16 %v2181, %v2179
        %v2238 = vpack.c.b16 %v2184, %v2182
        %v2239 = vpack.c.b16 %v2185, %v2183
        %v2240 = vpack.c.b16 %v2188, %v2186
        %v2241 = vpack.c.b16 %v2189, %v2187
        %v2242 = vpack.c.b16 %v2192, %v2190
        %v2243 = vpack.c.b16 %v2193, %v2191
        %v2244 = vpack.c.b16 %v2196, %v2194
        %v2245 = vpack.c.b16 %v2197, %v2195
        %v2246 = vpack.c.b16 %v2200, %v2198
        %v2247 = vpack.c.b16 %v2201, %v2199
        %v2248 = vpack.c.b16 %v2204, %v2202
        %v2249 = vpack.c.b16 %v2205, %v2203
        %v2250 = vpack.c.b16 %v2208, %v2206
        %v2251 = vpack.c.b16 %v2209, %v2207
        %v2252 = vpack.c.b16 %v2212, %v2210
        %v2253 = vpack.c.b16 %v2213, %v2211
        %v2254 = vpack.c.b16 %v2216, %v2214
        %v2255 = vpack.c.b16 %v2217, %v2215
        %v2256 = vpack.c.b16 %v2220, %v2218
        %v2257 = vpack.c.b16 %v2221, %v2219
        %v2258 = vpack.c.b16 %v2224, %v2222
        %v2259 = vpack.c.b16 %v2225, %v2223
        %v2260 = vpack.c.b16 %v2228, %v2226
        %v2261 = vpack.c.b16 %v2229, %v2227
        %2294 = vmatprep.subr.bf16.mxu0 %v1847
        %2295 = vmatpush1.bf16.msra.mxu0 %v1846
        %2296 = vmatprep.subr.bf16.mxu0 %v1851
        %2297 = vmatpush1.bf16.msra.mxu0 %v1850
        %2298 = vmatprep.subr.bf16.mxu0 %v1855
        %2299 = vmatpush1.bf16.msra.mxu0 %v1854
        %2300 = vmatprep.subr.bf16.mxu0 %v1859
        %2301 = vmatpush1.bf16.msra.mxu0 %v1858
        %2302 = vmatprep.subr.bf16.mxu0 %v1863
        %2303 = vmatpush1.bf16.msra.mxu0 %v1862
        %2304 = vmatprep.subr.bf16.mxu0 %v1867
        %2305 = vmatpush1.bf16.msra.mxu0 %v1866
        %2306 = vmatprep.subr.bf16.mxu0 %v1871
        %2307 = vmatpush1.bf16.msra.mxu0 %v1870
        %2308 = vmatprep.subr.bf16.mxu0 %v1875
        %2309 = vmatpush1.bf16.msra.mxu0 %v1874
        %2310 = vmatprep.subr.bf16.mxu0 %v1879
        %2311 = vmatpush1.bf16.msra.mxu0 %v1878
        %2312 = vmatprep.subr.bf16.mxu0 %v1883
        %2313 = vmatpush1.bf16.msra.mxu0 %v1882
        %2314 = vmatprep.subr.bf16.mxu0 %v1887
        %2315 = vmatpush1.bf16.msra.mxu0 %v1886
        %2316 = vmatprep.subr.bf16.mxu0 %v1891
        %2317 = vmatpush1.bf16.msra.mxu0 %v1890
        %2318 = vmatprep.subr.bf16.mxu0 %v1895
        %2319 = vmatpush1.bf16.msra.mxu0 %v1894
        %2320 = vmatprep.subr.bf16.mxu0 %v1899
        %2321 = vmatpush1.bf16.msra.mxu0 %v1898
        %2322 = vmatprep.subr.bf16.mxu0 %v1903
        %2323 = vmatpush1.bf16.msra.mxu0 %v1902
        %2324 = vmatprep.subr.bf16.mxu0 %v1907
        %2325 = vmatpush1.bf16.msra.mxu0 %v1906
        %2326 = vmatprep.mubr.bf16.mxu0 %v2231
        %2327 = vmatmul.mubr.bf16.gmra.mrb[0].mxu0 %v2230
        %v2328 = vpop.f32.mrb[0].mxu0
        %v2329 = vadd.f32 %v1977, %v2328
        %v2330 = vpop.f32.mrb[0].mxu0
        %v2331 = vadd.f32 %v1977, %v2330
        %v2332 = vpop.f32.mrb[0].mxu0
        %v2333 = vadd.f32 %v1982, %v2332
        %v2334 = vpop.f32.mrb[0].mxu0
        %v2335 = vadd.f32 %v1982, %v2334
        %2336 = vmatprep.mubr.bf16.mxu0 %v2233
        %2337 = vmatmul.mubr.bf16.gmra.mrb[0].mxu0 %v2232
        %v2338 = vpop.f32.mrb[0].mxu0
        %v2339 = vadd.f32 %v1987, %v2338
        %v2340 = vpop.f32.mrb[0].mxu0
        %v2341 = vadd.f32 %v1987, %v2340
        %v2342 = vpop.f32.mrb[0].mxu0
        %v2343 = vadd.f32 %v1992, %v2342
        %v2344 = vpop.f32.mrb[0].mxu0
        %v2345 = vadd.f32 %v1992, %v2344
        %2346 = vmatprep.mubr.bf16.mxu0 %v2235
        %2347 = vmatmul.mubr.bf16.gmra.mrb[0].mxu0 %v2234
        %v2348 = vpop.f32.mrb[0].mxu0
        %v2349 = vadd.f32 %v1997, %v2348
        %v2350 = vpop.f32.mrb[0].mxu0
        %v2351 = vadd.f32 %v1997, %v2350
        %v2352 = vpop.f32.mrb[0].mxu0
        %v2353 = vadd.f32 %v2002, %v2352
        %v2354 = vpop.f32.mrb[0].mxu0
        %v2355 = vadd.f32 %v2002, %v2354
        %2356 = vmatprep.mubr.bf16.mxu0 %v2237
        %2357 = vmatmul.mubr.bf16.gmra.mrb[0].mxu0 %v2236
        %v2358 = vpop.f32.mrb[0].mxu0
        %v2359 = vadd.f32 %v2007, %v2358
        %v2360 = vpop.f32.mrb[0].mxu0
        %v2361 = vadd.f32 %v2007, %v2360
        %v2362 = vpop.f32.mrb[0].mxu0
        %v2363 = vadd.f32 %v2012, %v2362
        %v2364 = vpop.f32.mrb[0].mxu0
        %v2365 = vadd.f32 %v2012, %v2364
        %2366 = vmatprep.mubr.bf16.mxu0 %v2239
        %2367 = vmatmul.mubr.bf16.gmra.mrb[0].mxu0 %v2238
        %v2368 = vpop.f32.mrb[0].mxu0
        %v2369 = vadd.f32 %v2017, %v2368
        %v2370 = vpop.f32.mrb[0].mxu0
        %v2371 = vadd.f32 %v2017, %v2370
        %v2372 = vpop.f32.mrb[0].mxu0
        %v2373 = vadd.f32 %v2022, %v2372
        %v2374 = vpop.f32.mrb[0].mxu0
        %v2375 = vadd.f32 %v2022, %v2374
        %2376 = vmatprep.mubr.bf16.mxu0 %v2241
        %2377 = vmatmul.mubr.bf16.gmra.mrb[0].mxu0 %v2240
        %v2378 = vpop.f32.mrb[0].mxu0
        %v2379 = vadd.f32 %v2027, %v2378
        %v2380 = vpop.f32.mrb[0].mxu0
        %v2381 = vadd.f32 %v2027, %v2380
        %v2382 = vpop.f32.mrb[0].mxu0
        %v2383 = vadd.f32 %v2032, %v2382
        %v2384 = vpop.f32.mrb[0].mxu0
        %v2385 = vadd.f32 %v2032, %v2384
        %2386 = vmatprep.mubr.bf16.mxu0 %v2243
        %2387 = vmatmul.mubr.bf16.gmra.mrb[0].mxu0 %v2242
        %v2388 = vpop.f32.mrb[0].mxu0
        %v2389 = vadd.f32 %v2037, %v2388
        %v2390 = vpop.f32.mrb[0].mxu0
        %v2391 = vadd.f32 %v2037, %v2390
        %v2392 = vpop.f32.mrb[0].mxu0
        %v2393 = vadd.f32 %v2042, %v2392
        %v2394 = vpop.f32.mrb[0].mxu0
        %v2395 = vadd.f32 %v2042, %v2394
        %2396 = vmatprep.mubr.bf16.mxu0 %v2245
        %2397 = vmatmul.mubr.bf16.gmra.mrb[0].mxu0 %v2244
        %v2398 = vpop.f32.mrb[0].mxu0
        %v2399 = vadd.f32 %v2047, %v2398
        %v2400 = vpop.f32.mrb[0].mxu0
        %v2401 = vadd.f32 %v2047, %v2400
        %v2402 = vpop.f32.mrb[0].mxu0
        %v2403 = vadd.f32 %v2052, %v2402
        %v2404 = vpop.f32.mrb[0].mxu0
        %v2405 = vadd.f32 %v2052, %v2404
        %2406 = vmatprep.mubr.bf16.mxu0 %v2247
        %2407 = vmatmul.mubr.bf16.gmra.mrb[0].mxu0 %v2246
        %v2408 = vpop.f32.mrb[0].mxu0
        %v2409 = vadd.f32 %v2057, %v2408
        %v2410 = vpop.f32.mrb[0].mxu0
        %v2411 = vadd.f32 %v2057, %v2410
        %v2412 = vpop.f32.mrb[0].mxu0
        %v2413 = vadd.f32 %v2062, %v2412
        %v2414 = vpop.f32.mrb[0].mxu0
        %v2415 = vadd.f32 %v2062, %v2414
        %2416 = vmatprep.mubr.bf16.mxu0 %v2249
        %2417 = vmatmul.mubr.bf16.gmra.mrb[0].mxu0 %v2248
        %v2418 = vpop.f32.mrb[0].mxu0
        %v2419 = vadd.f32 %v2067, %v2418
        %v2420 = vpop.f32.mrb[0].mxu0
        %v2421 = vadd.f32 %v2067, %v2420
        %v2422 = vpop.f32.mrb[0].mxu0
        %v2423 = vadd.f32 %v2072, %v2422
        %v2424 = vpop.f32.mrb[0].mxu0
        %v2425 = vadd.f32 %v2072, %v2424
        %2426 = vmatprep.mubr.bf16.mxu0 %v2251
        %2427 = vmatmul.mubr.bf16.gmra.mrb[0].mxu0 %v2250
        %v2428 = vpop.f32.mrb[0].mxu0
        %v2429 = vadd.f32 %v2077, %v2428
        %v2430 = vpop.f32.mrb[0].mxu0
        %v2431 = vadd.f32 %v2077, %v2430
        %v2432 = vpop.f32.mrb[0].mxu0
        %v2433 = vadd.f32 %v2082, %v2432
        %v2434 = vpop.f32.mrb[0].mxu0
        %v2435 = vadd.f32 %v2082, %v2434
        %2436 = vmatprep.mubr.bf16.mxu0 %v2253
        %2437 = vmatmul.mubr.bf16.gmra.mrb[0].mxu0 %v2252
        %v2438 = vpop.f32.mrb[0].mxu0
        %v2439 = vadd.f32 %v2087, %v2438
        %v2440 = vpop.f32.mrb[0].mxu0
        %v2441 = vadd.f32 %v2087, %v2440
        %v2442 = vpop.f32.mrb[0].mxu0
        %v2443 = vadd.f32 %v2092, %v2442
        %v2444 = vpop.f32.mrb[0].mxu0
        %v2445 = vadd.f32 %v2092, %v2444
        %2446 = vmatprep.mubr.bf16.mxu0 %v2255
        %2447 = vmatmul.mubr.bf16.gmra.mrb[0].mxu0 %v2254
        %v2448 = vpop.f32.mrb[0].mxu0
        %v2449 = vadd.f32 %v2097, %v2448
        %v2450 = vpop.f32.mrb[0].mxu0
        %v2451 = vadd.f32 %v2097, %v2450
        %v2452 = vpop.f32.mrb[0].mxu0
        %v2453 = vadd.f32 %v2102, %v2452
        %v2454 = vpop.f32.mrb[0].mxu0
        %v2455 = vadd.f32 %v2102, %v2454
        %2456 = vmatprep.mubr.bf16.mxu0 %v2257
        %2457 = vmatmul.mubr.bf16.gmra.mrb[0].mxu0 %v2256
        %v2458 = vpop.f32.mrb[0].mxu0
        %v2459 = vadd.f32 %v2107, %v2458
        %v2460 = vpop.f32.mrb[0].mxu0
        %v2461 = vadd.f32 %v2107, %v2460
        %v2462 = vpop.f32.mrb[0].mxu0
        %v2463 = vadd.f32 %v2112, %v2462
        %v2464 = vpop.f32.mrb[0].mxu0
        %v2465 = vadd.f32 %v2112, %v2464
        %2466 = vmatprep.mubr.bf16.mxu0 %v2259
        %2467 = vmatmul.mubr.bf16.gmra.mrb[0].mxu0 %v2258
        %v2468 = vpop.f32.mrb[0].mxu0
        %v2469 = vadd.f32 %v2117, %v2468
        %v2470 = vpop.f32.mrb[0].mxu0
        %v2471 = vadd.f32 %v2117, %v2470
        %v2472 = vpop.f32.mrb[0].mxu0
        %v2473 = vadd.f32 %v2122, %v2472
        %v2474 = vpop.f32.mrb[0].mxu0
        %v2475 = vadd.f32 %v2122, %v2474
        %2476 = vmatprep.mubr.bf16.mxu0 %v2261
        %2477 = vmatmul.mubr.bf16.gmra.mrb[0].mxu0 %v2260
        %v2478 = vpop.f32.mrb[0].mxu0
        %v2479 = vadd.f32 %v2127, %v2478
        %v2480 = vpop.f32.mrb[0].mxu0
        %v2481 = vadd.f32 %v2127, %v2480
        %v2482 = vpop.f32.mrb[0].mxu0
        %v2483 = vadd.f32 %v2132, %v2482
        %v2484 = vpop.f32.mrb[0].mxu0
        %v2485 = vadd.f32 %v2132, %v2484
        %2486 = vdwg.mxu0
        %2487 = vmatprep.subr.bf16.mxu0 %v1849
        %2488 = vmatpush1.bf16.msra.mxu0 %v1848
        %2489 = vmatprep.subr.bf16.mxu0 %v1853
        %2490 = vmatpush1.bf16.msra.mxu0 %v1852
        %2491 = vmatprep.subr.bf16.mxu0 %v1857
        %2492 = vmatpush1.bf16.msra.mxu0 %v1856
        %2493 = vmatprep.subr.bf16.mxu0 %v1861
        %2494 = vmatpush1.bf16.msra.mxu0 %v1860
        %2495 = vmatprep.subr.bf16.mxu0 %v1865
        %2496 = vmatpush1.bf16.msra.mxu0 %v1864
        %2497 = vmatprep.subr.bf16.mxu0 %v1869
        %2498 = vmatpush1.bf16.msra.mxu0 %v1868
        %2499 = vmatprep.subr.bf16.mxu0 %v1873
        %2500 = vmatpush1.bf16.msra.mxu0 %v1872
        %2501 = vmatprep.subr.bf16.mxu0 %v1877
        %2502 = vmatpush1.bf16.msra.mxu0 %v1876
        %2503 = vmatprep.subr.bf16.mxu0 %v1881
        %2504 = vmatpush1.bf16.msra.mxu0 %v1880
        %2505 = vmatprep.subr.bf16.mxu0 %v1885
        %2506 = vmatpush1.bf16.msra.mxu0 %v1884
        %2507 = vmatprep.subr.bf16.mxu0 %v1889
        %2508 = vmatpush1.bf16.msra.mxu0 %v1888
        %2509 = vmatprep.subr.bf16.mxu0 %v1893
        %2510 = vmatpush1.bf16.msra.mxu0 %v1892
        %2511 = vmatprep.subr.bf16.mxu0 %v1897
        %2512 = vmatpush1.bf16.msra.mxu0 %v1896
        %2513 = vmatprep.subr.bf16.mxu0 %v1901
        %2514 = vmatpush1.bf16.msra.mxu0 %v1900
        %2515 = vmatprep.subr.bf16.mxu0 %v1905
        %2516 = vmatpush1.bf16.msra.mxu0 %v1904
        %2517 = vmatprep.subr.bf16.mxu0 %v1909
        %2518 = vmatpush1.bf16.msra.mxu0 %v1908
        %2519 = vmatprep.mubr.bf16.mxu0 %v2231
        %2520 = vmatmul.mubr.bf16.gmra.mrb[0].mxu0 %v2230
        %v2521 = vpop.f32.mrb[0].mxu0
        %v2522 = vadd.f32 %v1977, %v2521
        %v2523 = vpop.f32.mrb[0].mxu0
        %v2524 = vadd.f32 %v1977, %v2523
        %v2525 = vpop.f32.mrb[0].mxu0
        %v2526 = vadd.f32 %v1982, %v2525
        %v2527 = vpop.f32.mrb[0].mxu0
        %v2528 = vadd.f32 %v1982, %v2527
        %2529 = vmatprep.mubr.bf16.mxu0 %v2233
        %2530 = vmatmul.mubr.bf16.gmra.mrb[0].mxu0 %v2232
        %v2531 = vpop.f32.mrb[0].mxu0
        %v2532 = vadd.f32 %v1987, %v2531
        %v2533 = vpop.f32.mrb[0].mxu0
        %v2534 = vadd.f32 %v1987, %v2533
        %v2535 = vpop.f32.mrb[0].mxu0
        %v2536 = vadd.f32 %v1992, %v2535
        %v2537 = vpop.f32.mrb[0].mxu0
        %v2538 = vadd.f32 %v1992, %v2537
        %2539 = vmatprep.mubr.bf16.mxu0 %v2235
        %2540 = vmatmul.mubr.bf16.gmra.mrb[0].mxu0 %v2234
        %v2541 = vpop.f32.mrb[0].mxu0
        %v2542 = vadd.f32 %v1997, %v2541
        %v2543 = vpop.f32.mrb[0].mxu0
        %v2544 = vadd.f32 %v1997, %v2543
        %v2545 = vpop.f32.mrb[0].mxu0
        %v2546 = vadd.f32 %v2002, %v2545
        %v2547 = vpop.f32.mrb[0].mxu0
        %v2548 = vadd.f32 %v2002, %v2547
        %2549 = vmatprep.mubr.bf16.mxu0 %v2237
        %2550 = vmatmul.mubr.bf16.gmra.mrb[0].mxu0 %v2236
        %v2551 = vpop.f32.mrb[0].mxu0
        %v2552 = vadd.f32 %v2007, %v2551
        %v2553 = vpop.f32.mrb[0].mxu0
        %v2554 = vadd.f32 %v2007, %v2553
        %v2555 = vpop.f32.mrb[0].mxu0
        %v2556 = vadd.f32 %v2012, %v2555
        %v2557 = vpop.f32.mrb[0].mxu0
        %v2558 = vadd.f32 %v2012, %v2557
        %2559 = vmatprep.mubr.bf16.mxu0 %v2239
        %2560 = vmatmul.mubr.bf16.gmra.mrb[0].mxu0 %v2238
        %v2561 = vpop.f32.mrb[0].mxu0
        %v2562 = vadd.f32 %v2017, %v2561
        %v2563 = vpop.f32.mrb[0].mxu0
        %v2564 = vadd.f32 %v2017, %v2563
        %v2565 = vpop.f32.mrb[0].mxu0
        %v2566 = vadd.f32 %v2022, %v2565
        %v2567 = vpop.f32.mrb[0].mxu0
        %v2568 = vadd.f32 %v2022, %v2567
        %2569 = vmatprep.mubr.bf16.mxu0 %v2241
        %2570 = vmatmul.mubr.bf16.gmra.mrb[0].mxu0 %v2240
        %v2571 = vpop.f32.mrb[0].mxu0
        %v2572 = vadd.f32 %v2027, %v2571
        %v2573 = vpop.f32.mrb[0].mxu0
        %v2574 = vadd.f32 %v2027, %v2573
        %v2575 = vpop.f32.mrb[0].mxu0
        %v2576 = vadd.f32 %v2032, %v2575
        %v2577 = vpop.f32.mrb[0].mxu0
        %v2578 = vadd.f32 %v2032, %v2577
        %2579 = vmatprep.mubr.bf16.mxu0 %v2243
        %2580 = vmatmul.mubr.bf16.gmra.mrb[0].mxu0 %v2242
        %v2581 = vpop.f32.mrb[0].mxu0
        %v2582 = vadd.f32 %v2037, %v2581
        %v2583 = vpop.f32.mrb[0].mxu0
        %v2584 = vadd.f32 %v2037, %v2583
        %v2585 = vpop.f32.mrb[0].mxu0
        %v2586 = vadd.f32 %v2042, %v2585
        %v2587 = vpop.f32.mrb[0].mxu0
        %v2588 = vadd.f32 %v2042, %v2587
        %2589 = vmatprep.mubr.bf16.mxu0 %v2245
        %2590 = vmatmul.mubr.bf16.gmra.mrb[0].mxu0 %v2244
        %v2591 = vpop.f32.mrb[0].mxu0
        %v2592 = vadd.f32 %v2047, %v2591
        %v2593 = vpop.f32.mrb[0].mxu0
        %v2594 = vadd.f32 %v2047, %v2593
        %v2595 = vpop.f32.mrb[0].mxu0
        %v2596 = vadd.f32 %v2052, %v2595
        %v2597 = vpop.f32.mrb[0].mxu0
        %v2598 = vadd.f32 %v2052, %v2597
        %2599 = vmatprep.mubr.bf16.mxu0 %v2247
        %2600 = vmatmul.mubr.bf16.gmra.mrb[0].mxu0 %v2246
        %v2601 = vpop.f32.mrb[0].mxu0
        %v2602 = vadd.f32 %v2057, %v2601
        %v2603 = vpop.f32.mrb[0].mxu0
        %v2604 = vadd.f32 %v2057, %v2603
        %v2605 = vpop.f32.mrb[0].mxu0
        %v2606 = vadd.f32 %v2062, %v2605
        %v2607 = vpop.f32.mrb[0].mxu0
        %v2608 = vadd.f32 %v2062, %v2607
        %2609 = vmatprep.mubr.bf16.mxu0 %v2249
        %2610 = vmatmul.mubr.bf16.gmra.mrb[0].mxu0 %v2248
        %v2611 = vpop.f32.mrb[0].mxu0
        %v2612 = vadd.f32 %v2067, %v2611
        %v2613 = vpop.f32.mrb[0].mxu0
        %v2614 = vadd.f32 %v2067, %v2613
        %v2615 = vpop.f32.mrb[0].mxu0
        %v2616 = vadd.f32 %v2072, %v2615
        %v2617 = vpop.f32.mrb[0].mxu0
        %v2618 = vadd.f32 %v2072, %v2617
        %2619 = vmatprep.mubr.bf16.mxu0 %v2251
        %2620 = vmatmul.mubr.bf16.gmra.mrb[0].mxu0 %v2250
        %v2621 = vpop.f32.mrb[0].mxu0
        %v2622 = vadd.f32 %v2077, %v2621
        %v2623 = vpop.f32.mrb[0].mxu0
        %v2624 = vadd.f32 %v2077, %v2623
        %v2625 = vpop.f32.mrb[0].mxu0
        %v2626 = vadd.f32 %v2082, %v2625
        %v2627 = vpop.f32.mrb[0].mxu0
        %v2628 = vadd.f32 %v2082, %v2627
        %2629 = vmatprep.mubr.bf16.mxu0 %v2253
        %2630 = vmatmul.mubr.bf16.gmra.mrb[0].mxu0 %v2252
        %v2631 = vpop.f32.mrb[0].mxu0
        %v2632 = vadd.f32 %v2087, %v2631
        %v2633 = vpop.f32.mrb[0].mxu0
        %v2634 = vadd.f32 %v2087, %v2633
        %v2635 = vpop.f32.mrb[0].mxu0
        %v2636 = vadd.f32 %v2092, %v2635
        %v2637 = vpop.f32.mrb[0].mxu0
        %v2638 = vadd.f32 %v2092, %v2637
        %2639 = vmatprep.mubr.bf16.mxu0 %v2255
        %2640 = vmatmul.mubr.bf16.gmra.mrb[0].mxu0 %v2254
        %v2641 = vpop.f32.mrb[0].mxu0
        %v2642 = vadd.f32 %v2097, %v2641
        %v2643 = vpop.f32.mrb[0].mxu0
        %v2644 = vadd.f32 %v2097, %v2643
        %v2645 = vpop.f32.mrb[0].mxu0
        %v2646 = vadd.f32 %v2102, %v2645
        %v2647 = vpop.f32.mrb[0].mxu0
        %v2648 = vadd.f32 %v2102, %v2647
        %2649 = vmatprep.mubr.bf16.mxu0 %v2257
        %2650 = vmatmul.mubr.bf16.gmra.mrb[0].mxu0 %v2256
        %v2651 = vpop.f32.mrb[0].mxu0
        %v2652 = vadd.f32 %v2107, %v2651
        %v2653 = vpop.f32.mrb[0].mxu0
        %v2654 = vadd.f32 %v2107, %v2653
        %v2655 = vpop.f32.mrb[0].mxu0
        %v2656 = vadd.f32 %v2112, %v2655
        %v2657 = vpop.f32.mrb[0].mxu0
        %v2658 = vadd.f32 %v2112, %v2657
        %2659 = vmatprep.mubr.bf16.mxu0 %v2259
        %2660 = vmatmul.mubr.bf16.gmra.mrb[0].mxu0 %v2258
        %v2661 = vpop.f32.mrb[0].mxu0
        %v2662 = vadd.f32 %v2117, %v2661
        %v2663 = vpop.f32.mrb[0].mxu0
        %v2664 = vadd.f32 %v2117, %v2663
        %v2665 = vpop.f32.mrb[0].mxu0
        %v2666 = vadd.f32 %v2122, %v2665
        %v2667 = vpop.f32.mrb[0].mxu0
        %v2668 = vadd.f32 %v2122, %v2667
        %2669 = vmatprep.mubr.bf16.mxu0 %v2261
        %2670 = vmatmul.mubr.bf16.gmra.mrb[0].mxu0 %v2260
        %v2671 = vpop.f32.mrb[0].mxu0
        %v2672 = vadd.f32 %v2127, %v2671
        %v2673 = vpop.f32.mrb[0].mxu0
        %v2674 = vadd.f32 %v2127, %v2673
        %v2675 = vpop.f32.mrb[0].mxu0
        %v2676 = vadd.f32 %v2132, %v2675
        %v2677 = vpop.f32.mrb[0].mxu0
        %v2678 = vadd.f32 %v2132, %v2677
        %2679 = vdwg.mxu0
        %v2680 = vmax.f32 %v2329, 0.0
        %v2681 = vmax.f32 %v2331, 0.0
        %v2682 = vmax.f32 %v2522, 0.0
        %v2683 = vmax.f32 %v2524, 0.0
        %v2684 = vmax.f32 %v2333, 0.0
        %v2685 = vmax.f32 %v2335, 0.0
        %v2686 = vmax.f32 %v2526, 0.0
        %v2687 = vmax.f32 %v2528, 0.0
        %v2688 = vmax.f32 %v2339, 0.0
        %v2689 = vmax.f32 %v2341, 0.0
        %v2690 = vmax.f32 %v2532, 0.0
        %v2691 = vmax.f32 %v2534, 0.0
        %v2692 = vmax.f32 %v2343, 0.0
        %v2693 = vmax.f32 %v2345, 0.0
        %v2694 = vmax.f32 %v2536, 0.0
        %v2695 = vmax.f32 %v2538, 0.0
        %v2696 = vmax.f32 %v2349, 0.0
        %v2697 = vmax.f32 %v2351, 0.0
        %v2698 = vmax.f32 %v2542, 0.0
        %v2699 = vmax.f32 %v2544, 0.0
        %v2700 = vmax.f32 %v2353, 0.0
        %v2701 = vmax.f32 %v2355, 0.0
        %v2702 = vmax.f32 %v2546, 0.0
        %v2703 = vmax.f32 %v2548, 0.0
        %v2704 = vmax.f32 %v2359, 0.0
        %v2705 = vmax.f32 %v2361, 0.0
        %v2706 = vmax.f32 %v2552, 0.0
        %v2707 = vmax.f32 %v2554, 0.0
        %v2708 = vmax.f32 %v2363, 0.0
        %v2709 = vmax.f32 %v2365, 0.0
        %v2710 = vmax.f32 %v2556, 0.0
        %v2711 = vmax.f32 %v2558, 0.0
        %v2712 = vmax.f32 %v2369, 0.0
        %v2713 = vmax.f32 %v2371, 0.0
        %v2714 = vmax.f32 %v2562, 0.0
        %v2715 = vmax.f32 %v2564, 0.0
        %v2716 = vmax.f32 %v2373, 0.0
        %v2717 = vmax.f32 %v2375, 0.0
        %v2718 = vmax.f32 %v2566, 0.0
        %v2719 = vmax.f32 %v2568, 0.0
        %v2720 = vmax.f32 %v2379, 0.0
        %v2721 = vmax.f32 %v2381, 0.0
        %v2722 = vmax.f32 %v2572, 0.0
        %v2723 = vmax.f32 %v2574, 0.0
        %v2724 = vmax.f32 %v2383, 0.0
        %v2725 = vmax.f32 %v2385, 0.0
        %v2726 = vmax.f32 %v2576, 0.0
        %v2727 = vmax.f32 %v2578, 0.0
        %v2728 = vmax.f32 %v2389, 0.0
        %v2729 = vmax.f32 %v2391, 0.0
        %v2730 = vmax.f32 %v2582, 0.0
        %v2731 = vmax.f32 %v2584, 0.0
        %v2732 = vmax.f32 %v2393, 0.0
        %v2733 = vmax.f32 %v2395, 0.0
        %v2734 = vmax.f32 %v2586, 0.0
        %v2735 = vmax.f32 %v2588, 0.0
        %v2736 = vmax.f32 %v2399, 0.0
        %v2737 = vmax.f32 %v2401, 0.0
        %v2738 = vmax.f32 %v2592, 0.0
        %v2739 = vmax.f32 %v2594, 0.0
        %v2740 = vmax.f32 %v2403, 0.0
        %v2741 = vmax.f32 %v2405, 0.0
        %v2742 = vmax.f32 %v2596, 0.0
        %v2743 = vmax.f32 %v2598, 0.0
        %v2744 = vmax.f32 %v2409, 0.0
        %v2745 = vmax.f32 %v2411, 0.0
        %v2746 = vmax.f32 %v2602, 0.0
        %v2747 = vmax.f32 %v2604, 0.0
        %v2748 = vmax.f32 %v2413, 0.0
        %v2749 = vmax.f32 %v2415, 0.0
        %v2750 = vmax.f32 %v2606, 0.0
        %v2751 = vmax.f32 %v2608, 0.0
        %v2752 = vmax.f32 %v2419, 0.0
        %v2753 = vmax.f32 %v2421, 0.0
        %v2754 = vmax.f32 %v2612, 0.0
        %v2755 = vmax.f32 %v2614, 0.0
        %v2756 = vmax.f32 %v2423, 0.0
        %v2757 = vmax.f32 %v2425, 0.0
        %v2758 = vmax.f32 %v2616, 0.0
        %v2759 = vmax.f32 %v2618, 0.0
        %v2760 = vmax.f32 %v2429, 0.0
        %v2761 = vmax.f32 %v2431, 0.0
        %v2762 = vmax.f32 %v2622, 0.0
        %v2763 = vmax.f32 %v2624, 0.0
        %v2764 = vmax.f32 %v2433, 0.0
        %v2765 = vmax.f32 %v2435, 0.0
        %v2766 = vmax.f32 %v2626, 0.0
        %v2767 = vmax.f32 %v2628, 0.0
        %v2768 = vmax.f32 %v2439, 0.0
        %v2769 = vmax.f32 %v2441, 0.0
        %v2770 = vmax.f32 %v2632, 0.0
        %v2771 = vmax.f32 %v2634, 0.0
        %v2772 = vmax.f32 %v2443, 0.0
        %v2773 = vmax.f32 %v2445, 0.0
        %v2774 = vmax.f32 %v2636, 0.0
        %v2775 = vmax.f32 %v2638, 0.0
        %v2776 = vmax.f32 %v2449, 0.0
        %v2777 = vmax.f32 %v2451, 0.0
        %v2778 = vmax.f32 %v2642, 0.0
        %v2779 = vmax.f32 %v2644, 0.0
        %v2780 = vmax.f32 %v2453, 0.0
        %v2781 = vmax.f32 %v2455, 0.0
        %v2782 = vmax.f32 %v2646, 0.0
        %v2783 = vmax.f32 %v2648, 0.0
        %v2784 = vmax.f32 %v2459, 0.0
        %v2785 = vmax.f32 %v2461, 0.0
        %v2786 = vmax.f32 %v2652, 0.0
        %v2787 = vmax.f32 %v2654, 0.0
        %v2788 = vmax.f32 %v2463, 0.0
        %v2789 = vmax.f32 %v2465, 0.0
        %v2790 = vmax.f32 %v2656, 0.0
        %v2791 = vmax.f32 %v2658, 0.0
        %v2792 = vmax.f32 %v2469, 0.0
        %v2793 = vmax.f32 %v2471, 0.0
        %v2794 = vmax.f32 %v2662, 0.0
        %v2795 = vmax.f32 %v2664, 0.0
        %v2796 = vmax.f32 %v2473, 0.0
        %v2797 = vmax.f32 %v2475, 0.0
        %v2798 = vmax.f32 %v2666, 0.0
        %v2799 = vmax.f32 %v2668, 0.0
        %v2800 = vmax.f32 %v2479, 0.0
        %v2801 = vmax.f32 %v2481, 0.0
        %v2802 = vmax.f32 %v2672, 0.0
        %v2803 = vmax.f32 %v2674, 0.0
        %v2804 = vmax.f32 %v2483, 0.0
        %v2805 = vmax.f32 %v2485, 0.0
        %v2806 = vmax.f32 %v2676, 0.0
        %v2807 = vmax.f32 %v2678, 0.0
        %v2808 = vpack.c.bf16 %v2684, %v2680
        %v2809 = vpack.c.bf16 %v2685, %v2681
        %v2810 = vpack.c.bf16 %v2686, %v2682
        %v2811 = vpack.c.bf16 %v2687, %v2683
        %v2812 = vpack.c.bf16 %v2692, %v2688
        %v2813 = vpack.c.bf16 %v2693, %v2689
        %v2814 = vpack.c.bf16 %v2694, %v2690
        %v2815 = vpack.c.bf16 %v2695, %v2691
        %v2816 = vpack.c.bf16 %v2700, %v2696
        %v2817 = vpack.c.bf16 %v2701, %v2697
        %v2818 = vpack.c.bf16 %v2702, %v2698
        %v2819 = vpack.c.bf16 %v2703, %v2699
        %v2820 = vpack.c.bf16 %v2708, %v2704
        %v2821 = vpack.c.bf16 %v2709, %v2705
        %v2822 = vpack.c.bf16 %v2710, %v2706
        %v2823 = vpack.c.bf16 %v2711, %v2707
        %v2824 = vpack.c.bf16 %v2716, %v2712
        %v2825 = vpack.c.bf16 %v2717, %v2713
        %v2826 = vpack.c.bf16 %v2718, %v2714
        %v2827 = vpack.c.bf16 %v2719, %v2715
        %v2828 = vpack.c.bf16 %v2724, %v2720
        %v2829 = vpack.c.bf16 %v2725, %v2721
        %v2830 = vpack.c.bf16 %v2726, %v2722
        %v2831 = vpack.c.bf16 %v2727, %v2723
        %v2832 = vpack.c.bf16 %v2732, %v2728
        %v2833 = vpack.c.bf16 %v2733, %v2729
        %v2834 = vpack.c.bf16 %v2734, %v2730
        %v2835 = vpack.c.bf16 %v2735, %v2731
        %v2836 = vpack.c.bf16 %v2740, %v2736
        %v2837 = vpack.c.bf16 %v2741, %v2737
        %v2838 = vpack.c.bf16 %v2742, %v2738
        %v2839 = vpack.c.bf16 %v2743, %v2739
        %v2840 = vpack.c.bf16 %v2748, %v2744
        %v2841 = vpack.c.bf16 %v2749, %v2745
        %v2842 = vpack.c.bf16 %v2750, %v2746
        %v2843 = vpack.c.bf16 %v2751, %v2747
        %v2844 = vpack.c.bf16 %v2756, %v2752
        %v2845 = vpack.c.bf16 %v2757, %v2753
        %v2846 = vpack.c.bf16 %v2758, %v2754
        %v2847 = vpack.c.bf16 %v2759, %v2755
        %v2848 = vpack.c.bf16 %v2764, %v2760
        %v2849 = vpack.c.bf16 %v2765, %v2761
        %v2850 = vpack.c.bf16 %v2766, %v2762
        %v2851 = vpack.c.bf16 %v2767, %v2763
        %v2852 = vpack.c.bf16 %v2772, %v2768
        %v2853 = vpack.c.bf16 %v2773, %v2769
        %v2854 = vpack.c.bf16 %v2774, %v2770
        %v2855 = vpack.c.bf16 %v2775, %v2771
        %v2856 = vpack.c.bf16 %v2780, %v2776
        %v2857 = vpack.c.bf16 %v2781, %v2777
        %v2858 = vpack.c.bf16 %v2782, %v2778
        %v2859 = vpack.c.bf16 %v2783, %v2779
        %v2860 = vpack.c.bf16 %v2788, %v2784
        %v2861 = vpack.c.bf16 %v2789, %v2785
        %v2862 = vpack.c.bf16 %v2790, %v2786
        %v2863 = vpack.c.bf16 %v2791, %v2787
        %v2864 = vpack.c.bf16 %v2796, %v2792
        %v2865 = vpack.c.bf16 %v2797, %v2793
        %v2866 = vpack.c.bf16 %v2798, %v2794
        %v2867 = vpack.c.bf16 %v2799, %v2795
        %v2868 = vpack.c.bf16 %v2804, %v2800
        %v2869 = vpack.c.bf16 %v2805, %v2801
        %v2870 = vpack.c.bf16 %v2806, %v2802
        %v2871 = vpack.c.bf16 %v2807, %v2803
        %v2872 = vld [vmem:[%s7] sm:$0xf]
        %v2873 = vld [vmem:[%s7 + $0x14] sm:$0xf]
        %v2874 = vld [vmem:[%s7 + $0x28] sm:$0xf]
        %v2875 = vld [vmem:[%s7 + $0x3c] sm:$0xf]
        %v2876 = vld [vmem:[%s7 + $0x50] sm:$0xf]
        %v2877 = vld [vmem:[%s7 + $0x64] sm:$0xf]
        %v2878 = vld [vmem:[%s7 + $0x78] sm:$0xf]
        %v2879 = vld [vmem:[%s7 + $0x8c] sm:$0xf]
        %v2880 = vld [vmem:[%s7 + $0xa0] sm:$0xf]
        %v2881 = vld [vmem:[%s7 + $0xb4] sm:$0xf]
        %v2882 = vld [vmem:[%s7 + $0xc8] sm:$0xf]
        %v2883 = vld [vmem:[%s7 + $0xdc] sm:$0xf]
        %v2884 = vld [vmem:[%s7 + $0xf0] sm:$0xf]
        %v2885 = vld [vmem:[%s7 + $0x104] sm:$0xf]
        %v2886 = vld [vmem:[%s7 + $0x118] sm:$0xf]
        %v2887 = vld [vmem:[%s7 + $0x12c] sm:$0xf]
        %v2888 = vld [vmem:[%s7 + $0x140] sm:$0xf]
        %v2889 = vld [vmem:[%s7 + $0x154] sm:$0xf]
        %v2890 = vld [vmem:[%s7 + $0x168] sm:$0xf]
        %v2891 = vld [vmem:[%s7 + $0x17c] sm:$0xf]
        %v2892 = vld [vmem:[%s7 + $0x190] sm:$0xf]
        %v2893 = vld [vmem:[%s7 + $0x1a4] sm:$0xf]
        %v2894 = vld [vmem:[%s7 + $0x1b8] sm:$0xf]
        %v2895 = vld [vmem:[%s7 + $0x1cc] sm:$0xf]
        %v2896 = vld [vmem:[%s7 + $0x1e0] sm:$0xf]
        %v2897 = vld [vmem:[%s7 + $0x1f4] sm:$0xf]
        %v2898 = vld [vmem:[%s7 + $0x208] sm:$0xf]
        %v2899 = vld [vmem:[%s7 + $0x21c] sm:$0xf]
        %v2900 = vld [vmem:[%s7 + $0x230] sm:$0xf]
        %v2901 = vld [vmem:[%s7 + $0x244] sm:$0xf]
        %v2902 = vld [vmem:[%s7 + $0x258] sm:$0xf]
        %v2903 = vld [vmem:[%s7 + $0x26c] sm:$0xf]
        %v2904 = vld [vmem:[%s7 + $0x280] sm:$0xf]
        %v2905 = vld [vmem:[%s7 + $0x294] sm:$0xf]
        %v2906 = vld [vmem:[%s7 + $0x2a8] sm:$0xf]
        %v2907 = vld [vmem:[%s7 + $0x2bc] sm:$0xf]
        %v2908 = vld [vmem:[%s7 + $0x2d0] sm:$0xf]
        %v2909 = vld [vmem:[%s7 + $0x2e4] sm:$0xf]
        %v2910 = vld [vmem:[%s7 + $0x2f8] sm:$0xf]
        %v2911 = vld [vmem:[%s7 + $0x30c] sm:$0xf]
        %v2912 = vld [vmem:[%s7 + $0x4] sm:$0xff]
        %v2913 = vld [vmem:[%s7 + $0x18] sm:$0xff]
        %v2914 = vld [vmem:[%s7 + $0x2c] sm:$0xff]
        %v2915 = vld [vmem:[%s7 + $0x40] sm:$0xff]
        %v2916 = vld [vmem:[%s7 + $0x54] sm:$0xff]
        %v2917 = vld [vmem:[%s7 + $0x68] sm:$0xff]
        %v2918 = vld [vmem:[%s7 + $0x7c] sm:$0xff]
        %v2919 = vld [vmem:[%s7 + $0x90] sm:$0xff]
        %v2920 = vld [vmem:[%s7 + $0xa4] sm:$0xff]
        %v2921 = vld [vmem:[%s7 + $0xb8] sm:$0xff]
        %v2922 = vld [vmem:[%s7 + $0xcc] sm:$0xff]
        %v2923 = vld [vmem:[%s7 + $0xe0] sm:$0xff]
        %v2924 = vld [vmem:[%s7 + $0xf4] sm:$0xff]
        %v2925 = vld [vmem:[%s7 + $0x108] sm:$0xff]
        %v2926 = vld [vmem:[%s7 + $0x11c] sm:$0xff]
        %v2927 = vld [vmem:[%s7 + $0x130] sm:$0xff]
        %v2928 = vld [vmem:[%s7 + $0x144] sm:$0xff]
        %v2929 = vld [vmem:[%s7 + $0x158] sm:$0xff]
        %v2930 = vld [vmem:[%s7 + $0x16c] sm:$0xff]
        %v2931 = vld [vmem:[%s7 + $0x180] sm:$0xff]
        %v2932 = vld [vmem:[%s7 + $0x194] sm:$0xff]
        %v2933 = vld [vmem:[%s7 + $0x1a8] sm:$0xff]
        %v2934 = vld [vmem:[%s7 + $0x1bc] sm:$0xff]
        %v2935 = vld [vmem:[%s7 + $0x1d0] sm:$0xff]
        %v2936 = vld [vmem:[%s7 + $0x1e4] sm:$0xff]
        %v2937 = vld [vmem:[%s7 + $0x1f8] sm:$0xff]
        %v2938 = vld [vmem:[%s7 + $0x20c] sm:$0xff]
        %v2939 = vld [vmem:[%s7 + $0x220] sm:$0xff]
        %v2940 = vld [vmem:[%s7 + $0x234] sm:$0xff]
        %v2941 = vld [vmem:[%s7 + $0x248] sm:$0xff]
        %v2942 = vld [vmem:[%s7 + $0x25c] sm:$0xff]
        %v2943 = vld [vmem:[%s7 + $0x270] sm:$0xff]
        %v2944 = vld [vmem:[%s7 + $0x284] sm:$0xff]
        %v2945 = vld [vmem:[%s7 + $0x298] sm:$0xff]
        %v2946 = vld [vmem:[%s7 + $0x2ac] sm:$0xff]
        %v2947 = vld [vmem:[%s7 + $0x2c0] sm:$0xff]
        %v2948 = vld [vmem:[%s7 + $0x2d4] sm:$0xff]
        %v2949 = vld [vmem:[%s7 + $0x2e8] sm:$0xff]
        %v2950 = vld [vmem:[%s7 + $0x2fc] sm:$0xff]
        %v2951 = vld [vmem:[%s7 + $0x310] sm:$0xff]
        %v2992 = vunpack.c.l.b16 %v2912
        %v2993 = vunpack.c.h.b16 %v2912
        %v2994 = vunpack.c.l.b16 %v2913
        %v2995 = vunpack.c.h.b16 %v2913
        %v2996 = vunpack.c.l.b16 %v2914
        %v2997 = vunpack.c.h.b16 %v2914
        %v2998 = vunpack.c.l.b16 %v2915
        %v2999 = vunpack.c.h.b16 %v2915
        %v3000 = vunpack.c.l.b16 %v2916
        %v3001 = vunpack.c.h.b16 %v2916
        %v3002 = vunpack.c.l.b16 %v2917
        %v3003 = vunpack.c.h.b16 %v2917
        %v3004 = vunpack.c.l.b16 %v2918
        %v3005 = vunpack.c.h.b16 %v2918
        %v3006 = vunpack.c.l.b16 %v2919
        %v3007 = vunpack.c.h.b16 %v2919
        %v3008 = vunpack.c.l.b16 %v2920
        %v3009 = vunpack.c.h.b16 %v2920
        %v3010 = vunpack.c.l.b16 %v2921
        %v3011 = vunpack.c.h.b16 %v2921
        %v3012 = vunpack.c.l.b16 %v2922
        %v3013 = vunpack.c.h.b16 %v2922
        %v3014 = vunpack.c.l.b16 %v2923
        %v3015 = vunpack.c.h.b16 %v2923
        %v3016 = vunpack.c.l.b16 %v2924
        %v3017 = vunpack.c.h.b16 %v2924
        %v3018 = vunpack.c.l.b16 %v2925
        %v3019 = vunpack.c.h.b16 %v2925
        %v3020 = vunpack.c.l.b16 %v2926
        %v3021 = vunpack.c.h.b16 %v2926
        %v3022 = vunpack.c.l.b16 %v2927
        %v3023 = vunpack.c.h.b16 %v2927
        %v3024 = vunpack.c.l.b16 %v2928
        %v3025 = vunpack.c.h.b16 %v2928
        %v3026 = vunpack.c.l.b16 %v2929
        %v3027 = vunpack.c.h.b16 %v2929
        %v3028 = vunpack.c.l.b16 %v2930
        %v3029 = vunpack.c.h.b16 %v2930
        %v3030 = vunpack.c.l.b16 %v2931
        %v3031 = vunpack.c.h.b16 %v2931
        %v3032 = vunpack.c.l.b16 %v2932
        %v3033 = vunpack.c.h.b16 %v2932
        %v3034 = vunpack.c.l.b16 %v2933
        %v3035 = vunpack.c.h.b16 %v2933
        %v3036 = vunpack.c.l.b16 %v2934
        %v3037 = vunpack.c.h.b16 %v2934
        %v3038 = vunpack.c.l.b16 %v2935
        %v3039 = vunpack.c.h.b16 %v2935
        %v3040 = vunpack.c.l.b16 %v2936
        %v3041 = vunpack.c.h.b16 %v2936
        %v3042 = vunpack.c.l.b16 %v2937
        %v3043 = vunpack.c.h.b16 %v2937
        %v3044 = vunpack.c.l.b16 %v2938
        %v3045 = vunpack.c.h.b16 %v2938
        %v3046 = vunpack.c.l.b16 %v2939
        %v3047 = vunpack.c.h.b16 %v2939
        %v3048 = vunpack.c.l.b16 %v2940
        %v3049 = vunpack.c.h.b16 %v2940
        %v3050 = vunpack.c.l.b16 %v2941
        %v3051 = vunpack.c.h.b16 %v2941
        %v3052 = vunpack.c.l.b16 %v2942
        %v3053 = vunpack.c.h.b16 %v2942
        %v3054 = vunpack.c.l.b16 %v2943
        %v3055 = vunpack.c.h.b16 %v2943
        %v3056 = vunpack.c.l.b16 %v2944
        %v3057 = vunpack.c.h.b16 %v2944
        %v3058 = vunpack.c.l.b16 %v2945
        %v3059 = vunpack.c.h.b16 %v2945
        %v3060 = vunpack.c.l.b16 %v2946
        %v3061 = vunpack.c.h.b16 %v2946
        %v3062 = vunpack.c.l.b16 %v2947
        %v3063 = vunpack.c.h.b16 %v2947
        %v3064 = vunpack.c.l.b16 %v2948
        %v3065 = vunpack.c.h.b16 %v2948
        %v3066 = vunpack.c.l.b16 %v2949
        %v3067 = vunpack.c.h.b16 %v2949
        %v3068 = vunpack.c.l.b16 %v2950
        %v3069 = vunpack.c.h.b16 %v2950
        %v3070 = vunpack.c.l.b16 %v2951
        %v3071 = vunpack.c.h.b16 %v2951
        %v3072 = vpack.c.b16 %v2994, %v2992
        %v3073 = vpack.c.b16 %v2995, %v2993
        %v3074 = vpack.c.b16 %v2998, %v2996
        %v3075 = vpack.c.b16 %v2999, %v2997
        %v3076 = vpack.c.b16 %v3002, %v3000
        %v3077 = vpack.c.b16 %v3003, %v3001
        %v3078 = vpack.c.b16 %v3006, %v3004
        %v3079 = vpack.c.b16 %v3007, %v3005
        %v3080 = vpack.c.b16 %v3010, %v3008
        %v3081 = vpack.c.b16 %v3011, %v3009
        %v3082 = vpack.c.b16 %v3014, %v3012
        %v3083 = vpack.c.b16 %v3015, %v3013
        %v3084 = vpack.c.b16 %v3018, %v3016
        %v3085 = vpack.c.b16 %v3019, %v3017
        %v3086 = vpack.c.b16 %v3022, %v3020
        %v3087 = vpack.c.b16 %v3023, %v3021
        %v3088 = vpack.c.b16 %v3026, %v3024
        %v3089 = vpack.c.b16 %v3027, %v3025
        %v3090 = vpack.c.b16 %v3030, %v3028
        %v3091 = vpack.c.b16 %v3031, %v3029
        %v3092 = vpack.c.b16 %v3034, %v3032
        %v3093 = vpack.c.b16 %v3035, %v3033
        %v3094 = vpack.c.b16 %v3038, %v3036
        %v3095 = vpack.c.b16 %v3039, %v3037
        %v3096 = vpack.c.b16 %v3042, %v3040
        %v3097 = vpack.c.b16 %v3043, %v3041
        %v3098 = vpack.c.b16 %v3046, %v3044
        %v3099 = vpack.c.b16 %v3047, %v3045
        %v3100 = vpack.c.b16 %v3050, %v3048
        %v3101 = vpack.c.b16 %v3051, %v3049
        %v3102 = vpack.c.b16 %v3054, %v3052
        %v3103 = vpack.c.b16 %v3055, %v3053
        %v3104 = vpack.c.b16 %v3058, %v3056
        %v3105 = vpack.c.b16 %v3059, %v3057
        %v3106 = vpack.c.b16 %v3062, %v3060
        %v3107 = vpack.c.b16 %v3063, %v3061
        %v3108 = vpack.c.b16 %v3066, %v3064
        %v3109 = vpack.c.b16 %v3067, %v3065
        %v3110 = vpack.c.b16 %v3070, %v3068
        %v3111 = vpack.c.b16 %v3071, %v3069
        %3152 = vmatprep.subr.bf16.mxu0 %v1847
        %3153 = vmatpush1.bf16.msra.mxu0 %v1846
        %3154 = vmatprep.subr.bf16.mxu0 %v1851
        %3155 = vmatpush1.bf16.msra.mxu0 %v1850
        %3156 = vmatprep.subr.bf16.mxu0 %v1855
        %3157 = vmatpush1.bf16.msra.mxu0 %v1854
        %3158 = vmatprep.subr.bf16.mxu0 %v1859
        %3159 = vmatpush1.bf16.msra.mxu0 %v1858
        %3160 = vmatprep.subr.bf16.mxu0 %v1863
        %3161 = vmatpush1.bf16.msra.mxu0 %v1862
        %3162 = vmatprep.subr.bf16.mxu0 %v1867
        %3163 = vmatpush1.bf16.msra.mxu0 %v1866
        %3164 = vmatprep.subr.bf16.mxu0 %v1871
        %3165 = vmatpush1.bf16.msra.mxu0 %v1870
        %3166 = vmatprep.subr.bf16.mxu0 %v1875
        %3167 = vmatpush1.bf16.msra.mxu0 %v1874
        %3168 = vmatprep.subr.bf16.mxu0 %v1879
        %3169 = vmatpush1.bf16.msra.mxu0 %v1878
        %3170 = vmatprep.subr.bf16.mxu0 %v1883
        %3171 = vmatpush1.bf16.msra.mxu0 %v1882
        %3172 = vmatprep.subr.bf16.mxu0 %v1887
        %3173 = vmatpush1.bf16.msra.mxu0 %v1886
        %3174 = vmatprep.subr.bf16.mxu0 %v1891
        %3175 = vmatpush1.bf16.msra.mxu0 %v1890
        %3176 = vmatprep.subr.bf16.mxu0 %v1895
        %3177 = vmatpush1.bf16.msra.mxu0 %v1894
        %3178 = vmatprep.subr.bf16.mxu0 %v1899
        %3179 = vmatpush1.bf16.msra.mxu0 %v1898
        %3180 = vmatprep.subr.bf16.mxu0 %v1903
        %3181 = vmatpush1.bf16.msra.mxu0 %v1902
        %3182 = vmatprep.subr.bf16.mxu0 %v1907
        %3183 = vmatpush1.bf16.msra.mxu0 %v1906
        %3184 = vmatprep.mubr.bf16.mxu0 %v3073
        %3185 = vmatmul.mubr.bf16.gmra.mrb[0].mxu0 %v3072
        %v3186 = vpop.f32.mrb[0].mxu0
        %v3187 = vadd.f32 0.0, %v3186
        %v3188 = vpop.f32.mrb[0].mxu0
        %v3189 = vadd.f32 0.0, %v3188
        %v3190 = vpop.f32.mrb[0].mxu0
        %v3191 = vadd.f32 0.0, %v3190
        %v3192 = vpop.f32.mrb[0].mxu0
        %v3193 = vadd.f32 0.0, %v3192
        %3194 = vmatprep.mubr.bf16.mxu0 %v3075
        %3195 = vmatmul.mubr.bf16.gmra.mrb[0].mxu0 %v3074
        %v3196 = vpop.f32.mrb[0].mxu0
        %v3197 = vadd.f32 0.0, %v3196
        %v3198 = vpop.f32.mrb[0].mxu0
        %v3199 = vadd.f32 0.0, %v3198
        %v3200 = vpop.f32.mrb[0].mxu0
        %v3201 = vadd.f32 0.0, %v3200
        %v3202 = vpop.f32.mrb[0].mxu0
        %v3203 = vadd.f32 0.0, %v3202
        %3204 = vmatprep.mubr.bf16.mxu0 %v3077
        %3205 = vmatmul.mubr.bf16.gmra.mrb[0].mxu0 %v3076
        %v3206 = vpop.f32.mrb[0].mxu0
        %v3207 = vadd.f32 0.0, %v3206
        %v3208 = vpop.f32.mrb[0].mxu0
        %v3209 = vadd.f32 0.0, %v3208
        %v3210 = vpop.f32.mrb[0].mxu0
        %v3211 = vadd.f32 0.0, %v3210
        %v3212 = vpop.f32.mrb[0].mxu0
        %v3213 = vadd.f32 0.0, %v3212
        %3214 = vmatprep.mubr.bf16.mxu0 %v3079
        %3215 = vmatmul.mubr.bf16.gmra.mrb[0].mxu0 %v3078
        %v3216 = vpop.f32.mrb[0].mxu0
        %v3217 = vadd.f32 0.0, %v3216
        %v3218 = vpop.f32.mrb[0].mxu0
        %v3219 = vadd.f32 0.0, %v3218
        %v3220 = vpop.f32.mrb[0].mxu0
        %v3221 = vadd.f32 0.0, %v3220
        %v3222 = vpop.f32.mrb[0].mxu0
        %v3223 = vadd.f32 0.0, %v3222
        %3224 = vmatprep.mubr.bf16.mxu0 %v3081
        %3225 = vmatmul.mubr.bf16.gmra.mrb[0].mxu0 %v3080
        %v3226 = vpop.f32.mrb[0].mxu0
        %v3227 = vadd.f32 0.0, %v3226
        %v3228 = vpop.f32.mrb[0].mxu0
        %v3229 = vadd.f32 0.0, %v3228
        %v3230 = vpop.f32.mrb[0].mxu0
        %v3231 = vadd.f32 0.0, %v3230
        %v3232 = vpop.f32.mrb[0].mxu0
        %v3233 = vadd.f32 0.0, %v3232
        %3234 = vmatprep.mubr.bf16.mxu0 %v3083
        %3235 = vmatmul.mubr.bf16.gmra.mrb[0].mxu0 %v3082
        %v3236 = vpop.f32.mrb[0].mxu0
        %v3237 = vadd.f32 0.0, %v3236
        %v3238 = vpop.f32.mrb[0].mxu0
        %v3239 = vadd.f32 0.0, %v3238
        %v3240 = vpop.f32.mrb[0].mxu0
        %v3241 = vadd.f32 0.0, %v3240
        %v3242 = vpop.f32.mrb[0].mxu0
        %v3243 = vadd.f32 0.0, %v3242
        %3244 = vmatprep.mubr.bf16.mxu0 %v3085
        %3245 = vmatmul.mubr.bf16.gmra.mrb[0].mxu0 %v3084
        %v3246 = vpop.f32.mrb[0].mxu0
        %v3247 = vadd.f32 0.0, %v3246
        %v3248 = vpop.f32.mrb[0].mxu0
        %v3249 = vadd.f32 0.0, %v3248
        %v3250 = vpop.f32.mrb[0].mxu0
        %v3251 = vadd.f32 0.0, %v3250
        %v3252 = vpop.f32.mrb[0].mxu0
        %v3253 = vadd.f32 0.0, %v3252
        %3254 = vmatprep.mubr.bf16.mxu0 %v3087
        %3255 = vmatmul.mubr.bf16.gmra.mrb[0].mxu0 %v3086
        %v3256 = vpop.f32.mrb[0].mxu0
        %v3257 = vadd.f32 0.0, %v3256
        %v3258 = vpop.f32.mrb[0].mxu0
        %v3259 = vadd.f32 0.0, %v3258
        %v3260 = vpop.f32.mrb[0].mxu0
        %v3261 = vadd.f32 0.0, %v3260
        %v3262 = vpop.f32.mrb[0].mxu0
        %v3263 = vadd.f32 0.0, %v3262
        %3264 = vmatprep.mubr.bf16.mxu0 %v3089
        %3265 = vmatmul.mubr.bf16.gmra.mrb[0].mxu0 %v3088
        %v3266 = vpop.f32.mrb[0].mxu0
        %v3267 = vadd.f32 0.0, %v3266
        %v3268 = vpop.f32.mrb[0].mxu0
        %v3269 = vadd.f32 0.0, %v3268
        %v3270 = vpop.f32.mrb[0].mxu0
        %v3271 = vadd.f32 0.0, %v3270
        %v3272 = vpop.f32.mrb[0].mxu0
        %v3273 = vadd.f32 0.0, %v3272
        %3274 = vmatprep.mubr.bf16.mxu0 %v3091
        %3275 = vmatmul.mubr.bf16.gmra.mrb[0].mxu0 %v3090
        %v3276 = vpop.f32.mrb[0].mxu0
        %v3277 = vadd.f32 0.0, %v3276
        %v3278 = vpop.f32.mrb[0].mxu0
        %v3279 = vadd.f32 0.0, %v3278
        %v3280 = vpop.f32.mrb[0].mxu0
        %v3281 = vadd.f32 0.0, %v3280
        %v3282 = vpop.f32.mrb[0].mxu0
        %v3283 = vadd.f32 0.0, %v3282
        %3284 = vmatprep.mubr.bf16.mxu0 %v3093
        %3285 = vmatmul.mubr.bf16.gmra.mrb[0].mxu0 %v3092
        %v3286 = vpop.f32.mrb[0].mxu0
        %v3287 = vadd.f32 0.0, %v3286
        %v3288 = vpop.f32.mrb[0].mxu0
        %v3289 = vadd.f32 0.0, %v3288
        %v3290 = vpop.f32.mrb[0].mxu0
        %v3291 = vadd.f32 0.0, %v3290
        %v3292 = vpop.f32.mrb[0].mxu0
        %v3293 = vadd.f32 0.0, %v3292
        %3294 = vmatprep.mubr.bf16.mxu0 %v3095
        %3295 = vmatmul.mubr.bf16.gmra.mrb[0].mxu0 %v3094
        %v3296 = vpop.f32.mrb[0].mxu0
        %v3297 = vadd.f32 0.0, %v3296
        %v3298 = vpop.f32.mrb[0].mxu0
        %v3299 = vadd.f32 0.0, %v3298
        %v3300 = vpop.f32.mrb[0].mxu0
        %v3301 = vadd.f32 0.0, %v3300
        %v3302 = vpop.f32.mrb[0].mxu0
        %v3303 = vadd.f32 0.0, %v3302
        %3304 = vmatprep.mubr.bf16.mxu0 %v3097
        %3305 = vmatmul.mubr.bf16.gmra.mrb[0].mxu0 %v3096
        %v3306 = vpop.f32.mrb[0].mxu0
        %v3307 = vadd.f32 0.0, %v3306
        %v3308 = vpop.f32.mrb[0].mxu0
        %v3309 = vadd.f32 0.0, %v3308
        %v3310 = vpop.f32.mrb[0].mxu0
        %v3311 = vadd.f32 0.0, %v3310
        %v3312 = vpop.f32.mrb[0].mxu0
        %v3313 = vadd.f32 0.0, %v3312
        %3314 = vmatprep.mubr.bf16.mxu0 %v3099
        %3315 = vmatmul.mubr.bf16.gmra.mrb[0].mxu0 %v3098
        %v3316 = vpop.f32.mrb[0].mxu0
        %v3317 = vadd.f32 0.0, %v3316
        %v3318 = vpop.f32.mrb[0].mxu0
        %v3319 = vadd.f32 0.0, %v3318
        %v3320 = vpop.f32.mrb[0].mxu0
        %v3321 = vadd.f32 0.0, %v3320
        %v3322 = vpop.f32.mrb[0].mxu0
        %v3323 = vadd.f32 0.0, %v3322
        %3324 = vmatprep.mubr.bf16.mxu0 %v3101
        %3325 = vmatmul.mubr.bf16.gmra.mrb[0].mxu0 %v3100
        %v3326 = vpop.f32.mrb[0].mxu0
        %v3327 = vadd.f32 0.0, %v3326
        %v3328 = vpop.f32.mrb[0].mxu0
        %v3329 = vadd.f32 0.0, %v3328
        %v3330 = vpop.f32.mrb[0].mxu0
        %v3331 = vadd.f32 0.0, %v3330
        %v3332 = vpop.f32.mrb[0].mxu0
        %v3333 = vadd.f32 0.0, %v3332
        %3334 = vmatprep.mubr.bf16.mxu0 %v3103
        %3335 = vmatmul.mubr.bf16.gmra.mrb[0].mxu0 %v3102
        %v3336 = vpop.f32.mrb[0].mxu0
        %v3337 = vadd.f32 0.0, %v3336
        %v3338 = vpop.f32.mrb[0].mxu0
        %v3339 = vadd.f32 0.0, %v3338
        %v3340 = vpop.f32.mrb[0].mxu0
        %v3341 = vadd.f32 0.0, %v3340
        %v3342 = vpop.f32.mrb[0].mxu0
        %v3343 = vadd.f32 0.0, %v3342
        %3344 = vmatprep.mubr.bf16.mxu0 %v3105
        %3345 = vmatmul.mubr.bf16.gmra.mrb[0].mxu0 %v3104
        %v3346 = vpop.f32.mrb[0].mxu0
        %v3347 = vadd.f32 0.0, %v3346
        %v3348 = vpop.f32.mrb[0].mxu0
        %v3349 = vadd.f32 0.0, %v3348
        %v3350 = vpop.f32.mrb[0].mxu0
        %v3351 = vadd.f32 0.0, %v3350
        %v3352 = vpop.f32.mrb[0].mxu0
        %v3353 = vadd.f32 0.0, %v3352
        %3354 = vmatprep.mubr.bf16.mxu0 %v3107
        %3355 = vmatmul.mubr.bf16.gmra.mrb[0].mxu0 %v3106
        %v3356 = vpop.f32.mrb[0].mxu0
        %v3357 = vadd.f32 0.0, %v3356
        %v3358 = vpop.f32.mrb[0].mxu0
        %v3359 = vadd.f32 0.0, %v3358
        %v3360 = vpop.f32.mrb[0].mxu0
        %v3361 = vadd.f32 0.0, %v3360
        %v3362 = vpop.f32.mrb[0].mxu0
        %v3363 = vadd.f32 0.0, %v3362
        %3364 = vmatprep.mubr.bf16.mxu0 %v3109
        %3365 = vmatmul.mubr.bf16.gmra.mrb[0].mxu0 %v3108
        %v3366 = vpop.f32.mrb[0].mxu0
        %v3367 = vadd.f32 0.0, %v3366
        %v3368 = vpop.f32.mrb[0].mxu0
        %v3369 = vadd.f32 0.0, %v3368
        %v3370 = vpop.f32.mrb[0].mxu0
        %v3371 = vadd.f32 0.0, %v3370
        %v3372 = vpop.f32.mrb[0].mxu0
        %v3373 = vadd.f32 0.0, %v3372
        %3374 = vmatprep.mubr.bf16.mxu0 %v3111
        %3375 = vmatmul.mubr.bf16.gmra.mrb[0].mxu0 %v3110
        %v3376 = vpop.f32.mrb[0].mxu0
        %v3377 = vadd.f32 0.0, %v3376
        %v3378 = vpop.f32.mrb[0].mxu0
        %v3379 = vadd.f32 0.0, %v3378
        %v3380 = vpop.f32.mrb[0].mxu0
        %v3381 = vadd.f32 0.0, %v3380
        %v3382 = vpop.f32.mrb[0].mxu0
        %v3383 = vadd.f32 0.0, %v3382
        %3384 = vdwg.mxu0
        %3385 = vmatprep.subr.bf16.mxu0 %v1849
        %3386 = vmatpush1.bf16.msra.mxu0 %v1848
        %3387 = vmatprep.subr.bf16.mxu0 %v1853
        %3388 = vmatpush1.bf16.msra.mxu0 %v1852
        %3389 = vmatprep.subr.bf16.mxu0 %v1857
        %3390 = vmatpush1.bf16.msra.mxu0 %v1856
        %3391 = vmatprep.subr.bf16.mxu0 %v1861
        %3392 = vmatpush1.bf16.msra.mxu0 %v1860
        %3393 = vmatprep.subr.bf16.mxu0 %v1865
        %3394 = vmatpush1.bf16.msra.mxu0 %v1864
        %3395 = vmatprep.subr.bf16.mxu0 %v1869
        %3396 = vmatpush1.bf16.msra.mxu0 %v1868
        %3397 = vmatprep.subr.bf16.mxu0 %v1873
        %3398 = vmatpush1.bf16.msra.mxu0 %v1872
        %3399 = vmatprep.subr.bf16.mxu0 %v1877
        %3400 = vmatpush1.bf16.msra.mxu0 %v1876
        %3401 = vmatprep.subr.bf16.mxu0 %v1881
        %3402 = vmatpush1.bf16.msra.mxu0 %v1880
        %3403 = vmatprep.subr.bf16.mxu0 %v1885
        %3404 = vmatpush1.bf16.msra.mxu0 %v1884
        %3405 = vmatprep.subr.bf16.mxu0 %v1889
        %3406 = vmatpush1.bf16.msra.mxu0 %v1888
        %3407 = vmatprep.subr.bf16.mxu0 %v1893
        %3408 = vmatpush1.bf16.msra.mxu0 %v1892
        %3409 = vmatprep.subr.bf16.mxu0 %v1897
        %3410 = vmatpush1.bf16.msra.mxu0 %v1896
        %3411 = vmatprep.subr.bf16.mxu0 %v1901
        %3412 = vmatpush1.bf16.msra.mxu0 %v1900
        %3413 = vmatprep.subr.bf16.mxu0 %v1905
        %3414 = vmatpush1.bf16.msra.mxu0 %v1904
        %3415 = vmatprep.subr.bf16.mxu0 %v1909
        %3416 = vmatpush1.bf16.msra.mxu0 %v1908
        %3417 = vmatprep.mubr.bf16.mxu0 %v3073
        %3418 = vmatmul.mubr.bf16.gmra.mrb[0].mxu0 %v3072
        %v3419 = vpop.f32.mrb[0].mxu0
        %v3420 = vadd.f32 0.0, %v3419
        %v3421 = vpop.f32.mrb[0].mxu0
        %v3422 = vadd.f32 0.0, %v3421
        %v3423 = vpop.f32.mrb[0].mxu0
        %v3424 = vadd.f32 0.0, %v3423
        %v3425 = vpop.f32.mrb[0].mxu0
        %v3426 = vadd.f32 0.0, %v3425
        %3427 = vmatprep.mubr.bf16.mxu0 %v3075
        %3428 = vmatmul.mubr.bf16.gmra.mrb[0].mxu0 %v3074
        %v3429 = vpop.f32.mrb[0].mxu0
        %v3430 = vadd.f32 0.0, %v3429
        %v3431 = vpop.f32.mrb[0].mxu0
        %v3432 = vadd.f32 0.0, %v3431
        %v3433 = vpop.f32.mrb[0].mxu0
        %v3434 = vadd.f32 0.0, %v3433
        %v3435 = vpop.f32.mrb[0].mxu0
        %v3436 = vadd.f32 0.0, %v3435
        %3437 = vmatprep.mubr.bf16.mxu0 %v3077
        %3438 = vmatmul.mubr.bf16.gmra.mrb[0].mxu0 %v3076
        %v3439 = vpop.f32.mrb[0].mxu0
        %v3440 = vadd.f32 0.0, %v3439
        %v3441 = vpop.f32.mrb[0].mxu0
        %v3442 = vadd.f32 0.0, %v3441
        %v3443 = vpop.f32.mrb[0].mxu0
        %v3444 = vadd.f32 0.0, %v3443
        %v3445 = vpop.f32.mrb[0].mxu0
        %v3446 = vadd.f32 0.0, %v3445
        %3447 = vmatprep.mubr.bf16.mxu0 %v3079
        %3448 = vmatmul.mubr.bf16.gmra.mrb[0].mxu0 %v3078
        %v3449 = vpop.f32.mrb[0].mxu0
        %v3450 = vadd.f32 0.0, %v3449
        %v3451 = vpop.f32.mrb[0].mxu0
        %v3452 = vadd.f32 0.0, %v3451
        %v3453 = vpop.f32.mrb[0].mxu0
        %v3454 = vadd.f32 0.0, %v3453
        %v3455 = vpop.f32.mrb[0].mxu0
        %v3456 = vadd.f32 0.0, %v3455
        %3457 = vmatprep.mubr.bf16.mxu0 %v3081
        %3458 = vmatmul.mubr.bf16.gmra.mrb[0].mxu0 %v3080
        %v3459 = vpop.f32.mrb[0].mxu0
        %v3460 = vadd.f32 0.0, %v3459
        %v3461 = vpop.f32.mrb[0].mxu0
        %v3462 = vadd.f32 0.0, %v3461
        %v3463 = vpop.f32.mrb[0].mxu0
        %v3464 = vadd.f32 0.0, %v3463
        %v3465 = vpop.f32.mrb[0].mxu0
        %v3466 = vadd.f32 0.0, %v3465
        %3467 = vmatprep.mubr.bf16.mxu0 %v3083
        %3468 = vmatmul.mubr.bf16.gmra.mrb[0].mxu0 %v3082
        %v3469 = vpop.f32.mrb[0].mxu0
        %v3470 = vadd.f32 0.0, %v3469
        %v3471 = vpop.f32.mrb[0].mxu0
        %v3472 = vadd.f32 0.0, %v3471
        %v3473 = vpop.f32.mrb[0].mxu0
        %v3474 = vadd.f32 0.0, %v3473
        %v3475 = vpop.f32.mrb[0].mxu0
        %v3476 = vadd.f32 0.0, %v3475
        %3477 = vmatprep.mubr.bf16.mxu0 %v3085
        %3478 = vmatmul.mubr.bf16.gmra.mrb[0].mxu0 %v3084
        %v3479 = vpop.f32.mrb[0].mxu0
        %v3480 = vadd.f32 0.0, %v3479
        %v3481 = vpop.f32.mrb[0].mxu0
        %v3482 = vadd.f32 0.0, %v3481
        %v3483 = vpop.f32.mrb[0].mxu0
        %v3484 = vadd.f32 0.0, %v3483
        %v3485 = vpop.f32.mrb[0].mxu0
        %v3486 = vadd.f32 0.0, %v3485
        %3487 = vmatprep.mubr.bf16.mxu0 %v3087
        %3488 = vmatmul.mubr.bf16.gmra.mrb[0].mxu0 %v3086
        %v3489 = vpop.f32.mrb[0].mxu0
        %v3490 = vadd.f32 0.0, %v3489
        %v3491 = vpop.f32.mrb[0].mxu0
        %v3492 = vadd.f32 0.0, %v3491
        %v3493 = vpop.f32.mrb[0].mxu0
        %v3494 = vadd.f32 0.0, %v3493
        %v3495 = vpop.f32.mrb[0].mxu0
        %v3496 = vadd.f32 0.0, %v3495
        %3497 = vmatprep.mubr.bf16.mxu0 %v3089
        %3498 = vmatmul.mubr.bf16.gmra.mrb[0].mxu0 %v3088
        %v3499 = vpop.f32.mrb[0].mxu0
        %v3500 = vadd.f32 0.0, %v3499
        %v3501 = vpop.f32.mrb[0].mxu0
        %v3502 = vadd.f32 0.0, %v3501
        %v3503 = vpop.f32.mrb[0].mxu0
        %v3504 = vadd.f32 0.0, %v3503
        %v3505 = vpop.f32.mrb[0].mxu0
        %v3506 = vadd.f32 0.0, %v3505
        %3507 = vmatprep.mubr.bf16.mxu0 %v3091
        %3508 = vmatmul.mubr.bf16.gmra.mrb[0].mxu0 %v3090
        %v3509 = vpop.f32.mrb[0].mxu0
        %v3510 = vadd.f32 0.0, %v3509
        %v3511 = vpop.f32.mrb[0].mxu0
        %v3512 = vadd.f32 0.0, %v3511
        %v3513 = vpop.f32.mrb[0].mxu0
        %v3514 = vadd.f32 0.0, %v3513
        %v3515 = vpop.f32.mrb[0].mxu0
        %v3516 = vadd.f32 0.0, %v3515
        %3517 = vmatprep.mubr.bf16.mxu0 %v3093
        %3518 = vmatmul.mubr.bf16.gmra.mrb[0].mxu0 %v3092
        %v3519 = vpop.f32.mrb[0].mxu0
        %v3520 = vadd.f32 0.0, %v3519
        %v3521 = vpop.f32.mrb[0].mxu0
        %v3522 = vadd.f32 0.0, %v3521
        %v3523 = vpop.f32.mrb[0].mxu0
        %v3524 = vadd.f32 0.0, %v3523
        %v3525 = vpop.f32.mrb[0].mxu0
        %v3526 = vadd.f32 0.0, %v3525
        %3527 = vmatprep.mubr.bf16.mxu0 %v3095
        %3528 = vmatmul.mubr.bf16.gmra.mrb[0].mxu0 %v3094
        %v3529 = vpop.f32.mrb[0].mxu0
        %v3530 = vadd.f32 0.0, %v3529
        %v3531 = vpop.f32.mrb[0].mxu0
        %v3532 = vadd.f32 0.0, %v3531
        %v3533 = vpop.f32.mrb[0].mxu0
        %v3534 = vadd.f32 0.0, %v3533
        %v3535 = vpop.f32.mrb[0].mxu0
        %v3536 = vadd.f32 0.0, %v3535
        %3537 = vmatprep.mubr.bf16.mxu0 %v3097
        %3538 = vmatmul.mubr.bf16.gmra.mrb[0].mxu0 %v3096
        %v3539 = vpop.f32.mrb[0].mxu0
        %v3540 = vadd.f32 0.0, %v3539
        %v3541 = vpop.f32.mrb[0].mxu0
        %v3542 = vadd.f32 0.0, %v3541
        %v3543 = vpop.f32.mrb[0].mxu0
        %v3544 = vadd.f32 0.0, %v3543
        %v3545 = vpop.f32.mrb[0].mxu0
        %v3546 = vadd.f32 0.0, %v3545
        %3547 = vmatprep.mubr.bf16.mxu0 %v3099
        %3548 = vmatmul.mubr.bf16.gmra.mrb[0].mxu0 %v3098
        %v3549 = vpop.f32.mrb[0].mxu0
        %v3550 = vadd.f32 0.0, %v3549
        %v3551 = vpop.f32.mrb[0].mxu0
        %v3552 = vadd.f32 0.0, %v3551
        %v3553 = vpop.f32.mrb[0].mxu0
        %v3554 = vadd.f32 0.0, %v3553
        %v3555 = vpop.f32.mrb[0].mxu0
        %v3556 = vadd.f32 0.0, %v3555
        %3557 = vmatprep.mubr.bf16.mxu0 %v3101
        %3558 = vmatmul.mubr.bf16.gmra.mrb[0].mxu0 %v3100
        %v3559 = vpop.f32.mrb[0].mxu0
        %v3560 = vadd.f32 0.0, %v3559
        %v3561 = vpop.f32.mrb[0].mxu0
        %v3562 = vadd.f32 0.0, %v3561
        %v3563 = vpop.f32.mrb[0].mxu0
        %v3564 = vadd.f32 0.0, %v3563
        %v3565 = vpop.f32.mrb[0].mxu0
        %v3566 = vadd.f32 0.0, %v3565
        %3567 = vmatprep.mubr.bf16.mxu0 %v3103
        %3568 = vmatmul.mubr.bf16.gmra.mrb[0].mxu0 %v3102
        %v3569 = vpop.f32.mrb[0].mxu0
        %v3570 = vadd.f32 0.0, %v3569
        %v3571 = vpop.f32.mrb[0].mxu0
        %v3572 = vadd.f32 0.0, %v3571
        %v3573 = vpop.f32.mrb[0].mxu0
        %v3574 = vadd.f32 0.0, %v3573
        %v3575 = vpop.f32.mrb[0].mxu0
        %v3576 = vadd.f32 0.0, %v3575
        %3577 = vmatprep.mubr.bf16.mxu0 %v3105
        %3578 = vmatmul.mubr.bf16.gmra.mrb[0].mxu0 %v3104
        %v3579 = vpop.f32.mrb[0].mxu0
        %v3580 = vadd.f32 0.0, %v3579
        %v3581 = vpop.f32.mrb[0].mxu0
        %v3582 = vadd.f32 0.0, %v3581
        %v3583 = vpop.f32.mrb[0].mxu0
        %v3584 = vadd.f32 0.0, %v3583
        %v3585 = vpop.f32.mrb[0].mxu0
        %v3586 = vadd.f32 0.0, %v3585
        %3587 = vmatprep.mubr.bf16.mxu0 %v3107
        %3588 = vmatmul.mubr.bf16.gmra.mrb[0].mxu0 %v3106
        %v3589 = vpop.f32.mrb[0].mxu0
        %v3590 = vadd.f32 0.0, %v3589
        %v3591 = vpop.f32.mrb[0].mxu0
        %v3592 = vadd.f32 0.0, %v3591
        %v3593 = vpop.f32.mrb[0].mxu0
        %v3594 = vadd.f32 0.0, %v3593
        %v3595 = vpop.f32.mrb[0].mxu0
        %v3596 = vadd.f32 0.0, %v3595
        %3597 = vmatprep.mubr.bf16.mxu0 %v3109
        %3598 = vmatmul.mubr.bf16.gmra.mrb[0].mxu0 %v3108
        %v3599 = vpop.f32.mrb[0].mxu0
        %v3600 = vadd.f32 0.0, %v3599
        %v3601 = vpop.f32.mrb[0].mxu0
        %v3602 = vadd.f32 0.0, %v3601
        %v3603 = vpop.f32.mrb[0].mxu0
        %v3604 = vadd.f32 0.0, %v3603
        %v3605 = vpop.f32.mrb[0].mxu0
        %v3606 = vadd.f32 0.0, %v3605
        %3607 = vmatprep.mubr.bf16.mxu0 %v3111
        %3608 = vmatmul.mubr.bf16.gmra.mrb[0].mxu0 %v3110
        %v3609 = vpop.f32.mrb[0].mxu0
        %v3610 = vadd.f32 0.0, %v3609
        %v3611 = vpop.f32.mrb[0].mxu0
        %v3612 = vadd.f32 0.0, %v3611
        %v3613 = vpop.f32.mrb[0].mxu0
        %v3614 = vadd.f32 0.0, %v3613
        %v3615 = vpop.f32.mrb[0].mxu0
        %v3616 = vadd.f32 0.0, %v3615
        %3617 = vdwg.mxu0
        %v3658 = vunpack.c.l.b16 %v2872
        %v3659 = vunpack.c.l.b16 %v2873
        %v3660 = vunpack.c.l.b16 %v2874
        %v3661 = vunpack.c.l.b16 %v2875
        %v3662 = vunpack.c.l.b16 %v2876
        %v3663 = vunpack.c.l.b16 %v2877
        %v3664 = vunpack.c.l.b16 %v2878
        %v3665 = vunpack.c.l.b16 %v2879
        %v3666 = vunpack.c.l.b16 %v2880
        %v3667 = vunpack.c.l.b16 %v2881
        %v3668 = vunpack.c.l.b16 %v2882
        %v3669 = vunpack.c.l.b16 %v2883
        %v3670 = vunpack.c.l.b16 %v2884
        %v3671 = vunpack.c.l.b16 %v2885
        %v3672 = vunpack.c.l.b16 %v2886
        %v3673 = vunpack.c.l.b16 %v2887
        %v3674 = vunpack.c.l.b16 %v2888
        %v3675 = vunpack.c.l.b16 %v2889
        %v3676 = vunpack.c.l.b16 %v2890
        %v3677 = vunpack.c.l.b16 %v2891
        %v3678 = vunpack.c.l.b16 %v2892
        %v3679 = vunpack.c.l.b16 %v2893
        %v3680 = vunpack.c.l.b16 %v2894
        %v3681 = vunpack.c.l.b16 %v2895
        %v3682 = vunpack.c.l.b16 %v2896
        %v3683 = vunpack.c.l.b16 %v2897
        %v3684 = vunpack.c.l.b16 %v2898
        %v3685 = vunpack.c.l.b16 %v2899
        %v3686 = vunpack.c.l.b16 %v2900
        %v3687 = vunpack.c.l.b16 %v2901
        %v3688 = vunpack.c.l.b16 %v2902
        %v3689 = vunpack.c.l.b16 %v2903
        %v3690 = vunpack.c.l.b16 %v2904
        %v3691 = vunpack.c.l.b16 %v2905
        %v3692 = vunpack.c.l.b16 %v2906
        %v3693 = vunpack.c.l.b16 %v2907
        %v3694 = vunpack.c.l.b16 %v2908
        %v3695 = vunpack.c.l.b16 %v2909
        %v3696 = vunpack.c.l.b16 %v2910
        %v3697 = vunpack.c.l.b16 %v2911
        %v3698 = vpack.c.b16 %v3659, %v3658
        %v3699 = vpack.c.b16 %v3661, %v3660
        %v3700 = vpack.c.b16 %v3663, %v3662
        %v3701 = vpack.c.b16 %v3665, %v3664
        %v3702 = vpack.c.b16 %v3667, %v3666
        %v3703 = vpack.c.b16 %v3669, %v3668
        %v3704 = vpack.c.b16 %v3671, %v3670
        %v3705 = vpack.c.b16 %v3673, %v3672
        %v3706 = vpack.c.b16 %v3675, %v3674
        %v3707 = vpack.c.b16 %v3677, %v3676
        %v3708 = vpack.c.b16 %v3679, %v3678
        %v3709 = vpack.c.b16 %v3681, %v3680
        %v3710 = vpack.c.b16 %v3683, %v3682
        %v3711 = vpack.c.b16 %v3685, %v3684
        %v3712 = vpack.c.b16 %v3687, %v3686
        %v3713 = vpack.c.b16 %v3689, %v3688
        %v3714 = vpack.c.b16 %v3691, %v3690
        %v3715 = vpack.c.b16 %v3693, %v3692
        %v3716 = vpack.c.b16 %v3695, %v3694
        %v3717 = vpack.c.b16 %v3697, %v3696
        %3738 = vmatprep.subr.bf16.mxu0 %v981
        %3739 = vmatpush1.bf16.msra.mxu0 %v980
        %3740 = vmatprep.subr.bf16.mxu0 %v985
        %3741 = vmatpush1.bf16.msra.mxu0 %v984
        %3742 = vmatprep.subr.bf16.mxu0 %v989
        %3743 = vmatpush1.bf16.msra.mxu0 %v988
        %3744 = vmatprep.subr.bf16.mxu0 %v993
        %3745 = vmatpush1.bf16.msra.mxu0 %v992
        %3746 = vmatprep.subr.bf16.mxu0 %v997
        %3747 = vmatpush1.bf16.msra.mxu0 %v996
        %3748 = vmatprep.subr.bf16.mxu0 %v1001
        %3749 = vmatpush1.bf16.msra.mxu0 %v1000
        %3750 = vmatprep.subr.bf16.mxu0 %v1005
        %3751 = vmatpush1.bf16.msra.mxu0 %v1004
        %3752 = vmatprep.subr.bf16.mxu0 %v1009
        %3753 = vmatpush1.bf16.msra.mxu0 %v1008
        %3754 = vmatprep.subr.bf16.mxu0 0
        %3755 = vmatpush1.bf16.msra.mxu0 0
        %3756 = vmatprep.subr.bf16.mxu0 0
        %3757 = vmatpush1.bf16.msra.mxu0 0
        %3758 = vmatprep.subr.bf16.mxu0 0
        %3759 = vmatpush1.bf16.msra.mxu0 0
        %3760 = vmatprep.subr.bf16.mxu0 0
        %3761 = vmatpush1.bf16.msra.mxu0 0
        %3762 = vmatprep.subr.bf16.mxu0 0
        %3763 = vmatpush1.bf16.msra.mxu0 0
        %3764 = vmatprep.subr.bf16.mxu0 0
        %3765 = vmatpush1.bf16.msra.mxu0 0
        %3766 = vmatprep.subr.bf16.mxu0 0
        %3767 = vmatpush1.bf16.msra.mxu0 0
        %3768 = vmatprep.subr.bf16.mxu0 0
        %3769 = vmatpush1.bf16.msra.mxu0 0
        %3770 = vmatprep.mubr.bf16.mxu0 0
        %3771 = vmatmul.mubr.bf16.gmra.mrb[0].mxu0 %v3698
        %v3772 = vpop.f32.mrb[0].mxu0
        %v3773 = vadd.f32 %v3187, %v3772
        %v3774 = vpop.f32.mrb[0].mxu0
        %v3775 = vadd.f32 %v3189, %v3774
        %v3776 = vpop.f32.mrb[0].mxu0
        %v3777 = vadd.f32 %v3191, %v3776
        %v3778 = vpop.f32.mrb[0].mxu0
        %v3779 = vadd.f32 %v3193, %v3778
        %3780 = vmatprep.mubr.bf16.mxu0 0
        %3781 = vmatmul.mubr.bf16.gmra.mrb[0].mxu0 %v3699
        %v3782 = vpop.f32.mrb[0].mxu0
        %v3783 = vadd.f32 %v3197, %v3782
        %v3784 = vpop.f32.mrb[0].mxu0
        %v3785 = vadd.f32 %v3199, %v3784
        %v3786 = vpop.f32.mrb[0].mxu0
        %v3787 = vadd.f32 %v3201, %v3786
        %v3788 = vpop.f32.mrb[0].mxu0
        %v3789 = vadd.f32 %v3203, %v3788
        %3790 = vmatprep.mubr.bf16.mxu0 0
        %3791 = vmatmul.mubr.bf16.gmra.mrb[0].mxu0 %v3700
        %v3792 = vpop.f32.mrb[0].mxu0
        %v3793 = vadd.f32 %v3207, %v3792
        %v3794 = vpop.f32.mrb[0].mxu0
        %v3795 = vadd.f32 %v3209, %v3794
        %v3796 = vpop.f32.mrb[0].mxu0
        %v3797 = vadd.f32 %v3211, %v3796
        %v3798 = vpop.f32.mrb[0].mxu0
        %v3799 = vadd.f32 %v3213, %v3798
        %3800 = vmatprep.mubr.bf16.mxu0 0
        %3801 = vmatmul.mubr.bf16.gmra.mrb[0].mxu0 %v3701
        %v3802 = vpop.f32.mrb[0].mxu0
        %v3803 = vadd.f32 %v3217, %v3802
        %v3804 = vpop.f32.mrb[0].mxu0
        %v3805 = vadd.f32 %v3219, %v3804
        %v3806 = vpop.f32.mrb[0].mxu0
        %v3807 = vadd.f32 %v3221, %v3806
        %v3808 = vpop.f32.mrb[0].mxu0
        %v3809 = vadd.f32 %v3223, %v3808
        %3810 = vmatprep.mubr.bf16.mxu0 0
        %3811 = vmatmul.mubr.bf16.gmra.mrb[0].mxu0 %v3702
        %v3812 = vpop.f32.mrb[0].mxu0
        %v3813 = vadd.f32 %v3227, %v3812
        %v3814 = vpop.f32.mrb[0].mxu0
        %v3815 = vadd.f32 %v3229, %v3814
        %v3816 = vpop.f32.mrb[0].mxu0
        %v3817 = vadd.f32 %v3231, %v3816
        %v3818 = vpop.f32.mrb[0].mxu0
        %v3819 = vadd.f32 %v3233, %v3818
        %3820 = vmatprep.mubr.bf16.mxu0 0
        %3821 = vmatmul.mubr.bf16.gmra.mrb[0].mxu0 %v3703
        %v3822 = vpop.f32.mrb[0].mxu0
        %v3823 = vadd.f32 %v3237, %v3822
        %v3824 = vpop.f32.mrb[0].mxu0
        %v3825 = vadd.f32 %v3239, %v3824
        %v3826 = vpop.f32.mrb[0].mxu0
        %v3827 = vadd.f32 %v3241, %v3826
        %v3828 = vpop.f32.mrb[0].mxu0
        %v3829 = vadd.f32 %v3243, %v3828
        %3830 = vmatprep.mubr.bf16.mxu0 0
        %3831 = vmatmul.mubr.bf16.gmra.mrb[0].mxu0 %v3704
        %v3832 = vpop.f32.mrb[0].mxu0
        %v3833 = vadd.f32 %v3247, %v3832
        %v3834 = vpop.f32.mrb[0].mxu0
        %v3835 = vadd.f32 %v3249, %v3834
        %v3836 = vpop.f32.mrb[0].mxu0
        %v3837 = vadd.f32 %v3251, %v3836
        %v3838 = vpop.f32.mrb[0].mxu0
        %v3839 = vadd.f32 %v3253, %v3838
        %3840 = vmatprep.mubr.bf16.mxu0 0
        %3841 = vmatmul.mubr.bf16.gmra.mrb[0].mxu0 %v3705
        %v3842 = vpop.f32.mrb[0].mxu0
        %v3843 = vadd.f32 %v3257, %v3842
        %v3844 = vpop.f32.mrb[0].mxu0
        %v3845 = vadd.f32 %v3259, %v3844
        %v3846 = vpop.f32.mrb[0].mxu0
        %v3847 = vadd.f32 %v3261, %v3846
        %v3848 = vpop.f32.mrb[0].mxu0
        %v3849 = vadd.f32 %v3263, %v3848
        %3850 = vmatprep.mubr.bf16.mxu0 0
        %3851 = vmatmul.mubr.bf16.gmra.mrb[0].mxu0 %v3706
        %v3852 = vpop.f32.mrb[0].mxu0
        %v3853 = vadd.f32 %v3267, %v3852
        %v3854 = vpop.f32.mrb[0].mxu0
        %v3855 = vadd.f32 %v3269, %v3854
        %v3856 = vpop.f32.mrb[0].mxu0
        %v3857 = vadd.f32 %v3271, %v3856
        %v3858 = vpop.f32.mrb[0].mxu0
        %v3859 = vadd.f32 %v3273, %v3858
        %3860 = vmatprep.mubr.bf16.mxu0 0
        %3861 = vmatmul.mubr.bf16.gmra.mrb[0].mxu0 %v3707
        %v3862 = vpop.f32.mrb[0].mxu0
        %v3863 = vadd.f32 %v3277, %v3862
        %v3864 = vpop.f32.mrb[0].mxu0
        %v3865 = vadd.f32 %v3279, %v3864
        %v3866 = vpop.f32.mrb[0].mxu0
        %v3867 = vadd.f32 %v3281, %v3866
        %v3868 = vpop.f32.mrb[0].mxu0
        %v3869 = vadd.f32 %v3283, %v3868
        %3870 = vmatprep.mubr.bf16.mxu0 0
        %3871 = vmatmul.mubr.bf16.gmra.mrb[0].mxu0 %v3708
        %v3872 = vpop.f32.mrb[0].mxu0
        %v3873 = vadd.f32 %v3287, %v3872
        %v3874 = vpop.f32.mrb[0].mxu0
        %v3875 = vadd.f32 %v3289, %v3874
        %v3876 = vpop.f32.mrb[0].mxu0
        %v3877 = vadd.f32 %v3291, %v3876
        %v3878 = vpop.f32.mrb[0].mxu0
        %v3879 = vadd.f32 %v3293, %v3878
        %3880 = vmatprep.mubr.bf16.mxu0 0
        %3881 = vmatmul.mubr.bf16.gmra.mrb[0].mxu0 %v3709
        %v3882 = vpop.f32.mrb[0].mxu0
        %v3883 = vadd.f32 %v3297, %v3882
        %v3884 = vpop.f32.mrb[0].mxu0
        %v3885 = vadd.f32 %v3299, %v3884
        %v3886 = vpop.f32.mrb[0].mxu0
        %v3887 = vadd.f32 %v3301, %v3886
        %v3888 = vpop.f32.mrb[0].mxu0
        %v3889 = vadd.f32 %v3303, %v3888
        %3890 = vmatprep.mubr.bf16.mxu0 0
        %3891 = vmatmul.mubr.bf16.gmra.mrb[0].mxu0 %v3710
        %v3892 = vpop.f32.mrb[0].mxu0
        %v3893 = vadd.f32 %v3307, %v3892
        %v3894 = vpop.f32.mrb[0].mxu0
        %v3895 = vadd.f32 %v3309, %v3894
        %v3896 = vpop.f32.mrb[0].mxu0
        %v3897 = vadd.f32 %v3311, %v3896
        %v3898 = vpop.f32.mrb[0].mxu0
        %v3899 = vadd.f32 %v3313, %v3898
        %3900 = vmatprep.mubr.bf16.mxu0 0
        %3901 = vmatmul.mubr.bf16.gmra.mrb[0].mxu0 %v3711
        %v3902 = vpop.f32.mrb[0].mxu0
        %v3903 = vadd.f32 %v3317, %v3902
        %v3904 = vpop.f32.mrb[0].mxu0
        %v3905 = vadd.f32 %v3319, %v3904
        %v3906 = vpop.f32.mrb[0].mxu0
        %v3907 = vadd.f32 %v3321, %v3906
        %v3908 = vpop.f32.mrb[0].mxu0
        %v3909 = vadd.f32 %v3323, %v3908
        %3910 = vmatprep.mubr.bf16.mxu0 0
        %3911 = vmatmul.mubr.bf16.gmra.mrb[0].mxu0 %v3712
        %v3912 = vpop.f32.mrb[0].mxu0
        %v3913 = vadd.f32 %v3327, %v3912
        %v3914 = vpop.f32.mrb[0].mxu0
        %v3915 = vadd.f32 %v3329, %v3914
        %v3916 = vpop.f32.mrb[0].mxu0
        %v3917 = vadd.f32 %v3331, %v3916
        %v3918 = vpop.f32.mrb[0].mxu0
        %v3919 = vadd.f32 %v3333, %v3918
        %3920 = vmatprep.mubr.bf16.mxu0 0
        %3921 = vmatmul.mubr.bf16.gmra.mrb[0].mxu0 %v3713
        %v3922 = vpop.f32.mrb[0].mxu0
        %v3923 = vadd.f32 %v3337, %v3922
        %v3924 = vpop.f32.mrb[0].mxu0
        %v3925 = vadd.f32 %v3339, %v3924
        %v3926 = vpop.f32.mrb[0].mxu0
        %v3927 = vadd.f32 %v3341, %v3926
        %v3928 = vpop.f32.mrb[0].mxu0
        %v3929 = vadd.f32 %v3343, %v3928
        %3930 = vmatprep.mubr.bf16.mxu0 0
        %3931 = vmatmul.mubr.bf16.gmra.mrb[0].mxu0 %v3714
        %v3932 = vpop.f32.mrb[0].mxu0
        %v3933 = vadd.f32 %v3347, %v3932
        %v3934 = vpop.f32.mrb[0].mxu0
        %v3935 = vadd.f32 %v3349, %v3934
        %v3936 = vpop.f32.mrb[0].mxu0
        %v3937 = vadd.f32 %v3351, %v3936
        %v3938 = vpop.f32.mrb[0].mxu0
        %v3939 = vadd.f32 %v3353, %v3938
        %3940 = vmatprep.mubr.bf16.mxu0 0
        %3941 = vmatmul.mubr.bf16.gmra.mrb[0].mxu0 %v3715
        %v3942 = vpop.f32.mrb[0].mxu0
        %v3943 = vadd.f32 %v3357, %v3942
        %v3944 = vpop.f32.mrb[0].mxu0
        %v3945 = vadd.f32 %v3359, %v3944
        %v3946 = vpop.f32.mrb[0].mxu0
        %v3947 = vadd.f32 %v3361, %v3946
        %v3948 = vpop.f32.mrb[0].mxu0
        %v3949 = vadd.f32 %v3363, %v3948
        %3950 = vmatprep.mubr.bf16.mxu0 0
        %3951 = vmatmul.mubr.bf16.gmra.mrb[0].mxu0 %v3716
        %v3952 = vpop.f32.mrb[0].mxu0
        %v3953 = vadd.f32 %v3367, %v3952
        %v3954 = vpop.f32.mrb[0].mxu0
        %v3955 = vadd.f32 %v3369, %v3954
        %v3956 = vpop.f32.mrb[0].mxu0
        %v3957 = vadd.f32 %v3371, %v3956
        %v3958 = vpop.f32.mrb[0].mxu0
        %v3959 = vadd.f32 %v3373, %v3958
        %3960 = vmatprep.mubr.bf16.mxu0 0
        %3961 = vmatmul.mubr.bf16.gmra.mrb[0].mxu0 %v3717
        %v3962 = vpop.f32.mrb[0].mxu0
        %v3963 = vadd.f32 %v3377, %v3962
        %v3964 = vpop.f32.mrb[0].mxu0
        %v3965 = vadd.f32 %v3379, %v3964
        %v3966 = vpop.f32.mrb[0].mxu0
        %v3967 = vadd.f32 %v3381, %v3966
        %v3968 = vpop.f32.mrb[0].mxu0
        %v3969 = vadd.f32 %v3383, %v3968
        %3970 = vdwg.mxu0
        %3971 = vmatprep.subr.bf16.mxu0 %v983
        %3972 = vmatpush1.bf16.msra.mxu0 %v982
        %3973 = vmatprep.subr.bf16.mxu0 %v987
        %3974 = vmatpush1.bf16.msra.mxu0 %v986
        %3975 = vmatprep.subr.bf16.mxu0 %v991
        %3976 = vmatpush1.bf16.msra.mxu0 %v990
        %3977 = vmatprep.subr.bf16.mxu0 %v995
        %3978 = vmatpush1.bf16.msra.mxu0 %v994
        %3979 = vmatprep.subr.bf16.mxu0 %v999
        %3980 = vmatpush1.bf16.msra.mxu0 %v998
        %3981 = vmatprep.subr.bf16.mxu0 %v1003
        %3982 = vmatpush1.bf16.msra.mxu0 %v1002
        %3983 = vmatprep.subr.bf16.mxu0 %v1007
        %3984 = vmatpush1.bf16.msra.mxu0 %v1006
        %3985 = vmatprep.subr.bf16.mxu0 %v1011
        %3986 = vmatpush1.bf16.msra.mxu0 %v1010
        %3987 = vmatprep.subr.bf16.mxu0 0
        %3988 = vmatpush1.bf16.msra.mxu0 0
        %3989 = vmatprep.subr.bf16.mxu0 0
        %3990 = vmatpush1.bf16.msra.mxu0 0
        %3991 = vmatprep.subr.bf16.mxu0 0
        %3992 = vmatpush1.bf16.msra.mxu0 0
        %3993 = vmatprep.subr.bf16.mxu0 0
        %3994 = vmatpush1.bf16.msra.mxu0 0
        %3995 = vmatprep.subr.bf16.mxu0 0
        %3996 = vmatpush1.bf16.msra.mxu0 0
        %3997 = vmatprep.subr.bf16.mxu0 0
        %3998 = vmatpush1.bf16.msra.mxu0 0
        %3999 = vmatprep.subr.bf16.mxu0 0
        %4000 = vmatpush1.bf16.msra.mxu0 0
        %4001 = vmatprep.subr.bf16.mxu0 0
        %4002 = vmatpush1.bf16.msra.mxu0 0
        %4003 = vmatprep.mubr.bf16.mxu0 0
        %4004 = vmatmul.mubr.bf16.gmra.mrb[0].mxu0 %v3698
        %v4005 = vpop.f32.mrb[0].mxu0
        %v4006 = vadd.f32 %v3420, %v4005
        %v4007 = vpop.f32.mrb[0].mxu0
        %v4008 = vadd.f32 %v3422, %v4007
        %v4009 = vpop.f32.mrb[0].mxu0
        %v4010 = vadd.f32 %v3424, %v4009
        %v4011 = vpop.f32.mrb[0].mxu0
        %v4012 = vadd.f32 %v3426, %v4011
        %4013 = vmatprep.mubr.bf16.mxu0 0
        %4014 = vmatmul.mubr.bf16.gmra.mrb[0].mxu0 %v3699
        %v4015 = vpop.f32.mrb[0].mxu0
        %v4016 = vadd.f32 %v3430, %v4015
        %v4017 = vpop.f32.mrb[0].mxu0
        %v4018 = vadd.f32 %v3432, %v4017
        %v4019 = vpop.f32.mrb[0].mxu0
        %v4020 = vadd.f32 %v3434, %v4019
        %v4021 = vpop.f32.mrb[0].mxu0
        %v4022 = vadd.f32 %v3436, %v4021
        %4023 = vmatprep.mubr.bf16.mxu0 0
        %4024 = vmatmul.mubr.bf16.gmra.mrb[0].mxu0 %v3700
        %v4025 = vpop.f32.mrb[0].mxu0
        %v4026 = vadd.f32 %v3440, %v4025
        %v4027 = vpop.f32.mrb[0].mxu0
        %v4028 = vadd.f32 %v3442, %v4027
        %v4029 = vpop.f32.mrb[0].mxu0
        %v4030 = vadd.f32 %v3444, %v4029
        %v4031 = vpop.f32.mrb[0].mxu0
        %v4032 = vadd.f32 %v3446, %v4031
        %4033 = vmatprep.mubr.bf16.mxu0 0
        %4034 = vmatmul.mubr.bf16.gmra.mrb[0].mxu0 %v3701
        %v4035 = vpop.f32.mrb[0].mxu0
        %v4036 = vadd.f32 %v3450, %v4035
        %v4037 = vpop.f32.mrb[0].mxu0
        %v4038 = vadd.f32 %v3452, %v4037
        %v4039 = vpop.f32.mrb[0].mxu0
        %v4040 = vadd.f32 %v3454, %v4039
        %v4041 = vpop.f32.mrb[0].mxu0
        %v4042 = vadd.f32 %v3456, %v4041
        %4043 = vmatprep.mubr.bf16.mxu0 0
        %4044 = vmatmul.mubr.bf16.gmra.mrb[0].mxu0 %v3702
        %v4045 = vpop.f32.mrb[0].mxu0
        %v4046 = vadd.f32 %v3460, %v4045
        %v4047 = vpop.f32.mrb[0].mxu0
        %v4048 = vadd.f32 %v3462, %v4047
        %v4049 = vpop.f32.mrb[0].mxu0
        %v4050 = vadd.f32 %v3464, %v4049
        %v4051 = vpop.f32.mrb[0].mxu0
        %v4052 = vadd.f32 %v3466, %v4051
        %4053 = vmatprep.mubr.bf16.mxu0 0
        %4054 = vmatmul.mubr.bf16.gmra.mrb[0].mxu0 %v3703
        %v4055 = vpop.f32.mrb[0].mxu0
        %v4056 = vadd.f32 %v3470, %v4055
        %v4057 = vpop.f32.mrb[0].mxu0
        %v4058 = vadd.f32 %v3472, %v4057
        %v4059 = vpop.f32.mrb[0].mxu0
        %v4060 = vadd.f32 %v3474, %v4059
        %v4061 = vpop.f32.mrb[0].mxu0
        %v4062 = vadd.f32 %v3476, %v4061
        %4063 = vmatprep.mubr.bf16.mxu0 0
        %4064 = vmatmul.mubr.bf16.gmra.mrb[0].mxu0 %v3704
        %v4065 = vpop.f32.mrb[0].mxu0
        %v4066 = vadd.f32 %v3480, %v4065
        %v4067 = vpop.f32.mrb[0].mxu0
        %v4068 = vadd.f32 %v3482, %v4067
        %v4069 = vpop.f32.mrb[0].mxu0
        %v4070 = vadd.f32 %v3484, %v4069
        %v4071 = vpop.f32.mrb[0].mxu0
        %v4072 = vadd.f32 %v3486, %v4071
        %4073 = vmatprep.mubr.bf16.mxu0 0
        %4074 = vmatmul.mubr.bf16.gmra.mrb[0].mxu0 %v3705
        %v4075 = vpop.f32.mrb[0].mxu0
        %v4076 = vadd.f32 %v3490, %v4075
        %v4077 = vpop.f32.mrb[0].mxu0
        %v4078 = vadd.f32 %v3492, %v4077
        %v4079 = vpop.f32.mrb[0].mxu0
        %v4080 = vadd.f32 %v3494, %v4079
        %v4081 = vpop.f32.mrb[0].mxu0
        %v4082 = vadd.f32 %v3496, %v4081
        %4083 = vmatprep.mubr.bf16.mxu0 0
        %4084 = vmatmul.mubr.bf16.gmra.mrb[0].mxu0 %v3706
        %v4085 = vpop.f32.mrb[0].mxu0
        %v4086 = vadd.f32 %v3500, %v4085
        %v4087 = vpop.f32.mrb[0].mxu0
        %v4088 = vadd.f32 %v3502, %v4087
        %v4089 = vpop.f32.mrb[0].mxu0
        %v4090 = vadd.f32 %v3504, %v4089
        %v4091 = vpop.f32.mrb[0].mxu0
        %v4092 = vadd.f32 %v3506, %v4091
        %4093 = vmatprep.mubr.bf16.mxu0 0
        %4094 = vmatmul.mubr.bf16.gmra.mrb[0].mxu0 %v3707
        %v4095 = vpop.f32.mrb[0].mxu0
        %v4096 = vadd.f32 %v3510, %v4095
        %v4097 = vpop.f32.mrb[0].mxu0
        %v4098 = vadd.f32 %v3512, %v4097
        %v4099 = vpop.f32.mrb[0].mxu0
        %v4100 = vadd.f32 %v3514, %v4099
        %v4101 = vpop.f32.mrb[0].mxu0
        %v4102 = vadd.f32 %v3516, %v4101
        %4103 = vmatprep.mubr.bf16.mxu0 0
        %4104 = vmatmul.mubr.bf16.gmra.mrb[0].mxu0 %v3708
        %v4105 = vpop.f32.mrb[0].mxu0
        %v4106 = vadd.f32 %v3520, %v4105
        %v4107 = vpop.f32.mrb[0].mxu0
        %v4108 = vadd.f32 %v3522, %v4107
        %v4109 = vpop.f32.mrb[0].mxu0
        %v4110 = vadd.f32 %v3524, %v4109
        %v4111 = vpop.f32.mrb[0].mxu0
        %v4112 = vadd.f32 %v3526, %v4111
        %4113 = vmatprep.mubr.bf16.mxu0 0
        %4114 = vmatmul.mubr.bf16.gmra.mrb[0].mxu0 %v3709
        %v4115 = vpop.f32.mrb[0].mxu0
        %v4116 = vadd.f32 %v3530, %v4115
        %v4117 = vpop.f32.mrb[0].mxu0
        %v4118 = vadd.f32 %v3532, %v4117
        %v4119 = vpop.f32.mrb[0].mxu0
        %v4120 = vadd.f32 %v3534, %v4119
        %v4121 = vpop.f32.mrb[0].mxu0
        %v4122 = vadd.f32 %v3536, %v4121
        %4123 = vmatprep.mubr.bf16.mxu0 0
        %4124 = vmatmul.mubr.bf16.gmra.mrb[0].mxu0 %v3710
        %v4125 = vpop.f32.mrb[0].mxu0
        %v4126 = vadd.f32 %v3540, %v4125
        %v4127 = vpop.f32.mrb[0].mxu0
        %v4128 = vadd.f32 %v3542, %v4127
        %v4129 = vpop.f32.mrb[0].mxu0
        %v4130 = vadd.f32 %v3544, %v4129
        %v4131 = vpop.f32.mrb[0].mxu0
        %v4132 = vadd.f32 %v3546, %v4131
        %4133 = vmatprep.mubr.bf16.mxu0 0
        %4134 = vmatmul.mubr.bf16.gmra.mrb[0].mxu0 %v3711
        %v4135 = vpop.f32.mrb[0].mxu0
        %v4136 = vadd.f32 %v3550, %v4135
        %v4137 = vpop.f32.mrb[0].mxu0
        %v4138 = vadd.f32 %v3552, %v4137
        %v4139 = vpop.f32.mrb[0].mxu0
        %v4140 = vadd.f32 %v3554, %v4139
        %v4141 = vpop.f32.mrb[0].mxu0
        %v4142 = vadd.f32 %v3556, %v4141
        %4143 = vmatprep.mubr.bf16.mxu0 0
        %4144 = vmatmul.mubr.bf16.gmra.mrb[0].mxu0 %v3712
        %v4145 = vpop.f32.mrb[0].mxu0
        %v4146 = vadd.f32 %v3560, %v4145
        %v4147 = vpop.f32.mrb[0].mxu0
        %v4148 = vadd.f32 %v3562, %v4147
        %v4149 = vpop.f32.mrb[0].mxu0
        %v4150 = vadd.f32 %v3564, %v4149
        %v4151 = vpop.f32.mrb[0].mxu0
        %v4152 = vadd.f32 %v3566, %v4151
        %4153 = vmatprep.mubr.bf16.mxu0 0
        %4154 = vmatmul.mubr.bf16.gmra.mrb[0].mxu0 %v3713
        %v4155 = vpop.f32.mrb[0].mxu0
        %v4156 = vadd.f32 %v3570, %v4155
        %v4157 = vpop.f32.mrb[0].mxu0
        %v4158 = vadd.f32 %v3572, %v4157
        %v4159 = vpop.f32.mrb[0].mxu0
        %v4160 = vadd.f32 %v3574, %v4159
        %v4161 = vpop.f32.mrb[0].mxu0
        %v4162 = vadd.f32 %v3576, %v4161
        %4163 = vmatprep.mubr.bf16.mxu0 0
        %4164 = vmatmul.mubr.bf16.gmra.mrb[0].mxu0 %v3714
        %v4165 = vpop.f32.mrb[0].mxu0
        %v4166 = vadd.f32 %v3580, %v4165
        %v4167 = vpop.f32.mrb[0].mxu0
        %v4168 = vadd.f32 %v3582, %v4167
        %v4169 = vpop.f32.mrb[0].mxu0
        %v4170 = vadd.f32 %v3584, %v4169
        %v4171 = vpop.f32.mrb[0].mxu0
        %v4172 = vadd.f32 %v3586, %v4171
        %4173 = vmatprep.mubr.bf16.mxu0 0
        %4174 = vmatmul.mubr.bf16.gmra.mrb[0].mxu0 %v3715
        %v4175 = vpop.f32.mrb[0].mxu0
        %v4176 = vadd.f32 %v3590, %v4175
        %v4177 = vpop.f32.mrb[0].mxu0
        %v4178 = vadd.f32 %v3592, %v4177
        %v4179 = vpop.f32.mrb[0].mxu0
        %v4180 = vadd.f32 %v3594, %v4179
        %v4181 = vpop.f32.mrb[0].mxu0
        %v4182 = vadd.f32 %v3596, %v4181
        %4183 = vmatprep.mubr.bf16.mxu0 0
        %4184 = vmatmul.mubr.bf16.gmra.mrb[0].mxu0 %v3716
        %v4185 = vpop.f32.mrb[0].mxu0
        %v4186 = vadd.f32 %v3600, %v4185
        %v4187 = vpop.f32.mrb[0].mxu0
        %v4188 = vadd.f32 %v3602, %v4187
        %v4189 = vpop.f32.mrb[0].mxu0
        %v4190 = vadd.f32 %v3604, %v4189
        %v4191 = vpop.f32.mrb[0].mxu0
        %v4192 = vadd.f32 %v3606, %v4191
        %4193 = vmatprep.mubr.bf16.mxu0 0
        %4194 = vmatmul.mubr.bf16.gmra.mrb[0].mxu0 %v3717
        %v4195 = vpop.f32.mrb[0].mxu0
        %v4196 = vadd.f32 %v3610, %v4195
        %v4197 = vpop.f32.mrb[0].mxu0
        %v4198 = vadd.f32 %v3612, %v4197
        %v4199 = vpop.f32.mrb[0].mxu0
        %v4200 = vadd.f32 %v3614, %v4199
        %v4201 = vpop.f32.mrb[0].mxu0
        %v4202 = vadd.f32 %v3616, %v4201
        %4203 = vdwg.mxu0
        %v4204 = vld [vmem:[%s7 + $0xc] sm:$0xff]
        %v4205 = vld [vmem:[%s7 + $0x20] sm:$0xff]
        %v4206 = vld [vmem:[%s7 + $0x34] sm:$0xff]
        %v4207 = vld [vmem:[%s7 + $0x48] sm:$0xff]
        %v4208 = vld [vmem:[%s7 + $0x5c] sm:$0xff]
        %v4209 = vld [vmem:[%s7 + $0x70] sm:$0xff]
        %v4210 = vld [vmem:[%s7 + $0x84] sm:$0xff]
        %v4211 = vld [vmem:[%s7 + $0x98] sm:$0xff]
        %v4212 = vld [vmem:[%s7 + $0xac] sm:$0xff]
        %v4213 = vld [vmem:[%s7 + $0xc0] sm:$0xff]
        %v4214 = vld [vmem:[%s7 + $0xd4] sm:$0xff]
        %v4215 = vld [vmem:[%s7 + $0xe8] sm:$0xff]
        %v4216 = vld [vmem:[%s7 + $0xfc] sm:$0xff]
        %v4217 = vld [vmem:[%s7 + $0x110] sm:$0xff]
        %v4218 = vld [vmem:[%s7 + $0x124] sm:$0xff]
        %v4219 = vld [vmem:[%s7 + $0x138] sm:$0xff]
        %v4220 = vld [vmem:[%s7 + $0x14c] sm:$0xff]
        %v4221 = vld [vmem:[%s7 + $0x160] sm:$0xff]
        %v4222 = vld [vmem:[%s7 + $0x174] sm:$0xff]
        %v4223 = vld [vmem:[%s7 + $0x188] sm:$0xff]
        %v4224 = vld [vmem:[%s7 + $0x19c] sm:$0xff]
        %v4225 = vld [vmem:[%s7 + $0x1b0] sm:$0xff]
        %v4226 = vld [vmem:[%s7 + $0x1c4] sm:$0xff]
        %v4227 = vld [vmem:[%s7 + $0x1d8] sm:$0xff]
        %v4228 = vld [vmem:[%s7 + $0x1ec] sm:$0xff]
        %v4229 = vld [vmem:[%s7 + $0x200] sm:$0xff]
        %v4230 = vld [vmem:[%s7 + $0x214] sm:$0xff]
        %v4231 = vld [vmem:[%s7 + $0x228] sm:$0xff]
        %v4232 = vld [vmem:[%s7 + $0x23c] sm:$0xff]
        %v4233 = vld [vmem:[%s7 + $0x250] sm:$0xff]
        %v4234 = vld [vmem:[%s7 + $0x264] sm:$0xff]
        %v4235 = vld [vmem:[%s7 + $0x278] sm:$0xff]
        %v4236 = vld [vmem:[%s7 + $0x28c] sm:$0xff]
        %v4237 = vld [vmem:[%s7 + $0x2a0] sm:$0xff]
        %v4238 = vld [vmem:[%s7 + $0x2b4] sm:$0xff]
        %v4239 = vld [vmem:[%s7 + $0x2c8] sm:$0xff]
        %v4240 = vld [vmem:[%s7 + $0x2dc] sm:$0xff]
        %v4241 = vld [vmem:[%s7 + $0x2f0] sm:$0xff]
        %v4242 = vld [vmem:[%s7 + $0x304] sm:$0xff]
        %v4243 = vld [vmem:[%s7 + $0x318] sm:$0xff]
        %v4284 = vunpack.c.l.b16 %v4204
        %v4285 = vunpack.c.h.b16 %v4204
        %v4286 = vunpack.c.l.b16 %v4205
        %v4287 = vunpack.c.h.b16 %v4205
        %v4288 = vunpack.c.l.b16 %v4206
        %v4289 = vunpack.c.h.b16 %v4206
        %v4290 = vunpack.c.l.b16 %v4207
        %v4291 = vunpack.c.h.b16 %v4207
        %v4292 = vunpack.c.l.b16 %v4208
        %v4293 = vunpack.c.h.b16 %v4208
        %v4294 = vunpack.c.l.b16 %v4209
        %v4295 = vunpack.c.h.b16 %v4209
        %v4296 = vunpack.c.l.b16 %v4210
        %v4297 = vunpack.c.h.b16 %v4210
        %v4298 = vunpack.c.l.b16 %v4211
        %v4299 = vunpack.c.h.b16 %v4211
        %v4300 = vunpack.c.l.b16 %v4212
        %v4301 = vunpack.c.h.b16 %v4212
        %v4302 = vunpack.c.l.b16 %v4213
        %v4303 = vunpack.c.h.b16 %v4213
        %v4304 = vunpack.c.l.b16 %v4214
        %v4305 = vunpack.c.h.b16 %v4214
        %v4306 = vunpack.c.l.b16 %v4215
        %v4307 = vunpack.c.h.b16 %v4215
        %v4308 = vunpack.c.l.b16 %v4216
        %v4309 = vunpack.c.h.b16 %v4216
        %v4310 = vunpack.c.l.b16 %v4217
        %v4311 = vunpack.c.h.b16 %v4217
        %v4312 = vunpack.c.l.b16 %v4218
        %v4313 = vunpack.c.h.b16 %v4218
        %v4314 = vunpack.c.l.b16 %v4219
        %v4315 = vunpack.c.h.b16 %v4219
        %v4316 = vunpack.c.l.b16 %v4220
        %v4317 = vunpack.c.h.b16 %v4220
        %v4318 = vunpack.c.l.b16 %v4221
        %v4319 = vunpack.c.h.b16 %v4221
        %v4320 = vunpack.c.l.b16 %v4222
        %v4321 = vunpack.c.h.b16 %v4222
        %v4322 = vunpack.c.l.b16 %v4223
        %v4323 = vunpack.c.h.b16 %v4223
        %v4324 = vunpack.c.l.b16 %v4224
        %v4325 = vunpack.c.h.b16 %v4224
        %v4326 = vunpack.c.l.b16 %v4225
        %v4327 = vunpack.c.h.b16 %v4225
        %v4328 = vunpack.c.l.b16 %v4226
        %v4329 = vunpack.c.h.b16 %v4226
        %v4330 = vunpack.c.l.b16 %v4227
        %v4331 = vunpack.c.h.b16 %v4227
        %v4332 = vunpack.c.l.b16 %v4228
        %v4333 = vunpack.c.h.b16 %v4228
        %v4334 = vunpack.c.l.b16 %v4229
        %v4335 = vunpack.c.h.b16 %v4229
        %v4336 = vunpack.c.l.b16 %v4230
        %v4337 = vunpack.c.h.b16 %v4230
        %v4338 = vunpack.c.l.b16 %v4231
        %v4339 = vunpack.c.h.b16 %v4231
        %v4340 = vunpack.c.l.b16 %v4232
        %v4341 = vunpack.c.h.b16 %v4232
        %v4342 = vunpack.c.l.b16 %v4233
        %v4343 = vunpack.c.h.b16 %v4233
        %v4344 = vunpack.c.l.b16 %v4234
        %v4345 = vunpack.c.h.b16 %v4234
        %v4346 = vunpack.c.l.b16 %v4235
        %v4347 = vunpack.c.h.b16 %v4235
        %v4348 = vunpack.c.l.b16 %v4236
        %v4349 = vunpack.c.h.b16 %v4236
        %v4350 = vunpack.c.l.b16 %v4237
        %v4351 = vunpack.c.h.b16 %v4237
        %v4352 = vunpack.c.l.b16 %v4238
        %v4353 = vunpack.c.h.b16 %v4238
        %v4354 = vunpack.c.l.b16 %v4239
        %v4355 = vunpack.c.h.b16 %v4239
        %v4356 = vunpack.c.l.b16 %v4240
        %v4357 = vunpack.c.h.b16 %v4240
        %v4358 = vunpack.c.l.b16 %v4241
        %v4359 = vunpack.c.h.b16 %v4241
        %v4360 = vunpack.c.l.b16 %v4242
        %v4361 = vunpack.c.h.b16 %v4242
        %v4362 = vunpack.c.l.b16 %v4243
        %v4363 = vunpack.c.h.b16 %v4243
        %v4364 = vpack.c.b16 %v4286, %v4284
        %v4365 = vpack.c.b16 %v4287, %v4285
        %v4366 = vpack.c.b16 %v4290, %v4288
        %v4367 = vpack.c.b16 %v4291, %v4289
        %v4368 = vpack.c.b16 %v4294, %v4292
        %v4369 = vpack.c.b16 %v4295, %v4293
        %v4370 = vpack.c.b16 %v4298, %v4296
        %v4371 = vpack.c.b16 %v4299, %v4297
        %v4372 = vpack.c.b16 %v4302, %v4300
        %v4373 = vpack.c.b16 %v4303, %v4301
        %v4374 = vpack.c.b16 %v4306, %v4304
        %v4375 = vpack.c.b16 %v4307, %v4305
        %v4376 = vpack.c.b16 %v4310, %v4308
        %v4377 = vpack.c.b16 %v4311, %v4309
        %v4378 = vpack.c.b16 %v4314, %v4312
        %v4379 = vpack.c.b16 %v4315, %v4313
        %v4380 = vpack.c.b16 %v4318, %v4316
        %v4381 = vpack.c.b16 %v4319, %v4317
        %v4382 = vpack.c.b16 %v4322, %v4320
        %v4383 = vpack.c.b16 %v4323, %v4321
        %v4384 = vpack.c.b16 %v4326, %v4324
        %v4385 = vpack.c.b16 %v4327, %v4325
        %v4386 = vpack.c.b16 %v4330, %v4328
        %v4387 = vpack.c.b16 %v4331, %v4329
        %v4388 = vpack.c.b16 %v4334, %v4332
        %v4389 = vpack.c.b16 %v4335, %v4333
        %v4390 = vpack.c.b16 %v4338, %v4336
        %v4391 = vpack.c.b16 %v4339, %v4337
        %v4392 = vpack.c.b16 %v4342, %v4340
        %v4393 = vpack.c.b16 %v4343, %v4341
        %v4394 = vpack.c.b16 %v4346, %v4344
        %v4395 = vpack.c.b16 %v4347, %v4345
        %v4396 = vpack.c.b16 %v4350, %v4348
        %v4397 = vpack.c.b16 %v4351, %v4349
        %v4398 = vpack.c.b16 %v4354, %v4352
        %v4399 = vpack.c.b16 %v4355, %v4353
        %v4400 = vpack.c.b16 %v4358, %v4356
        %v4401 = vpack.c.b16 %v4359, %v4357
        %v4402 = vpack.c.b16 %v4362, %v4360
        %v4403 = vpack.c.b16 %v4363, %v4361
        %4444 = vmatprep.subr.bf16.mxu0 %v2809
        %4445 = vmatpush1.bf16.msra.mxu0 %v2808
        %4446 = vmatprep.subr.bf16.mxu0 %v2813
        %4447 = vmatpush1.bf16.msra.mxu0 %v2812
        %4448 = vmatprep.subr.bf16.mxu0 %v2817
        %4449 = vmatpush1.bf16.msra.mxu0 %v2816
        %4450 = vmatprep.subr.bf16.mxu0 %v2821
        %4451 = vmatpush1.bf16.msra.mxu0 %v2820
        %4452 = vmatprep.subr.bf16.mxu0 %v2825
        %4453 = vmatpush1.bf16.msra.mxu0 %v2824
        %4454 = vmatprep.subr.bf16.mxu0 %v2829
        %4455 = vmatpush1.bf16.msra.mxu0 %v2828
        %4456 = vmatprep.subr.bf16.mxu0 %v2833
        %4457 = vmatpush1.bf16.msra.mxu0 %v2832
        %4458 = vmatprep.subr.bf16.mxu0 %v2837
        %4459 = vmatpush1.bf16.msra.mxu0 %v2836
        %4460 = vmatprep.subr.bf16.mxu0 %v2841
        %4461 = vmatpush1.bf16.msra.mxu0 %v2840
        %4462 = vmatprep.subr.bf16.mxu0 %v2845
        %4463 = vmatpush1.bf16.msra.mxu0 %v2844
        %4464 = vmatprep.subr.bf16.mxu0 %v2849
        %4465 = vmatpush1.bf16.msra.mxu0 %v2848
        %4466 = vmatprep.subr.bf16.mxu0 %v2853
        %4467 = vmatpush1.bf16.msra.mxu0 %v2852
        %4468 = vmatprep.subr.bf16.mxu0 %v2857
        %4469 = vmatpush1.bf16.msra.mxu0 %v2856
        %4470 = vmatprep.subr.bf16.mxu0 %v2861
        %4471 = vmatpush1.bf16.msra.mxu0 %v2860
        %4472 = vmatprep.subr.bf16.mxu0 %v2865
        %4473 = vmatpush1.bf16.msra.mxu0 %v2864
        %4474 = vmatprep.subr.bf16.mxu0 %v2869
        %4475 = vmatpush1.bf16.msra.mxu0 %v2868
        %4476 = vmatprep.mubr.bf16.mxu0 %v4365
        %4477 = vmatmul.mubr.bf16.gmra.mrb[0].mxu0 %v4364
        %v4478 = vpop.f32.mrb[0].mxu0
        %v4479 = vadd.f32 0.0, %v4478
        %v4480 = vpop.f32.mrb[0].mxu0
        %v4481 = vadd.f32 0.0, %v4480
        %v4482 = vpop.f32.mrb[0].mxu0
        %v4483 = vadd.f32 0.0, %v4482
        %v4484 = vpop.f32.mrb[0].mxu0
        %v4485 = vadd.f32 0.0, %v4484
        %4486 = vmatprep.mubr.bf16.mxu0 %v4367
        %4487 = vmatmul.mubr.bf16.gmra.mrb[0].mxu0 %v4366
        %v4488 = vpop.f32.mrb[0].mxu0
        %v4489 = vadd.f32 0.0, %v4488
        %v4490 = vpop.f32.mrb[0].mxu0
        %v4491 = vadd.f32 0.0, %v4490
        %v4492 = vpop.f32.mrb[0].mxu0
        %v4493 = vadd.f32 0.0, %v4492
        %v4494 = vpop.f32.mrb[0].mxu0
        %v4495 = vadd.f32 0.0, %v4494
        %4496 = vmatprep.mubr.bf16.mxu0 %v4369
        %4497 = vmatmul.mubr.bf16.gmra.mrb[0].mxu0 %v4368
        %v4498 = vpop.f32.mrb[0].mxu0
        %v4499 = vadd.f32 0.0, %v4498
        %v4500 = vpop.f32.mrb[0].mxu0
        %v4501 = vadd.f32 0.0, %v4500
        %v4502 = vpop.f32.mrb[0].mxu0
        %v4503 = vadd.f32 0.0, %v4502
        %v4504 = vpop.f32.mrb[0].mxu0
        %v4505 = vadd.f32 0.0, %v4504
        %4506 = vmatprep.mubr.bf16.mxu0 %v4371
        %4507 = vmatmul.mubr.bf16.gmra.mrb[0].mxu0 %v4370
        %v4508 = vpop.f32.mrb[0].mxu0
        %v4509 = vadd.f32 0.0, %v4508
        %v4510 = vpop.f32.mrb[0].mxu0
        %v4511 = vadd.f32 0.0, %v4510
        %v4512 = vpop.f32.mrb[0].mxu0
        %v4513 = vadd.f32 0.0, %v4512
        %v4514 = vpop.f32.mrb[0].mxu0
        %v4515 = vadd.f32 0.0, %v4514
        %4516 = vmatprep.mubr.bf16.mxu0 %v4373
        %4517 = vmatmul.mubr.bf16.gmra.mrb[0].mxu0 %v4372
        %v4518 = vpop.f32.mrb[0].mxu0
        %v4519 = vadd.f32 0.0, %v4518
        %v4520 = vpop.f32.mrb[0].mxu0
        %v4521 = vadd.f32 0.0, %v4520
        %v4522 = vpop.f32.mrb[0].mxu0
        %v4523 = vadd.f32 0.0, %v4522
        %v4524 = vpop.f32.mrb[0].mxu0
        %v4525 = vadd.f32 0.0, %v4524
        %4526 = vmatprep.mubr.bf16.mxu0 %v4375
        %4527 = vmatmul.mubr.bf16.gmra.mrb[0].mxu0 %v4374
        %v4528 = vpop.f32.mrb[0].mxu0
        %v4529 = vadd.f32 0.0, %v4528
        %v4530 = vpop.f32.mrb[0].mxu0
        %v4531 = vadd.f32 0.0, %v4530
        %v4532 = vpop.f32.mrb[0].mxu0
        %v4533 = vadd.f32 0.0, %v4532
        %v4534 = vpop.f32.mrb[0].mxu0
        %v4535 = vadd.f32 0.0, %v4534
        %4536 = vmatprep.mubr.bf16.mxu0 %v4377
        %4537 = vmatmul.mubr.bf16.gmra.mrb[0].mxu0 %v4376
        %v4538 = vpop.f32.mrb[0].mxu0
        %v4539 = vadd.f32 0.0, %v4538
        %v4540 = vpop.f32.mrb[0].mxu0
        %v4541 = vadd.f32 0.0, %v4540
        %v4542 = vpop.f32.mrb[0].mxu0
        %v4543 = vadd.f32 0.0, %v4542
        %v4544 = vpop.f32.mrb[0].mxu0
        %v4545 = vadd.f32 0.0, %v4544
        %4546 = vmatprep.mubr.bf16.mxu0 %v4379
        %4547 = vmatmul.mubr.bf16.gmra.mrb[0].mxu0 %v4378
        %v4548 = vpop.f32.mrb[0].mxu0
        %v4549 = vadd.f32 0.0, %v4548
        %v4550 = vpop.f32.mrb[0].mxu0
        %v4551 = vadd.f32 0.0, %v4550
        %v4552 = vpop.f32.mrb[0].mxu0
        %v4553 = vadd.f32 0.0, %v4552
        %v4554 = vpop.f32.mrb[0].mxu0
        %v4555 = vadd.f32 0.0, %v4554
        %4556 = vmatprep.mubr.bf16.mxu0 %v4381
        %4557 = vmatmul.mubr.bf16.gmra.mrb[0].mxu0 %v4380
        %v4558 = vpop.f32.mrb[0].mxu0
        %v4559 = vadd.f32 0.0, %v4558
        %v4560 = vpop.f32.mrb[0].mxu0
        %v4561 = vadd.f32 0.0, %v4560
        %v4562 = vpop.f32.mrb[0].mxu0
        %v4563 = vadd.f32 0.0, %v4562
        %v4564 = vpop.f32.mrb[0].mxu0
        %v4565 = vadd.f32 0.0, %v4564
        %4566 = vmatprep.mubr.bf16.mxu0 %v4383
        %4567 = vmatmul.mubr.bf16.gmra.mrb[0].mxu0 %v4382
        %v4568 = vpop.f32.mrb[0].mxu0
        %v4569 = vadd.f32 0.0, %v4568
        %v4570 = vpop.f32.mrb[0].mxu0
        %v4571 = vadd.f32 0.0, %v4570
        %v4572 = vpop.f32.mrb[0].mxu0
        %v4573 = vadd.f32 0.0, %v4572
        %v4574 = vpop.f32.mrb[0].mxu0
        %v4575 = vadd.f32 0.0, %v4574
        %4576 = vmatprep.mubr.bf16.mxu0 %v4385
        %4577 = vmatmul.mubr.bf16.gmra.mrb[0].mxu0 %v4384
        %v4578 = vpop.f32.mrb[0].mxu0
        %v4579 = vadd.f32 0.0, %v4578
        %v4580 = vpop.f32.mrb[0].mxu0
        %v4581 = vadd.f32 0.0, %v4580
        %v4582 = vpop.f32.mrb[0].mxu0
        %v4583 = vadd.f32 0.0, %v4582
        %v4584 = vpop.f32.mrb[0].mxu0
        %v4585 = vadd.f32 0.0, %v4584
        %4586 = vmatprep.mubr.bf16.mxu0 %v4387
        %4587 = vmatmul.mubr.bf16.gmra.mrb[0].mxu0 %v4386
        %v4588 = vpop.f32.mrb[0].mxu0
        %v4589 = vadd.f32 0.0, %v4588
        %v4590 = vpop.f32.mrb[0].mxu0
        %v4591 = vadd.f32 0.0, %v4590
        %v4592 = vpop.f32.mrb[0].mxu0
        %v4593 = vadd.f32 0.0, %v4592
        %v4594 = vpop.f32.mrb[0].mxu0
        %v4595 = vadd.f32 0.0, %v4594
        %4596 = vmatprep.mubr.bf16.mxu0 %v4389
        %4597 = vmatmul.mubr.bf16.gmra.mrb[0].mxu0 %v4388
        %v4598 = vpop.f32.mrb[0].mxu0
        %v4599 = vadd.f32 0.0, %v4598
        %v4600 = vpop.f32.mrb[0].mxu0
        %v4601 = vadd.f32 0.0, %v4600
        %v4602 = vpop.f32.mrb[0].mxu0
        %v4603 = vadd.f32 0.0, %v4602
        %v4604 = vpop.f32.mrb[0].mxu0
        %v4605 = vadd.f32 0.0, %v4604
        %4606 = vmatprep.mubr.bf16.mxu0 %v4391
        %4607 = vmatmul.mubr.bf16.gmra.mrb[0].mxu0 %v4390
        %v4608 = vpop.f32.mrb[0].mxu0
        %v4609 = vadd.f32 0.0, %v4608
        %v4610 = vpop.f32.mrb[0].mxu0
        %v4611 = vadd.f32 0.0, %v4610
        %v4612 = vpop.f32.mrb[0].mxu0
        %v4613 = vadd.f32 0.0, %v4612
        %v4614 = vpop.f32.mrb[0].mxu0
        %v4615 = vadd.f32 0.0, %v4614
        %4616 = vmatprep.mubr.bf16.mxu0 %v4393
        %4617 = vmatmul.mubr.bf16.gmra.mrb[0].mxu0 %v4392
        %v4618 = vpop.f32.mrb[0].mxu0
        %v4619 = vadd.f32 0.0, %v4618
        %v4620 = vpop.f32.mrb[0].mxu0
        %v4621 = vadd.f32 0.0, %v4620
        %v4622 = vpop.f32.mrb[0].mxu0
        %v4623 = vadd.f32 0.0, %v4622
        %v4624 = vpop.f32.mrb[0].mxu0
        %v4625 = vadd.f32 0.0, %v4624
        %4626 = vmatprep.mubr.bf16.mxu0 %v4395
        %4627 = vmatmul.mubr.bf16.gmra.mrb[0].mxu0 %v4394
        %v4628 = vpop.f32.mrb[0].mxu0
        %v4629 = vadd.f32 0.0, %v4628
        %v4630 = vpop.f32.mrb[0].mxu0
        %v4631 = vadd.f32 0.0, %v4630
        %v4632 = vpop.f32.mrb[0].mxu0
        %v4633 = vadd.f32 0.0, %v4632
        %v4634 = vpop.f32.mrb[0].mxu0
        %v4635 = vadd.f32 0.0, %v4634
        %4636 = vmatprep.mubr.bf16.mxu0 %v4397
        %4637 = vmatmul.mubr.bf16.gmra.mrb[0].mxu0 %v4396
        %v4638 = vpop.f32.mrb[0].mxu0
        %v4639 = vadd.f32 0.0, %v4638
        %v4640 = vpop.f32.mrb[0].mxu0
        %v4641 = vadd.f32 0.0, %v4640
        %v4642 = vpop.f32.mrb[0].mxu0
        %v4643 = vadd.f32 0.0, %v4642
        %v4644 = vpop.f32.mrb[0].mxu0
        %v4645 = vadd.f32 0.0, %v4644
        %4646 = vmatprep.mubr.bf16.mxu0 %v4399
        %4647 = vmatmul.mubr.bf16.gmra.mrb[0].mxu0 %v4398
        %v4648 = vpop.f32.mrb[0].mxu0
        %v4649 = vadd.f32 0.0, %v4648
        %v4650 = vpop.f32.mrb[0].mxu0
        %v4651 = vadd.f32 0.0, %v4650
        %v4652 = vpop.f32.mrb[0].mxu0
        %v4653 = vadd.f32 0.0, %v4652
        %v4654 = vpop.f32.mrb[0].mxu0
        %v4655 = vadd.f32 0.0, %v4654
        %4656 = vmatprep.mubr.bf16.mxu0 %v4401
        %4657 = vmatmul.mubr.bf16.gmra.mrb[0].mxu0 %v4400
        %v4658 = vpop.f32.mrb[0].mxu0
        %v4659 = vadd.f32 0.0, %v4658
        %v4660 = vpop.f32.mrb[0].mxu0
        %v4661 = vadd.f32 0.0, %v4660
        %v4662 = vpop.f32.mrb[0].mxu0
        %v4663 = vadd.f32 0.0, %v4662
        %v4664 = vpop.f32.mrb[0].mxu0
        %v4665 = vadd.f32 0.0, %v4664
        %4666 = vmatprep.mubr.bf16.mxu0 %v4403
        %4667 = vmatmul.mubr.bf16.gmra.mrb[0].mxu0 %v4402
        %v4668 = vpop.f32.mrb[0].mxu0
        %v4669 = vadd.f32 0.0, %v4668
        %v4670 = vpop.f32.mrb[0].mxu0
        %v4671 = vadd.f32 0.0, %v4670
        %v4672 = vpop.f32.mrb[0].mxu0
        %v4673 = vadd.f32 0.0, %v4672
        %v4674 = vpop.f32.mrb[0].mxu0
        %v4675 = vadd.f32 0.0, %v4674
        %4676 = vdwg.mxu0
        %4677 = vmatprep.subr.bf16.mxu0 %v2811
        %4678 = vmatpush1.bf16.msra.mxu0 %v2810
        %4679 = vmatprep.subr.bf16.mxu0 %v2815
        %4680 = vmatpush1.bf16.msra.mxu0 %v2814
        %4681 = vmatprep.subr.bf16.mxu0 %v2819
        %4682 = vmatpush1.bf16.msra.mxu0 %v2818
        %4683 = vmatprep.subr.bf16.mxu0 %v2823
        %4684 = vmatpush1.bf16.msra.mxu0 %v2822
        %4685 = vmatprep.subr.bf16.mxu0 %v2827
        %4686 = vmatpush1.bf16.msra.mxu0 %v2826
        %4687 = vmatprep.subr.bf16.mxu0 %v2831
        %4688 = vmatpush1.bf16.msra.mxu0 %v2830
        %4689 = vmatprep.subr.bf16.mxu0 %v2835
        %4690 = vmatpush1.bf16.msra.mxu0 %v2834
        %4691 = vmatprep.subr.bf16.mxu0 %v2839
        %4692 = vmatpush1.bf16.msra.mxu0 %v2838
        %4693 = vmatprep.subr.bf16.mxu0 %v2843
        %4694 = vmatpush1.bf16.msra.mxu0 %v2842
        %4695 = vmatprep.subr.bf16.mxu0 %v2847
        %4696 = vmatpush1.bf16.msra.mxu0 %v2846
        %4697 = vmatprep.subr.bf16.mxu0 %v2851
        %4698 = vmatpush1.bf16.msra.mxu0 %v2850
        %4699 = vmatprep.subr.bf16.mxu0 %v2855
        %4700 = vmatpush1.bf16.msra.mxu0 %v2854
        %4701 = vmatprep.subr.bf16.mxu0 %v2859
        %4702 = vmatpush1.bf16.msra.mxu0 %v2858
        %4703 = vmatprep.subr.bf16.mxu0 %v2863
        %4704 = vmatpush1.bf16.msra.mxu0 %v2862
        %4705 = vmatprep.subr.bf16.mxu0 %v2867
        %4706 = vmatpush1.bf16.msra.mxu0 %v2866
        %4707 = vmatprep.subr.bf16.mxu0 %v2871
        %4708 = vmatpush1.bf16.msra.mxu0 %v2870
        %4709 = vmatprep.mubr.bf16.mxu0 %v4365
        %4710 = vmatmul.mubr.bf16.gmra.mrb[0].mxu0 %v4364
        %v4711 = vpop.f32.mrb[0].mxu0
        %v4712 = vadd.f32 0.0, %v4711
        %v4713 = vpop.f32.mrb[0].mxu0
        %v4714 = vadd.f32 0.0, %v4713
        %v4715 = vpop.f32.mrb[0].mxu0
        %v4716 = vadd.f32 0.0, %v4715
        %v4717 = vpop.f32.mrb[0].mxu0
        %v4718 = vadd.f32 0.0, %v4717
        %4719 = vmatprep.mubr.bf16.mxu0 %v4367
        %4720 = vmatmul.mubr.bf16.gmra.mrb[0].mxu0 %v4366
        %v4721 = vpop.f32.mrb[0].mxu0
        %v4722 = vadd.f32 0.0, %v4721
        %v4723 = vpop.f32.mrb[0].mxu0
        %v4724 = vadd.f32 0.0, %v4723
        %v4725 = vpop.f32.mrb[0].mxu0
        %v4726 = vadd.f32 0.0, %v4725
        %v4727 = vpop.f32.mrb[0].mxu0
        %v4728 = vadd.f32 0.0, %v4727
        %4729 = vmatprep.mubr.bf16.mxu0 %v4369
        %4730 = vmatmul.mubr.bf16.gmra.mrb[0].mxu0 %v4368
        %v4731 = vpop.f32.mrb[0].mxu0
        %v4732 = vadd.f32 0.0, %v4731
        %v4733 = vpop.f32.mrb[0].mxu0
        %v4734 = vadd.f32 0.0, %v4733
        %v4735 = vpop.f32.mrb[0].mxu0
        %v4736 = vadd.f32 0.0, %v4735
        %v4737 = vpop.f32.mrb[0].mxu0
        %v4738 = vadd.f32 0.0, %v4737
        %4739 = vmatprep.mubr.bf16.mxu0 %v4371
        %4740 = vmatmul.mubr.bf16.gmra.mrb[0].mxu0 %v4370
        %v4741 = vpop.f32.mrb[0].mxu0
        %v4742 = vadd.f32 0.0, %v4741
        %v4743 = vpop.f32.mrb[0].mxu0
        %v4744 = vadd.f32 0.0, %v4743
        %v4745 = vpop.f32.mrb[0].mxu0
        %v4746 = vadd.f32 0.0, %v4745
        %v4747 = vpop.f32.mrb[0].mxu0
        %v4748 = vadd.f32 0.0, %v4747
        %4749 = vmatprep.mubr.bf16.mxu0 %v4373
        %4750 = vmatmul.mubr.bf16.gmra.mrb[0].mxu0 %v4372
        %v4751 = vpop.f32.mrb[0].mxu0
        %v4752 = vadd.f32 0.0, %v4751
        %v4753 = vpop.f32.mrb[0].mxu0
        %v4754 = vadd.f32 0.0, %v4753
        %v4755 = vpop.f32.mrb[0].mxu0
        %v4756 = vadd.f32 0.0, %v4755
        %v4757 = vpop.f32.mrb[0].mxu0
        %v4758 = vadd.f32 0.0, %v4757
        %4759 = vmatprep.mubr.bf16.mxu0 %v4375
        %4760 = vmatmul.mubr.bf16.gmra.mrb[0].mxu0 %v4374
        %v4761 = vpop.f32.mrb[0].mxu0
        %v4762 = vadd.f32 0.0, %v4761
        %v4763 = vpop.f32.mrb[0].mxu0
        %v4764 = vadd.f32 0.0, %v4763
        %v4765 = vpop.f32.mrb[0].mxu0
        %v4766 = vadd.f32 0.0, %v4765
        %v4767 = vpop.f32.mrb[0].mxu0
        %v4768 = vadd.f32 0.0, %v4767
        %4769 = vmatprep.mubr.bf16.mxu0 %v4377
        %4770 = vmatmul.mubr.bf16.gmra.mrb[0].mxu0 %v4376
        %v4771 = vpop.f32.mrb[0].mxu0
        %v4772 = vadd.f32 0.0, %v4771
        %v4773 = vpop.f32.mrb[0].mxu0
        %v4774 = vadd.f32 0.0, %v4773
        %v4775 = vpop.f32.mrb[0].mxu0
        %v4776 = vadd.f32 0.0, %v4775
        %v4777 = vpop.f32.mrb[0].mxu0
        %v4778 = vadd.f32 0.0, %v4777
        %4779 = vmatprep.mubr.bf16.mxu0 %v4379
        %4780 = vmatmul.mubr.bf16.gmra.mrb[0].mxu0 %v4378
        %v4781 = vpop.f32.mrb[0].mxu0
        %v4782 = vadd.f32 0.0, %v4781
        %v4783 = vpop.f32.mrb[0].mxu0
        %v4784 = vadd.f32 0.0, %v4783
        %v4785 = vpop.f32.mrb[0].mxu0
        %v4786 = vadd.f32 0.0, %v4785
        %v4787 = vpop.f32.mrb[0].mxu0
        %v4788 = vadd.f32 0.0, %v4787
        %4789 = vmatprep.mubr.bf16.mxu0 %v4381
        %4790 = vmatmul.mubr.bf16.gmra.mrb[0].mxu0 %v4380
        %v4791 = vpop.f32.mrb[0].mxu0
        %v4792 = vadd.f32 0.0, %v4791
        %v4793 = vpop.f32.mrb[0].mxu0
        %v4794 = vadd.f32 0.0, %v4793
        %v4795 = vpop.f32.mrb[0].mxu0
        %v4796 = vadd.f32 0.0, %v4795
        %v4797 = vpop.f32.mrb[0].mxu0
        %v4798 = vadd.f32 0.0, %v4797
        %4799 = vmatprep.mubr.bf16.mxu0 %v4383
        %4800 = vmatmul.mubr.bf16.gmra.mrb[0].mxu0 %v4382
        %v4801 = vpop.f32.mrb[0].mxu0
        %v4802 = vadd.f32 0.0, %v4801
        %v4803 = vpop.f32.mrb[0].mxu0
        %v4804 = vadd.f32 0.0, %v4803
        %v4805 = vpop.f32.mrb[0].mxu0
        %v4806 = vadd.f32 0.0, %v4805
        %v4807 = vpop.f32.mrb[0].mxu0
        %v4808 = vadd.f32 0.0, %v4807
        %4809 = vmatprep.mubr.bf16.mxu0 %v4385
        %4810 = vmatmul.mubr.bf16.gmra.mrb[0].mxu0 %v4384
        %v4811 = vpop.f32.mrb[0].mxu0
        %v4812 = vadd.f32 0.0, %v4811
        %v4813 = vpop.f32.mrb[0].mxu0
        %v4814 = vadd.f32 0.0, %v4813
        %v4815 = vpop.f32.mrb[0].mxu0
        %v4816 = vadd.f32 0.0, %v4815
        %v4817 = vpop.f32.mrb[0].mxu0
        %v4818 = vadd.f32 0.0, %v4817
        %4819 = vmatprep.mubr.bf16.mxu0 %v4387
        %4820 = vmatmul.mubr.bf16.gmra.mrb[0].mxu0 %v4386
        %v4821 = vpop.f32.mrb[0].mxu0
        %v4822 = vadd.f32 0.0, %v4821
        %v4823 = vpop.f32.mrb[0].mxu0
        %v4824 = vadd.f32 0.0, %v4823
        %v4825 = vpop.f32.mrb[0].mxu0
        %v4826 = vadd.f32 0.0, %v4825
        %v4827 = vpop.f32.mrb[0].mxu0
        %v4828 = vadd.f32 0.0, %v4827
        %4829 = vmatprep.mubr.bf16.mxu0 %v4389
        %4830 = vmatmul.mubr.bf16.gmra.mrb[0].mxu0 %v4388
        %v4831 = vpop.f32.mrb[0].mxu0
        %v4832 = vadd.f32 0.0, %v4831
        %v4833 = vpop.f32.mrb[0].mxu0
        %v4834 = vadd.f32 0.0, %v4833
        %v4835 = vpop.f32.mrb[0].mxu0
        %v4836 = vadd.f32 0.0, %v4835
        %v4837 = vpop.f32.mrb[0].mxu0
        %v4838 = vadd.f32 0.0, %v4837
        %4839 = vmatprep.mubr.bf16.mxu0 %v4391
        %4840 = vmatmul.mubr.bf16.gmra.mrb[0].mxu0 %v4390
        %v4841 = vpop.f32.mrb[0].mxu0
        %v4842 = vadd.f32 0.0, %v4841
        %v4843 = vpop.f32.mrb[0].mxu0
        %v4844 = vadd.f32 0.0, %v4843
        %v4845 = vpop.f32.mrb[0].mxu0
        %v4846 = vadd.f32 0.0, %v4845
        %v4847 = vpop.f32.mrb[0].mxu0
        %v4848 = vadd.f32 0.0, %v4847
        %4849 = vmatprep.mubr.bf16.mxu0 %v4393
        %4850 = vmatmul.mubr.bf16.gmra.mrb[0].mxu0 %v4392
        %v4851 = vpop.f32.mrb[0].mxu0
        %v4852 = vadd.f32 0.0, %v4851
        %v4853 = vpop.f32.mrb[0].mxu0
        %v4854 = vadd.f32 0.0, %v4853
        %v4855 = vpop.f32.mrb[0].mxu0
        %v4856 = vadd.f32 0.0, %v4855
        %v4857 = vpop.f32.mrb[0].mxu0
        %v4858 = vadd.f32 0.0, %v4857
        %4859 = vmatprep.mubr.bf16.mxu0 %v4395
        %4860 = vmatmul.mubr.bf16.gmra.mrb[0].mxu0 %v4394
        %v4861 = vpop.f32.mrb[0].mxu0
        %v4862 = vadd.f32 0.0, %v4861
        %v4863 = vpop.f32.mrb[0].mxu0
        %v4864 = vadd.f32 0.0, %v4863
        %v4865 = vpop.f32.mrb[0].mxu0
        %v4866 = vadd.f32 0.0, %v4865
        %v4867 = vpop.f32.mrb[0].mxu0
        %v4868 = vadd.f32 0.0, %v4867
        %4869 = vmatprep.mubr.bf16.mxu0 %v4397
        %4870 = vmatmul.mubr.bf16.gmra.mrb[0].mxu0 %v4396
        %v4871 = vpop.f32.mrb[0].mxu0
        %v4872 = vadd.f32 0.0, %v4871
        %v4873 = vpop.f32.mrb[0].mxu0
        %v4874 = vadd.f32 0.0, %v4873
        %v4875 = vpop.f32.mrb[0].mxu0
        %v4876 = vadd.f32 0.0, %v4875
        %v4877 = vpop.f32.mrb[0].mxu0
        %v4878 = vadd.f32 0.0, %v4877
        %4879 = vmatprep.mubr.bf16.mxu0 %v4399
        %4880 = vmatmul.mubr.bf16.gmra.mrb[0].mxu0 %v4398
        %v4881 = vpop.f32.mrb[0].mxu0
        %v4882 = vadd.f32 0.0, %v4881
        %v4883 = vpop.f32.mrb[0].mxu0
        %v4884 = vadd.f32 0.0, %v4883
        %v4885 = vpop.f32.mrb[0].mxu0
        %v4886 = vadd.f32 0.0, %v4885
        %v4887 = vpop.f32.mrb[0].mxu0
        %v4888 = vadd.f32 0.0, %v4887
        %4889 = vmatprep.mubr.bf16.mxu0 %v4401
        %4890 = vmatmul.mubr.bf16.gmra.mrb[0].mxu0 %v4400
        %v4891 = vpop.f32.mrb[0].mxu0
        %v4892 = vadd.f32 0.0, %v4891
        %v4893 = vpop.f32.mrb[0].mxu0
        %v4894 = vadd.f32 0.0, %v4893
        %v4895 = vpop.f32.mrb[0].mxu0
        %v4896 = vadd.f32 0.0, %v4895
        %v4897 = vpop.f32.mrb[0].mxu0
        %v4898 = vadd.f32 0.0, %v4897
        %4899 = vmatprep.mubr.bf16.mxu0 %v4403
        %4900 = vmatmul.mubr.bf16.gmra.mrb[0].mxu0 %v4402
        %v4901 = vpop.f32.mrb[0].mxu0
        %v4902 = vadd.f32 0.0, %v4901
        %v4903 = vpop.f32.mrb[0].mxu0
        %v4904 = vadd.f32 0.0, %v4903
        %v4905 = vpop.f32.mrb[0].mxu0
        %v4906 = vadd.f32 0.0, %v4905
        %v4907 = vpop.f32.mrb[0].mxu0
        %v4908 = vadd.f32 0.0, %v4907
        %4909 = vdwg.mxu0
        %v4910 = vadd.f32 %v3773, %v4479
        %v4911 = vadd.f32 %v3775, %v4481
        %v4912 = vadd.f32 %v4006, %v4712
        %v4913 = vadd.f32 %v4008, %v4714
        %v4914 = vadd.f32 %v3777, %v4483
        %v4915 = vadd.f32 %v3779, %v4485
        %v4916 = vadd.f32 %v4010, %v4716
        %v4917 = vadd.f32 %v4012, %v4718
        %v4918 = vadd.f32 %v3783, %v4489
        %v4919 = vadd.f32 %v3785, %v4491
        %v4920 = vadd.f32 %v4016, %v4722
        %v4921 = vadd.f32 %v4018, %v4724
        %v4922 = vadd.f32 %v3787, %v4493
        %v4923 = vadd.f32 %v3789, %v4495
        %v4924 = vadd.f32 %v4020, %v4726
        %v4925 = vadd.f32 %v4022, %v4728
        %v4926 = vadd.f32 %v3793, %v4499
        %v4927 = vadd.f32 %v3795, %v4501
        %v4928 = vadd.f32 %v4026, %v4732
        %v4929 = vadd.f32 %v4028, %v4734
        %v4930 = vadd.f32 %v3797, %v4503
        %v4931 = vadd.f32 %v3799, %v4505
        %v4932 = vadd.f32 %v4030, %v4736
        %v4933 = vadd.f32 %v4032, %v4738
        %v4934 = vadd.f32 %v3803, %v4509
        %v4935 = vadd.f32 %v3805, %v4511
        %v4936 = vadd.f32 %v4036, %v4742
        %v4937 = vadd.f32 %v4038, %v4744
        %v4938 = vadd.f32 %v3807, %v4513
        %v4939 = vadd.f32 %v3809, %v4515
        %v4940 = vadd.f32 %v4040, %v4746
        %v4941 = vadd.f32 %v4042, %v4748
        %v4942 = vadd.f32 %v3813, %v4519
        %v4943 = vadd.f32 %v3815, %v4521
        %v4944 = vadd.f32 %v4046, %v4752
        %v4945 = vadd.f32 %v4048, %v4754
        %v4946 = vadd.f32 %v3817, %v4523
        %v4947 = vadd.f32 %v3819, %v4525
        %v4948 = vadd.f32 %v4050, %v4756
        %v4949 = vadd.f32 %v4052, %v4758
        %v4950 = vadd.f32 %v3823, %v4529
        %v4951 = vadd.f32 %v3825, %v4531
        %v4952 = vadd.f32 %v4056, %v4762
        %v4953 = vadd.f32 %v4058, %v4764
        %v4954 = vadd.f32 %v3827, %v4533
        %v4955 = vadd.f32 %v3829, %v4535
        %v4956 = vadd.f32 %v4060, %v4766
        %v4957 = vadd.f32 %v4062, %v4768
        %v4958 = vadd.f32 %v3833, %v4539
        %v4959 = vadd.f32 %v3835, %v4541
        %v4960 = vadd.f32 %v4066, %v4772
        %v4961 = vadd.f32 %v4068, %v4774
        %v4962 = vadd.f32 %v3837, %v4543
        %v4963 = vadd.f32 %v3839, %v4545
        %v4964 = vadd.f32 %v4070, %v4776
        %v4965 = vadd.f32 %v4072, %v4778
        %v4966 = vadd.f32 %v3843, %v4549
        %v4967 = vadd.f32 %v3845, %v4551
        %v4968 = vadd.f32 %v4076, %v4782
        %v4969 = vadd.f32 %v4078, %v4784
        %v4970 = vadd.f32 %v3847, %v4553
        %v4971 = vadd.f32 %v3849, %v4555
        %v4972 = vadd.f32 %v4080, %v4786
        %v4973 = vadd.f32 %v4082, %v4788
        %v4974 = vadd.f32 %v3853, %v4559
        %v4975 = vadd.f32 %v3855, %v4561
        %v4976 = vadd.f32 %v4086, %v4792
        %v4977 = vadd.f32 %v4088, %v4794
        %v4978 = vadd.f32 %v3857, %v4563
        %v4979 = vadd.f32 %v3859, %v4565
        %v4980 = vadd.f32 %v4090, %v4796
        %v4981 = vadd.f32 %v4092, %v4798
        %v4982 = vadd.f32 %v3863, %v4569
        %v4983 = vadd.f32 %v3865, %v4571
        %v4984 = vadd.f32 %v4096, %v4802
        %v4985 = vadd.f32 %v4098, %v4804
        %v4986 = vadd.f32 %v3867, %v4573
        %v4987 = vadd.f32 %v3869, %v4575
        %v4988 = vadd.f32 %v4100, %v4806
        %v4989 = vadd.f32 %v4102, %v4808
        %v4990 = vadd.f32 %v3873, %v4579
        %v4991 = vadd.f32 %v3875, %v4581
        %v4992 = vadd.f32 %v4106, %v4812
        %v4993 = vadd.f32 %v4108, %v4814
        %v4994 = vadd.f32 %v3877, %v4583
        %v4995 = vadd.f32 %v3879, %v4585
        %v4996 = vadd.f32 %v4110, %v4816
        %v4997 = vadd.f32 %v4112, %v4818
        %v4998 = vadd.f32 %v3883, %v4589
        %v4999 = vadd.f32 %v3885, %v4591
        %v5000 = vadd.f32 %v4116, %v4822
        %v5001 = vadd.f32 %v4118, %v4824
        %v5002 = vadd.f32 %v3887, %v4593
        %v5003 = vadd.f32 %v3889, %v4595
        %v5004 = vadd.f32 %v4120, %v4826
        %v5005 = vadd.f32 %v4122, %v4828
        %v5006 = vadd.f32 %v3893, %v4599
        %v5007 = vadd.f32 %v3895, %v4601
        %v5008 = vadd.f32 %v4126, %v4832
        %v5009 = vadd.f32 %v4128, %v4834
        %v5010 = vadd.f32 %v3897, %v4603
        %v5011 = vadd.f32 %v3899, %v4605
        %v5012 = vadd.f32 %v4130, %v4836
        %v5013 = vadd.f32 %v4132, %v4838
        %v5014 = vadd.f32 %v3903, %v4609
        %v5015 = vadd.f32 %v3905, %v4611
        %v5016 = vadd.f32 %v4136, %v4842
        %v5017 = vadd.f32 %v4138, %v4844
        %v5018 = vadd.f32 %v3907, %v4613
        %v5019 = vadd.f32 %v3909, %v4615
        %v5020 = vadd.f32 %v4140, %v4846
        %v5021 = vadd.f32 %v4142, %v4848
        %v5022 = vadd.f32 %v3913, %v4619
        %v5023 = vadd.f32 %v3915, %v4621
        %v5024 = vadd.f32 %v4146, %v4852
        %v5025 = vadd.f32 %v4148, %v4854
        %v5026 = vadd.f32 %v3917, %v4623
        %v5027 = vadd.f32 %v3919, %v4625
        %v5028 = vadd.f32 %v4150, %v4856
        %v5029 = vadd.f32 %v4152, %v4858
        %v5030 = vadd.f32 %v3923, %v4629
        %v5031 = vadd.f32 %v3925, %v4631
        %v5032 = vadd.f32 %v4156, %v4862
        %v5033 = vadd.f32 %v4158, %v4864
        %v5034 = vadd.f32 %v3927, %v4633
        %v5035 = vadd.f32 %v3929, %v4635
        %v5036 = vadd.f32 %v4160, %v4866
        %v5037 = vadd.f32 %v4162, %v4868
        %v5038 = vadd.f32 %v3933, %v4639
        %v5039 = vadd.f32 %v3935, %v4641
        %v5040 = vadd.f32 %v4166, %v4872
        %v5041 = vadd.f32 %v4168, %v4874
        %v5042 = vadd.f32 %v3937, %v4643
        %v5043 = vadd.f32 %v3939, %v4645
        %v5044 = vadd.f32 %v4170, %v4876
        %v5045 = vadd.f32 %v4172, %v4878
        %v5046 = vadd.f32 %v3943, %v4649
        %v5047 = vadd.f32 %v3945, %v4651
        %v5048 = vadd.f32 %v4176, %v4882
        %v5049 = vadd.f32 %v4178, %v4884
        %v5050 = vadd.f32 %v3947, %v4653
        %v5051 = vadd.f32 %v3949, %v4655
        %v5052 = vadd.f32 %v4180, %v4886
        %v5053 = vadd.f32 %v4182, %v4888
        %v5054 = vadd.f32 %v3953, %v4659
        %v5055 = vadd.f32 %v3955, %v4661
        %v5056 = vadd.f32 %v4186, %v4892
        %v5057 = vadd.f32 %v4188, %v4894
        %v5058 = vadd.f32 %v3957, %v4663
        %v5059 = vadd.f32 %v3959, %v4665
        %v5060 = vadd.f32 %v4190, %v4896
        %v5061 = vadd.f32 %v4192, %v4898
        %v5062 = vadd.f32 %v3963, %v4669
        %v5063 = vadd.f32 %v3965, %v4671
        %v5064 = vadd.f32 %v4196, %v4902
        %v5065 = vadd.f32 %v4198, %v4904
        %v5066 = vadd.f32 %v3967, %v4673
        %v5067 = vadd.f32 %v3969, %v4675
        %v5068 = vadd.f32 %v4200, %v4906
        %v5069 = vadd.f32 %v4202, %v4908
        %v5070 = vld [vmem:[%s8] sm:$0xff]
        %v5071 = vld [vmem:[%s8 + $0x8] sm:$0xff]
        %v5072 = vld [vmem:[%s8 + $0x10] sm:$0xff]
        %v5073 = vld [vmem:[%s8 + $0x18] sm:$0xff]
        %v5074 = vld [vmem:[%s8 + $0x20] sm:$0xff]
        %v5075 = vld [vmem:[%s8 + $0x28] sm:$0xff]
        %v5076 = vld [vmem:[%s8 + $0x30] sm:$0xff]
        %v5077 = vld [vmem:[%s8 + $0x38] sm:$0xff]
        %v5078 = vld [vmem:[%s8 + $0x40] sm:$0xff]
        %v5079 = vld [vmem:[%s8 + $0x48] sm:$0xff]
        %v5080 = vld [vmem:[%s8 + $0x50] sm:$0xff]
        %v5081 = vld [vmem:[%s8 + $0x58] sm:$0xff]
        %v5082 = vld [vmem:[%s8 + $0x60] sm:$0xff]
        %v5083 = vld [vmem:[%s8 + $0x68] sm:$0xff]
        %v5084 = vld [vmem:[%s8 + $0x70] sm:$0xff]
        %v5085 = vld [vmem:[%s8 + $0x78] sm:$0xff]
        %v5086 = vld [vmem:[%s8 + $0x80] sm:$0xff]
        %v5087 = vld [vmem:[%s8 + $0x88] sm:$0xff]
        %v5088 = vld [vmem:[%s8 + $0x90] sm:$0xff]
        %v5089 = vld [vmem:[%s8 + $0x98] sm:$0xff]
        %v5090 = vld [vmem:[%s8 + $0xa0] sm:$0xff]
        %v5091 = vld [vmem:[%s8 + $0xa8] sm:$0xff]
        %v5092 = vld [vmem:[%s8 + $0xb0] sm:$0xff]
        %v5093 = vld [vmem:[%s8 + $0xb8] sm:$0xff]
        %v5094 = vld [vmem:[%s8 + $0xc0] sm:$0xff]
        %v5095 = vld [vmem:[%s8 + $0xc8] sm:$0xff]
        %v5096 = vld [vmem:[%s8 + $0xd0] sm:$0xff]
        %v5097 = vld [vmem:[%s8 + $0xd8] sm:$0xff]
        %v5098 = vld [vmem:[%s8 + $0xe0] sm:$0xff]
        %v5099 = vld [vmem:[%s8 + $0xe8] sm:$0xff]
        %v5100 = vld [vmem:[%s8 + $0xf0] sm:$0xff]
        %v5101 = vld [vmem:[%s8 + $0xf8] sm:$0xff]
        %v5102 = vld [vmem:[%s8 + $0x100] sm:$0xff]
        %v5103 = vld [vmem:[%s8 + $0x108] sm:$0xff]
        %v5104 = vld [vmem:[%s8 + $0x110] sm:$0xff]
        %v5105 = vld [vmem:[%s8 + $0x118] sm:$0xff]
        %v5106 = vld [vmem:[%s8 + $0x120] sm:$0xff]
        %v5107 = vld [vmem:[%s8 + $0x128] sm:$0xff]
        %v5108 = vld [vmem:[%s8 + $0x130] sm:$0xff]
        %v5109 = vld [vmem:[%s8 + $0x138] sm:$0xff]
        %5111 = vset.pattern.permute.xlu0 0
        %5112 = vperm.xlu0 %5111, %v5070
        %v5113 = vpop.permute.xlu0 %5112
        %5116 = vset.pattern.permute.xlu0 0
        %5117 = vperm.xlu0 %5116, %v5071
        %v5118 = vpop.permute.xlu0 %5117
        %5121 = vset.pattern.permute.xlu0 0
        %5122 = vperm.xlu0 %5121, %v5072
        %v5123 = vpop.permute.xlu0 %5122
        %5126 = vset.pattern.permute.xlu0 0
        %5127 = vperm.xlu0 %5126, %v5073
        %v5128 = vpop.permute.xlu0 %5127
        %5131 = vset.pattern.permute.xlu0 0
        %5132 = vperm.xlu0 %5131, %v5074
        %v5133 = vpop.permute.xlu0 %5132
        %5136 = vset.pattern.permute.xlu0 0
        %5137 = vperm.xlu0 %5136, %v5075
        %v5138 = vpop.permute.xlu0 %5137
        %5141 = vset.pattern.permute.xlu0 0
        %5142 = vperm.xlu0 %5141, %v5076
        %v5143 = vpop.permute.xlu0 %5142
        %5146 = vset.pattern.permute.xlu0 0
        %5147 = vperm.xlu0 %5146, %v5077
        %v5148 = vpop.permute.xlu0 %5147
        %5151 = vset.pattern.permute.xlu0 0
        %5152 = vperm.xlu0 %5151, %v5078
        %v5153 = vpop.permute.xlu0 %5152
        %5156 = vset.pattern.permute.xlu0 0
        %5157 = vperm.xlu0 %5156, %v5079
        %v5158 = vpop.permute.xlu0 %5157
        %5161 = vset.pattern.permute.xlu0 0
        %5162 = vperm.xlu0 %5161, %v5080
        %v5163 = vpop.permute.xlu0 %5162
        %5166 = vset.pattern.permute.xlu0 0
        %5167 = vperm.xlu0 %5166, %v5081
        %v5168 = vpop.permute.xlu0 %5167
        %5171 = vset.pattern.permute.xlu0 0
        %5172 = vperm.xlu0 %5171, %v5082
        %v5173 = vpop.permute.xlu0 %5172
        %5176 = vset.pattern.permute.xlu0 0
        %5177 = vperm.xlu0 %5176, %v5083
        %v5178 = vpop.permute.xlu0 %5177
        %5181 = vset.pattern.permute.xlu0 0
        %5182 = vperm.xlu0 %5181, %v5084
        %v5183 = vpop.permute.xlu0 %5182
        %5186 = vset.pattern.permute.xlu0 0
        %5187 = vperm.xlu0 %5186, %v5085
        %v5188 = vpop.permute.xlu0 %5187
        %5191 = vset.pattern.permute.xlu0 0
        %5192 = vperm.xlu0 %5191, %v5086
        %v5193 = vpop.permute.xlu0 %5192
        %5196 = vset.pattern.permute.xlu0 0
        %5197 = vperm.xlu0 %5196, %v5087
        %v5198 = vpop.permute.xlu0 %5197
        %5201 = vset.pattern.permute.xlu0 0
        %5202 = vperm.xlu0 %5201, %v5088
        %v5203 = vpop.permute.xlu0 %5202
        %5206 = vset.pattern.permute.xlu0 0
        %5207 = vperm.xlu0 %5206, %v5089
        %v5208 = vpop.permute.xlu0 %5207
        %5211 = vset.pattern.permute.xlu0 0
        %5212 = vperm.xlu0 %5211, %v5090
        %v5213 = vpop.permute.xlu0 %5212
        %5216 = vset.pattern.permute.xlu0 0
        %5217 = vperm.xlu0 %5216, %v5091
        %v5218 = vpop.permute.xlu0 %5217
        %5221 = vset.pattern.permute.xlu0 0
        %5222 = vperm.xlu0 %5221, %v5092
        %v5223 = vpop.permute.xlu0 %5222
        %5226 = vset.pattern.permute.xlu0 0
        %5227 = vperm.xlu0 %5226, %v5093
        %v5228 = vpop.permute.xlu0 %5227
        %5231 = vset.pattern.permute.xlu0 0
        %5232 = vperm.xlu0 %5231, %v5094
        %v5233 = vpop.permute.xlu0 %5232
        %5236 = vset.pattern.permute.xlu0 0
        %5237 = vperm.xlu0 %5236, %v5095
        %v5238 = vpop.permute.xlu0 %5237
        %5241 = vset.pattern.permute.xlu0 0
        %5242 = vperm.xlu0 %5241, %v5096
        %v5243 = vpop.permute.xlu0 %5242
        %5246 = vset.pattern.permute.xlu0 0
        %5247 = vperm.xlu0 %5246, %v5097
        %v5248 = vpop.permute.xlu0 %5247
        %5251 = vset.pattern.permute.xlu0 0
        %5252 = vperm.xlu0 %5251, %v5098
        %v5253 = vpop.permute.xlu0 %5252
        %5256 = vset.pattern.permute.xlu0 0
        %5257 = vperm.xlu0 %5256, %v5099
        %v5258 = vpop.permute.xlu0 %5257
        %5261 = vset.pattern.permute.xlu0 0
        %5262 = vperm.xlu0 %5261, %v5100
        %v5263 = vpop.permute.xlu0 %5262
        %5266 = vset.pattern.permute.xlu0 0
        %5267 = vperm.xlu0 %5266, %v5101
        %v5268 = vpop.permute.xlu0 %5267
        %5271 = vset.pattern.permute.xlu0 0
        %5272 = vperm.xlu0 %5271, %v5102
        %v5273 = vpop.permute.xlu0 %5272
        %5276 = vset.pattern.permute.xlu0 0
        %5277 = vperm.xlu0 %5276, %v5103
        %v5278 = vpop.permute.xlu0 %5277
        %5281 = vset.pattern.permute.xlu0 0
        %5282 = vperm.xlu0 %5281, %v5104
        %v5283 = vpop.permute.xlu0 %5282
        %5286 = vset.pattern.permute.xlu0 0
        %5287 = vperm.xlu0 %5286, %v5105
        %v5288 = vpop.permute.xlu0 %5287
        %5291 = vset.pattern.permute.xlu0 0
        %5292 = vperm.xlu0 %5291, %v5106
        %v5293 = vpop.permute.xlu0 %5292
        %5296 = vset.pattern.permute.xlu0 0
        %5297 = vperm.xlu0 %5296, %v5107
        %v5298 = vpop.permute.xlu0 %5297
        %5301 = vset.pattern.permute.xlu0 0
        %5302 = vperm.xlu0 %5301, %v5108
        %v5303 = vpop.permute.xlu0 %5302
        %5306 = vset.pattern.permute.xlu0 0
        %5307 = vperm.xlu0 %5306, %v5109
        %v5308 = vpop.permute.xlu0 %5307
        %v5310 = vadd.f32 %v4910, %v5113
        %v5311 = vadd.f32 %v4911, %v5113
        %v5312 = vadd.f32 %v4912, %v5113
        %v5313 = vadd.f32 %v4913, %v5113
        %v5314 = vadd.f32 %v4914, %v5118
        %v5315 = vadd.f32 %v4915, %v5118
        %v5316 = vadd.f32 %v4916, %v5118
        %v5317 = vadd.f32 %v4917, %v5118
        %v5318 = vadd.f32 %v4918, %v5123
        %v5319 = vadd.f32 %v4919, %v5123
        %v5320 = vadd.f32 %v4920, %v5123
        %v5321 = vadd.f32 %v4921, %v5123
        %v5322 = vadd.f32 %v4922, %v5128
        %v5323 = vadd.f32 %v4923, %v5128
        %v5324 = vadd.f32 %v4924, %v5128
        %v5325 = vadd.f32 %v4925, %v5128
        %v5326 = vadd.f32 %v4926, %v5133
        %v5327 = vadd.f32 %v4927, %v5133
        %v5328 = vadd.f32 %v4928, %v5133
        %v5329 = vadd.f32 %v4929, %v5133
        %v5330 = vadd.f32 %v4930, %v5138
        %v5331 = vadd.f32 %v4931, %v5138
        %v5332 = vadd.f32 %v4932, %v5138
        %v5333 = vadd.f32 %v4933, %v5138
        %v5334 = vadd.f32 %v4934, %v5143
        %v5335 = vadd.f32 %v4935, %v5143
        %v5336 = vadd.f32 %v4936, %v5143
        %v5337 = vadd.f32 %v4937, %v5143
        %v5338 = vadd.f32 %v4938, %v5148
        %v5339 = vadd.f32 %v4939, %v5148
        %v5340 = vadd.f32 %v4940, %v5148
        %v5341 = vadd.f32 %v4941, %v5148
        %v5342 = vadd.f32 %v4942, %v5153
        %v5343 = vadd.f32 %v4943, %v5153
        %v5344 = vadd.f32 %v4944, %v5153
        %v5345 = vadd.f32 %v4945, %v5153
        %v5346 = vadd.f32 %v4946, %v5158
        %v5347 = vadd.f32 %v4947, %v5158
        %v5348 = vadd.f32 %v4948, %v5158
        %v5349 = vadd.f32 %v4949, %v5158
        %v5350 = vadd.f32 %v4950, %v5163
        %v5351 = vadd.f32 %v4951, %v5163
        %v5352 = vadd.f32 %v4952, %v5163
        %v5353 = vadd.f32 %v4953, %v5163
        %v5354 = vadd.f32 %v4954, %v5168
        %v5355 = vadd.f32 %v4955, %v5168
        %v5356 = vadd.f32 %v4956, %v5168
        %v5357 = vadd.f32 %v4957, %v5168
        %v5358 = vadd.f32 %v4958, %v5173
        %v5359 = vadd.f32 %v4959, %v5173
        %v5360 = vadd.f32 %v4960, %v5173
        %v5361 = vadd.f32 %v4961, %v5173
        %v5362 = vadd.f32 %v4962, %v5178
        %v5363 = vadd.f32 %v4963, %v5178
        %v5364 = vadd.f32 %v4964, %v5178
        %v5365 = vadd.f32 %v4965, %v5178
        %v5366 = vadd.f32 %v4966, %v5183
        %v5367 = vadd.f32 %v4967, %v5183
        %v5368 = vadd.f32 %v4968, %v5183
        %v5369 = vadd.f32 %v4969, %v5183
        %v5370 = vadd.f32 %v4970, %v5188
        %v5371 = vadd.f32 %v4971, %v5188
        %v5372 = vadd.f32 %v4972, %v5188
        %v5373 = vadd.f32 %v4973, %v5188
        %v5374 = vadd.f32 %v4974, %v5193
        %v5375 = vadd.f32 %v4975, %v5193
        %v5376 = vadd.f32 %v4976, %v5193
        %v5377 = vadd.f32 %v4977, %v5193
        %v5378 = vadd.f32 %v4978, %v5198
        %v5379 = vadd.f32 %v4979, %v5198
        %v5380 = vadd.f32 %v4980, %v5198
        %v5381 = vadd.f32 %v4981, %v5198
        %v5382 = vadd.f32 %v4982, %v5203
        %v5383 = vadd.f32 %v4983, %v5203
        %v5384 = vadd.f32 %v4984, %v5203
        %v5385 = vadd.f32 %v4985, %v5203
        %v5386 = vadd.f32 %v4986, %v5208
        %v5387 = vadd.f32 %v4987, %v5208
        %v5388 = vadd.f32 %v4988, %v5208
        %v5389 = vadd.f32 %v4989, %v5208
        %v5390 = vadd.f32 %v4990, %v5213
        %v5391 = vadd.f32 %v4991, %v5213
        %v5392 = vadd.f32 %v4992, %v5213
        %v5393 = vadd.f32 %v4993, %v5213
        %v5394 = vadd.f32 %v4994, %v5218
        %v5395 = vadd.f32 %v4995, %v5218
        %v5396 = vadd.f32 %v4996, %v5218
        %v5397 = vadd.f32 %v4997, %v5218
        %v5398 = vadd.f32 %v4998, %v5223
        %v5399 = vadd.f32 %v4999, %v5223
        %v5400 = vadd.f32 %v5000, %v5223
        %v5401 = vadd.f32 %v5001, %v5223
        %v5402 = vadd.f32 %v5002, %v5228
        %v5403 = vadd.f32 %v5003, %v5228
        %v5404 = vadd.f32 %v5004, %v5228
        %v5405 = vadd.f32 %v5005, %v5228
        %v5406 = vadd.f32 %v5006, %v5233
        %v5407 = vadd.f32 %v5007, %v5233
        %v5408 = vadd.f32 %v5008, %v5233
        %v5409 = vadd.f32 %v5009, %v5233
        %v5410 = vadd.f32 %v5010, %v5238
        %v5411 = vadd.f32 %v5011, %v5238
        %v5412 = vadd.f32 %v5012, %v5238
        %v5413 = vadd.f32 %v5013, %v5238
        %v5414 = vadd.f32 %v5014, %v5243
        %v5415 = vadd.f32 %v5015, %v5243
        %v5416 = vadd.f32 %v5016, %v5243
        %v5417 = vadd.f32 %v5017, %v5243
        %v5418 = vadd.f32 %v5018, %v5248
        %v5419 = vadd.f32 %v5019, %v5248
        %v5420 = vadd.f32 %v5020, %v5248
        %v5421 = vadd.f32 %v5021, %v5248
        %v5422 = vadd.f32 %v5022, %v5253
        %v5423 = vadd.f32 %v5023, %v5253
        %v5424 = vadd.f32 %v5024, %v5253
        %v5425 = vadd.f32 %v5025, %v5253
        %v5426 = vadd.f32 %v5026, %v5258
        %v5427 = vadd.f32 %v5027, %v5258
        %v5428 = vadd.f32 %v5028, %v5258
        %v5429 = vadd.f32 %v5029, %v5258
        %v5430 = vadd.f32 %v5030, %v5263
        %v5431 = vadd.f32 %v5031, %v5263
        %v5432 = vadd.f32 %v5032, %v5263
        %v5433 = vadd.f32 %v5033, %v5263
        %v5434 = vadd.f32 %v5034, %v5268
        %v5435 = vadd.f32 %v5035, %v5268
        %v5436 = vadd.f32 %v5036, %v5268
        %v5437 = vadd.f32 %v5037, %v5268
        %v5438 = vadd.f32 %v5038, %v5273
        %v5439 = vadd.f32 %v5039, %v5273
        %v5440 = vadd.f32 %v5040, %v5273
        %v5441 = vadd.f32 %v5041, %v5273
        %v5442 = vadd.f32 %v5042, %v5278
        %v5443 = vadd.f32 %v5043, %v5278
        %v5444 = vadd.f32 %v5044, %v5278
        %v5445 = vadd.f32 %v5045, %v5278
        %v5446 = vadd.f32 %v5046, %v5283
        %v5447 = vadd.f32 %v5047, %v5283
        %v5448 = vadd.f32 %v5048, %v5283
        %v5449 = vadd.f32 %v5049, %v5283
        %v5450 = vadd.f32 %v5050, %v5288
        %v5451 = vadd.f32 %v5051, %v5288
        %v5452 = vadd.f32 %v5052, %v5288
        %v5453 = vadd.f32 %v5053, %v5288
        %v5454 = vadd.f32 %v5054, %v5293
        %v5455 = vadd.f32 %v5055, %v5293
        %v5456 = vadd.f32 %v5056, %v5293
        %v5457 = vadd.f32 %v5057, %v5293
        %v5458 = vadd.f32 %v5058, %v5298
        %v5459 = vadd.f32 %v5059, %v5298
        %v5460 = vadd.f32 %v5060, %v5298
        %v5461 = vadd.f32 %v5061, %v5298
        %v5462 = vadd.f32 %v5062, %v5303
        %v5463 = vadd.f32 %v5063, %v5303
        %v5464 = vadd.f32 %v5064, %v5303
        %v5465 = vadd.f32 %v5065, %v5303
        %v5466 = vadd.f32 %v5066, %v5308
        %v5467 = vadd.f32 %v5067, %v5308
        %v5468 = vadd.f32 %v5068, %v5308
        %v5469 = vadd.f32 %v5069, %v5308
        %vm5470 = vcmp.gt.f32.partialorder %v5310, 0.0
        %vm5471 = vcmp.gt.f32.partialorder %v5311, 0.0
        %vm5472 = vcmp.gt.f32.partialorder %v5312, 0.0
        %vm5473 = vcmp.gt.f32.partialorder %v5313, 0.0
        %vm5474 = vcmp.gt.f32.partialorder %v5314, 0.0
        %vm5475 = vcmp.gt.f32.partialorder %v5315, 0.0
        %vm5476 = vcmp.gt.f32.partialorder %v5316, 0.0
        %vm5477 = vcmp.gt.f32.partialorder %v5317, 0.0
        %vm5478 = vcmp.gt.f32.partialorder %v5318, 0.0
        %vm5479 = vcmp.gt.f32.partialorder %v5319, 0.0
        %vm5480 = vcmp.gt.f32.partialorder %v5320, 0.0
        %vm5481 = vcmp.gt.f32.partialorder %v5321, 0.0
        %vm5482 = vcmp.gt.f32.partialorder %v5322, 0.0
        %vm5483 = vcmp.gt.f32.partialorder %v5323, 0.0
        %vm5484 = vcmp.gt.f32.partialorder %v5324, 0.0
        %vm5485 = vcmp.gt.f32.partialorder %v5325, 0.0
        %vm5486 = vcmp.gt.f32.partialorder %v5326, 0.0
        %vm5487 = vcmp.gt.f32.partialorder %v5327, 0.0
        %vm5488 = vcmp.gt.f32.partialorder %v5328, 0.0
        %vm5489 = vcmp.gt.f32.partialorder %v5329, 0.0
        %vm5490 = vcmp.gt.f32.partialorder %v5330, 0.0
        %vm5491 = vcmp.gt.f32.partialorder %v5331, 0.0
        %vm5492 = vcmp.gt.f32.partialorder %v5332, 0.0
        %vm5493 = vcmp.gt.f32.partialorder %v5333, 0.0
        %vm5494 = vcmp.gt.f32.partialorder %v5334, 0.0
        %vm5495 = vcmp.gt.f32.partialorder %v5335, 0.0
        %vm5496 = vcmp.gt.f32.partialorder %v5336, 0.0
        %vm5497 = vcmp.gt.f32.partialorder %v5337, 0.0
        %vm5498 = vcmp.gt.f32.partialorder %v5338, 0.0
        %vm5499 = vcmp.gt.f32.partialorder %v5339, 0.0
        %vm5500 = vcmp.gt.f32.partialorder %v5340, 0.0
        %vm5501 = vcmp.gt.f32.partialorder %v5341, 0.0
        %vm5502 = vcmp.gt.f32.partialorder %v5342, 0.0
        %vm5503 = vcmp.gt.f32.partialorder %v5343, 0.0
        %vm5504 = vcmp.gt.f32.partialorder %v5344, 0.0
        %vm5505 = vcmp.gt.f32.partialorder %v5345, 0.0
        %vm5506 = vcmp.gt.f32.partialorder %v5346, 0.0
        %vm5507 = vcmp.gt.f32.partialorder %v5347, 0.0
        %vm5508 = vcmp.gt.f32.partialorder %v5348, 0.0
        %vm5509 = vcmp.gt.f32.partialorder %v5349, 0.0
        %vm5510 = vcmp.gt.f32.partialorder %v5350, 0.0
        %vm5511 = vcmp.gt.f32.partialorder %v5351, 0.0
        %vm5512 = vcmp.gt.f32.partialorder %v5352, 0.0
        %vm5513 = vcmp.gt.f32.partialorder %v5353, 0.0
        %vm5514 = vcmp.gt.f32.partialorder %v5354, 0.0
        %vm5515 = vcmp.gt.f32.partialorder %v5355, 0.0
        %vm5516 = vcmp.gt.f32.partialorder %v5356, 0.0
        %vm5517 = vcmp.gt.f32.partialorder %v5357, 0.0
        %vm5518 = vcmp.gt.f32.partialorder %v5358, 0.0
        %vm5519 = vcmp.gt.f32.partialorder %v5359, 0.0
        %vm5520 = vcmp.gt.f32.partialorder %v5360, 0.0
        %vm5521 = vcmp.gt.f32.partialorder %v5361, 0.0
        %vm5522 = vcmp.gt.f32.partialorder %v5362, 0.0
        %vm5523 = vcmp.gt.f32.partialorder %v5363, 0.0
        %vm5524 = vcmp.gt.f32.partialorder %v5364, 0.0
        %vm5525 = vcmp.gt.f32.partialorder %v5365, 0.0
        %vm5526 = vcmp.gt.f32.partialorder %v5366, 0.0
        %vm5527 = vcmp.gt.f32.partialorder %v5367, 0.0
        %vm5528 = vcmp.gt.f32.partialorder %v5368, 0.0
        %vm5529 = vcmp.gt.f32.partialorder %v5369, 0.0
        %vm5530 = vcmp.gt.f32.partialorder %v5370, 0.0
        %vm5531 = vcmp.gt.f32.partialorder %v5371, 0.0
        %vm5532 = vcmp.gt.f32.partialorder %v5372, 0.0
        %vm5533 = vcmp.gt.f32.partialorder %v5373, 0.0
        %vm5534 = vcmp.gt.f32.partialorder %v5374, 0.0
        %vm5535 = vcmp.gt.f32.partialorder %v5375, 0.0
        %vm5536 = vcmp.gt.f32.partialorder %v5376, 0.0
        %vm5537 = vcmp.gt.f32.partialorder %v5377, 0.0
        %vm5538 = vcmp.gt.f32.partialorder %v5378, 0.0
        %vm5539 = vcmp.gt.f32.partialorder %v5379, 0.0
        %vm5540 = vcmp.gt.f32.partialorder %v5380, 0.0
        %vm5541 = vcmp.gt.f32.partialorder %v5381, 0.0
        %vm5542 = vcmp.gt.f32.partialorder %v5382, 0.0
        %vm5543 = vcmp.gt.f32.partialorder %v5383, 0.0
        %vm5544 = vcmp.gt.f32.partialorder %v5384, 0.0
        %vm5545 = vcmp.gt.f32.partialorder %v5385, 0.0
        %vm5546 = vcmp.gt.f32.partialorder %v5386, 0.0
        %vm5547 = vcmp.gt.f32.partialorder %v5387, 0.0
        %vm5548 = vcmp.gt.f32.partialorder %v5388, 0.0
        %vm5549 = vcmp.gt.f32.partialorder %v5389, 0.0
        %vm5550 = vcmp.gt.f32.partialorder %v5390, 0.0
        %vm5551 = vcmp.gt.f32.partialorder %v5391, 0.0
        %vm5552 = vcmp.gt.f32.partialorder %v5392, 0.0
        %vm5553 = vcmp.gt.f32.partialorder %v5393, 0.0
        %vm5554 = vcmp.gt.f32.partialorder %v5394, 0.0
        %vm5555 = vcmp.gt.f32.partialorder %v5395, 0.0
        %vm5556 = vcmp.gt.f32.partialorder %v5396, 0.0
        %vm5557 = vcmp.gt.f32.partialorder %v5397, 0.0
        %vm5558 = vcmp.gt.f32.partialorder %v5398, 0.0
        %vm5559 = vcmp.gt.f32.partialorder %v5399, 0.0
        %vm5560 = vcmp.gt.f32.partialorder %v5400, 0.0
        %vm5561 = vcmp.gt.f32.partialorder %v5401, 0.0
        %vm5562 = vcmp.gt.f32.partialorder %v5402, 0.0
        %vm5563 = vcmp.gt.f32.partialorder %v5403, 0.0
        %vm5564 = vcmp.gt.f32.partialorder %v5404, 0.0
        %vm5565 = vcmp.gt.f32.partialorder %v5405, 0.0
        %vm5566 = vcmp.gt.f32.partialorder %v5406, 0.0
        %vm5567 = vcmp.gt.f32.partialorder %v5407, 0.0
        %vm5568 = vcmp.gt.f32.partialorder %v5408, 0.0
        %vm5569 = vcmp.gt.f32.partialorder %v5409, 0.0
        %vm5570 = vcmp.gt.f32.partialorder %v5410, 0.0
        %vm5571 = vcmp.gt.f32.partialorder %v5411, 0.0
        %vm5572 = vcmp.gt.f32.partialorder %v5412, 0.0
        %vm5573 = vcmp.gt.f32.partialorder %v5413, 0.0
        %vm5574 = vcmp.gt.f32.partialorder %v5414, 0.0
        %vm5575 = vcmp.gt.f32.partialorder %v5415, 0.0
        %vm5576 = vcmp.gt.f32.partialorder %v5416, 0.0
        %vm5577 = vcmp.gt.f32.partialorder %v5417, 0.0
        %vm5578 = vcmp.gt.f32.partialorder %v5418, 0.0
        %vm5579 = vcmp.gt.f32.partialorder %v5419, 0.0
        %vm5580 = vcmp.gt.f32.partialorder %v5420, 0.0
        %vm5581 = vcmp.gt.f32.partialorder %v5421, 0.0
        %vm5582 = vcmp.gt.f32.partialorder %v5422, 0.0
        %vm5583 = vcmp.gt.f32.partialorder %v5423, 0.0
        %vm5584 = vcmp.gt.f32.partialorder %v5424, 0.0
        %vm5585 = vcmp.gt.f32.partialorder %v5425, 0.0
        %vm5586 = vcmp.gt.f32.partialorder %v5426, 0.0
        %vm5587 = vcmp.gt.f32.partialorder %v5427, 0.0
        %vm5588 = vcmp.gt.f32.partialorder %v5428, 0.0
        %vm5589 = vcmp.gt.f32.partialorder %v5429, 0.0
        %vm5590 = vcmp.gt.f32.partialorder %v5430, 0.0
        %vm5591 = vcmp.gt.f32.partialorder %v5431, 0.0
        %vm5592 = vcmp.gt.f32.partialorder %v5432, 0.0
        %vm5593 = vcmp.gt.f32.partialorder %v5433, 0.0
        %vm5594 = vcmp.gt.f32.partialorder %v5434, 0.0
        %vm5595 = vcmp.gt.f32.partialorder %v5435, 0.0
        %vm5596 = vcmp.gt.f32.partialorder %v5436, 0.0
        %vm5597 = vcmp.gt.f32.partialorder %v5437, 0.0
        %vm5598 = vcmp.gt.f32.partialorder %v5438, 0.0
        %vm5599 = vcmp.gt.f32.partialorder %v5439, 0.0
        %vm5600 = vcmp.gt.f32.partialorder %v5440, 0.0
        %vm5601 = vcmp.gt.f32.partialorder %v5441, 0.0
        %vm5602 = vcmp.gt.f32.partialorder %v5442, 0.0
        %vm5603 = vcmp.gt.f32.partialorder %v5443, 0.0
        %vm5604 = vcmp.gt.f32.partialorder %v5444, 0.0
        %vm5605 = vcmp.gt.f32.partialorder %v5445, 0.0
        %vm5606 = vcmp.gt.f32.partialorder %v5446, 0.0
        %vm5607 = vcmp.gt.f32.partialorder %v5447, 0.0
        %vm5608 = vcmp.gt.f32.partialorder %v5448, 0.0
        %vm5609 = vcmp.gt.f32.partialorder %v5449, 0.0
        %vm5610 = vcmp.gt.f32.partialorder %v5450, 0.0
        %vm5611 = vcmp.gt.f32.partialorder %v5451, 0.0
        %vm5612 = vcmp.gt.f32.partialorder %v5452, 0.0
        %vm5613 = vcmp.gt.f32.partialorder %v5453, 0.0
        %vm5614 = vcmp.gt.f32.partialorder %v5454, 0.0
        %vm5615 = vcmp.gt.f32.partialorder %v5455, 0.0
        %vm5616 = vcmp.gt.f32.partialorder %v5456, 0.0
        %vm5617 = vcmp.gt.f32.partialorder %v5457, 0.0
        %vm5618 = vcmp.gt.f32.partialorder %v5458, 0.0
        %vm5619 = vcmp.gt.f32.partialorder %v5459, 0.0
        %vm5620 = vcmp.gt.f32.partialorder %v5460, 0.0
        %vm5621 = vcmp.gt.f32.partialorder %v5461, 0.0
        %vm5622 = vcmp.gt.f32.partialorder %v5462, 0.0
        %vm5623 = vcmp.gt.f32.partialorder %v5463, 0.0
        %vm5624 = vcmp.gt.f32.partialorder %v5464, 0.0
        %vm5625 = vcmp.gt.f32.partialorder %v5465, 0.0
        %vm5626 = vcmp.gt.f32.partialorder %v5466, 0.0
        %vm5627 = vcmp.gt.f32.partialorder %v5467, 0.0
        %vm5628 = vcmp.gt.f32.partialorder %v5468, 0.0
        %vm5629 = vcmp.gt.f32.partialorder %v5469, 0.0
        %v5630 = vmul.f32 %v5310, 0.01
        %v5631 = vmul.f32 %v5311, 0.01
        %v5632 = vmul.f32 %v5312, 0.01
        %v5633 = vmul.f32 %v5313, 0.01
        %v5634 = vmul.f32 %v5314, 0.01
        %v5635 = vmul.f32 %v5315, 0.01
        %v5636 = vmul.f32 %v5316, 0.01
        %v5637 = vmul.f32 %v5317, 0.01
        %v5638 = vmul.f32 %v5318, 0.01
        %v5639 = vmul.f32 %v5319, 0.01
        %v5640 = vmul.f32 %v5320, 0.01
        %v5641 = vmul.f32 %v5321, 0.01
        %v5642 = vmul.f32 %v5322, 0.01
        %v5643 = vmul.f32 %v5323, 0.01
        %v5644 = vmul.f32 %v5324, 0.01
        %v5645 = vmul.f32 %v5325, 0.01
        %v5646 = vmul.f32 %v5326, 0.01
        %v5647 = vmul.f32 %v5327, 0.01
        %v5648 = vmul.f32 %v5328, 0.01
        %v5649 = vmul.f32 %v5329, 0.01
        %v5650 = vmul.f32 %v5330, 0.01
        %v5651 = vmul.f32 %v5331, 0.01
        %v5652 = vmul.f32 %v5332, 0.01
        %v5653 = vmul.f32 %v5333, 0.01
        %v5654 = vmul.f32 %v5334, 0.01
        %v5655 = vmul.f32 %v5335, 0.01
        %v5656 = vmul.f32 %v5336, 0.01
        %v5657 = vmul.f32 %v5337, 0.01
        %v5658 = vmul.f32 %v5338, 0.01
        %v5659 = vmul.f32 %v5339, 0.01
        %v5660 = vmul.f32 %v5340, 0.01
        %v5661 = vmul.f32 %v5341, 0.01
        %v5662 = vmul.f32 %v5342, 0.01
        %v5663 = vmul.f32 %v5343, 0.01
        %v5664 = vmul.f32 %v5344, 0.01
        %v5665 = vmul.f32 %v5345, 0.01
        %v5666 = vmul.f32 %v5346, 0.01
        %v5667 = vmul.f32 %v5347, 0.01
        %v5668 = vmul.f32 %v5348, 0.01
        %v5669 = vmul.f32 %v5349, 0.01
        %v5670 = vmul.f32 %v5350, 0.01
        %v5671 = vmul.f32 %v5351, 0.01
        %v5672 = vmul.f32 %v5352, 0.01
        %v5673 = vmul.f32 %v5353, 0.01
        %v5674 = vmul.f32 %v5354, 0.01
        %v5675 = vmul.f32 %v5355, 0.01
        %v5676 = vmul.f32 %v5356, 0.01
        %v5677 = vmul.f32 %v5357, 0.01
        %v5678 = vmul.f32 %v5358, 0.01
        %v5679 = vmul.f32 %v5359, 0.01
        %v5680 = vmul.f32 %v5360, 0.01
        %v5681 = vmul.f32 %v5361, 0.01
        %v5682 = vmul.f32 %v5362, 0.01
        %v5683 = vmul.f32 %v5363, 0.01
        %v5684 = vmul.f32 %v5364, 0.01
        %v5685 = vmul.f32 %v5365, 0.01
        %v5686 = vmul.f32 %v5366, 0.01
        %v5687 = vmul.f32 %v5367, 0.01
        %v5688 = vmul.f32 %v5368, 0.01
        %v5689 = vmul.f32 %v5369, 0.01
        %v5690 = vmul.f32 %v5370, 0.01
        %v5691 = vmul.f32 %v5371, 0.01
        %v5692 = vmul.f32 %v5372, 0.01
        %v5693 = vmul.f32 %v5373, 0.01
        %v5694 = vmul.f32 %v5374, 0.01
        %v5695 = vmul.f32 %v5375, 0.01
        %v5696 = vmul.f32 %v5376, 0.01
        %v5697 = vmul.f32 %v5377, 0.01
        %v5698 = vmul.f32 %v5378, 0.01
        %v5699 = vmul.f32 %v5379, 0.01
        %v5700 = vmul.f32 %v5380, 0.01
        %v5701 = vmul.f32 %v5381, 0.01
        %v5702 = vmul.f32 %v5382, 0.01
        %v5703 = vmul.f32 %v5383, 0.01
        %v5704 = vmul.f32 %v5384, 0.01
        %v5705 = vmul.f32 %v5385, 0.01
        %v5706 = vmul.f32 %v5386, 0.01
        %v5707 = vmul.f32 %v5387, 0.01
        %v5708 = vmul.f32 %v5388, 0.01
        %v5709 = vmul.f32 %v5389, 0.01
        %v5710 = vmul.f32 %v5390, 0.01
        %v5711 = vmul.f32 %v5391, 0.01
        %v5712 = vmul.f32 %v5392, 0.01
        %v5713 = vmul.f32 %v5393, 0.01
        %v5714 = vmul.f32 %v5394, 0.01
        %v5715 = vmul.f32 %v5395, 0.01
        %v5716 = vmul.f32 %v5396, 0.01
        %v5717 = vmul.f32 %v5397, 0.01
        %v5718 = vmul.f32 %v5398, 0.01
        %v5719 = vmul.f32 %v5399, 0.01
        %v5720 = vmul.f32 %v5400, 0.01
        %v5721 = vmul.f32 %v5401, 0.01
        %v5722 = vmul.f32 %v5402, 0.01
        %v5723 = vmul.f32 %v5403, 0.01
        %v5724 = vmul.f32 %v5404, 0.01
        %v5725 = vmul.f32 %v5405, 0.01
        %v5726 = vmul.f32 %v5406, 0.01
        %v5727 = vmul.f32 %v5407, 0.01
        %v5728 = vmul.f32 %v5408, 0.01
        %v5729 = vmul.f32 %v5409, 0.01
        %v5730 = vmul.f32 %v5410, 0.01
        %v5731 = vmul.f32 %v5411, 0.01
        %v5732 = vmul.f32 %v5412, 0.01
        %v5733 = vmul.f32 %v5413, 0.01
        %v5734 = vmul.f32 %v5414, 0.01
        %v5735 = vmul.f32 %v5415, 0.01
        %v5736 = vmul.f32 %v5416, 0.01
        %v5737 = vmul.f32 %v5417, 0.01
        %v5738 = vmul.f32 %v5418, 0.01
        %v5739 = vmul.f32 %v5419, 0.01
        %v5740 = vmul.f32 %v5420, 0.01
        %v5741 = vmul.f32 %v5421, 0.01
        %v5742 = vmul.f32 %v5422, 0.01
        %v5743 = vmul.f32 %v5423, 0.01
        %v5744 = vmul.f32 %v5424, 0.01
        %v5745 = vmul.f32 %v5425, 0.01
        %v5746 = vmul.f32 %v5426, 0.01
        %v5747 = vmul.f32 %v5427, 0.01
        %v5748 = vmul.f32 %v5428, 0.01
        %v5749 = vmul.f32 %v5429, 0.01
        %v5750 = vmul.f32 %v5430, 0.01
        %v5751 = vmul.f32 %v5431, 0.01
        %v5752 = vmul.f32 %v5432, 0.01
        %v5753 = vmul.f32 %v5433, 0.01
        %v5754 = vmul.f32 %v5434, 0.01
        %v5755 = vmul.f32 %v5435, 0.01
        %v5756 = vmul.f32 %v5436, 0.01
        %v5757 = vmul.f32 %v5437, 0.01
        %v5758 = vmul.f32 %v5438, 0.01
        %v5759 = vmul.f32 %v5439, 0.01
        %v5760 = vmul.f32 %v5440, 0.01
        %v5761 = vmul.f32 %v5441, 0.01
        %v5762 = vmul.f32 %v5442, 0.01
        %v5763 = vmul.f32 %v5443, 0.01
        %v5764 = vmul.f32 %v5444, 0.01
        %v5765 = vmul.f32 %v5445, 0.01
        %v5766 = vmul.f32 %v5446, 0.01
        %v5767 = vmul.f32 %v5447, 0.01
        %v5768 = vmul.f32 %v5448, 0.01
        %v5769 = vmul.f32 %v5449, 0.01
        %v5770 = vmul.f32 %v5450, 0.01
        %v5771 = vmul.f32 %v5451, 0.01
        %v5772 = vmul.f32 %v5452, 0.01
        %v5773 = vmul.f32 %v5453, 0.01
        %v5774 = vmul.f32 %v5454, 0.01
        %v5775 = vmul.f32 %v5455, 0.01
        %v5776 = vmul.f32 %v5456, 0.01
        %v5777 = vmul.f32 %v5457, 0.01
        %v5778 = vmul.f32 %v5458, 0.01
        %v5779 = vmul.f32 %v5459, 0.01
        %v5780 = vmul.f32 %v5460, 0.01
        %v5781 = vmul.f32 %v5461, 0.01
        %v5782 = vmul.f32 %v5462, 0.01
        %v5783 = vmul.f32 %v5463, 0.01
        %v5784 = vmul.f32 %v5464, 0.01
        %v5785 = vmul.f32 %v5465, 0.01
        %v5786 = vmul.f32 %v5466, 0.01
        %v5787 = vmul.f32 %v5467, 0.01
        %v5788 = vmul.f32 %v5468, 0.01
        %v5789 = vmul.f32 %v5469, 0.01
        %v5790 = vsel %vm5470, %v5310, %v5630
        %v5791 = vsel %vm5471, %v5311, %v5631
        %v5792 = vsel %vm5472, %v5312, %v5632
        %v5793 = vsel %vm5473, %v5313, %v5633
        %v5794 = vsel %vm5474, %v5314, %v5634
        %v5795 = vsel %vm5475, %v5315, %v5635
        %v5796 = vsel %vm5476, %v5316, %v5636
        %v5797 = vsel %vm5477, %v5317, %v5637
        %v5798 = vsel %vm5478, %v5318, %v5638
        %v5799 = vsel %vm5479, %v5319, %v5639
        %v5800 = vsel %vm5480, %v5320, %v5640
        %v5801 = vsel %vm5481, %v5321, %v5641
        %v5802 = vsel %vm5482, %v5322, %v5642
        %v5803 = vsel %vm5483, %v5323, %v5643
        %v5804 = vsel %vm5484, %v5324, %v5644
        %v5805 = vsel %vm5485, %v5325, %v5645
        %v5806 = vsel %vm5486, %v5326, %v5646
        %v5807 = vsel %vm5487, %v5327, %v5647
        %v5808 = vsel %vm5488, %v5328, %v5648
        %v5809 = vsel %vm5489, %v5329, %v5649
        %v5810 = vsel %vm5490, %v5330, %v5650
        %v5811 = vsel %vm5491, %v5331, %v5651
        %v5812 = vsel %vm5492, %v5332, %v5652
        %v5813 = vsel %vm5493, %v5333, %v5653
        %v5814 = vsel %vm5494, %v5334, %v5654
        %v5815 = vsel %vm5495, %v5335, %v5655
        %v5816 = vsel %vm5496, %v5336, %v5656
        %v5817 = vsel %vm5497, %v5337, %v5657
        %v5818 = vsel %vm5498, %v5338, %v5658
        %v5819 = vsel %vm5499, %v5339, %v5659
        %v5820 = vsel %vm5500, %v5340, %v5660
        %v5821 = vsel %vm5501, %v5341, %v5661
        %v5822 = vsel %vm5502, %v5342, %v5662
        %v5823 = vsel %vm5503, %v5343, %v5663
        %v5824 = vsel %vm5504, %v5344, %v5664
        %v5825 = vsel %vm5505, %v5345, %v5665
        %v5826 = vsel %vm5506, %v5346, %v5666
        %v5827 = vsel %vm5507, %v5347, %v5667
        %v5828 = vsel %vm5508, %v5348, %v5668
        %v5829 = vsel %vm5509, %v5349, %v5669
        %v5830 = vsel %vm5510, %v5350, %v5670
        %v5831 = vsel %vm5511, %v5351, %v5671
        %v5832 = vsel %vm5512, %v5352, %v5672
        %v5833 = vsel %vm5513, %v5353, %v5673
        %v5834 = vsel %vm5514, %v5354, %v5674
        %v5835 = vsel %vm5515, %v5355, %v5675
        %v5836 = vsel %vm5516, %v5356, %v5676
        %v5837 = vsel %vm5517, %v5357, %v5677
        %v5838 = vsel %vm5518, %v5358, %v5678
        %v5839 = vsel %vm5519, %v5359, %v5679
        %v5840 = vsel %vm5520, %v5360, %v5680
        %v5841 = vsel %vm5521, %v5361, %v5681
        %v5842 = vsel %vm5522, %v5362, %v5682
        %v5843 = vsel %vm5523, %v5363, %v5683
        %v5844 = vsel %vm5524, %v5364, %v5684
        %v5845 = vsel %vm5525, %v5365, %v5685
        %v5846 = vsel %vm5526, %v5366, %v5686
        %v5847 = vsel %vm5527, %v5367, %v5687
        %v5848 = vsel %vm5528, %v5368, %v5688
        %v5849 = vsel %vm5529, %v5369, %v5689
        %v5850 = vsel %vm5530, %v5370, %v5690
        %v5851 = vsel %vm5531, %v5371, %v5691
        %v5852 = vsel %vm5532, %v5372, %v5692
        %v5853 = vsel %vm5533, %v5373, %v5693
        %v5854 = vsel %vm5534, %v5374, %v5694
        %v5855 = vsel %vm5535, %v5375, %v5695
        %v5856 = vsel %vm5536, %v5376, %v5696
        %v5857 = vsel %vm5537, %v5377, %v5697
        %v5858 = vsel %vm5538, %v5378, %v5698
        %v5859 = vsel %vm5539, %v5379, %v5699
        %v5860 = vsel %vm5540, %v5380, %v5700
        %v5861 = vsel %vm5541, %v5381, %v5701
        %v5862 = vsel %vm5542, %v5382, %v5702
        %v5863 = vsel %vm5543, %v5383, %v5703
        %v5864 = vsel %vm5544, %v5384, %v5704
        %v5865 = vsel %vm5545, %v5385, %v5705
        %v5866 = vsel %vm5546, %v5386, %v5706
        %v5867 = vsel %vm5547, %v5387, %v5707
        %v5868 = vsel %vm5548, %v5388, %v5708
        %v5869 = vsel %vm5549, %v5389, %v5709
        %v5870 = vsel %vm5550, %v5390, %v5710
        %v5871 = vsel %vm5551, %v5391, %v5711
        %v5872 = vsel %vm5552, %v5392, %v5712
        %v5873 = vsel %vm5553, %v5393, %v5713
        %v5874 = vsel %vm5554, %v5394, %v5714
        %v5875 = vsel %vm5555, %v5395, %v5715
        %v5876 = vsel %vm5556, %v5396, %v5716
        %v5877 = vsel %vm5557, %v5397, %v5717
        %v5878 = vsel %vm5558, %v5398, %v5718
        %v5879 = vsel %vm5559, %v5399, %v5719
        %v5880 = vsel %vm5560, %v5400, %v5720
        %v5881 = vsel %vm5561, %v5401, %v5721
        %v5882 = vsel %vm5562, %v5402, %v5722
        %v5883 = vsel %vm5563, %v5403, %v5723
        %v5884 = vsel %vm5564, %v5404, %v5724
        %v5885 = vsel %vm5565, %v5405, %v5725
        %v5886 = vsel %vm5566, %v5406, %v5726
        %v5887 = vsel %vm5567, %v5407, %v5727
        %v5888 = vsel %vm5568, %v5408, %v5728
        %v5889 = vsel %vm5569, %v5409, %v5729
        %v5890 = vsel %vm5570, %v5410, %v5730
        %v5891 = vsel %vm5571, %v5411, %v5731
        %v5892 = vsel %vm5572, %v5412, %v5732
        %v5893 = vsel %vm5573, %v5413, %v5733
        %v5894 = vsel %vm5574, %v5414, %v5734
        %v5895 = vsel %vm5575, %v5415, %v5735
        %v5896 = vsel %vm5576, %v5416, %v5736
        %v5897 = vsel %vm5577, %v5417, %v5737
        %v5898 = vsel %vm5578, %v5418, %v5738
        %v5899 = vsel %vm5579, %v5419, %v5739
        %v5900 = vsel %vm5580, %v5420, %v5740
        %v5901 = vsel %vm5581, %v5421, %v5741
        %v5902 = vsel %vm5582, %v5422, %v5742
        %v5903 = vsel %vm5583, %v5423, %v5743
        %v5904 = vsel %vm5584, %v5424, %v5744
        %v5905 = vsel %vm5585, %v5425, %v5745
        %v5906 = vsel %vm5586, %v5426, %v5746
        %v5907 = vsel %vm5587, %v5427, %v5747
        %v5908 = vsel %vm5588, %v5428, %v5748
        %v5909 = vsel %vm5589, %v5429, %v5749
        %v5910 = vsel %vm5590, %v5430, %v5750
        %v5911 = vsel %vm5591, %v5431, %v5751
        %v5912 = vsel %vm5592, %v5432, %v5752
        %v5913 = vsel %vm5593, %v5433, %v5753
        %v5914 = vsel %vm5594, %v5434, %v5754
        %v5915 = vsel %vm5595, %v5435, %v5755
        %v5916 = vsel %vm5596, %v5436, %v5756
        %v5917 = vsel %vm5597, %v5437, %v5757
        %v5918 = vsel %vm5598, %v5438, %v5758
        %v5919 = vsel %vm5599, %v5439, %v5759
        %v5920 = vsel %vm5600, %v5440, %v5760
        %v5921 = vsel %vm5601, %v5441, %v5761
        %v5922 = vsel %vm5602, %v5442, %v5762
        %v5923 = vsel %vm5603, %v5443, %v5763
        %v5924 = vsel %vm5604, %v5444, %v5764
        %v5925 = vsel %vm5605, %v5445, %v5765
        %v5926 = vsel %vm5606, %v5446, %v5766
        %v5927 = vsel %vm5607, %v5447, %v5767
        %v5928 = vsel %vm5608, %v5448, %v5768
        %v5929 = vsel %vm5609, %v5449, %v5769
        %v5930 = vsel %vm5610, %v5450, %v5770
        %v5931 = vsel %vm5611, %v5451, %v5771
        %v5932 = vsel %vm5612, %v5452, %v5772
        %v5933 = vsel %vm5613, %v5453, %v5773
        %v5934 = vsel %vm5614, %v5454, %v5774
        %v5935 = vsel %vm5615, %v5455, %v5775
        %v5936 = vsel %vm5616, %v5456, %v5776
        %v5937 = vsel %vm5617, %v5457, %v5777
        %v5938 = vsel %vm5618, %v5458, %v5778
        %v5939 = vsel %vm5619, %v5459, %v5779
        %v5940 = vsel %vm5620, %v5460, %v5780
        %v5941 = vsel %vm5621, %v5461, %v5781
        %v5942 = vsel %vm5622, %v5462, %v5782
        %v5943 = vsel %vm5623, %v5463, %v5783
        %v5944 = vsel %vm5624, %v5464, %v5784
        %v5945 = vsel %vm5625, %v5465, %v5785
        %v5946 = vsel %vm5626, %v5466, %v5786
        %v5947 = vsel %vm5627, %v5467, %v5787
        %v5948 = vsel %vm5628, %v5468, %v5788
        %v5949 = vsel %vm5629, %v5469, %v5789
        %v5950 = vld [vmem:[%s9] sm:$0xff]
        %v5951 = vld [vmem:[%s9 + $0x8] sm:$0xf]
        %v5952 = vld [vmem:[%s9 + $0xc] sm:$0xff]
        %v5953 = vld [vmem:[%s9 + $0x14] sm:$0xf]
        %v5954 = vld [vmem:[%s9 + $0x18] sm:$0xff]
        %v5955 = vld [vmem:[%s9 + $0x20] sm:$0xf]
        %v5956 = vld [vmem:[%s9 + $0x24] sm:$0xff]
        %v5957 = vld [vmem:[%s9 + $0x2c] sm:$0xf]
        %v5958 = vld [vmem:[%s9 + $0x30] sm:$0xff]
        %v5959 = vld [vmem:[%s9 + $0x38] sm:$0xf]
        %v5960 = vld [vmem:[%s9 + $0x3c] sm:$0xff]
        %v5961 = vld [vmem:[%s9 + $0x44] sm:$0xf]
        %v5962 = vld [vmem:[%s9 + $0x48] sm:$0xff]
        %v5963 = vld [vmem:[%s9 + $0x50] sm:$0xf]
        %v5964 = vld [vmem:[%s9 + $0x54] sm:$0xff]
        %v5965 = vld [vmem:[%s9 + $0x5c] sm:$0xf]
        %v5966 = vld [vmem:[%s9 + $0x60] sm:$0xff]
        %v5967 = vld [vmem:[%s9 + $0x68] sm:$0xf]
        %v5968 = vld [vmem:[%s9 + $0x6c] sm:$0xff]
        %v5969 = vld [vmem:[%s9 + $0x74] sm:$0xf]
        %v5970 = vld [vmem:[%s9 + $0x78] sm:$0xff]
        %v5971 = vld [vmem:[%s9 + $0x80] sm:$0xf]
        %v5972 = vld [vmem:[%s9 + $0x84] sm:$0xff]
        %v5973 = vld [vmem:[%s9 + $0x8c] sm:$0xf]
        %v5974 = vld [vmem:[%s9 + $0x90] sm:$0xff]
        %v5975 = vld [vmem:[%s9 + $0x98] sm:$0xf]
        %v5976 = vld [vmem:[%s9 + $0x9c] sm:$0xff]
        %v5977 = vld [vmem:[%s9 + $0xa4] sm:$0xf]
        %v5978 = vld [vmem:[%s9 + $0xa8] sm:$0xff]
        %v5979 = vld [vmem:[%s9 + $0xb0] sm:$0xf]
        %v5980 = vld [vmem:[%s9 + $0xb4] sm:$0xff]
        %v5981 = vld [vmem:[%s9 + $0xbc] sm:$0xf]
        %v5982 = vld [vmem:[%s9 + $0xc0] sm:$0xff]
        %v5983 = vld [vmem:[%s9 + $0xc8] sm:$0xf]
        %v5984 = vld [vmem:[%s9 + $0xcc] sm:$0xff]
        %v5985 = vld [vmem:[%s9 + $0xd4] sm:$0xf]
        %v5986 = vld [vmem:[%s9 + $0xd8] sm:$0xff]
        %v5987 = vld [vmem:[%s9 + $0xe0] sm:$0xf]
        %v5988 = vld [vmem:[%s9 + $0xe4] sm:$0xff]
        %v5989 = vld [vmem:[%s9 + $0xec] sm:$0xf]
        %v5990 = vpack.c.bf16 %v5794, %v5790
        %v5991 = vpack.c.bf16 %v5795, %v5791
        %v5992 = vpack.c.bf16 %v5796, %v5792
        %v5993 = vpack.c.bf16 %v5797, %v5793
        %v5994 = vpack.c.bf16 %v5802, %v5798
        %v5995 = vpack.c.bf16 %v5803, %v5799
        %v5996 = vpack.c.bf16 %v5804, %v5800
        %v5997 = vpack.c.bf16 %v5805, %v5801
        %v5998 = vpack.c.bf16 %v5810, %v5806
        %v5999 = vpack.c.bf16 %v5811, %v5807
        %v6000 = vpack.c.bf16 %v5812, %v5808
        %v6001 = vpack.c.bf16 %v5813, %v5809
        %v6002 = vpack.c.bf16 %v5818, %v5814
        %v6003 = vpack.c.bf16 %v5819, %v5815
        %v6004 = vpack.c.bf16 %v5820, %v5816
        %v6005 = vpack.c.bf16 %v5821, %v5817
        %v6006 = vpack.c.bf16 %v5826, %v5822
        %v6007 = vpack.c.bf16 %v5827, %v5823
        %v6008 = vpack.c.bf16 %v5828, %v5824
        %v6009 = vpack.c.bf16 %v5829, %v5825
        %v6010 = vpack.c.bf16 %v5834, %v5830
        %v6011 = vpack.c.bf16 %v5835, %v5831
        %v6012 = vpack.c.bf16 %v5836, %v5832
        %v6013 = vpack.c.bf16 %v5837, %v5833
        %v6014 = vpack.c.bf16 %v5842, %v5838
        %v6015 = vpack.c.bf16 %v5843, %v5839
        %v6016 = vpack.c.bf16 %v5844, %v5840
        %v6017 = vpack.c.bf16 %v5845, %v5841
        %v6018 = vpack.c.bf16 %v5850, %v5846
        %v6019 = vpack.c.bf16 %v5851, %v5847
        %v6020 = vpack.c.bf16 %v5852, %v5848
        %v6021 = vpack.c.bf16 %v5853, %v5849
        %v6022 = vpack.c.bf16 %v5858, %v5854
        %v6023 = vpack.c.bf16 %v5859, %v5855
        %v6024 = vpack.c.bf16 %v5860, %v5856
        %v6025 = vpack.c.bf16 %v5861, %v5857
        %v6026 = vpack.c.bf16 %v5866, %v5862
        %v6027 = vpack.c.bf16 %v5867, %v5863
        %v6028 = vpack.c.bf16 %v5868, %v5864
        %v6029 = vpack.c.bf16 %v5869, %v5865
        %v6030 = vpack.c.bf16 %v5874, %v5870
        %v6031 = vpack.c.bf16 %v5875, %v5871
        %v6032 = vpack.c.bf16 %v5876, %v5872
        %v6033 = vpack.c.bf16 %v5877, %v5873
        %v6034 = vpack.c.bf16 %v5882, %v5878
        %v6035 = vpack.c.bf16 %v5883, %v5879
        %v6036 = vpack.c.bf16 %v5884, %v5880
        %v6037 = vpack.c.bf16 %v5885, %v5881
        %v6038 = vpack.c.bf16 %v5890, %v5886
        %v6039 = vpack.c.bf16 %v5891, %v5887
        %v6040 = vpack.c.bf16 %v5892, %v5888
        %v6041 = vpack.c.bf16 %v5893, %v5889
        %v6042 = vpack.c.bf16 %v5898, %v5894
        %v6043 = vpack.c.bf16 %v5899, %v5895
        %v6044 = vpack.c.bf16 %v5900, %v5896
        %v6045 = vpack.c.bf16 %v5901, %v5897
        %v6046 = vpack.c.bf16 %v5906, %v5902
        %v6047 = vpack.c.bf16 %v5907, %v5903
        %v6048 = vpack.c.bf16 %v5908, %v5904
        %v6049 = vpack.c.bf16 %v5909, %v5905
        %v6050 = vpack.c.bf16 %v5914, %v5910
        %v6051 = vpack.c.bf16 %v5915, %v5911
        %v6052 = vpack.c.bf16 %v5916, %v5912
        %v6053 = vpack.c.bf16 %v5917, %v5913
        %v6054 = vpack.c.bf16 %v5922, %v5918
        %v6055 = vpack.c.bf16 %v5923, %v5919
        %v6056 = vpack.c.bf16 %v5924, %v5920
        %v6057 = vpack.c.bf16 %v5925, %v5921
        %v6058 = vpack.c.bf16 %v5930, %v5926
        %v6059 = vpack.c.bf16 %v5931, %v5927
        %v6060 = vpack.c.bf16 %v5932, %v5928
        %v6061 = vpack.c.bf16 %v5933, %v5929
        %v6062 = vpack.c.bf16 %v5938, %v5934
        %v6063 = vpack.c.bf16 %v5939, %v5935
        %v6064 = vpack.c.bf16 %v5940, %v5936
        %v6065 = vpack.c.bf16 %v5941, %v5937
        %v6066 = vpack.c.bf16 %v5946, %v5942
        %v6067 = vpack.c.bf16 %v5947, %v5943
        %v6068 = vpack.c.bf16 %v5948, %v5944
        %v6069 = vpack.c.bf16 %v5949, %v5945
        %v6070 = vld [vmem:[%s10] sm:$0xff]
        %v6071 = vld [vmem:[%s10 + $0x8] sm:$0xff]
        %v6072 = vld [vmem:[%s10 + $0x10] sm:$0xff]
        %v6073 = vld [vmem:[%s10 + $0x18] sm:$0xff]
        %v6074 = vld [vmem:[%s10 + $0x20] sm:$0xff]
        %v6075 = vld [vmem:[%s10 + $0x28] sm:$0xff]
        %v6076 = vld [vmem:[%s10 + $0x30] sm:$0xff]
        %v6077 = vld [vmem:[%s10 + $0x38] sm:$0xff]
        %v6078 = vld [vmem:[%s10 + $0x40] sm:$0xff]
        %v6079 = vld [vmem:[%s10 + $0x48] sm:$0xff]
        %v6080 = vld [vmem:[%s10 + $0x50] sm:$0xff]
        %v6081 = vld [vmem:[%s10 + $0x58] sm:$0xff]
        %v6082 = vld [vmem:[%s10 + $0x60] sm:$0xff]
        %v6083 = vld [vmem:[%s10 + $0x68] sm:$0xff]
        %v6084 = vld [vmem:[%s10 + $0x70] sm:$0xff]
        %v6085 = vld [vmem:[%s10 + $0x78] sm:$0xff]
        %v6086 = vld [vmem:[%s10 + $0x80] sm:$0xff]
        %v6087 = vld [vmem:[%s10 + $0x88] sm:$0xff]
        %v6088 = vld [vmem:[%s10 + $0x90] sm:$0xff]
        %v6089 = vld [vmem:[%s10 + $0x98] sm:$0xff]
        %6091 = vset.pattern.permute.xlu0 0
        %6092 = vperm.xlu0 %6091, %v6070
        %v6093 = vpop.permute.xlu0 %6092
        %6096 = vset.pattern.permute.xlu0 0
        %6097 = vperm.xlu0 %6096, %v6071
        %v6098 = vpop.permute.xlu0 %6097
        %6101 = vset.pattern.permute.xlu0 0
        %6102 = vperm.xlu0 %6101, %v6072
        %v6103 = vpop.permute.xlu0 %6102
        %6106 = vset.pattern.permute.xlu0 0
        %6107 = vperm.xlu0 %6106, %v6073
        %v6108 = vpop.permute.xlu0 %6107
        %6111 = vset.pattern.permute.xlu0 0
        %6112 = vperm.xlu0 %6111, %v6074
        %v6113 = vpop.permute.xlu0 %6112
        %6116 = vset.pattern.permute.xlu0 0
        %6117 = vperm.xlu0 %6116, %v6075
        %v6118 = vpop.permute.xlu0 %6117
        %6121 = vset.pattern.permute.xlu0 0
        %6122 = vperm.xlu0 %6121, %v6076
        %v6123 = vpop.permute.xlu0 %6122
        %6126 = vset.pattern.permute.xlu0 0
        %6127 = vperm.xlu0 %6126, %v6077
        %v6128 = vpop.permute.xlu0 %6127
        %6131 = vset.pattern.permute.xlu0 0
        %6132 = vperm.xlu0 %6131, %v6078
        %v6133 = vpop.permute.xlu0 %6132
        %6136 = vset.pattern.permute.xlu0 0
        %6137 = vperm.xlu0 %6136, %v6079
        %v6138 = vpop.permute.xlu0 %6137
        %6141 = vset.pattern.permute.xlu0 0
        %6142 = vperm.xlu0 %6141, %v6080
        %v6143 = vpop.permute.xlu0 %6142
        %6146 = vset.pattern.permute.xlu0 0
        %6147 = vperm.xlu0 %6146, %v6081
        %v6148 = vpop.permute.xlu0 %6147
        %6151 = vset.pattern.permute.xlu0 0
        %6152 = vperm.xlu0 %6151, %v6082
        %v6153 = vpop.permute.xlu0 %6152
        %6156 = vset.pattern.permute.xlu0 0
        %6157 = vperm.xlu0 %6156, %v6083
        %v6158 = vpop.permute.xlu0 %6157
        %6161 = vset.pattern.permute.xlu0 0
        %6162 = vperm.xlu0 %6161, %v6084
        %v6163 = vpop.permute.xlu0 %6162
        %6166 = vset.pattern.permute.xlu0 0
        %6167 = vperm.xlu0 %6166, %v6085
        %v6168 = vpop.permute.xlu0 %6167
        %6171 = vset.pattern.permute.xlu0 0
        %6172 = vperm.xlu0 %6171, %v6086
        %v6173 = vpop.permute.xlu0 %6172
        %6176 = vset.pattern.permute.xlu0 0
        %6177 = vperm.xlu0 %6176, %v6087
        %v6178 = vpop.permute.xlu0 %6177
        %6181 = vset.pattern.permute.xlu0 0
        %6182 = vperm.xlu0 %6181, %v6088
        %v6183 = vpop.permute.xlu0 %6182
        %6186 = vset.pattern.permute.xlu0 0
        %6187 = vperm.xlu0 %6186, %v6089
        %v6188 = vpop.permute.xlu0 %6187
        %v6230 = vunpack.c.l.b16 %v5950
        %v6231 = vunpack.c.h.b16 %v5950
        %v6232 = vunpack.c.l.b16 %v5951
        %v6233 = vunpack.c.l.b16 %v5952
        %v6234 = vunpack.c.h.b16 %v5952
        %v6235 = vunpack.c.l.b16 %v5953
        %v6236 = vunpack.c.l.b16 %v5954
        %v6237 = vunpack.c.h.b16 %v5954
        %v6238 = vunpack.c.l.b16 %v5955
        %v6239 = vunpack.c.l.b16 %v5956
        %v6240 = vunpack.c.h.b16 %v5956
        %v6241 = vunpack.c.l.b16 %v5957
        %v6242 = vunpack.c.l.b16 %v5958
        %v6243 = vunpack.c.h.b16 %v5958
        %v6244 = vunpack.c.l.b16 %v5959
        %v6245 = vunpack.c.l.b16 %v5960
        %v6246 = vunpack.c.h.b16 %v5960
        %v6247 = vunpack.c.l.b16 %v5961
        %v6248 = vunpack.c.l.b16 %v5962
        %v6249 = vunpack.c.h.b16 %v5962
        %v6250 = vunpack.c.l.b16 %v5963
        %v6251 = vunpack.c.l.b16 %v5964
        %v6252 = vunpack.c.h.b16 %v5964
        %v6253 = vunpack.c.l.b16 %v5965
        %v6254 = vunpack.c.l.b16 %v5966
        %v6255 = vunpack.c.h.b16 %v5966
        %v6256 = vunpack.c.l.b16 %v5967
        %v6257 = vunpack.c.l.b16 %v5968
        %v6258 = vunpack.c.h.b16 %v5968
        %v6259 = vunpack.c.l.b16 %v5969
        %v6260 = vunpack.c.l.b16 %v5970
        %v6261 = vunpack.c.h.b16 %v5970
        %v6262 = vunpack.c.l.b16 %v5971
        %v6263 = vunpack.c.l.b16 %v5972
        %v6264 = vunpack.c.h.b16 %v5972
        %v6265 = vunpack.c.l.b16 %v5973
        %v6266 = vunpack.c.l.b16 %v5974
        %v6267 = vunpack.c.h.b16 %v5974
        %v6268 = vunpack.c.l.b16 %v5975
        %v6269 = vunpack.c.l.b16 %v5976
        %v6270 = vunpack.c.h.b16 %v5976
        %v6271 = vunpack.c.l.b16 %v5977
        %v6272 = vunpack.c.l.b16 %v5978
        %v6273 = vunpack.c.h.b16 %v5978
        %v6274 = vunpack.c.l.b16 %v5979
        %v6275 = vunpack.c.l.b16 %v5980
        %v6276 = vunpack.c.h.b16 %v5980
        %v6277 = vunpack.c.l.b16 %v5981
        %v6278 = vunpack.c.l.b16 %v5982
        %v6279 = vunpack.c.h.b16 %v5982
        %v6280 = vunpack.c.l.b16 %v5983
        %v6281 = vunpack.c.l.b16 %v5984
        %v6282 = vunpack.c.h.b16 %v5984
        %v6283 = vunpack.c.l.b16 %v5985
        %v6284 = vunpack.c.l.b16 %v5986
        %v6285 = vunpack.c.h.b16 %v5986
        %v6286 = vunpack.c.l.b16 %v5987
        %v6287 = vunpack.c.l.b16 %v5988
        %v6288 = vunpack.c.h.b16 %v5988
        %v6289 = vunpack.c.l.b16 %v5989
        %v6290 = vpack.c.b16 %v6233, %v6230
        %v6291 = vpack.c.b16 %v6234, %v6231
        %v6292 = vpack.c.b16 %v6235, %v6232
        %v6293 = vpack.c.b16 %v6239, %v6236
        %v6294 = vpack.c.b16 %v6240, %v6237
        %v6295 = vpack.c.b16 %v6241, %v6238
        %v6296 = vpack.c.b16 %v6245, %v6242
        %v6297 = vpack.c.b16 %v6246, %v6243
        %v6298 = vpack.c.b16 %v6247, %v6244
        %v6299 = vpack.c.b16 %v6251, %v6248
        %v6300 = vpack.c.b16 %v6252, %v6249
        %v6301 = vpack.c.b16 %v6253, %v6250
        %v6302 = vpack.c.b16 %v6257, %v6254
        %v6303 = vpack.c.b16 %v6258, %v6255
        %v6304 = vpack.c.b16 %v6259, %v6256
        %v6305 = vpack.c.b16 %v6263, %v6260
        %v6306 = vpack.c.b16 %v6264, %v6261
        %v6307 = vpack.c.b16 %v6265, %v6262
        %v6308 = vpack.c.b16 %v6269, %v6266
        %v6309 = vpack.c.b16 %v6270, %v6267
        %v6310 = vpack.c.b16 %v6271, %v6268
        %v6311 = vpack.c.b16 %v6275, %v6272
        %v6312 = vpack.c.b16 %v6276, %v6273
        %v6313 = vpack.c.b16 %v6277, %v6274
        %v6314 = vpack.c.b16 %v6281, %v6278
        %v6315 = vpack.c.b16 %v6282, %v6279
        %v6316 = vpack.c.b16 %v6283, %v6280
        %v6317 = vpack.c.b16 %v6287, %v6284
        %v6318 = vpack.c.b16 %v6288, %v6285
        %v6319 = vpack.c.b16 %v6289, %v6286
        %v6341 = vsel %vm665, %v6292, 0
        %v6344 = vsel %vm665, %v6295, 0
        %v6347 = vsel %vm665, %v6298, 0
        %v6350 = vsel %vm665, %v6301, 0
        %v6353 = vsel %vm665, %v6304, 0
        %v6356 = vsel %vm665, %v6307, 0
        %v6359 = vsel %vm665, %v6310, 0
        %v6362 = vsel %vm665, %v6313, 0
        %v6365 = vsel %vm665, %v6316, 0
        %v6368 = vsel %vm665, %v6319, 0
        %6370 = vmatprep.subr.bf16.mxu0 %v5991
        %6371 = vmatpush1.bf16.msra.mxu0 %v5990
        %6372 = vmatprep.subr.bf16.mxu0 %v5995
        %6373 = vmatpush1.bf16.msra.mxu0 %v5994
        %6374 = vmatprep.subr.bf16.mxu0 %v5999
        %6375 = vmatpush1.bf16.msra.mxu0 %v5998
        %6376 = vmatprep.subr.bf16.mxu0 %v6003
        %6377 = vmatpush1.bf16.msra.mxu0 %v6002
        %6378 = vmatprep.subr.bf16.mxu0 %v6007
        %6379 = vmatpush1.bf16.msra.mxu0 %v6006
        %6380 = vmatprep.subr.bf16.mxu0 %v6011
        %6381 = vmatpush1.bf16.msra.mxu0 %v6010
        %6382 = vmatprep.subr.bf16.mxu0 %v6015
        %6383 = vmatpush1.bf16.msra.mxu0 %v6014
        %6384 = vmatprep.subr.bf16.mxu0 %v6019
        %6385 = vmatpush1.bf16.msra.mxu0 %v6018
        %6386 = vmatprep.subr.bf16.mxu0 %v6023
        %6387 = vmatpush1.bf16.msra.mxu0 %v6022
        %6388 = vmatprep.subr.bf16.mxu0 %v6027
        %6389 = vmatpush1.bf16.msra.mxu0 %v6026
        %6390 = vmatprep.subr.bf16.mxu0 %v6031
        %6391 = vmatpush1.bf16.msra.mxu0 %v6030
        %6392 = vmatprep.subr.bf16.mxu0 %v6035
        %6393 = vmatpush1.bf16.msra.mxu0 %v6034
        %6394 = vmatprep.subr.bf16.mxu0 %v6039
        %6395 = vmatpush1.bf16.msra.mxu0 %v6038
        %6396 = vmatprep.subr.bf16.mxu0 %v6043
        %6397 = vmatpush1.bf16.msra.mxu0 %v6042
        %6398 = vmatprep.subr.bf16.mxu0 %v6047
        %6399 = vmatpush1.bf16.msra.mxu0 %v6046
        %6400 = vmatprep.subr.bf16.mxu0 %v6051
        %6401 = vmatpush1.bf16.msra.mxu0 %v6050
        %6402 = vmatprep.mubr.bf16.mxu0 %v6291
        %6403 = vmatmul.mubr.bf16.gmra.mrb[0].mxu0 %v6290
        %v6404 = vpop.f32.mrb[0].mxu0
        %v6405 = vadd.f32 %v6093, %v6404
        %v6406 = vpop.f32.mrb[0].mxu0
        %v6407 = vadd.f32 %v6093, %v6406
        %v6408 = vpop.f32.mrb[0].mxu0
        %v6409 = vadd.f32 %v6098, %v6408
        %v6410 = vpop.f32.mrb[0].mxu0
        %v6411 = vadd.f32 %v6098, %v6410
        %6412 = vmatprep.mubr.bf16.mxu0 %v6294
        %6413 = vmatmul.mubr.bf16.gmra.mrb[0].mxu0 %v6293
        %v6414 = vpop.f32.mrb[0].mxu0
        %v6415 = vadd.f32 %v6103, %v6414
        %v6416 = vpop.f32.mrb[0].mxu0
        %v6417 = vadd.f32 %v6103, %v6416
        %v6418 = vpop.f32.mrb[0].mxu0
        %v6419 = vadd.f32 %v6108, %v6418
        %v6420 = vpop.f32.mrb[0].mxu0
        %v6421 = vadd.f32 %v6108, %v6420
        %6422 = vmatprep.mubr.bf16.mxu0 %v6297
        %6423 = vmatmul.mubr.bf16.gmra.mrb[0].mxu0 %v6296
        %v6424 = vpop.f32.mrb[0].mxu0
        %v6425 = vadd.f32 %v6113, %v6424
        %v6426 = vpop.f32.mrb[0].mxu0
        %v6427 = vadd.f32 %v6113, %v6426
        %v6428 = vpop.f32.mrb[0].mxu0
        %v6429 = vadd.f32 %v6118, %v6428
        %v6430 = vpop.f32.mrb[0].mxu0
        %v6431 = vadd.f32 %v6118, %v6430
        %6432 = vmatprep.mubr.bf16.mxu0 %v6300
        %6433 = vmatmul.mubr.bf16.gmra.mrb[0].mxu0 %v6299
        %v6434 = vpop.f32.mrb[0].mxu0
        %v6435 = vadd.f32 %v6123, %v6434
        %v6436 = vpop.f32.mrb[0].mxu0
        %v6437 = vadd.f32 %v6123, %v6436
        %v6438 = vpop.f32.mrb[0].mxu0
        %v6439 = vadd.f32 %v6128, %v6438
        %v6440 = vpop.f32.mrb[0].mxu0
        %v6441 = vadd.f32 %v6128, %v6440
        %6442 = vmatprep.mubr.bf16.mxu0 %v6303
        %6443 = vmatmul.mubr.bf16.gmra.mrb[0].mxu0 %v6302
        %v6444 = vpop.f32.mrb[0].mxu0
        %v6445 = vadd.f32 %v6133, %v6444
        %v6446 = vpop.f32.mrb[0].mxu0
        %v6447 = vadd.f32 %v6133, %v6446
        %v6448 = vpop.f32.mrb[0].mxu0
        %v6449 = vadd.f32 %v6138, %v6448
        %v6450 = vpop.f32.mrb[0].mxu0
        %v6451 = vadd.f32 %v6138, %v6450
        %6452 = vmatprep.mubr.bf16.mxu0 %v6306
        %6453 = vmatmul.mubr.bf16.gmra.mrb[0].mxu0 %v6305
        %v6454 = vpop.f32.mrb[0].mxu0
        %v6455 = vadd.f32 %v6143, %v6454
        %v6456 = vpop.f32.mrb[0].mxu0
        %v6457 = vadd.f32 %v6143, %v6456
        %v6458 = vpop.f32.mrb[0].mxu0
        %v6459 = vadd.f32 %v6148, %v6458
        %v6460 = vpop.f32.mrb[0].mxu0
        %v6461 = vadd.f32 %v6148, %v6460
        %6462 = vmatprep.mubr.bf16.mxu0 %v6309
        %6463 = vmatmul.mubr.bf16.gmra.mrb[0].mxu0 %v6308
        %v6464 = vpop.f32.mrb[0].mxu0
        %v6465 = vadd.f32 %v6153, %v6464
        %v6466 = vpop.f32.mrb[0].mxu0
        %v6467 = vadd.f32 %v6153, %v6466
        %v6468 = vpop.f32.mrb[0].mxu0
        %v6469 = vadd.f32 %v6158, %v6468
        %v6470 = vpop.f32.mrb[0].mxu0
        %v6471 = vadd.f32 %v6158, %v6470
        %6472 = vmatprep.mubr.bf16.mxu0 %v6312
        %6473 = vmatmul.mubr.bf16.gmra.mrb[0].mxu0 %v6311
        %v6474 = vpop.f32.mrb[0].mxu0
        %v6475 = vadd.f32 %v6163, %v6474
        %v6476 = vpop.f32.mrb[0].mxu0
        %v6477 = vadd.f32 %v6163, %v6476
        %v6478 = vpop.f32.mrb[0].mxu0
        %v6479 = vadd.f32 %v6168, %v6478
        %v6480 = vpop.f32.mrb[0].mxu0
        %v6481 = vadd.f32 %v6168, %v6480
        %6482 = vmatprep.mubr.bf16.mxu0 %v6315
        %6483 = vmatmul.mubr.bf16.gmra.mrb[0].mxu0 %v6314
        %v6484 = vpop.f32.mrb[0].mxu0
        %v6485 = vadd.f32 %v6173, %v6484
        %v6486 = vpop.f32.mrb[0].mxu0
        %v6487 = vadd.f32 %v6173, %v6486
        %v6488 = vpop.f32.mrb[0].mxu0
        %v6489 = vadd.f32 %v6178, %v6488
        %v6490 = vpop.f32.mrb[0].mxu0
        %v6491 = vadd.f32 %v6178, %v6490
        %6492 = vmatprep.mubr.bf16.mxu0 %v6318
        %6493 = vmatmul.mubr.bf16.gmra.mrb[0].mxu0 %v6317
        %v6494 = vpop.f32.mrb[0].mxu0
        %v6495 = vadd.f32 %v6183, %v6494
        %v6496 = vpop.f32.mrb[0].mxu0
        %v6497 = vadd.f32 %v6183, %v6496
        %v6498 = vpop.f32.mrb[0].mxu0
        %v6499 = vadd.f32 %v6188, %v6498
        %v6500 = vpop.f32.mrb[0].mxu0
        %v6501 = vadd.f32 %v6188, %v6500
        %6502 = vdwg.mxu0
        %6503 = vmatprep.subr.bf16.mxu0 %v6055
        %6504 = vmatpush1.bf16.msra.mxu0 %v6054
        %6505 = vmatprep.subr.bf16.mxu0 %v6059
        %6506 = vmatpush1.bf16.msra.mxu0 %v6058
        %6507 = vmatprep.subr.bf16.mxu0 %v6063
        %6508 = vmatpush1.bf16.msra.mxu0 %v6062
        %6509 = vmatprep.subr.bf16.mxu0 %v6067
        %6510 = vmatpush1.bf16.msra.mxu0 %v6066
        %6511 = vmatprep.subr.bf16.mxu0 0
        %6512 = vmatpush1.bf16.msra.mxu0 0
        %6513 = vmatprep.subr.bf16.mxu0 0
        %6514 = vmatpush1.bf16.msra.mxu0 0
        %6515 = vmatprep.subr.bf16.mxu0 0
        %6516 = vmatpush1.bf16.msra.mxu0 0
        %6517 = vmatprep.subr.bf16.mxu0 0
        %6518 = vmatpush1.bf16.msra.mxu0 0
        %6519 = vmatprep.subr.bf16.mxu0 0
        %6520 = vmatpush1.bf16.msra.mxu0 0
        %6521 = vmatprep.subr.bf16.mxu0 0
        %6522 = vmatpush1.bf16.msra.mxu0 0
        %6523 = vmatprep.subr.bf16.mxu0 0
        %6524 = vmatpush1.bf16.msra.mxu0 0
        %6525 = vmatprep.subr.bf16.mxu0 0
        %6526 = vmatpush1.bf16.msra.mxu0 0
        %6527 = vmatprep.subr.bf16.mxu0 0
        %6528 = vmatpush1.bf16.msra.mxu0 0
        %6529 = vmatprep.subr.bf16.mxu0 0
        %6530 = vmatpush1.bf16.msra.mxu0 0
        %6531 = vmatprep.subr.bf16.mxu0 0
        %6532 = vmatpush1.bf16.msra.mxu0 0
        %6533 = vmatprep.subr.bf16.mxu0 0
        %6534 = vmatpush1.bf16.msra.mxu0 0
        %6535 = vmatprep.mubr.bf16.mxu0 0
        %6536 = vmatmul.mubr.bf16.gmra.mrb[0].mxu0 %v6341
        %v6537 = vpop.f32.mrb[0].mxu0
        %v6538 = vadd.f32 %v6405, %v6537
        %v6539 = vpop.f32.mrb[0].mxu0
        %v6540 = vadd.f32 %v6407, %v6539
        %v6541 = vpop.f32.mrb[0].mxu0
        %v6542 = vadd.f32 %v6409, %v6541
        %v6543 = vpop.f32.mrb[0].mxu0
        %v6544 = vadd.f32 %v6411, %v6543
        %6545 = vmatprep.mubr.bf16.mxu0 0
        %6546 = vmatmul.mubr.bf16.gmra.mrb[0].mxu0 %v6344
        %v6547 = vpop.f32.mrb[0].mxu0
        %v6548 = vadd.f32 %v6415, %v6547
        %v6549 = vpop.f32.mrb[0].mxu0
        %v6550 = vadd.f32 %v6417, %v6549
        %v6551 = vpop.f32.mrb[0].mxu0
        %v6552 = vadd.f32 %v6419, %v6551
        %v6553 = vpop.f32.mrb[0].mxu0
        %v6554 = vadd.f32 %v6421, %v6553
        %6555 = vmatprep.mubr.bf16.mxu0 0
        %6556 = vmatmul.mubr.bf16.gmra.mrb[0].mxu0 %v6347
        %v6557 = vpop.f32.mrb[0].mxu0
        %v6558 = vadd.f32 %v6425, %v6557
        %v6559 = vpop.f32.mrb[0].mxu0
        %v6560 = vadd.f32 %v6427, %v6559
        %v6561 = vpop.f32.mrb[0].mxu0
        %v6562 = vadd.f32 %v6429, %v6561
        %v6563 = vpop.f32.mrb[0].mxu0
        %v6564 = vadd.f32 %v6431, %v6563
        %6565 = vmatprep.mubr.bf16.mxu0 0
        %6566 = vmatmul.mubr.bf16.gmra.mrb[0].mxu0 %v6350
        %v6567 = vpop.f32.mrb[0].mxu0
        %v6568 = vadd.f32 %v6435, %v6567
        %v6569 = vpop.f32.mrb[0].mxu0
        %v6570 = vadd.f32 %v6437, %v6569
        %v6571 = vpop.f32.mrb[0].mxu0
        %v6572 = vadd.f32 %v6439, %v6571
        %v6573 = vpop.f32.mrb[0].mxu0
        %v6574 = vadd.f32 %v6441, %v6573
        %6575 = vmatprep.mubr.bf16.mxu0 0
        %6576 = vmatmul.mubr.bf16.gmra.mrb[0].mxu0 %v6353
        %v6577 = vpop.f32.mrb[0].mxu0
        %v6578 = vadd.f32 %v6445, %v6577
        %v6579 = vpop.f32.mrb[0].mxu0
        %v6580 = vadd.f32 %v6447, %v6579
        %v6581 = vpop.f32.mrb[0].mxu0
        %v6582 = vadd.f32 %v6449, %v6581
        %v6583 = vpop.f32.mrb[0].mxu0
        %v6584 = vadd.f32 %v6451, %v6583
        %6585 = vmatprep.mubr.bf16.mxu0 0
        %6586 = vmatmul.mubr.bf16.gmra.mrb[0].mxu0 %v6356
        %v6587 = vpop.f32.mrb[0].mxu0
        %v6588 = vadd.f32 %v6455, %v6587
        %v6589 = vpop.f32.mrb[0].mxu0
        %v6590 = vadd.f32 %v6457, %v6589
        %v6591 = vpop.f32.mrb[0].mxu0
        %v6592 = vadd.f32 %v6459, %v6591
        %v6593 = vpop.f32.mrb[0].mxu0
        %v6594 = vadd.f32 %v6461, %v6593
        %6595 = vmatprep.mubr.bf16.mxu0 0
        %6596 = vmatmul.mubr.bf16.gmra.mrb[0].mxu0 %v6359
        %v6597 = vpop.f32.mrb[0].mxu0
        %v6598 = vadd.f32 %v6465, %v6597
        %v6599 = vpop.f32.mrb[0].mxu0
        %v6600 = vadd.f32 %v6467, %v6599
        %v6601 = vpop.f32.mrb[0].mxu0
        %v6602 = vadd.f32 %v6469, %v6601
        %v6603 = vpop.f32.mrb[0].mxu0
        %v6604 = vadd.f32 %v6471, %v6603
        %6605 = vmatprep.mubr.bf16.mxu0 0
        %6606 = vmatmul.mubr.bf16.gmra.mrb[0].mxu0 %v6362
        %v6607 = vpop.f32.mrb[0].mxu0
        %v6608 = vadd.f32 %v6475, %v6607
        %v6609 = vpop.f32.mrb[0].mxu0
        %v6610 = vadd.f32 %v6477, %v6609
        %v6611 = vpop.f32.mrb[0].mxu0
        %v6612 = vadd.f32 %v6479, %v6611
        %v6613 = vpop.f32.mrb[0].mxu0
        %v6614 = vadd.f32 %v6481, %v6613
        %6615 = vmatprep.mubr.bf16.mxu0 0
        %6616 = vmatmul.mubr.bf16.gmra.mrb[0].mxu0 %v6365
        %v6617 = vpop.f32.mrb[0].mxu0
        %v6618 = vadd.f32 %v6485, %v6617
        %v6619 = vpop.f32.mrb[0].mxu0
        %v6620 = vadd.f32 %v6487, %v6619
        %v6621 = vpop.f32.mrb[0].mxu0
        %v6622 = vadd.f32 %v6489, %v6621
        %v6623 = vpop.f32.mrb[0].mxu0
        %v6624 = vadd.f32 %v6491, %v6623
        %6625 = vmatprep.mubr.bf16.mxu0 0
        %6626 = vmatmul.mubr.bf16.gmra.mrb[0].mxu0 %v6368
        %v6627 = vpop.f32.mrb[0].mxu0
        %v6628 = vadd.f32 %v6495, %v6627
        %v6629 = vpop.f32.mrb[0].mxu0
        %v6630 = vadd.f32 %v6497, %v6629
        %v6631 = vpop.f32.mrb[0].mxu0
        %v6632 = vadd.f32 %v6499, %v6631
        %v6633 = vpop.f32.mrb[0].mxu0
        %v6634 = vadd.f32 %v6501, %v6633
        %6635 = vdwg.mxu0
        %6636 = vmatprep.subr.bf16.mxu0 %v5993
        %6637 = vmatpush1.bf16.msra.mxu0 %v5992
        %6638 = vmatprep.subr.bf16.mxu0 %v5997
        %6639 = vmatpush1.bf16.msra.mxu0 %v5996
        %6640 = vmatprep.subr.bf16.mxu0 %v6001
        %6641 = vmatpush1.bf16.msra.mxu0 %v6000
        %6642 = vmatprep.subr.bf16.mxu0 %v6005
        %6643 = vmatpush1.bf16.msra.mxu0 %v6004
        %6644 = vmatprep.subr.bf16.mxu0 %v6009
        %6645 = vmatpush1.bf16.msra.mxu0 %v6008
        %6646 = vmatprep.subr.bf16.mxu0 %v6013
        %6647 = vmatpush1.bf16.msra.mxu0 %v6012
        %6648 = vmatprep.subr.bf16.mxu0 %v6017
        %6649 = vmatpush1.bf16.msra.mxu0 %v6016
        %6650 = vmatprep.subr.bf16.mxu0 %v6021
        %6651 = vmatpush1.bf16.msra.mxu0 %v6020
        %6652 = vmatprep.subr.bf16.mxu0 %v6025
        %6653 = vmatpush1.bf16.msra.mxu0 %v6024
        %6654 = vmatprep.subr.bf16.mxu0 %v6029
        %6655 = vmatpush1.bf16.msra.mxu0 %v6028
        %6656 = vmatprep.subr.bf16.mxu0 %v6033
        %6657 = vmatpush1.bf16.msra.mxu0 %v6032
        %6658 = vmatprep.subr.bf16.mxu0 %v6037
        %6659 = vmatpush1.bf16.msra.mxu0 %v6036
        %6660 = vmatprep.subr.bf16.mxu0 %v6041
        %6661 = vmatpush1.bf16.msra.mxu0 %v6040
        %6662 = vmatprep.subr.bf16.mxu0 %v6045
        %6663 = vmatpush1.bf16.msra.mxu0 %v6044
        %6664 = vmatprep.subr.bf16.mxu0 %v6049
        %6665 = vmatpush1.bf16.msra.mxu0 %v6048
        %6666 = vmatprep.subr.bf16.mxu0 %v6053
        %6667 = vmatpush1.bf16.msra.mxu0 %v6052
        %6668 = vmatprep.mubr.bf16.mxu0 %v6291
        %6669 = vmatmul.mubr.bf16.gmra.mrb[0].mxu0 %v6290
        %v6670 = vpop.f32.mrb[0].mxu0
        %v6671 = vadd.f32 %v6093, %v6670
        %v6672 = vpop.f32.mrb[0].mxu0
        %v6673 = vadd.f32 %v6093, %v6672
        %v6674 = vpop.f32.mrb[0].mxu0
        %v6675 = vadd.f32 %v6098, %v6674
        %v6676 = vpop.f32.mrb[0].mxu0
        %v6677 = vadd.f32 %v6098, %v6676
        %6678 = vmatprep.mubr.bf16.mxu0 %v6294
        %6679 = vmatmul.mubr.bf16.gmra.mrb[0].mxu0 %v6293
        %v6680 = vpop.f32.mrb[0].mxu0
        %v6681 = vadd.f32 %v6103, %v6680
        %v6682 = vpop.f32.mrb[0].mxu0
        %v6683 = vadd.f32 %v6103, %v6682
        %v6684 = vpop.f32.mrb[0].mxu0
        %v6685 = vadd.f32 %v6108, %v6684
        %v6686 = vpop.f32.mrb[0].mxu0
        %v6687 = vadd.f32 %v6108, %v6686
        %6688 = vmatprep.mubr.bf16.mxu0 %v6297
        %6689 = vmatmul.mubr.bf16.gmra.mrb[0].mxu0 %v6296
        %v6690 = vpop.f32.mrb[0].mxu0
        %v6691 = vadd.f32 %v6113, %v6690
        %v6692 = vpop.f32.mrb[0].mxu0
        %v6693 = vadd.f32 %v6113, %v6692
        %v6694 = vpop.f32.mrb[0].mxu0
        %v6695 = vadd.f32 %v6118, %v6694
        %v6696 = vpop.f32.mrb[0].mxu0
        %v6697 = vadd.f32 %v6118, %v6696
        %6698 = vmatprep.mubr.bf16.mxu0 %v6300
        %6699 = vmatmul.mubr.bf16.gmra.mrb[0].mxu0 %v6299
        %v6700 = vpop.f32.mrb[0].mxu0
        %v6701 = vadd.f32 %v6123, %v6700
        %v6702 = vpop.f32.mrb[0].mxu0
        %v6703 = vadd.f32 %v6123, %v6702
        %v6704 = vpop.f32.mrb[0].mxu0
        %v6705 = vadd.f32 %v6128, %v6704
        %v6706 = vpop.f32.mrb[0].mxu0
        %v6707 = vadd.f32 %v6128, %v6706
        %6708 = vmatprep.mubr.bf16.mxu0 %v6303
        %6709 = vmatmul.mubr.bf16.gmra.mrb[0].mxu0 %v6302
        %v6710 = vpop.f32.mrb[0].mxu0
        %v6711 = vadd.f32 %v6133, %v6710
        %v6712 = vpop.f32.mrb[0].mxu0
        %v6713 = vadd.f32 %v6133, %v6712
        %v6714 = vpop.f32.mrb[0].mxu0
        %v6715 = vadd.f32 %v6138, %v6714
        %v6716 = vpop.f32.mrb[0].mxu0
        %v6717 = vadd.f32 %v6138, %v6716
        %6718 = vmatprep.mubr.bf16.mxu0 %v6306
        %6719 = vmatmul.mubr.bf16.gmra.mrb[0].mxu0 %v6305
        %v6720 = vpop.f32.mrb[0].mxu0
        %v6721 = vadd.f32 %v6143, %v6720
        %v6722 = vpop.f32.mrb[0].mxu0
        %v6723 = vadd.f32 %v6143, %v6722
        %v6724 = vpop.f32.mrb[0].mxu0
        %v6725 = vadd.f32 %v6148, %v6724
        %v6726 = vpop.f32.mrb[0].mxu0
        %v6727 = vadd.f32 %v6148, %v6726
        %6728 = vmatprep.mubr.bf16.mxu0 %v6309
        %6729 = vmatmul.mubr.bf16.gmra.mrb[0].mxu0 %v6308
        %v6730 = vpop.f32.mrb[0].mxu0
        %v6731 = vadd.f32 %v6153, %v6730
        %v6732 = vpop.f32.mrb[0].mxu0
        %v6733 = vadd.f32 %v6153, %v6732
        %v6734 = vpop.f32.mrb[0].mxu0
        %v6735 = vadd.f32 %v6158, %v6734
        %v6736 = vpop.f32.mrb[0].mxu0
        %v6737 = vadd.f32 %v6158, %v6736
        %6738 = vmatprep.mubr.bf16.mxu0 %v6312
        %6739 = vmatmul.mubr.bf16.gmra.mrb[0].mxu0 %v6311
        %v6740 = vpop.f32.mrb[0].mxu0
        %v6741 = vadd.f32 %v6163, %v6740
        %v6742 = vpop.f32.mrb[0].mxu0
        %v6743 = vadd.f32 %v6163, %v6742
        %v6744 = vpop.f32.mrb[0].mxu0
        %v6745 = vadd.f32 %v6168, %v6744
        %v6746 = vpop.f32.mrb[0].mxu0
        %v6747 = vadd.f32 %v6168, %v6746
        %6748 = vmatprep.mubr.bf16.mxu0 %v6315
        %6749 = vmatmul.mubr.bf16.gmra.mrb[0].mxu0 %v6314
        %v6750 = vpop.f32.mrb[0].mxu0
        %v6751 = vadd.f32 %v6173, %v6750
        %v6752 = vpop.f32.mrb[0].mxu0
        %v6753 = vadd.f32 %v6173, %v6752
        %v6754 = vpop.f32.mrb[0].mxu0
        %v6755 = vadd.f32 %v6178, %v6754
        %v6756 = vpop.f32.mrb[0].mxu0
        %v6757 = vadd.f32 %v6178, %v6756
        %6758 = vmatprep.mubr.bf16.mxu0 %v6318
        %6759 = vmatmul.mubr.bf16.gmra.mrb[0].mxu0 %v6317
        %v6760 = vpop.f32.mrb[0].mxu0
        %v6761 = vadd.f32 %v6183, %v6760
        %v6762 = vpop.f32.mrb[0].mxu0
        %v6763 = vadd.f32 %v6183, %v6762
        %v6764 = vpop.f32.mrb[0].mxu0
        %v6765 = vadd.f32 %v6188, %v6764
        %v6766 = vpop.f32.mrb[0].mxu0
        %v6767 = vadd.f32 %v6188, %v6766
        %6768 = vdwg.mxu0
        %6769 = vmatprep.subr.bf16.mxu0 %v6057
        %6770 = vmatpush1.bf16.msra.mxu0 %v6056
        %6771 = vmatprep.subr.bf16.mxu0 %v6061
        %6772 = vmatpush1.bf16.msra.mxu0 %v6060
        %6773 = vmatprep.subr.bf16.mxu0 %v6065
        %6774 = vmatpush1.bf16.msra.mxu0 %v6064
        %6775 = vmatprep.subr.bf16.mxu0 %v6069
        %6776 = vmatpush1.bf16.msra.mxu0 %v6068
        %6777 = vmatprep.subr.bf16.mxu0 0
        %6778 = vmatpush1.bf16.msra.mxu0 0
        %6779 = vmatprep.subr.bf16.mxu0 0
        %6780 = vmatpush1.bf16.msra.mxu0 0
        %6781 = vmatprep.subr.bf16.mxu0 0
        %6782 = vmatpush1.bf16.msra.mxu0 0
        %6783 = vmatprep.subr.bf16.mxu0 0
        %6784 = vmatpush1.bf16.msra.mxu0 0
        %6785 = vmatprep.subr.bf16.mxu0 0
        %6786 = vmatpush1.bf16.msra.mxu0 0
        %6787 = vmatprep.subr.bf16.mxu0 0
        %6788 = vmatpush1.bf16.msra.mxu0 0
        %6789 = vmatprep.subr.bf16.mxu0 0
        %6790 = vmatpush1.bf16.msra.mxu0 0
        %6791 = vmatprep.subr.bf16.mxu0 0
        %6792 = vmatpush1.bf16.msra.mxu0 0
        %6793 = vmatprep.subr.bf16.mxu0 0
        %6794 = vmatpush1.bf16.msra.mxu0 0
        %6795 = vmatprep.subr.bf16.mxu0 0
        %6796 = vmatpush1.bf16.msra.mxu0 0
        %6797 = vmatprep.subr.bf16.mxu0 0
        %6798 = vmatpush1.bf16.msra.mxu0 0
        %6799 = vmatprep.subr.bf16.mxu0 0
        %6800 = vmatpush1.bf16.msra.mxu0 0
        %6801 = vmatprep.mubr.bf16.mxu0 0
        %6802 = vmatmul.mubr.bf16.gmra.mrb[0].mxu0 %v6341
        %v6803 = vpop.f32.mrb[0].mxu0
        %v6804 = vadd.f32 %v6671, %v6803
        %v6805 = vpop.f32.mrb[0].mxu0
        %v6806 = vadd.f32 %v6673, %v6805
        %v6807 = vpop.f32.mrb[0].mxu0
        %v6808 = vadd.f32 %v6675, %v6807
        %v6809 = vpop.f32.mrb[0].mxu0
        %v6810 = vadd.f32 %v6677, %v6809
        %6811 = vmatprep.mubr.bf16.mxu0 0
        %6812 = vmatmul.mubr.bf16.gmra.mrb[0].mxu0 %v6344
        %v6813 = vpop.f32.mrb[0].mxu0
        %v6814 = vadd.f32 %v6681, %v6813
        %v6815 = vpop.f32.mrb[0].mxu0
        %v6816 = vadd.f32 %v6683, %v6815
        %v6817 = vpop.f32.mrb[0].mxu0
        %v6818 = vadd.f32 %v6685, %v6817
        %v6819 = vpop.f32.mrb[0].mxu0
        %v6820 = vadd.f32 %v6687, %v6819
        %6821 = vmatprep.mubr.bf16.mxu0 0
        %6822 = vmatmul.mubr.bf16.gmra.mrb[0].mxu0 %v6347
        %v6823 = vpop.f32.mrb[0].mxu0
        %v6824 = vadd.f32 %v6691, %v6823
        %v6825 = vpop.f32.mrb[0].mxu0
        %v6826 = vadd.f32 %v6693, %v6825
        %v6827 = vpop.f32.mrb[0].mxu0
        %v6828 = vadd.f32 %v6695, %v6827
        %v6829 = vpop.f32.mrb[0].mxu0
        %v6830 = vadd.f32 %v6697, %v6829
        %6831 = vmatprep.mubr.bf16.mxu0 0
        %6832 = vmatmul.mubr.bf16.gmra.mrb[0].mxu0 %v6350
        %v6833 = vpop.f32.mrb[0].mxu0
        %v6834 = vadd.f32 %v6701, %v6833
        %v6835 = vpop.f32.mrb[0].mxu0
        %v6836 = vadd.f32 %v6703, %v6835
        %v6837 = vpop.f32.mrb[0].mxu0
        %v6838 = vadd.f32 %v6705, %v6837
        %v6839 = vpop.f32.mrb[0].mxu0
        %v6840 = vadd.f32 %v6707, %v6839
        %6841 = vmatprep.mubr.bf16.mxu0 0
        %6842 = vmatmul.mubr.bf16.gmra.mrb[0].mxu0 %v6353
        %v6843 = vpop.f32.mrb[0].mxu0
        %v6844 = vadd.f32 %v6711, %v6843
        %v6845 = vpop.f32.mrb[0].mxu0
        %v6846 = vadd.f32 %v6713, %v6845
        %v6847 = vpop.f32.mrb[0].mxu0
        %v6848 = vadd.f32 %v6715, %v6847
        %v6849 = vpop.f32.mrb[0].mxu0
        %v6850 = vadd.f32 %v6717, %v6849
        %6851 = vmatprep.mubr.bf16.mxu0 0
        %6852 = vmatmul.mubr.bf16.gmra.mrb[0].mxu0 %v6356
        %v6853 = vpop.f32.mrb[0].mxu0
        %v6854 = vadd.f32 %v6721, %v6853
        %v6855 = vpop.f32.mrb[0].mxu0
        %v6856 = vadd.f32 %v6723, %v6855
        %v6857 = vpop.f32.mrb[0].mxu0
        %v6858 = vadd.f32 %v6725, %v6857
        %v6859 = vpop.f32.mrb[0].mxu0
        %v6860 = vadd.f32 %v6727, %v6859
        %6861 = vmatprep.mubr.bf16.mxu0 0
        %6862 = vmatmul.mubr.bf16.gmra.mrb[0].mxu0 %v6359
        %v6863 = vpop.f32.mrb[0].mxu0
        %v6864 = vadd.f32 %v6731, %v6863
        %v6865 = vpop.f32.mrb[0].mxu0
        %v6866 = vadd.f32 %v6733, %v6865
        %v6867 = vpop.f32.mrb[0].mxu0
        %v6868 = vadd.f32 %v6735, %v6867
        %v6869 = vpop.f32.mrb[0].mxu0
        %v6870 = vadd.f32 %v6737, %v6869
        %6871 = vmatprep.mubr.bf16.mxu0 0
        %6872 = vmatmul.mubr.bf16.gmra.mrb[0].mxu0 %v6362
        %v6873 = vpop.f32.mrb[0].mxu0
        %v6874 = vadd.f32 %v6741, %v6873
        %v6875 = vpop.f32.mrb[0].mxu0
        %v6876 = vadd.f32 %v6743, %v6875
        %v6877 = vpop.f32.mrb[0].mxu0
        %v6878 = vadd.f32 %v6745, %v6877
        %v6879 = vpop.f32.mrb[0].mxu0
        %v6880 = vadd.f32 %v6747, %v6879
        %6881 = vmatprep.mubr.bf16.mxu0 0
        %6882 = vmatmul.mubr.bf16.gmra.mrb[0].mxu0 %v6365
        %v6883 = vpop.f32.mrb[0].mxu0
        %v6884 = vadd.f32 %v6751, %v6883
        %v6885 = vpop.f32.mrb[0].mxu0
        %v6886 = vadd.f32 %v6753, %v6885
        %v6887 = vpop.f32.mrb[0].mxu0
        %v6888 = vadd.f32 %v6755, %v6887
        %v6889 = vpop.f32.mrb[0].mxu0
        %v6890 = vadd.f32 %v6757, %v6889
        %6891 = vmatprep.mubr.bf16.mxu0 0
        %6892 = vmatmul.mubr.bf16.gmra.mrb[0].mxu0 %v6368
        %v6893 = vpop.f32.mrb[0].mxu0
        %v6894 = vadd.f32 %v6761, %v6893
        %v6895 = vpop.f32.mrb[0].mxu0
        %v6896 = vadd.f32 %v6763, %v6895
        %v6897 = vpop.f32.mrb[0].mxu0
        %v6898 = vadd.f32 %v6765, %v6897
        %v6899 = vpop.f32.mrb[0].mxu0
        %v6900 = vadd.f32 %v6767, %v6899
        %6901 = vdwg.mxu0
        %6902 = vst [vmem:[%s404] sm:$0xff] %v6538
        %6903 = vst [vmem:[%s404 + $0x8] sm:$0xff] %v6540
        %6904 = vst [vmem:[%s404 + $0x10] sm:$0xff] %v6804
        %6905 = vst [vmem:[%s404 + $0x18] sm:$0xff] %v6806
        %6906 = vst [vmem:[%s404 + $0x20] sm:$0xff] %v6542
        %6907 = vst [vmem:[%s404 + $0x28] sm:$0xff] %v6544
        %6908 = vst [vmem:[%s404 + $0x30] sm:$0xff] %v6808
        %6909 = vst [vmem:[%s404 + $0x38] sm:$0xff] %v6810
        %6910 = vst [vmem:[%s404 + $0x40] sm:$0xff] %v6548
        %6911 = vst [vmem:[%s404 + $0x48] sm:$0xff] %v6550
        %6912 = vst [vmem:[%s404 + $0x50] sm:$0xff] %v6814
        %6913 = vst [vmem:[%s404 + $0x58] sm:$0xff] %v6816
        %6914 = vst [vmem:[%s404 + $0x60] sm:$0xff] %v6552
        %6915 = vst [vmem:[%s404 + $0x68] sm:$0xff] %v6554
        %6916 = vst [vmem:[%s404 + $0x70] sm:$0xff] %v6818
        %6917 = vst [vmem:[%s404 + $0x78] sm:$0xff] %v6820
        %6918 = vst [vmem:[%s404 + $0x80] sm:$0xff] %v6558
        %6919 = vst [vmem:[%s404 + $0x88] sm:$0xff] %v6560
        %6920 = vst [vmem:[%s404 + $0x90] sm:$0xff] %v6824
        %6921 = vst [vmem:[%s404 + $0x98] sm:$0xff] %v6826
        %6922 = vst [vmem:[%s404 + $0xa0] sm:$0xff] %v6562
        %6923 = vst [vmem:[%s404 + $0xa8] sm:$0xff] %v6564
        %6924 = vst [vmem:[%s404 + $0xb0] sm:$0xff] %v6828
        %6925 = vst [vmem:[%s404 + $0xb8] sm:$0xff] %v6830
        %6926 = vst [vmem:[%s404 + $0xc0] sm:$0xff] %v6568
        %6927 = vst [vmem:[%s404 + $0xc8] sm:$0xff] %v6570
        %6928 = vst [vmem:[%s404 + $0xd0] sm:$0xff] %v6834
        %6929 = vst [vmem:[%s404 + $0xd8] sm:$0xff] %v6836
        %6930 = vst [vmem:[%s404 + $0xe0] sm:$0xff] %v6572
        %6931 = vst [vmem:[%s404 + $0xe8] sm:$0xff] %v6574
        %6932 = vst [vmem:[%s404 + $0xf0] sm:$0xff] %v6838
        %6933 = vst [vmem:[%s404 + $0xf8] sm:$0xff] %v6840
        %6934 = vst [vmem:[%s404 + $0x100] sm:$0xff] %v6578
        %6935 = vst [vmem:[%s404 + $0x108] sm:$0xff] %v6580
        %6936 = vst [vmem:[%s404 + $0x110] sm:$0xff] %v6844
        %6937 = vst [vmem:[%s404 + $0x118] sm:$0xff] %v6846
        %6938 = vst [vmem:[%s404 + $0x120] sm:$0xff] %v6582
        %6939 = vst [vmem:[%s404 + $0x128] sm:$0xff] %v6584
        %6940 = vst [vmem:[%s404 + $0x130] sm:$0xff] %v6848
        %6941 = vst [vmem:[%s404 + $0x138] sm:$0xff] %v6850
        %6942 = vst [vmem:[%s404 + $0x140] sm:$0xff] %v6588
        %6943 = vst [vmem:[%s404 + $0x148] sm:$0xff] %v6590
        %6944 = vst [vmem:[%s404 + $0x150] sm:$0xff] %v6854
        %6945 = vst [vmem:[%s404 + $0x158] sm:$0xff] %v6856
        %6946 = vst [vmem:[%s404 + $0x160] sm:$0xff] %v6592
        %6947 = vst [vmem:[%s404 + $0x168] sm:$0xff] %v6594
        %6948 = vst [vmem:[%s404 + $0x170] sm:$0xff] %v6858
        %6949 = vst [vmem:[%s404 + $0x178] sm:$0xff] %v6860
        %6950 = vst [vmem:[%s404 + $0x180] sm:$0xff] %v6598
        %6951 = vst [vmem:[%s404 + $0x188] sm:$0xff] %v6600
        %6952 = vst [vmem:[%s404 + $0x190] sm:$0xff] %v6864
        %6953 = vst [vmem:[%s404 + $0x198] sm:$0xff] %v6866
        %6954 = vst [vmem:[%s404 + $0x1a0] sm:$0xff] %v6602
        %6955 = vst [vmem:[%s404 + $0x1a8] sm:$0xff] %v6604
        %6956 = vst [vmem:[%s404 + $0x1b0] sm:$0xff] %v6868
        %6957 = vst [vmem:[%s404 + $0x1b8] sm:$0xff] %v6870
        %6958 = vst [vmem:[%s404 + $0x1c0] sm:$0xff] %v6608
        %6959 = vst [vmem:[%s404 + $0x1c8] sm:$0xff] %v6610
        %6960 = vst [vmem:[%s404 + $0x1d0] sm:$0xff] %v6874
        %6961 = vst [vmem:[%s404 + $0x1d8] sm:$0xff] %v6876
        %6962 = vst [vmem:[%s404 + $0x1e0] sm:$0xff] %v6612
        %6963 = vst [vmem:[%s404 + $0x1e8] sm:$0xff] %v6614
        %6964 = vst [vmem:[%s404 + $0x1f0] sm:$0xff] %v6878
        %6965 = vst [vmem:[%s404 + $0x1f8] sm:$0xff] %v6880
        %6966 = vst [vmem:[%s404 + $0x200] sm:$0xff] %v6618
        %6967 = vst [vmem:[%s404 + $0x208] sm:$0xff] %v6620
        %6968 = vst [vmem:[%s404 + $0x210] sm:$0xff] %v6884
        %6969 = vst [vmem:[%s404 + $0x218] sm:$0xff] %v6886
        %6970 = vst [vmem:[%s404 + $0x220] sm:$0xff] %v6622
        %6971 = vst [vmem:[%s404 + $0x228] sm:$0xff] %v6624
        %6972 = vst [vmem:[%s404 + $0x230] sm:$0xff] %v6888
        %6973 = vst [vmem:[%s404 + $0x238] sm:$0xff] %v6890
        %6974 = vst [vmem:[%s404 + $0x240] sm:$0xff] %v6628
        %6975 = vst [vmem:[%s404 + $0x248] sm:$0xff] %v6630
        %6976 = vst [vmem:[%s404 + $0x250] sm:$0xff] %v6894
        %6977 = vst [vmem:[%s404 + $0x258] sm:$0xff] %v6896
        %6978 = vst [vmem:[%s404 + $0x260] sm:$0xff] %v6632
        %6979 = vst [vmem:[%s404 + $0x268] sm:$0xff] %v6634
        %6980 = vst [vmem:[%s404 + $0x270] sm:$0xff] %v6898
        %6981 = vst [vmem:[%s404 + $0x278] sm:$0xff] %v6900
        %s6982 = sand.u32 %s285, 1
        %s6983 = scalar_lea.sflag [#allocation3], %s6982
        %s6984 = sand.u32 %s285, 1
        %s6985 = smul.addr %s6984, 640
        %s6986 = scalar_lea.vmem [#allocation2], %s6985
        // Predicated region
        $region65: #{_lambda_.1} parent=63 // pred_check
          %p6987 = pneg %p295
        $region66: #{_lambda_.1} parent=63 // pred_check_branch
          %6989 = sbr.rel (%p6987) target = $region68
        $region67: #{_lambda_.1} parent=63 // pred_region
          %s6990 = smul.u32 4, %s30
          %s6992 = ssub.s32 10240, 10240
          %6993 = vsyncadd %s6983, %s6992
          %s6994 = smul.addr %s29, 80
          %s6995 = sadd.s32 %s6990, %s6994
          %s6996 = smul.addr %s6995, 128
          %s6997 = scalar_lea.hbm %s11, %s6996
          %s6998 = sshll.u32 %s6986, 4
          %s6999 = int_to_ptr.vmem [resolvable:$true] %s6998
          %7004 = dma.vmem_to_hbm [thread:$0]  %s6999, 10240, %s6997, %s6983, 512, 512, 32
        $region68: #{_lambda_.1} parent=63 // pred_fallthru
          _
      $region64: #{_lambda_.1} parent=5 // pred_fallthru
        _
      %p7005 = scmp.le.s32.totalorder 2, %s20
      // Predicated region
      $region69: #{_lambda_.1} parent=5 // pred_check
        %p7006 = pneg %p7005
      $region70: #{_lambda_.1} parent=5 // pred_check_branch
        %7008 = sbr.rel (%p7006) target = $region72
      $region71: #{_lambda_.1} parent=5 // pred_region
        %s7009 = ssub.s32 %s20, 2
        // Predicated region
        $region73: #{_lambda_.1} parent=71 // pred_check
          %p7010 = pneg %p301
        $region74: #{_lambda_.1} parent=71 // pred_check_branch
          %7012 = sbr.rel (%p7010) target = $region76
        $region75: #{_lambda_.1} parent=71 // pred_region
          %s7013 = sand.u32 %s286, 1
          %s7014 = scalar_lea.sflag [#allocation3], %s7013
          %s7015 = sand.u32 %s286, 1
          %s7016 = smul.addr %s7015, 640
          %s7017 = scalar_lea.vmem [#allocation2], %s7016
          %7018 = dma.done %s7014, 10240
        $region76: #{_lambda_.1} parent=71 // pred_fallthru
          _
      $region72: #{_lambda_.1} parent=5 // pred_fallthru
        _
    $region6: #{_lambda_.1} parent=1 // loop_footer
      %s24 = sadd.s32 1, %s20
    $region7: #{_lambda_.1} parent=1 // loop_footer_branch
      %19 = sbr.rel target = $region3
    $region8: #{_lambda_.1} parent=1 // loop_exit
      _
    %7019 = vsyncpa [#allocation3], 1
    %s7020 = scalar_lea.sflag [#allocation3], 1
    %7021 = vsyncpa %s7020, 1

</llo_original>
